<compile_context>
chip_gen: v6e
topology: v6e:2x2x1
jax: 0.10.0
libtpu: 0.0.40
codegen_flags: <defaults>
</compile_context>

<pallas_src>
import numpy as np
import jax
import jax.numpy as jnp
from jax import lax
from jax.experimental import pallas as pl
from jax.experimental.pallas import tpu as pltpu

# ----------------------------- module config -------------------------------
NUM_FC = 2
NUM_LAYERS = NUM_FC + 1            # 3 linear layers (Linear-ReLU-Linear-ReLU-Linear)
FC_DIM = 32                        # hidden width
NUM_CLASSES = 1                    # CLS_AGNOSTIC_MASK
IMG_CHANNELS = 4                   # fine-grained feature channels
NUM_ENC = 128                      # Gaussian positional-encoding frequencies
IN_CHANNELS = 2 * NUM_ENC + IMG_CHANNELS          # 260

NUM_WEIGHT_PARAMS = [IN_CHANNELS * FC_DIM, FC_DIM * FC_DIM, FC_DIM * NUM_CLASSES]
NUM_BIAS_PARAMS = [FC_DIM, FC_DIM, NUM_CLASSES]
NUM_PARAMS = sum(NUM_WEIGHT_PARAMS) + sum(NUM_BIAS_PARAMS)

TWO_PI = 2.0 * np.pi

# --------------------------- packed layouts ---------------------------------
IMG_AUG = IMG_CHANNELS + 1         # image features + ones channel (b0 fold)
FEAT_ROWS = 8                      # rows: x, y, 1, img0..img3, 0

SLAB_ROWS = 3 * FC_DIM + 8         # 104
SLAB_LANES = NUM_ENC               # 128
_ROW_SIN = 0                       # rows [0,32)   lanes [0,128) : w0_sin
_ROW_COS = FC_DIM                  # rows [32,64)  lanes [0,128) : w0_cos
_ROW_SMALL = 2 * FC_DIM            # rows [64,96)  : w1 / [b0|w0_img] / b1
_ROW_LAST = 3 * FC_DIM             # row 96        : w2 / b2
_COL_W1 = 0                        # w1  at lanes [0,32)
_COL_IMG = FC_DIM                  # [b0 | w0_img] at lanes [32,37)
_COL_BIAS = 40                     # b1 (rows 64:96) and b2 (row 96) at lane 40


# ------------------------------ helpers --------------------------------------
def _round_up(x, m):
    return ((x + m - 1) // m) * m


def _bmm(a, b):
    """(B, M, K) @ (B, K, N) -> (B, M, N), f32 accumulation on the MXU."""
    return lax.dot_general(a, b, (((2,), (1,)), ((0,), (0,))),
                           preferred_element_type=jnp.float32)


def _sincos(z):
    """sin / cos of 2*pi*z with one shared range reduction.

    angle = 2*pi*z = k*(pi/2) + r, r in [-pi/4, pi/4]; both short polynomials
    are evaluated on r and the quadrant (k mod 4) swaps / negates.  Cheaper on
    the VPU (the dominant unit here) than two independent libm lowerings.
    """
    k = jnp.floor(z * 4.0 + 0.5)
    r = (z - k * 0.25) * TWO_PI
    q = k.astype(jnp.int32) & 3
    r2 = r * r
    sp = r2 * (-1.0 / 5040.0) + (1.0 / 120.0)
    sp = r2 * sp + (-1.0 / 6.0)
    sin_r = r + r * (r2 * sp)
    cp = r2 * (-1.0 / 720.0) + (1.0 / 24.0)
    cp = r2 * cp + (-0.5)
    cos_r = 1.0 + r2 * cp
    swap = (q & 1) == 1
    s_base = jnp.where(swap, cos_r, sin_r)
    c_base = jnp.where(swap, sin_r, cos_r)
    sin_a = jnp.where(q >= 2, -s_base, s_base)
    cos_a = jnp.where((q == 1) | (q == 2), -c_base, c_base)
    return sin_a, cos_a


# ------------------------------ Pallas kernel --------------------------------
def _point_head_kernel(feat_ref, slab_ref, gpe_ref, out_ref):
    # feat_ref: (B, 8, P)            f32   rows: x, y, 1, img0..img3, 0
    # slab_ref: (B, SLAB_ROWS, 128)  bf16  packed per-instance MLP parameters
    # gpe_ref:  (128, 8)             f32   [2*G^T | -G^T@1 | 0...]
    # out_ref:  (B, P)               f32   mask logits (class dim squeezed)
    B, P = out_ref.shape
    feat = feat_ref[...]                                   # (B, 8, P)
    img = feat[:, 2:2 + IMG_AUG, :]                        # (B, 5, P) = [1; img]

    # Positional-encoding phase z = G^T (2c - 1) for all B instances in one
    # batched tiny-K MXU pass (affine fold lives in gpe; extra columns are 0).
    g = jnp.broadcast_to(gpe_ref[...], (B,) + gpe_ref.shape)   # (B, 128, 8)
    z = _bmm(g, feat)                                          # (B, 128, P) f32
    sin_a, cos_a = _sincos(z)
    sin_b = sin_a.astype(jnp.bfloat16)
    cos_b = cos_a.astype(jnp.bfloat16)

    # Per-instance parameter views out of the packed slab (static slices).
    w0s = slab_ref[:, _ROW_SIN:_ROW_SIN + FC_DIM, :]                           # (B,32,128)
    w0c = slab_ref[:, _ROW_COS:_ROW_COS + FC_DIM, :]                           # (B,32,128)
    w1 = slab_ref[:, _ROW_SMALL:_ROW_SMALL + FC_DIM, _COL_W1:_COL_W1 + FC_DIM]  # (B,32,32)
    w0i = slab_ref[:, _ROW_SMALL:_ROW_SMALL + FC_DIM,
                   _COL_IMG:_COL_IMG + IMG_AUG]                                 # (B,32,5)
    b1 = slab_ref[:, _ROW_SMALL:_ROW_SMALL + FC_DIM,
                  _COL_BIAS:_COL_BIAS + 1].astype(jnp.float32)                  # (B,32,1)
    w2 = slab_ref[:, _ROW_LAST:_ROW_LAST + NUM_CLASSES,
                  _COL_W1:_COL_W1 + FC_DIM]                                     # (B,1,32)
    b2 = slab_ref[:, _ROW_LAST:_ROW_LAST + NUM_CLASSES,
                  _COL_BIAS:_COL_BIAS + 1].astype(jnp.float32)                  # (B,1,1)

    # Layer 0 (ReLU): split matmul over sin / cos / img channel groups; b0 is
    # folded into the img branch via the ones channel.  bf16 in, f32 accum.
    h = (_bmm(w0s, sin_b) + _bmm(w0c, cos_b)
         + _bmm(w0i, img.astype(jnp.bfloat16)))             # (B, 32, P)
    h = jnp.maximum(h, 0.0)

    # Layer 1 (ReLU)
    h = _bmm(w1, h.astype(jnp.bfloat16)) + b1
    h = jnp.maximum(h, 0.0)

    # Layer 2 (no ReLU), then one lane-dense (B, P) store.
    logits = _bmm(w2, h.astype(jnp.bfloat16)) + b2          # (B, 1, P)
    out_ref[...] = logits[:, 0, :]


# ---------------------- one-time parameter packing ---------------------------
def fold_gaussian_matrix(gaussian_matrix):
    """(2,128) registered-buffer Gaussian matrix -> (128, 8) folded matrix
    [2*G^T | -G^T@1 | zeros]; the `2*coords - 1` affine is baked in.  One-time
    prep, kept out of the per-call forward."""
    gt = jnp.transpose(gaussian_matrix, (1, 0)).astype(jnp.float32)     # (128, 2)
    off = -jnp.sum(gt, axis=1, keepdims=True)                           # (128, 1)
    zeros = jnp.zeros((NUM_ENC, FEAT_ROWS - 3), jnp.float32)
    return jnp.concatenate([2.0 * gt, off, zeros], axis=1)              # (128, 8)


def pack_parameters(parameters, dtype=jnp.bfloat16):
    """Pack the flat per-instance MLP parameters into ONE lane-dense slab.

    Layout (per instance, SLAB_ROWS x 128 lanes):
      rows [0,32)   lanes [0,128) : w0_sin          (32, 128)
      rows [32,64)  lanes [0,128) : w0_cos          (32, 128)
      rows [64,96)  lanes [0,32)  : w1              (32, 32)
      rows [64,96)  lanes [32,37) : [b0 | w0_img]   (32, 5)
      rows [64,96)  lane  40      : b1              (32, 1)
      row  96       lanes [0,32)  : w2              (1, 32)
      row  96       lane  40      : b2              (1, 1)
    One-time prep (kept out of the per-call forward wrapper)."""
    N = parameters.shape[0]
    sizes = NUM_WEIGHT_PARAMS + NUM_BIAS_PARAMS
    offs = np.cumsum([0] + sizes)
    w0 = parameters[:, offs[0]:offs[1]].reshape(N, FC_DIM, IN_CHANNELS)
    w1 = parameters[:, offs[1]:offs[2]].reshape(N, FC_DIM, FC_DIM)
    w2 = parameters[:, offs[2]:offs[3]].reshape(N, NUM_CLASSES, FC_DIM)
    b0 = parameters[:, offs[3]:offs[4]].reshape(N, FC_DIM, 1)
    b1 = parameters[:, offs[4]:offs[5]].reshape(N, FC_DIM, 1)
    b2 = parameters[:, offs[5]:offs[6]].reshape(N, NUM_CLASSES, 1)

    slab = jnp.zeros((N, SLAB_ROWS, SLAB_LANES), jnp.float32)
    slab = slab.at[:, _ROW_SIN:_ROW_SIN + FC_DIM, :].set(w0[:, :, 0:NUM_ENC])
    slab = slab.at[:, _ROW_COS:_ROW_COS + FC_DIM, :].set(w0[:, :, NUM_ENC:2 * NUM_ENC])
    slab = slab.at[:, _ROW_SMALL:_ROW_SMALL + FC_DIM,
                   _COL_W1:_COL_W1 + FC_DIM].set(w1)
    slab = slab.at[:, _ROW_SMALL:_ROW_SMALL + FC_DIM,
                   _COL_IMG:_COL_IMG + 1].set(b0)
    slab = slab.at[:, _ROW_SMALL:_ROW_SMALL + FC_DIM,
                   _COL_IMG + 1:_COL_IMG + IMG_AUG].set(w0[:, :, 2 * NUM_ENC:IN_CHANNELS])
    slab = slab.at[:, _ROW_SMALL:_ROW_SMALL + FC_DIM,
                   _COL_BIAS:_COL_BIAS + 1].set(b1)
    slab = slab.at[:, _ROW_LAST:_ROW_LAST + NUM_CLASSES,
                   _COL_W1:_COL_W1 + FC_DIM].set(w2)
    slab = slab.at[:, _ROW_LAST:_ROW_LAST + NUM_CLASSES,
                   _COL_BIAS:_COL_BIAS + 1].set(b2)
    return slab.astype(dtype)


# --------------------------------- wrapper ------------------------------------
def implicit_point_head_forward(fine_grained_features, point_coords, param_slab,
                                gpe, *, block_insts=32):
    """fine_grained_features: (N, IMG_CHANNELS, P) f32
       point_coords:          (N, P, 2) f32 in [0, 1]
       param_slab:            (N, SLAB_ROWS, 128) from pack_parameters()
       gpe:                   (128, 8) from fold_gaussian_matrix()
       returns point_logits:  (N, NUM_CLASSES, P) f32
    """
    N, c_img, P = fine_grained_features.shape
    assert c_img == IMG_CHANNELS
    if N == 0:
        return jnp.zeros((0, NUM_CLASSES, P), jnp.float32)

    # Lane-dense points: pad P up to a multiple of 128.
    P_pad = _round_up(P, 128)

    # Instance block size: multiple of 8 sublane rows; clamp so the 1-D grid
    # keeps >= 2 steps when there is enough work (two TensorCores on v7x).
    B = max(8, (int(block_insts) // 8) * 8)
    half = _round_up((N + 1) // 2, 8)
    B = max(8, min(B, half))
    N_pad = _round_up(N, B)

    # Single activation input: rows [x, y, 1, img0..3, 0]; the ones row serves
    # both the positional-encoding affine fold and the b0 fold.
    coords_t = jnp.transpose(point_coords, (0, 2, 1)).astype(jnp.float32)   # (N,2,P)
    feat = jnp.concatenate(
        [coords_t,
         jnp.ones((N, 1, P), jnp.float32),
         fine_grained_features.astype(jnp.float32),
         jnp.zeros((N, FEAT_ROWS - 3 - IMG_CHANNELS, P), jnp.float32)], axis=1)
    feat = jnp.pad(feat, ((0, N_pad - N), (0, 0), (0, P_pad - P)))

    slab = param_slab
    if N_pad > N:
        slab = jnp.pad(slab, ((0, N_pad - N), (0, 0), (0, 0)))
    gpe = gpe.astype(jnp.float32)

    flops = int(N_pad * P_pad * 2 * (NUM_ENC * FEAT_ROWS + FC_DIM * NUM_ENC * 2
                                     + FC_DIM * IMG_AUG + FC_DIM * FC_DIM
                                     + NUM_CLASSES * FC_DIM))
    transcendentals = int(2 * NUM_ENC * N_pad * P_pad)
    bytes_accessed = int(feat.size * 4 + slab.size * slab.dtype.itemsize
                         + gpe.size * 4 + N_pad * P_pad * 4)

    out = pl.pallas_call(
        _point_head_kernel,
        out_shape=jax.ShapeDtypeStruct((N_pad, P_pad), jnp.float32),
        grid=(N_pad // B,),
        in_specs=[
            pl.BlockSpec((B, FEAT_ROWS, P_pad), lambda n: (n, 0, 0)),       # feat
            pl.BlockSpec((B, SLAB_ROWS, SLAB_LANES), lambda n: (n, 0, 0)),  # param slab
            pl.BlockSpec((NUM_ENC, FEAT_ROWS), lambda n: (0, 0)),           # folded G (resident)
        ],
        out_specs=pl.BlockSpec((B, P_pad), lambda n: (n, 0)),
        compiler_params=pltpu.CompilerParams(
            dimension_semantics=("parallel",),
            vmem_limit_bytes=48 * 1024 * 1024),
        cost_estimate=pl.CostEstimate(flops=flops,
                                      transcendentals=transcendentals,
                                      bytes_accessed=bytes_accessed),
    )(feat, slab, gpe)

    return out[:N, :P].reshape(N, NUM_CLASSES, P)


# --------------------------- pure-JAX reference ------------------------------
def reference_forward(fine_grained_features, point_coords, parameters,
                      gaussian_matrix):
    N, C_img, P = fine_grained_features.shape
    loc = 2.0 * point_coords.reshape(N * P, 2) - 1.0
    loc = loc @ gaussian_matrix
    loc = TWO_PI * loc
    loc = jnp.concatenate([jnp.sin(loc), jnp.cos(loc)], axis=1)
    loc = loc.reshape(N, P, 2 * NUM_ENC).transpose(0, 2, 1)
    x = jnp.concatenate([loc, fine_grained_features], axis=1)   # (N, 260, P)

    sizes = NUM_WEIGHT_PARAMS + NUM_BIAS_PARAMS
    offs = np.cumsum([0] + sizes)
    ws = [parameters[:, offs[0]:offs[1]].reshape(N, FC_DIM, IN_CHANNELS),
          parameters[:, offs[1]:offs[2]].reshape(N, FC_DIM, FC_DIM),
          parameters[:, offs[2]:offs[3]].reshape(N, NUM_CLASSES, FC_DIM)]
    bs = [parameters[:, offs[3]:offs[4]].reshape(N, FC_DIM, 1),
          parameters[:, offs[4]:offs[5]].reshape(N, FC_DIM, 1),
          parameters[:, offs[5]:offs[6]].reshape(N, NUM_CLASSES, 1)]
    for i, (w, b) in enumerate(zip(ws, bs)):
        x = jnp.einsum('nck,ndc->ndk', x, w) + b
        if i < len(ws) - 1:
            x = jnp.maximum(x, 0.0)
    return x.reshape(N, NUM_CLASSES, P)


# --------------------------------- main ---------------------------------------
if __name__ == "__main__":
    key = jax.random.PRNGKey(0)
    k1, k2, k3, k4 = jax.random.split(key, 4)

    N, P = 2, 128
    fine_grained_features = jax.random.normal(k1, (N, IMG_CHANNELS, P), jnp.float32)
    point_coords = jax.random.uniform(k2, (N, P, 2), jnp.float32)
    parameters = 0.1 * jax.random.normal(k3, (N, NUM_PARAMS), jnp.float32)
    gaussian_matrix = jax.random.normal(k4, (2, NUM_ENC), jnp.float32)  # registered buffer

    # One-time packing (kept out of the per-call forward wrapper).
    param_slab = pack_parameters(parameters)
    gpe = fold_gaussian_matrix(gaussian_matrix)

    out = implicit_point_head_forward(fine_grained_features, point_coords,
                                      param_slab, gpe)
    out = jax.block_until_ready(out)

    ref = reference_forward(fine_grained_features, point_coords, parameters,
                            gaussian_matrix)
    assert out.shape == (N, NUM_CLASSES, P), out.shape
    # bf16 MXU operands (per review) -> loosened tolerance vs. the f32 reference.
    np.testing.assert_allclose(np.asarray(out), np.asarray(ref),
                               rtol=2e-2, atol=2e-2)
    print("KERNEL_OK")
</pallas_src>

<mosaic_0001>
module attributes {stable_mosaic.version = 11 : i64} {
  func.func @_point_head_kernel(%arg0: i32, %arg1: memref<8x8x128xf32, #tpu.memory_space<vmem>>, %arg2: memref<8x104x128xbf16, #tpu.memory_space<vmem>>, %arg3: memref<128x8xf32, #tpu.memory_space<vmem>>, %arg4: memref<8x128xf32, #tpu.memory_space<vmem>>) attributes {dimension_semantics = [#tpu.dimension_semantics<parallel>], iteration_bounds = array<i64: 1>, scalar_prefetch = 0 : i64, scratch_operands = 0 : i64, tpu.core_type = #tpu.core_type<tc>, window_params = [{transform_indices = @transform_0, window_bounds = array<i64: 8, 8, 128>}, {transform_indices = @transform_1, window_bounds = array<i64: 8, 104, 128>}, {pipeline_mode = #tpu.pipeline_mode<synchronous>, transform_indices = @transform_2, window_bounds = array<i64: 128, 8>}, {transform_indices = @transform_3, window_bounds = array<i64: 8, 128>}]} {
    %c0 = arith.constant 0 : index
    %c0_0 = arith.constant 0 : index
    %c0_1 = arith.constant 0 : index
    %0 = vector.load %arg1[%c0, %c0_0, %c0_1] : memref<8x8x128xf32, #tpu.memory_space<vmem>>, vector<8x8x128xf32>
    %1 = vector.extract_strided_slice %0 {offsets = [0, 2, 0], sizes = [8, 5, 128], strides = [1, 1, 1]} : vector<8x8x128xf32> to vector<8x5x128xf32>
    %c0_2 = arith.constant 0 : index
    %c0_3 = arith.constant 0 : index
    %2 = vector.load %arg3[%c0_2, %c0_3] : memref<128x8xf32, #tpu.memory_space<vmem>>, vector<128x8xf32>
    %3 = vector.shape_cast %2 : vector<128x8xf32> to vector<1x128x8xf32>
    %4 = vector.broadcast %3 : vector<1x128x8xf32> to vector<8x128x8xf32>
    %cst = arith.constant dense<0.000000e+00> : vector<8x128x128xf32>
    %5 = tpu.matmul %4, %0, %cst {dimension_numbers = #tpu.dot_dimension_numbers<[2], [1], [1], [2], [0, 0, 0, 1, 1, 2], [0], [0]>} : vector<8x128x8xf32>, vector<8x8x128xf32>, vector<8x128x128xf32> -> vector<8x128x128xf32>
    %cst_4 = arith.constant 4.000000e+00 : f32
    %6 = vector.broadcast %cst_4 : f32 to vector<8x128x128xf32>
    %7 = arith.mulf %5, %6 : vector<8x128x128xf32>
    %cst_5 = arith.constant 5.000000e-01 : f32
    %8 = vector.broadcast %cst_5 : f32 to vector<8x128x128xf32>
    %9 = arith.addf %7, %8 : vector<8x128x128xf32>
    %10 = math.floor %9 : vector<8x128x128xf32>
    %cst_6 = arith.constant 2.500000e-01 : f32
    %11 = vector.broadcast %cst_6 : f32 to vector<8x128x128xf32>
    %12 = arith.mulf %10, %11 : vector<8x128x128xf32>
    %13 = arith.subf %5, %12 : vector<8x128x128xf32>
    %cst_7 = arith.constant 6.28318548 : f32
    %14 = vector.broadcast %cst_7 : f32 to vector<8x128x128xf32>
    %15 = arith.mulf %13, %14 : vector<8x128x128xf32>
    %16 = arith.fptosi %10 : vector<8x128x128xf32> to vector<8x128x128xi32>
    %c3_i32 = arith.constant 3 : i32
    %17 = vector.broadcast %c3_i32 : i32 to vector<8x128x128xi32>
    %18 = arith.andi %16, %17 : vector<8x128x128xi32>
    %19 = arith.mulf %15, %15 : vector<8x128x128xf32>
    %cst_8 = arith.constant -1.98412701E-4 : f32
    %20 = vector.broadcast %cst_8 : f32 to vector<8x128x128xf32>
    %21 = arith.mulf %19, %20 : vector<8x128x128xf32>
    %cst_9 = arith.constant 0.00833333377 : f32
    %22 = vector.broadcast %cst_9 : f32 to vector<8x128x128xf32>
    %23 = arith.addf %21, %22 : vector<8x128x128xf32>
    %24 = arith.mulf %19, %23 : vector<8x128x128xf32>
    %cst_10 = arith.constant -0.166666672 : f32
    %25 = vector.broadcast %cst_10 : f32 to vector<8x128x128xf32>
    %26 = arith.addf %24, %25 : vector<8x128x128xf32>
    %27 = arith.mulf %19, %26 : vector<8x128x128xf32>
    %28 = arith.mulf %15, %27 : vector<8x128x128xf32>
    %29 = arith.addf %15, %28 : vector<8x128x128xf32>
    %cst_11 = arith.constant -0.00138888892 : f32
    %30 = vector.broadcast %cst_11 : f32 to vector<8x128x128xf32>
    %31 = arith.mulf %19, %30 : vector<8x128x128xf32>
    %cst_12 = arith.constant 0.0416666679 : f32
    %32 = vector.broadcast %cst_12 : f32 to vector<8x128x128xf32>
    %33 = arith.addf %31, %32 : vector<8x128x128xf32>
    %34 = arith.mulf %19, %33 : vector<8x128x128xf32>
    %cst_13 = arith.constant -5.000000e-01 : f32
    %35 = vector.broadcast %cst_13 : f32 to vector<8x128x128xf32>
    %36 = arith.addf %34, %35 : vector<8x128x128xf32>
    %37 = arith.mulf %19, %36 : vector<8x128x128xf32>
    %cst_14 = arith.constant 1.000000e+00 : f32
    %38 = vector.broadcast %cst_14 : f32 to vector<8x128x128xf32>
    %39 = arith.addf %38, %37 : vector<8x128x128xf32>
    %c1_i32 = arith.constant 1 : i32
    %40 = vector.broadcast %c1_i32 : i32 to vector<8x128x128xi32>
    %41 = arith.andi %18, %40 : vector<8x128x128xi32>
    %c1_i32_15 = arith.constant 1 : i32
    %42 = vector.broadcast %c1_i32_15 : i32 to vector<8x128x128xi32>
    %43 = arith.cmpi eq, %41, %42 : vector<8x128x128xi32>
    %44 = arith.select %43, %39, %29 : vector<8x128x128xi1>, vector<8x128x128xf32>
    %45 = arith.select %43, %29, %39 : vector<8x128x128xi1>, vector<8x128x128xf32>
    %c2_i32 = arith.constant 2 : i32
    %46 = vector.broadcast %c2_i32 : i32 to vector<8x128x128xi32>
    %47 = arith.cmpi sge, %18, %46 : vector<8x128x128xi32>
    %cst_16 = arith.constant 0.000000e+00 : f32
    %48 = vector.broadcast %cst_16 : f32 to vector<8x128x128xf32>
    %49 = arith.subf %48, %44 : vector<8x128x128xf32>
    %50 = arith.select %47, %49, %44 : vector<8x128x128xi1>, vector<8x128x128xf32>
    %c1_i32_17 = arith.constant 1 : i32
    %51 = vector.broadcast %c1_i32_17 : i32 to vector<8x128x128xi32>
    %52 = arith.cmpi eq, %18, %51 : vector<8x128x128xi32>
    %c2_i32_18 = arith.constant 2 : i32
    %53 = vector.broadcast %c2_i32_18 : i32 to vector<8x128x128xi32>
    %54 = arith.cmpi eq, %18, %53 : vector<8x128x128xi32>
    %55 = arith.ori %52, %54 : vector<8x128x128xi1>
    %cst_19 = arith.constant 0.000000e+00 : f32
    %56 = vector.broadcast %cst_19 : f32 to vector<8x128x128xf32>
    %57 = arith.subf %56, %45 : vector<8x128x128xf32>
    %58 = arith.select %55, %57, %45 : vector<8x128x128xi1>, vector<8x128x128xf32>
    %59 = arith.truncf %50 : vector<8x128x128xf32> to vector<8x128x128xbf16>
    %60 = arith.truncf %58 : vector<8x128x128xf32> to vector<8x128x128xbf16>
    %c0_20 = arith.constant 0 : index
    %c0_21 = arith.constant 0 : index
    %c0_22 = arith.constant 0 : index
    %61 = vector.load %arg2[%c0_20, %c0_21, %c0_22] : memref<8x104x128xbf16, #tpu.memory_space<vmem>>, vector<8x32x128xbf16>
    %c0_23 = arith.constant 0 : index
    %c32 = arith.constant 32 : index
    %c0_24 = arith.constant 0 : index
    %62 = vector.load %arg2[%c0_23, %c32, %c0_24] : memref<8x104x128xbf16, #tpu.memory_space<vmem>>, vector<8x32x128xbf16>
    %c0_25 = arith.constant 0 : index
    %c64 = arith.constant 64 : index
    %c0_26 = arith.constant 0 : index
    %63 = vector.load %arg2[%c0_25, %c64, %c0_26] : memref<8x104x128xbf16, #tpu.memory_space<vmem>>, vector<8x32x32xbf16>
    %c0_27 = arith.constant 0 : index
    %c64_28 = arith.constant 64 : index
    %c32_29 = arith.constant 32 : index
    %64 = vector.load %arg2[%c0_27, %c64_28, %c32_29] : memref<8x104x128xbf16, #tpu.memory_space<vmem>>, vector<8x32x5xbf16>
    %c0_30 = arith.constant 0 : index
    %c64_31 = arith.constant 64 : index
    %c40 = arith.constant 40 : index
    %65 = vector.load %arg2[%c0_30, %c64_31, %c40] : memref<8x104x128xbf16, #tpu.memory_space<vmem>>, vector<8x32x1xbf16>
    %66 = arith.extf %65 : vector<8x32x1xbf16> to vector<8x32x1xf32>
    %c0_32 = arith.constant 0 : index
    %c96 = arith.constant 96 : index
    %c0_33 = arith.constant 0 : index
    %67 = vector.load %arg2[%c0_32, %c96, %c0_33] : memref<8x104x128xbf16, #tpu.memory_space<vmem>>, vector<8x1x32xbf16>
    %c0_34 = arith.constant 0 : index
    %c96_35 = arith.constant 96 : index
    %c40_36 = arith.constant 40 : index
    %68 = vector.load %arg2[%c0_34, %c96_35, %c40_36] : memref<8x104x128xbf16, #tpu.memory_space<vmem>>, vector<8x1x1xbf16>
    %69 = arith.extf %68 : vector<8x1x1xbf16> to vector<8x1x1xf32>
    %cst_37 = arith.constant dense<0.000000e+00> : vector<8x32x128xf32>
    %70 = tpu.matmul %61, %59, %cst_37 {dimension_numbers = #tpu.dot_dimension_numbers<[2], [1], [1], [2], [0, 0, 0, 1, 1, 2], [0], [0]>} : vector<8x32x128xbf16>, vector<8x128x128xbf16>, vector<8x32x128xf32> -> vector<8x32x128xf32>
    %cst_38 = arith.constant dense<0.000000e+00> : vector<8x32x128xf32>
    %71 = tpu.matmul %62, %60, %cst_38 {dimension_numbers = #tpu.dot_dimension_numbers<[2], [1], [1], [2], [0, 0, 0, 1, 1, 2], [0], [0]>} : vector<8x32x128xbf16>, vector<8x128x128xbf16>, vector<8x32x128xf32> -> vector<8x32x128xf32>
    %72 = arith.addf %70, %71 : vector<8x32x128xf32>
    %73 = arith.truncf %1 : vector<8x5x128xf32> to vector<8x5x128xbf16>
    %cst_39 = arith.constant dense<0.000000e+00> : vector<8x32x128xf32>
    %74 = tpu.matmul %64, %73, %cst_39 {dimension_numbers = #tpu.dot_dimension_numbers<[2], [1], [1], [2], [0, 0, 0, 1, 1, 2], [0], [0]>} : vector<8x32x5xbf16>, vector<8x5x128xbf16>, vector<8x32x128xf32> -> vector<8x32x128xf32>
    %75 = arith.addf %72, %74 : vector<8x32x128xf32>
    %cst_40 = arith.constant 0.000000e+00 : f32
    %76 = vector.broadcast %cst_40 : f32 to vector<8x32x128xf32>
    %77 = arith.maximumf %75, %76 : vector<8x32x128xf32>
    %78 = arith.truncf %77 : vector<8x32x128xf32> to vector<8x32x128xbf16>
    %cst_41 = arith.constant dense<0.000000e+00> : vector<8x32x128xf32>
    %79 = tpu.matmul %63, %78, %cst_41 {dimension_numbers = #tpu.dot_dimension_numbers<[2], [1], [1], [2], [0, 0, 0, 1, 1, 2], [0], [0]>} : vector<8x32x32xbf16>, vector<8x32x128xbf16>, vector<8x32x128xf32> -> vector<8x32x128xf32>
    %80 = vector.broadcast %66 : vector<8x32x1xf32> to vector<8x32x128xf32>
    %81 = arith.addf %79, %80 : vector<8x32x128xf32>
    %cst_42 = arith.constant 0.000000e+00 : f32
    %82 = vector.broadcast %cst_42 : f32 to vector<8x32x128xf32>
    %83 = arith.maximumf %81, %82 : vector<8x32x128xf32>
    %84 = arith.truncf %83 : vector<8x32x128xf32> to vector<8x32x128xbf16>
    %cst_43 = arith.constant dense<0.000000e+00> : vector<8x1x128xf32>
    %85 = tpu.matmul %67, %84, %cst_43 {dimension_numbers = #tpu.dot_dimension_numbers<[2], [1], [1], [2], [0, 0, 0, 1, 1, 2], [0], [0]>} : vector<8x1x32xbf16>, vector<8x32x128xbf16>, vector<8x1x128xf32> -> vector<8x1x128xf32>
    %86 = vector.broadcast %69 : vector<8x1x1xf32> to vector<8x1x128xf32>
    %87 = arith.addf %85, %86 : vector<8x1x128xf32>
    %88 = vector.shape_cast %87 : vector<8x1x128xf32> to vector<8x128xf32>
    %c0_44 = arith.constant 0 : index
    %c0_45 = arith.constant 0 : index
    %89 = vector.load %arg4[%c0_44, %c0_45] : memref<8x128xf32, #tpu.memory_space<vmem>>, vector<8x128xf32>
    tpu.vector_store %arg4[%c0_44, %c0_45], %88 {strides = array<i32>} : memref<8x128xf32, #tpu.memory_space<vmem>>, vector<8x128xf32>,
    return
  }
  func.func @transform_0(%arg0: i32) -> (i32, i32, i32) {
    %c0_i32 = arith.constant 0 : i32
    %c0_i32_0 = arith.constant 0 : i32
    %c0_i32_1 = arith.constant 0 : i32
    return %arg0, %c0_i32, %c0_i32_0 : i32, i32, i32
  }
  func.func @transform_1(%arg0: i32) -> (i32, i32, i32) {
    %c0_i32 = arith.constant 0 : i32
    %c0_i32_0 = arith.constant 0 : i32
    %c0_i32_1 = arith.constant 0 : i32
    return %arg0, %c0_i32, %c0_i32_0 : i32, i32, i32
  }
  func.func @transform_2(%arg0: i32) -> (i32, i32) {
    %c0_i32 = arith.constant 0 : i32
    %c0_i32_0 = arith.constant 0 : i32
    %c0_i32_1 = arith.constant 0 : i32
    return %c0_i32, %c0_i32_0 : i32, i32
  }
  func.func @transform_3(%arg0: i32) -> (i32, i32) {
    %c0_i32 = arith.constant 0 : i32
    %c0_i32_0 = arith.constant 0 : i32
    return %arg0, %c0_i32 : i32, i32
  }
}

</mosaic_0001>

<llo_original>
// kernel: tpu_custom_call.1
$region0: #{tpu_custom_call.1}
  #allocation0 [shape = 'u32[]', space=smem, size = 0x4, offset = 0x4, fixed_abs, tag = 'smem constant byte address 0x4 - core index']
  #allocation1 [shape = 'u32[144,128]{1,0:T(1,128)}', space=vmem, size = 0x12000, scoped, tag = 'internal scratch']
  %s0 = inlined_call_operand.vmem [shape: f32[8,8,128], index: 0, kind: input, shape index: {}]
  %s1 = inlined_call_operand.hbm [shape: bf16[8,104,128], index: 1, kind: input, shape index: {}]
  %s2 = inlined_call_operand.vmem [shape: f32[128,8], index: 2, kind: input, shape index: {}]
  %s3 = inlined_call_operand.hbm [shape: f32[8,128], index: 3, kind: output, shape index: {}]
  %s4 = sld [smem:[#allocation0]]
  $region26: #{tpu_custom_call.1} parent=0
    _
  %s6 = ssub.s32 1, %s4
  %s7 = scalar_select 0, %s6, %s4
  $region1: #{tpu_custom_call.1} parent=0
    #allocation2 [shape = 'u8[212992]{0}', space=vmem, size = 0x34000, scoped, tag = 'input window, operand 1, single buffered']
    #allocation3 [shape = 's32[1]{0}', space=sflag, size = 0x4, scoped, tag = 'scoped memory for tpu_custom_call.1']
    #allocation4 [shape = 's32[1]{0}', space=sflag, size = 0x4, scoped, tag = 'scoped memory for tpu_custom_call.1']
    #allocation5 [shape = 'u8[4096]{0}', space=vmem, size = 0x1000, scoped, tag = 'output window, operand 0, single buffered']
    %8 = vsyncpa [#allocation3], 0
    %9 = vsyncpa [#allocation4], 0
    // Predicated region
    $region2: #{tpu_custom_call.1} parent=1 // pred_check
      _
    $region3: #{tpu_custom_call.1} parent=1 // pred_check_branch
      %11 = sbr.rel (0) target = $region5
    $region4: #{tpu_custom_call.1} parent=1 // pred_region
      _
    $region5: #{tpu_custom_call.1} parent=1 // pred_fallthru
      _
    // Predicated region
    $region6: #{tpu_custom_call.1} parent=1 // pred_check
      _
    $region7: #{tpu_custom_call.1} parent=1 // pred_check_branch
      %13 = sbr.rel (0) target = $region9
    $region8: #{tpu_custom_call.1} parent=1 // pred_region
      %s15 = ssub.s32 6656, 6656
      %16 = vsyncadd [#allocation3], %s15
      %s17 = sshll.u32 [#allocation2], 4
      %s18 = int_to_ptr.vmem [resolvable:$true] %s17
      %23 = dma.hbm_to_vmem [thread:$0]  %s1, 6656, %s18, [#allocation3], 64, 64, 4
    $region9: #{tpu_custom_call.1} parent=1 // pred_fallthru
      _
    // Predicated region
    $region10: #{tpu_custom_call.1} parent=1 // pred_check
      _
    $region11: #{tpu_custom_call.1} parent=1 // pred_check_branch
      %25 = sbr.rel (0) target = $region13
    $region12: #{tpu_custom_call.1} parent=1 // pred_region
      _
    $region13: #{tpu_custom_call.1} parent=1 // pred_fallthru
      _
    // Predicated region
    $region14: #{tpu_custom_call.1} parent=1 // pred_check
      _
    $region15: #{tpu_custom_call.1} parent=1 // pred_check_branch
      %27 = sbr.rel (0) target = $region17
    $region16: #{tpu_custom_call.1} parent=1 // pred_region
      %28 = dma.done [#allocation3], 6656
    $region17: #{tpu_custom_call.1} parent=1 // pred_fallthru
      _
    %v30 = vld [vmem:[%s0] sm:$0xff]
    %v31 = vld [vmem:[%s0 + $0x8] sm:$0xff]
    %v32 = vld [vmem:[%s0 + $0x10] sm:$0xff]
    %v33 = vld [vmem:[%s0 + $0x18] sm:$0xff]
    %v34 = vld [vmem:[%s0 + $0x20] sm:$0xff]
    %v35 = vld [vmem:[%s0 + $0x28] sm:$0xff]
    %v36 = vld [vmem:[%s0 + $0x30] sm:$0xff]
    %v37 = vld [vmem:[%s0 + $0x38] sm:$0xff]
    %v38 = vld [vmem:[%s2] sm:$0xff]
    %v39 = vld [vmem:[%s2 + $0x8] sm:$0xff]
    %v40 = vld [vmem:[%s2 + $0x10] sm:$0xff]
    %v41 = vld [vmem:[%s2 + $0x18] sm:$0xff]
    %v42 = vld [vmem:[%s2 + $0x20] sm:$0xff]
    %v43 = vld [vmem:[%s2 + $0x28] sm:$0xff]
    %v44 = vld [vmem:[%s2 + $0x30] sm:$0xff]
    %v45 = vld [vmem:[%s2 + $0x38] sm:$0xff]
    %v46 = vld [vmem:[%s2 + $0x40] sm:$0xff]
    %v47 = vld [vmem:[%s2 + $0x48] sm:$0xff]
    %v48 = vld [vmem:[%s2 + $0x50] sm:$0xff]
    %v49 = vld [vmem:[%s2 + $0x58] sm:$0xff]
    %v50 = vld [vmem:[%s2 + $0x60] sm:$0xff]
    %v51 = vld [vmem:[%s2 + $0x68] sm:$0xff]
    %v52 = vld [vmem:[%s2 + $0x70] sm:$0xff]
    %v53 = vld [vmem:[%s2 + $0x78] sm:$0xff]
    %vm54 = vcmask 64512
    %v56 = vsel %vm54, %v38, 0
    %v59 = vsel %vm54, %v39, 0
    %v62 = vsel %vm54, %v40, 0
    %v65 = vsel %vm54, %v41, 0
    %v68 = vsel %vm54, %v42, 0
    %v71 = vsel %vm54, %v43, 0
    %v74 = vsel %vm54, %v44, 0
    %v77 = vsel %vm54, %v45, 0
    %v80 = vsel %vm54, %v46, 0
    %v83 = vsel %vm54, %v47, 0
    %v86 = vsel %vm54, %v48, 0
    %v89 = vsel %vm54, %v49, 0
    %v92 = vsel %vm54, %v50, 0
    %v95 = vsel %vm54, %v51, 0
    %v98 = vsel %vm54, %v52, 0
    %v101 = vsel %vm54, %v53, 0
    %103 = vmatprep.subr.mxu0 0.0
    %104 = vmatpush1.msra.mxu0 0.0
    %105 = vmatprep.subr.mxu0 0.0
    %106 = vmatpush1.msra.mxu0 0.0
    %107 = vmatprep.subr.mxu0 0.0
    %108 = vmatpush1.msra.mxu0 0.0
    %109 = vmatprep.subr.mxu0 0.0
    %110 = vmatpush1.msra.mxu0 0.0
    %111 = vmatprep.subr.mxu0 0.0
    %112 = vmatpush1.msra.mxu0 0.0
    %113 = vmatprep.subr.mxu0 0.0
    %114 = vmatpush1.msra.mxu0 0.0
    %115 = vmatprep.subr.mxu0 0.0
    %116 = vmatpush1.msra.mxu0 0.0
    %117 = vmatprep.subr.mxu0 0.0
    %118 = vmatpush1.msra.mxu0 0.0
    %119 = vmatprep.subr.mxu0 0.0
    %120 = vmatpush1.msra.mxu0 0.0
    %121 = vmatprep.subr.mxu0 0.0
    %122 = vmatpush1.msra.mxu0 0.0
    %123 = vmatprep.subr.mxu0 0.0
    %124 = vmatpush1.msra.mxu0 0.0
    %125 = vmatprep.subr.mxu0 0.0
    %126 = vmatpush1.msra.mxu0 0.0
    %127 = vmatprep.subr.mxu0 0.0
    %128 = vmatpush1.msra.mxu0 0.0
    %129 = vmatprep.subr.mxu0 0.0
    %130 = vmatpush1.msra.mxu0 0.0
    %131 = vmatprep.subr.mxu0 0.0
    %132 = vmatpush1.msra.mxu0 0.0
    %133 = vmatprep.subr.mxu0 0.0
    %134 = vmatpush1.msra.mxu0 %v30
    %135 = vmatprep.subr.mxu0 0.0
    %136 = vmatpush2.msra.mxu0 0.0
    %137 = vmatprep.subr.mxu0 0.0
    %138 = vmatpush2.msra.mxu0 0.0
    %139 = vmatprep.subr.mxu0 0.0
    %140 = vmatpush2.msra.mxu0 0.0
    %141 = vmatprep.subr.mxu0 0.0
    %142 = vmatpush2.msra.mxu0 0.0
    %143 = vmatprep.subr.mxu0 0.0
    %144 = vmatpush2.msra.mxu0 0.0
    %145 = vmatprep.subr.mxu0 0.0
    %146 = vmatpush2.msra.mxu0 0.0
    %147 = vmatprep.subr.mxu0 0.0
    %148 = vmatpush2.msra.mxu0 0.0
    %149 = vmatprep.subr.mxu0 0.0
    %150 = vmatpush2.msra.mxu0 0.0
    %151 = vmatprep.subr.mxu0 0.0
    %152 = vmatpush2.msra.mxu0 0.0
    %153 = vmatprep.subr.mxu0 0.0
    %154 = vmatpush2.msra.mxu0 0.0
    %155 = vmatprep.subr.mxu0 0.0
    %156 = vmatpush2.msra.mxu0 0.0
    %157 = vmatprep.subr.mxu0 0.0
    %158 = vmatpush2.msra.mxu0 0.0
    %159 = vmatprep.subr.mxu0 0.0
    %160 = vmatpush2.msra.mxu0 0.0
    %161 = vmatprep.subr.mxu0 0.0
    %162 = vmatpush2.msra.mxu0 0.0
    %163 = vmatprep.subr.mxu0 0.0
    %164 = vmatpush2.msra.mxu0 0.0
    %165 = vmatprep.subr.mxu0 0.0
    %166 = vmatpush2.msra.mxu0 0.0
    %167 = vmatprep.mubr.f32.mxu0 0.0
    %168 = vmatmul.mubr.f32.gmra.mxu0 %v56
    %v169 = vpop.f32.mrf.mxu0
    %v170 = vadd.f32 0.0, %v169
    %v171 = vpop.f32.mrf.mxu0
    %172 = vmatprep.mubr.f32.mxu0 0.0
    %173 = vmatmul.mubr.f32.gmra.mxu0 %v59
    %v174 = vpop.f32.mrf.mxu0
    %v175 = vadd.f32 0.0, %v174
    %v176 = vpop.f32.mrf.mxu0
    %177 = vmatprep.mubr.f32.mxu0 0.0
    %178 = vmatmul.mubr.f32.gmra.mxu0 %v62
    %v179 = vpop.f32.mrf.mxu0
    %v180 = vadd.f32 0.0, %v179
    %v181 = vpop.f32.mrf.mxu0
    %182 = vmatprep.mubr.f32.mxu0 0.0
    %183 = vmatmul.mubr.f32.gmra.mxu0 %v65
    %v184 = vpop.f32.mrf.mxu0
    %v185 = vadd.f32 0.0, %v184
    %v186 = vpop.f32.mrf.mxu0
    %187 = vmatprep.mubr.f32.mxu0 0.0
    %188 = vmatmul.mubr.f32.gmra.mxu0 %v68
    %v189 = vpop.f32.mrf.mxu0
    %v190 = vadd.f32 0.0, %v189
    %v191 = vpop.f32.mrf.mxu0
    %192 = vmatprep.mubr.f32.mxu0 0.0
    %193 = vmatmul.mubr.f32.gmra.mxu0 %v71
    %v194 = vpop.f32.mrf.mxu0
    %v195 = vadd.f32 0.0, %v194
    %v196 = vpop.f32.mrf.mxu0
    %197 = vmatprep.mubr.f32.mxu0 0.0
    %198 = vmatmul.mubr.f32.gmra.mxu0 %v74
    %v199 = vpop.f32.mrf.mxu0
    %v200 = vadd.f32 0.0, %v199
    %v201 = vpop.f32.mrf.mxu0
    %202 = vmatprep.mubr.f32.mxu0 0.0
    %203 = vmatmul.mubr.f32.gmra.mxu0 %v77
    %v204 = vpop.f32.mrf.mxu0
    %v205 = vadd.f32 0.0, %v204
    %v206 = vpop.f32.mrf.mxu0
    %207 = vmatprep.mubr.f32.mxu0 0.0
    %208 = vmatmul.mubr.f32.gmra.mxu0 %v80
    %v209 = vpop.f32.mrf.mxu0
    %v210 = vadd.f32 0.0, %v209
    %v211 = vpop.f32.mrf.mxu0
    %212 = vmatprep.mubr.f32.mxu0 0.0
    %213 = vmatmul.mubr.f32.gmra.mxu0 %v83
    %v214 = vpop.f32.mrf.mxu0
    %v215 = vadd.f32 0.0, %v214
    %v216 = vpop.f32.mrf.mxu0
    %217 = vmatprep.mubr.f32.mxu0 0.0
    %218 = vmatmul.mubr.f32.gmra.mxu0 %v86
    %v219 = vpop.f32.mrf.mxu0
    %v220 = vadd.f32 0.0, %v219
    %v221 = vpop.f32.mrf.mxu0
    %222 = vmatprep.mubr.f32.mxu0 0.0
    %223 = vmatmul.mubr.f32.gmra.mxu0 %v89
    %v224 = vpop.f32.mrf.mxu0
    %v225 = vadd.f32 0.0, %v224
    %v226 = vpop.f32.mrf.mxu0
    %227 = vmatprep.mubr.f32.mxu0 0.0
    %228 = vmatmul.mubr.f32.gmra.mxu0 %v92
    %v229 = vpop.f32.mrf.mxu0
    %v230 = vadd.f32 0.0, %v229
    %v231 = vpop.f32.mrf.mxu0
    %232 = vmatprep.mubr.f32.mxu0 0.0
    %233 = vmatmul.mubr.f32.gmra.mxu0 %v95
    %v234 = vpop.f32.mrf.mxu0
    %v235 = vadd.f32 0.0, %v234
    %v236 = vpop.f32.mrf.mxu0
    %237 = vmatprep.mubr.f32.mxu0 0.0
    %238 = vmatmul.mubr.f32.gmra.mxu0 %v98
    %v239 = vpop.f32.mrf.mxu0
    %v240 = vadd.f32 0.0, %v239
    %v241 = vpop.f32.mrf.mxu0
    %242 = vmatprep.mubr.f32.mxu0 0.0
    %243 = vmatmul.mubr.f32.gmra.mxu0 %v101
    %v244 = vpop.f32.mrf.mxu0
    %v245 = vadd.f32 0.0, %v244
    %v246 = vpop.f32.mrf.mxu0
    %247 = vdwg.mxu0
    %248 = vmatprep.subr.mxu0 0.0
    %249 = vmatpush1.msra.mxu0 0.0
    %250 = vmatprep.subr.mxu0 0.0
    %251 = vmatpush1.msra.mxu0 0.0
    %252 = vmatprep.subr.mxu0 0.0
    %253 = vmatpush1.msra.mxu0 0.0
    %254 = vmatprep.subr.mxu0 0.0
    %255 = vmatpush1.msra.mxu0 0.0
    %256 = vmatprep.subr.mxu0 0.0
    %257 = vmatpush1.msra.mxu0 0.0
    %258 = vmatprep.subr.mxu0 0.0
    %259 = vmatpush1.msra.mxu0 0.0
    %260 = vmatprep.subr.mxu0 0.0
    %261 = vmatpush1.msra.mxu0 0.0
    %262 = vmatprep.subr.mxu0 0.0
    %263 = vmatpush1.msra.mxu0 0.0
    %264 = vmatprep.subr.mxu0 0.0
    %265 = vmatpush1.msra.mxu0 0.0
    %266 = vmatprep.subr.mxu0 0.0
    %267 = vmatpush1.msra.mxu0 0.0
    %268 = vmatprep.subr.mxu0 0.0
    %269 = vmatpush1.msra.mxu0 0.0
    %270 = vmatprep.subr.mxu0 0.0
    %271 = vmatpush1.msra.mxu0 0.0
    %272 = vmatprep.subr.mxu0 0.0
    %273 = vmatpush1.msra.mxu0 0.0
    %274 = vmatprep.subr.mxu0 0.0
    %275 = vmatpush1.msra.mxu0 0.0
    %276 = vmatprep.subr.mxu0 0.0
    %277 = vmatpush1.msra.mxu0 0.0
    %278 = vmatprep.subr.mxu0 0.0
    %279 = vmatpush1.msra.mxu0 %v31
    %280 = vmatprep.subr.mxu0 0.0
    %281 = vmatpush2.msra.mxu0 0.0
    %282 = vmatprep.subr.mxu0 0.0
    %283 = vmatpush2.msra.mxu0 0.0
    %284 = vmatprep.subr.mxu0 0.0
    %285 = vmatpush2.msra.mxu0 0.0
    %286 = vmatprep.subr.mxu0 0.0
    %287 = vmatpush2.msra.mxu0 0.0
    %288 = vmatprep.subr.mxu0 0.0
    %289 = vmatpush2.msra.mxu0 0.0
    %290 = vmatprep.subr.mxu0 0.0
    %291 = vmatpush2.msra.mxu0 0.0
    %292 = vmatprep.subr.mxu0 0.0
    %293 = vmatpush2.msra.mxu0 0.0
    %294 = vmatprep.subr.mxu0 0.0
    %295 = vmatpush2.msra.mxu0 0.0
    %296 = vmatprep.subr.mxu0 0.0
    %297 = vmatpush2.msra.mxu0 0.0
    %298 = vmatprep.subr.mxu0 0.0
    %299 = vmatpush2.msra.mxu0 0.0
    %300 = vmatprep.subr.mxu0 0.0
    %301 = vmatpush2.msra.mxu0 0.0
    %302 = vmatprep.subr.mxu0 0.0
    %303 = vmatpush2.msra.mxu0 0.0
    %304 = vmatprep.subr.mxu0 0.0
    %305 = vmatpush2.msra.mxu0 0.0
    %306 = vmatprep.subr.mxu0 0.0
    %307 = vmatpush2.msra.mxu0 0.0
    %308 = vmatprep.subr.mxu0 0.0
    %309 = vmatpush2.msra.mxu0 0.0
    %310 = vmatprep.subr.mxu0 0.0
    %311 = vmatpush2.msra.mxu0 0.0
    %312 = vmatprep.mubr.f32.mxu0 0.0
    %313 = vmatmul.mubr.f32.gmra.mxu0 %v56
    %v314 = vpop.f32.mrf.mxu0
    %v315 = vadd.f32 0.0, %v314
    %v316 = vpop.f32.mrf.mxu0
    %317 = vmatprep.mubr.f32.mxu0 0.0
    %318 = vmatmul.mubr.f32.gmra.mxu0 %v59
    %v319 = vpop.f32.mrf.mxu0
    %v320 = vadd.f32 0.0, %v319
    %v321 = vpop.f32.mrf.mxu0
    %322 = vmatprep.mubr.f32.mxu0 0.0
    %323 = vmatmul.mubr.f32.gmra.mxu0 %v62
    %v324 = vpop.f32.mrf.mxu0
    %v325 = vadd.f32 0.0, %v324
    %v326 = vpop.f32.mrf.mxu0
    %327 = vmatprep.mubr.f32.mxu0 0.0
    %328 = vmatmul.mubr.f32.gmra.mxu0 %v65
    %v329 = vpop.f32.mrf.mxu0
    %v330 = vadd.f32 0.0, %v329
    %v331 = vpop.f32.mrf.mxu0
    %332 = vmatprep.mubr.f32.mxu0 0.0
    %333 = vmatmul.mubr.f32.gmra.mxu0 %v68
    %v334 = vpop.f32.mrf.mxu0
    %v335 = vadd.f32 0.0, %v334
    %v336 = vpop.f32.mrf.mxu0
    %337 = vmatprep.mubr.f32.mxu0 0.0
    %338 = vmatmul.mubr.f32.gmra.mxu0 %v71
    %v339 = vpop.f32.mrf.mxu0
    %v340 = vadd.f32 0.0, %v339
    %v341 = vpop.f32.mrf.mxu0
    %342 = vmatprep.mubr.f32.mxu0 0.0
    %343 = vmatmul.mubr.f32.gmra.mxu0 %v74
    %v344 = vpop.f32.mrf.mxu0
    %v345 = vadd.f32 0.0, %v344
    %v346 = vpop.f32.mrf.mxu0
    %347 = vmatprep.mubr.f32.mxu0 0.0
    %348 = vmatmul.mubr.f32.gmra.mxu0 %v77
    %v349 = vpop.f32.mrf.mxu0
    %v350 = vadd.f32 0.0, %v349
    %v351 = vpop.f32.mrf.mxu0
    %352 = vmatprep.mubr.f32.mxu0 0.0
    %353 = vmatmul.mubr.f32.gmra.mxu0 %v80
    %v354 = vpop.f32.mrf.mxu0
    %v355 = vadd.f32 0.0, %v354
    %v356 = vpop.f32.mrf.mxu0
    %357 = vmatprep.mubr.f32.mxu0 0.0
    %358 = vmatmul.mubr.f32.gmra.mxu0 %v83
    %v359 = vpop.f32.mrf.mxu0
    %v360 = vadd.f32 0.0, %v359
    %v361 = vpop.f32.mrf.mxu0
    %362 = vmatprep.mubr.f32.mxu0 0.0
    %363 = vmatmul.mubr.f32.gmra.mxu0 %v86
    %v364 = vpop.f32.mrf.mxu0
    %v365 = vadd.f32 0.0, %v364
    %v366 = vpop.f32.mrf.mxu0
    %367 = vmatprep.mubr.f32.mxu0 0.0
    %368 = vmatmul.mubr.f32.gmra.mxu0 %v89
    %v369 = vpop.f32.mrf.mxu0
    %v370 = vadd.f32 0.0, %v369
    %v371 = vpop.f32.mrf.mxu0
    %372 = vmatprep.mubr.f32.mxu0 0.0
    %373 = vmatmul.mubr.f32.gmra.mxu0 %v92
    %v374 = vpop.f32.mrf.mxu0
    %v375 = vadd.f32 0.0, %v374
    %v376 = vpop.f32.mrf.mxu0
    %377 = vmatprep.mubr.f32.mxu0 0.0
    %378 = vmatmul.mubr.f32.gmra.mxu0 %v95
    %v379 = vpop.f32.mrf.mxu0
    %v380 = vadd.f32 0.0, %v379
    %v381 = vpop.f32.mrf.mxu0
    %382 = vmatprep.mubr.f32.mxu0 0.0
    %383 = vmatmul.mubr.f32.gmra.mxu0 %v98
    %v384 = vpop.f32.mrf.mxu0
    %v385 = vadd.f32 0.0, %v384
    %v386 = vpop.f32.mrf.mxu0
    %387 = vmatprep.mubr.f32.mxu0 0.0
    %388 = vmatmul.mubr.f32.gmra.mxu0 %v101
    %v389 = vpop.f32.mrf.mxu0
    %v390 = vadd.f32 0.0, %v389
    %v391 = vpop.f32.mrf.mxu0
    %392 = vdwg.mxu0
    %393 = vmatprep.subr.mxu0 0.0
    %394 = vmatpush1.msra.mxu0 0.0
    %395 = vmatprep.subr.mxu0 0.0
    %396 = vmatpush1.msra.mxu0 0.0
    %397 = vmatprep.subr.mxu0 0.0
    %398 = vmatpush1.msra.mxu0 0.0
    %399 = vmatprep.subr.mxu0 0.0
    %400 = vmatpush1.msra.mxu0 0.0
    %401 = vmatprep.subr.mxu0 0.0
    %402 = vmatpush1.msra.mxu0 0.0
    %403 = vmatprep.subr.mxu0 0.0
    %404 = vmatpush1.msra.mxu0 0.0
    %405 = vmatprep.subr.mxu0 0.0
    %406 = vmatpush1.msra.mxu0 0.0
    %407 = vmatprep.subr.mxu0 0.0
    %408 = vmatpush1.msra.mxu0 0.0
    %409 = vmatprep.subr.mxu0 0.0
    %410 = vmatpush1.msra.mxu0 0.0
    %411 = vmatprep.subr.mxu0 0.0
    %412 = vmatpush1.msra.mxu0 0.0
    %413 = vmatprep.subr.mxu0 0.0
    %414 = vmatpush1.msra.mxu0 0.0
    %415 = vmatprep.subr.mxu0 0.0
    %416 = vmatpush1.msra.mxu0 0.0
    %417 = vmatprep.subr.mxu0 0.0
    %418 = vmatpush1.msra.mxu0 0.0
    %419 = vmatprep.subr.mxu0 0.0
    %420 = vmatpush1.msra.mxu0 0.0
    %421 = vmatprep.subr.mxu0 0.0
    %422 = vmatpush1.msra.mxu0 0.0
    %423 = vmatprep.subr.mxu0 0.0
    %424 = vmatpush1.msra.mxu0 %v32
    %425 = vmatprep.subr.mxu0 0.0
    %426 = vmatpush2.msra.mxu0 0.0
    %427 = vmatprep.subr.mxu0 0.0
    %428 = vmatpush2.msra.mxu0 0.0
    %429 = vmatprep.subr.mxu0 0.0
    %430 = vmatpush2.msra.mxu0 0.0
    %431 = vmatprep.subr.mxu0 0.0
    %432 = vmatpush2.msra.mxu0 0.0
    %433 = vmatprep.subr.mxu0 0.0
    %434 = vmatpush2.msra.mxu0 0.0
    %435 = vmatprep.subr.mxu0 0.0
    %436 = vmatpush2.msra.mxu0 0.0
    %437 = vmatprep.subr.mxu0 0.0
    %438 = vmatpush2.msra.mxu0 0.0
    %439 = vmatprep.subr.mxu0 0.0
    %440 = vmatpush2.msra.mxu0 0.0
    %441 = vmatprep.subr.mxu0 0.0
    %442 = vmatpush2.msra.mxu0 0.0
    %443 = vmatprep.subr.mxu0 0.0
    %444 = vmatpush2.msra.mxu0 0.0
    %445 = vmatprep.subr.mxu0 0.0
    %446 = vmatpush2.msra.mxu0 0.0
    %447 = vmatprep.subr.mxu0 0.0
    %448 = vmatpush2.msra.mxu0 0.0
    %449 = vmatprep.subr.mxu0 0.0
    %450 = vmatpush2.msra.mxu0 0.0
    %451 = vmatprep.subr.mxu0 0.0
    %452 = vmatpush2.msra.mxu0 0.0
    %453 = vmatprep.subr.mxu0 0.0
    %454 = vmatpush2.msra.mxu0 0.0
    %455 = vmatprep.subr.mxu0 0.0
    %456 = vmatpush2.msra.mxu0 0.0
    %457 = vmatprep.mubr.f32.mxu0 0.0
    %458 = vmatmul.mubr.f32.gmra.mxu0 %v56
    %v459 = vpop.f32.mrf.mxu0
    %v460 = vadd.f32 0.0, %v459
    %v461 = vpop.f32.mrf.mxu0
    %462 = vmatprep.mubr.f32.mxu0 0.0
    %463 = vmatmul.mubr.f32.gmra.mxu0 %v59
    %v464 = vpop.f32.mrf.mxu0
    %v465 = vadd.f32 0.0, %v464
    %v466 = vpop.f32.mrf.mxu0
    %467 = vmatprep.mubr.f32.mxu0 0.0
    %468 = vmatmul.mubr.f32.gmra.mxu0 %v62
    %v469 = vpop.f32.mrf.mxu0
    %v470 = vadd.f32 0.0, %v469
    %v471 = vpop.f32.mrf.mxu0
    %472 = vmatprep.mubr.f32.mxu0 0.0
    %473 = vmatmul.mubr.f32.gmra.mxu0 %v65
    %v474 = vpop.f32.mrf.mxu0
    %v475 = vadd.f32 0.0, %v474
    %v476 = vpop.f32.mrf.mxu0
    %477 = vmatprep.mubr.f32.mxu0 0.0
    %478 = vmatmul.mubr.f32.gmra.mxu0 %v68
    %v479 = vpop.f32.mrf.mxu0
    %v480 = vadd.f32 0.0, %v479
    %v481 = vpop.f32.mrf.mxu0
    %482 = vmatprep.mubr.f32.mxu0 0.0
    %483 = vmatmul.mubr.f32.gmra.mxu0 %v71
    %v484 = vpop.f32.mrf.mxu0
    %v485 = vadd.f32 0.0, %v484
    %v486 = vpop.f32.mrf.mxu0
    %487 = vmatprep.mubr.f32.mxu0 0.0
    %488 = vmatmul.mubr.f32.gmra.mxu0 %v74
    %v489 = vpop.f32.mrf.mxu0
    %v490 = vadd.f32 0.0, %v489
    %v491 = vpop.f32.mrf.mxu0
    %492 = vmatprep.mubr.f32.mxu0 0.0
    %493 = vmatmul.mubr.f32.gmra.mxu0 %v77
    %v494 = vpop.f32.mrf.mxu0
    %v495 = vadd.f32 0.0, %v494
    %v496 = vpop.f32.mrf.mxu0
    %497 = vmatprep.mubr.f32.mxu0 0.0
    %498 = vmatmul.mubr.f32.gmra.mxu0 %v80
    %v499 = vpop.f32.mrf.mxu0
    %v500 = vadd.f32 0.0, %v499
    %v501 = vpop.f32.mrf.mxu0
    %502 = vmatprep.mubr.f32.mxu0 0.0
    %503 = vmatmul.mubr.f32.gmra.mxu0 %v83
    %v504 = vpop.f32.mrf.mxu0
    %v505 = vadd.f32 0.0, %v504
    %v506 = vpop.f32.mrf.mxu0
    %507 = vmatprep.mubr.f32.mxu0 0.0
    %508 = vmatmul.mubr.f32.gmra.mxu0 %v86
    %v509 = vpop.f32.mrf.mxu0
    %v510 = vadd.f32 0.0, %v509
    %v511 = vpop.f32.mrf.mxu0
    %512 = vmatprep.mubr.f32.mxu0 0.0
    %513 = vmatmul.mubr.f32.gmra.mxu0 %v89
    %v514 = vpop.f32.mrf.mxu0
    %v515 = vadd.f32 0.0, %v514
    %v516 = vpop.f32.mrf.mxu0
    %517 = vmatprep.mubr.f32.mxu0 0.0
    %518 = vmatmul.mubr.f32.gmra.mxu0 %v92
    %v519 = vpop.f32.mrf.mxu0
    %v520 = vadd.f32 0.0, %v519
    %v521 = vpop.f32.mrf.mxu0
    %522 = vmatprep.mubr.f32.mxu0 0.0
    %523 = vmatmul.mubr.f32.gmra.mxu0 %v95
    %v524 = vpop.f32.mrf.mxu0
    %v525 = vadd.f32 0.0, %v524
    %v526 = vpop.f32.mrf.mxu0
    %527 = vmatprep.mubr.f32.mxu0 0.0
    %528 = vmatmul.mubr.f32.gmra.mxu0 %v98
    %v529 = vpop.f32.mrf.mxu0
    %v530 = vadd.f32 0.0, %v529
    %v531 = vpop.f32.mrf.mxu0
    %532 = vmatprep.mubr.f32.mxu0 0.0
    %533 = vmatmul.mubr.f32.gmra.mxu0 %v101
    %v534 = vpop.f32.mrf.mxu0
    %v535 = vadd.f32 0.0, %v534
    %v536 = vpop.f32.mrf.mxu0
    %537 = vdwg.mxu0
    %538 = vmatprep.subr.mxu0 0.0
    %539 = vmatpush1.msra.mxu0 0.0
    %540 = vmatprep.subr.mxu0 0.0
    %541 = vmatpush1.msra.mxu0 0.0
    %542 = vmatprep.subr.mxu0 0.0
    %543 = vmatpush1.msra.mxu0 0.0
    %544 = vmatprep.subr.mxu0 0.0
    %545 = vmatpush1.msra.mxu0 0.0
    %546 = vmatprep.subr.mxu0 0.0
    %547 = vmatpush1.msra.mxu0 0.0
    %548 = vmatprep.subr.mxu0 0.0
    %549 = vmatpush1.msra.mxu0 0.0
    %550 = vmatprep.subr.mxu0 0.0
    %551 = vmatpush1.msra.mxu0 0.0
    %552 = vmatprep.subr.mxu0 0.0
    %553 = vmatpush1.msra.mxu0 0.0
    %554 = vmatprep.subr.mxu0 0.0
    %555 = vmatpush1.msra.mxu0 0.0
    %556 = vmatprep.subr.mxu0 0.0
    %557 = vmatpush1.msra.mxu0 0.0
    %558 = vmatprep.subr.mxu0 0.0
    %559 = vmatpush1.msra.mxu0 0.0
    %560 = vmatprep.subr.mxu0 0.0
    %561 = vmatpush1.msra.mxu0 0.0
    %562 = vmatprep.subr.mxu0 0.0
    %563 = vmatpush1.msra.mxu0 0.0
    %564 = vmatprep.subr.mxu0 0.0
    %565 = vmatpush1.msra.mxu0 0.0
    %566 = vmatprep.subr.mxu0 0.0
    %567 = vmatpush1.msra.mxu0 0.0
    %568 = vmatprep.subr.mxu0 0.0
    %569 = vmatpush1.msra.mxu0 %v33
    %570 = vmatprep.subr.mxu0 0.0
    %571 = vmatpush2.msra.mxu0 0.0
    %572 = vmatprep.subr.mxu0 0.0
    %573 = vmatpush2.msra.mxu0 0.0
    %574 = vmatprep.subr.mxu0 0.0
    %575 = vmatpush2.msra.mxu0 0.0
    %576 = vmatprep.subr.mxu0 0.0
    %577 = vmatpush2.msra.mxu0 0.0
    %578 = vmatprep.subr.mxu0 0.0
    %579 = vmatpush2.msra.mxu0 0.0
    %580 = vmatprep.subr.mxu0 0.0
    %581 = vmatpush2.msra.mxu0 0.0
    %582 = vmatprep.subr.mxu0 0.0
    %583 = vmatpush2.msra.mxu0 0.0
    %584 = vmatprep.subr.mxu0 0.0
    %585 = vmatpush2.msra.mxu0 0.0
    %586 = vmatprep.subr.mxu0 0.0
    %587 = vmatpush2.msra.mxu0 0.0
    %588 = vmatprep.subr.mxu0 0.0
    %589 = vmatpush2.msra.mxu0 0.0
    %590 = vmatprep.subr.mxu0 0.0
    %591 = vmatpush2.msra.mxu0 0.0
    %592 = vmatprep.subr.mxu0 0.0
    %593 = vmatpush2.msra.mxu0 0.0
    %594 = vmatprep.subr.mxu0 0.0
    %595 = vmatpush2.msra.mxu0 0.0
    %596 = vmatprep.subr.mxu0 0.0
    %597 = vmatpush2.msra.mxu0 0.0
    %598 = vmatprep.subr.mxu0 0.0
    %599 = vmatpush2.msra.mxu0 0.0
    %600 = vmatprep.subr.mxu0 0.0
    %601 = vmatpush2.msra.mxu0 0.0
    %602 = vmatprep.mubr.f32.mxu0 0.0
    %603 = vmatmul.mubr.f32.gmra.mxu0 %v56
    %v604 = vpop.f32.mrf.mxu0
    %v605 = vadd.f32 0.0, %v604
    %v606 = vpop.f32.mrf.mxu0
    %607 = vmatprep.mubr.f32.mxu0 0.0
    %608 = vmatmul.mubr.f32.gmra.mxu0 %v59
    %v609 = vpop.f32.mrf.mxu0
    %v610 = vadd.f32 0.0, %v609
    %v611 = vpop.f32.mrf.mxu0
    %612 = vmatprep.mubr.f32.mxu0 0.0
    %613 = vmatmul.mubr.f32.gmra.mxu0 %v62
    %v614 = vpop.f32.mrf.mxu0
    %v615 = vadd.f32 0.0, %v614
    %v616 = vpop.f32.mrf.mxu0
    %617 = vmatprep.mubr.f32.mxu0 0.0
    %618 = vmatmul.mubr.f32.gmra.mxu0 %v65
    %v619 = vpop.f32.mrf.mxu0
    %v620 = vadd.f32 0.0, %v619
    %v621 = vpop.f32.mrf.mxu0
    %622 = vmatprep.mubr.f32.mxu0 0.0
    %623 = vmatmul.mubr.f32.gmra.mxu0 %v68
    %v624 = vpop.f32.mrf.mxu0
    %v625 = vadd.f32 0.0, %v624
    %v626 = vpop.f32.mrf.mxu0
    %627 = vmatprep.mubr.f32.mxu0 0.0
    %628 = vmatmul.mubr.f32.gmra.mxu0 %v71
    %v629 = vpop.f32.mrf.mxu0
    %v630 = vadd.f32 0.0, %v629
    %v631 = vpop.f32.mrf.mxu0
    %632 = vmatprep.mubr.f32.mxu0 0.0
    %633 = vmatmul.mubr.f32.gmra.mxu0 %v74
    %v634 = vpop.f32.mrf.mxu0
    %v635 = vadd.f32 0.0, %v634
    %v636 = vpop.f32.mrf.mxu0
    %637 = vmatprep.mubr.f32.mxu0 0.0
    %638 = vmatmul.mubr.f32.gmra.mxu0 %v77
    %v639 = vpop.f32.mrf.mxu0
    %v640 = vadd.f32 0.0, %v639
    %v641 = vpop.f32.mrf.mxu0
    %642 = vmatprep.mubr.f32.mxu0 0.0
    %643 = vmatmul.mubr.f32.gmra.mxu0 %v80
    %v644 = vpop.f32.mrf.mxu0
    %v645 = vadd.f32 0.0, %v644
    %v646 = vpop.f32.mrf.mxu0
    %647 = vmatprep.mubr.f32.mxu0 0.0
    %648 = vmatmul.mubr.f32.gmra.mxu0 %v83
    %v649 = vpop.f32.mrf.mxu0
    %v650 = vadd.f32 0.0, %v649
    %v651 = vpop.f32.mrf.mxu0
    %652 = vmatprep.mubr.f32.mxu0 0.0
    %653 = vmatmul.mubr.f32.gmra.mxu0 %v86
    %v654 = vpop.f32.mrf.mxu0
    %v655 = vadd.f32 0.0, %v654
    %v656 = vpop.f32.mrf.mxu0
    %657 = vmatprep.mubr.f32.mxu0 0.0
    %658 = vmatmul.mubr.f32.gmra.mxu0 %v89
    %v659 = vpop.f32.mrf.mxu0
    %v660 = vadd.f32 0.0, %v659
    %v661 = vpop.f32.mrf.mxu0
    %662 = vmatprep.mubr.f32.mxu0 0.0
    %663 = vmatmul.mubr.f32.gmra.mxu0 %v92
    %v664 = vpop.f32.mrf.mxu0
    %v665 = vadd.f32 0.0, %v664
    %v666 = vpop.f32.mrf.mxu0
    %667 = vmatprep.mubr.f32.mxu0 0.0
    %668 = vmatmul.mubr.f32.gmra.mxu0 %v95
    %v669 = vpop.f32.mrf.mxu0
    %v670 = vadd.f32 0.0, %v669
    %v671 = vpop.f32.mrf.mxu0
    %672 = vmatprep.mubr.f32.mxu0 0.0
    %673 = vmatmul.mubr.f32.gmra.mxu0 %v98
    %v674 = vpop.f32.mrf.mxu0
    %v675 = vadd.f32 0.0, %v674
    %v676 = vpop.f32.mrf.mxu0
    %677 = vmatprep.mubr.f32.mxu0 0.0
    %678 = vmatmul.mubr.f32.gmra.mxu0 %v101
    %v679 = vpop.f32.mrf.mxu0
    %v680 = vadd.f32 0.0, %v679
    %v681 = vpop.f32.mrf.mxu0
    %682 = vdwg.mxu0
    %683 = vmatprep.subr.mxu0 0.0
    %684 = vmatpush1.msra.mxu0 0.0
    %685 = vmatprep.subr.mxu0 0.0
    %686 = vmatpush1.msra.mxu0 0.0
    %687 = vmatprep.subr.mxu0 0.0
    %688 = vmatpush1.msra.mxu0 0.0
    %689 = vmatprep.subr.mxu0 0.0
    %690 = vmatpush1.msra.mxu0 0.0
    %691 = vmatprep.subr.mxu0 0.0
    %692 = vmatpush1.msra.mxu0 0.0
    %693 = vmatprep.subr.mxu0 0.0
    %694 = vmatpush1.msra.mxu0 0.0
    %695 = vmatprep.subr.mxu0 0.0
    %696 = vmatpush1.msra.mxu0 0.0
    %697 = vmatprep.subr.mxu0 0.0
    %698 = vmatpush1.msra.mxu0 0.0
    %699 = vmatprep.subr.mxu0 0.0
    %700 = vmatpush1.msra.mxu0 0.0
    %701 = vmatprep.subr.mxu0 0.0
    %702 = vmatpush1.msra.mxu0 0.0
    %703 = vmatprep.subr.mxu0 0.0
    %704 = vmatpush1.msra.mxu0 0.0
    %705 = vmatprep.subr.mxu0 0.0
    %706 = vmatpush1.msra.mxu0 0.0
    %707 = vmatprep.subr.mxu0 0.0
    %708 = vmatpush1.msra.mxu0 0.0
    %709 = vmatprep.subr.mxu0 0.0
    %710 = vmatpush1.msra.mxu0 0.0
    %711 = vmatprep.subr.mxu0 0.0
    %712 = vmatpush1.msra.mxu0 0.0
    %713 = vmatprep.subr.mxu0 0.0
    %714 = vmatpush1.msra.mxu0 %v34
    %715 = vmatprep.subr.mxu0 0.0
    %716 = vmatpush2.msra.mxu0 0.0
    %717 = vmatprep.subr.mxu0 0.0
    %718 = vmatpush2.msra.mxu0 0.0
    %719 = vmatprep.subr.mxu0 0.0
    %720 = vmatpush2.msra.mxu0 0.0
    %721 = vmatprep.subr.mxu0 0.0
    %722 = vmatpush2.msra.mxu0 0.0
    %723 = vmatprep.subr.mxu0 0.0
    %724 = vmatpush2.msra.mxu0 0.0
    %725 = vmatprep.subr.mxu0 0.0
    %726 = vmatpush2.msra.mxu0 0.0
    %727 = vmatprep.subr.mxu0 0.0
    %728 = vmatpush2.msra.mxu0 0.0
    %729 = vmatprep.subr.mxu0 0.0
    %730 = vmatpush2.msra.mxu0 0.0
    %731 = vmatprep.subr.mxu0 0.0
    %732 = vmatpush2.msra.mxu0 0.0
    %733 = vmatprep.subr.mxu0 0.0
    %734 = vmatpush2.msra.mxu0 0.0
    %735 = vmatprep.subr.mxu0 0.0
    %736 = vmatpush2.msra.mxu0 0.0
    %737 = vmatprep.subr.mxu0 0.0
    %738 = vmatpush2.msra.mxu0 0.0
    %739 = vmatprep.subr.mxu0 0.0
    %740 = vmatpush2.msra.mxu0 0.0
    %741 = vmatprep.subr.mxu0 0.0
    %742 = vmatpush2.msra.mxu0 0.0
    %743 = vmatprep.subr.mxu0 0.0
    %744 = vmatpush2.msra.mxu0 0.0
    %745 = vmatprep.subr.mxu0 0.0
    %746 = vmatpush2.msra.mxu0 0.0
    %747 = vmatprep.mubr.f32.mxu0 0.0
    %748 = vmatmul.mubr.f32.gmra.mxu0 %v56
    %v749 = vpop.f32.mrf.mxu0
    %v750 = vadd.f32 0.0, %v749
    %v751 = vpop.f32.mrf.mxu0
    %752 = vmatprep.mubr.f32.mxu0 0.0
    %753 = vmatmul.mubr.f32.gmra.mxu0 %v59
    %v754 = vpop.f32.mrf.mxu0
    %v755 = vadd.f32 0.0, %v754
    %v756 = vpop.f32.mrf.mxu0
    %757 = vmatprep.mubr.f32.mxu0 0.0
    %758 = vmatmul.mubr.f32.gmra.mxu0 %v62
    %v759 = vpop.f32.mrf.mxu0
    %v760 = vadd.f32 0.0, %v759
    %v761 = vpop.f32.mrf.mxu0
    %762 = vmatprep.mubr.f32.mxu0 0.0
    %763 = vmatmul.mubr.f32.gmra.mxu0 %v65
    %v764 = vpop.f32.mrf.mxu0
    %v765 = vadd.f32 0.0, %v764
    %v766 = vpop.f32.mrf.mxu0
    %767 = vmatprep.mubr.f32.mxu0 0.0
    %768 = vmatmul.mubr.f32.gmra.mxu0 %v68
    %v769 = vpop.f32.mrf.mxu0
    %v770 = vadd.f32 0.0, %v769
    %v771 = vpop.f32.mrf.mxu0
    %772 = vmatprep.mubr.f32.mxu0 0.0
    %773 = vmatmul.mubr.f32.gmra.mxu0 %v71
    %v774 = vpop.f32.mrf.mxu0
    %v775 = vadd.f32 0.0, %v774
    %v776 = vpop.f32.mrf.mxu0
    %777 = vmatprep.mubr.f32.mxu0 0.0
    %778 = vmatmul.mubr.f32.gmra.mxu0 %v74
    %v779 = vpop.f32.mrf.mxu0
    %v780 = vadd.f32 0.0, %v779
    %v781 = vpop.f32.mrf.mxu0
    %782 = vmatprep.mubr.f32.mxu0 0.0
    %783 = vmatmul.mubr.f32.gmra.mxu0 %v77
    %v784 = vpop.f32.mrf.mxu0
    %v785 = vadd.f32 0.0, %v784
    %v786 = vpop.f32.mrf.mxu0
    %787 = vmatprep.mubr.f32.mxu0 0.0
    %788 = vmatmul.mubr.f32.gmra.mxu0 %v80
    %v789 = vpop.f32.mrf.mxu0
    %v790 = vadd.f32 0.0, %v789
    %v791 = vpop.f32.mrf.mxu0
    %792 = vmatprep.mubr.f32.mxu0 0.0
    %793 = vmatmul.mubr.f32.gmra.mxu0 %v83
    %v794 = vpop.f32.mrf.mxu0
    %v795 = vadd.f32 0.0, %v794
    %v796 = vpop.f32.mrf.mxu0
    %797 = vmatprep.mubr.f32.mxu0 0.0
    %798 = vmatmul.mubr.f32.gmra.mxu0 %v86
    %v799 = vpop.f32.mrf.mxu0
    %v800 = vadd.f32 0.0, %v799
    %v801 = vpop.f32.mrf.mxu0
    %802 = vmatprep.mubr.f32.mxu0 0.0
    %803 = vmatmul.mubr.f32.gmra.mxu0 %v89
    %v804 = vpop.f32.mrf.mxu0
    %v805 = vadd.f32 0.0, %v804
    %v806 = vpop.f32.mrf.mxu0
    %807 = vmatprep.mubr.f32.mxu0 0.0
    %808 = vmatmul.mubr.f32.gmra.mxu0 %v92
    %v809 = vpop.f32.mrf.mxu0
    %v810 = vadd.f32 0.0, %v809
    %v811 = vpop.f32.mrf.mxu0
    %812 = vmatprep.mubr.f32.mxu0 0.0
    %813 = vmatmul.mubr.f32.gmra.mxu0 %v95
    %v814 = vpop.f32.mrf.mxu0
    %v815 = vadd.f32 0.0, %v814
    %v816 = vpop.f32.mrf.mxu0
    %817 = vmatprep.mubr.f32.mxu0 0.0
    %818 = vmatmul.mubr.f32.gmra.mxu0 %v98
    %v819 = vpop.f32.mrf.mxu0
    %v820 = vadd.f32 0.0, %v819
    %v821 = vpop.f32.mrf.mxu0
    %822 = vmatprep.mubr.f32.mxu0 0.0
    %823 = vmatmul.mubr.f32.gmra.mxu0 %v101
    %v824 = vpop.f32.mrf.mxu0
    %v825 = vadd.f32 0.0, %v824
    %v826 = vpop.f32.mrf.mxu0
    %827 = vdwg.mxu0
    %828 = vmatprep.subr.mxu0 0.0
    %829 = vmatpush1.msra.mxu0 0.0
    %830 = vmatprep.subr.mxu0 0.0
    %831 = vmatpush1.msra.mxu0 0.0
    %832 = vmatprep.subr.mxu0 0.0
    %833 = vmatpush1.msra.mxu0 0.0
    %834 = vmatprep.subr.mxu0 0.0
    %835 = vmatpush1.msra.mxu0 0.0
    %836 = vmatprep.subr.mxu0 0.0
    %837 = vmatpush1.msra.mxu0 0.0
    %838 = vmatprep.subr.mxu0 0.0
    %839 = vmatpush1.msra.mxu0 0.0
    %840 = vmatprep.subr.mxu0 0.0
    %841 = vmatpush1.msra.mxu0 0.0
    %842 = vmatprep.subr.mxu0 0.0
    %843 = vmatpush1.msra.mxu0 0.0
    %844 = vmatprep.subr.mxu0 0.0
    %845 = vmatpush1.msra.mxu0 0.0
    %846 = vmatprep.subr.mxu0 0.0
    %847 = vmatpush1.msra.mxu0 0.0
    %848 = vmatprep.subr.mxu0 0.0
    %849 = vmatpush1.msra.mxu0 0.0
    %850 = vmatprep.subr.mxu0 0.0
    %851 = vmatpush1.msra.mxu0 0.0
    %852 = vmatprep.subr.mxu0 0.0
    %853 = vmatpush1.msra.mxu0 0.0
    %854 = vmatprep.subr.mxu0 0.0
    %855 = vmatpush1.msra.mxu0 0.0
    %856 = vmatprep.subr.mxu0 0.0
    %857 = vmatpush1.msra.mxu0 0.0
    %858 = vmatprep.subr.mxu0 0.0
    %859 = vmatpush1.msra.mxu0 %v35
    %860 = vmatprep.subr.mxu0 0.0
    %861 = vmatpush2.msra.mxu0 0.0
    %862 = vmatprep.subr.mxu0 0.0
    %863 = vmatpush2.msra.mxu0 0.0
    %864 = vmatprep.subr.mxu0 0.0
    %865 = vmatpush2.msra.mxu0 0.0
    %866 = vmatprep.subr.mxu0 0.0
    %867 = vmatpush2.msra.mxu0 0.0
    %868 = vmatprep.subr.mxu0 0.0
    %869 = vmatpush2.msra.mxu0 0.0
    %870 = vmatprep.subr.mxu0 0.0
    %871 = vmatpush2.msra.mxu0 0.0
    %872 = vmatprep.subr.mxu0 0.0
    %873 = vmatpush2.msra.mxu0 0.0
    %874 = vmatprep.subr.mxu0 0.0
    %875 = vmatpush2.msra.mxu0 0.0
    %876 = vmatprep.subr.mxu0 0.0
    %877 = vmatpush2.msra.mxu0 0.0
    %878 = vmatprep.subr.mxu0 0.0
    %879 = vmatpush2.msra.mxu0 0.0
    %880 = vmatprep.subr.mxu0 0.0
    %881 = vmatpush2.msra.mxu0 0.0
    %882 = vmatprep.subr.mxu0 0.0
    %883 = vmatpush2.msra.mxu0 0.0
    %884 = vmatprep.subr.mxu0 0.0
    %885 = vmatpush2.msra.mxu0 0.0
    %886 = vmatprep.subr.mxu0 0.0
    %887 = vmatpush2.msra.mxu0 0.0
    %888 = vmatprep.subr.mxu0 0.0
    %889 = vmatpush2.msra.mxu0 0.0
    %890 = vmatprep.subr.mxu0 0.0
    %891 = vmatpush2.msra.mxu0 0.0
    %892 = vmatprep.mubr.f32.mxu0 0.0
    %893 = vmatmul.mubr.f32.gmra.mxu0 %v56
    %v894 = vpop.f32.mrf.mxu0
    %v895 = vadd.f32 0.0, %v894
    %v896 = vpop.f32.mrf.mxu0
    %897 = vmatprep.mubr.f32.mxu0 0.0
    %898 = vmatmul.mubr.f32.gmra.mxu0 %v59
    %v899 = vpop.f32.mrf.mxu0
    %v900 = vadd.f32 0.0, %v899
    %v901 = vpop.f32.mrf.mxu0
    %902 = vmatprep.mubr.f32.mxu0 0.0
    %903 = vmatmul.mubr.f32.gmra.mxu0 %v62
    %v904 = vpop.f32.mrf.mxu0
    %v905 = vadd.f32 0.0, %v904
    %v906 = vpop.f32.mrf.mxu0
    %907 = vmatprep.mubr.f32.mxu0 0.0
    %908 = vmatmul.mubr.f32.gmra.mxu0 %v65
    %v909 = vpop.f32.mrf.mxu0
    %v910 = vadd.f32 0.0, %v909
    %v911 = vpop.f32.mrf.mxu0
    %912 = vmatprep.mubr.f32.mxu0 0.0
    %913 = vmatmul.mubr.f32.gmra.mxu0 %v68
    %v914 = vpop.f32.mrf.mxu0
    %v915 = vadd.f32 0.0, %v914
    %v916 = vpop.f32.mrf.mxu0
    %917 = vmatprep.mubr.f32.mxu0 0.0
    %918 = vmatmul.mubr.f32.gmra.mxu0 %v71
    %v919 = vpop.f32.mrf.mxu0
    %v920 = vadd.f32 0.0, %v919
    %v921 = vpop.f32.mrf.mxu0
    %922 = vmatprep.mubr.f32.mxu0 0.0
    %923 = vmatmul.mubr.f32.gmra.mxu0 %v74
    %v924 = vpop.f32.mrf.mxu0
    %v925 = vadd.f32 0.0, %v924
    %v926 = vpop.f32.mrf.mxu0
    %927 = vmatprep.mubr.f32.mxu0 0.0
    %928 = vmatmul.mubr.f32.gmra.mxu0 %v77
    %v929 = vpop.f32.mrf.mxu0
    %v930 = vadd.f32 0.0, %v929
    %v931 = vpop.f32.mrf.mxu0
    %932 = vmatprep.mubr.f32.mxu0 0.0
    %933 = vmatmul.mubr.f32.gmra.mxu0 %v80
    %v934 = vpop.f32.mrf.mxu0
    %v935 = vadd.f32 0.0, %v934
    %v936 = vpop.f32.mrf.mxu0
    %937 = vmatprep.mubr.f32.mxu0 0.0
    %938 = vmatmul.mubr.f32.gmra.mxu0 %v83
    %v939 = vpop.f32.mrf.mxu0
    %v940 = vadd.f32 0.0, %v939
    %v941 = vpop.f32.mrf.mxu0
    %942 = vmatprep.mubr.f32.mxu0 0.0
    %943 = vmatmul.mubr.f32.gmra.mxu0 %v86
    %v944 = vpop.f32.mrf.mxu0
    %v945 = vadd.f32 0.0, %v944
    %v946 = vpop.f32.mrf.mxu0
    %947 = vmatprep.mubr.f32.mxu0 0.0
    %948 = vmatmul.mubr.f32.gmra.mxu0 %v89
    %v949 = vpop.f32.mrf.mxu0
    %v950 = vadd.f32 0.0, %v949
    %v951 = vpop.f32.mrf.mxu0
    %952 = vmatprep.mubr.f32.mxu0 0.0
    %953 = vmatmul.mubr.f32.gmra.mxu0 %v92
    %v954 = vpop.f32.mrf.mxu0
    %v955 = vadd.f32 0.0, %v954
    %v956 = vpop.f32.mrf.mxu0
    %957 = vmatprep.mubr.f32.mxu0 0.0
    %958 = vmatmul.mubr.f32.gmra.mxu0 %v95
    %v959 = vpop.f32.mrf.mxu0
    %v960 = vadd.f32 0.0, %v959
    %v961 = vpop.f32.mrf.mxu0
    %962 = vmatprep.mubr.f32.mxu0 0.0
    %963 = vmatmul.mubr.f32.gmra.mxu0 %v98
    %v964 = vpop.f32.mrf.mxu0
    %v965 = vadd.f32 0.0, %v964
    %v966 = vpop.f32.mrf.mxu0
    %967 = vmatprep.mubr.f32.mxu0 0.0
    %968 = vmatmul.mubr.f32.gmra.mxu0 %v101
    %v969 = vpop.f32.mrf.mxu0
    %v970 = vadd.f32 0.0, %v969
    %v971 = vpop.f32.mrf.mxu0
    %972 = vdwg.mxu0
    %973 = vmatprep.subr.mxu0 0.0
    %974 = vmatpush1.msra.mxu0 0.0
    %975 = vmatprep.subr.mxu0 0.0
    %976 = vmatpush1.msra.mxu0 0.0
    %977 = vmatprep.subr.mxu0 0.0
    %978 = vmatpush1.msra.mxu0 0.0
    %979 = vmatprep.subr.mxu0 0.0
    %980 = vmatpush1.msra.mxu0 0.0
    %981 = vmatprep.subr.mxu0 0.0
    %982 = vmatpush1.msra.mxu0 0.0
    %983 = vmatprep.subr.mxu0 0.0
    %984 = vmatpush1.msra.mxu0 0.0
    %985 = vmatprep.subr.mxu0 0.0
    %986 = vmatpush1.msra.mxu0 0.0
    %987 = vmatprep.subr.mxu0 0.0
    %988 = vmatpush1.msra.mxu0 0.0
    %989 = vmatprep.subr.mxu0 0.0
    %990 = vmatpush1.msra.mxu0 0.0
    %991 = vmatprep.subr.mxu0 0.0
    %992 = vmatpush1.msra.mxu0 0.0
    %993 = vmatprep.subr.mxu0 0.0
    %994 = vmatpush1.msra.mxu0 0.0
    %995 = vmatprep.subr.mxu0 0.0
    %996 = vmatpush1.msra.mxu0 0.0
    %997 = vmatprep.subr.mxu0 0.0
    %998 = vmatpush1.msra.mxu0 0.0
    %999 = vmatprep.subr.mxu0 0.0
    %1000 = vmatpush1.msra.mxu0 0.0
    %1001 = vmatprep.subr.mxu0 0.0
    %1002 = vmatpush1.msra.mxu0 0.0
    %1003 = vmatprep.subr.mxu0 0.0
    %1004 = vmatpush1.msra.mxu0 %v36
    %1005 = vmatprep.subr.mxu0 0.0
    %1006 = vmatpush2.msra.mxu0 0.0
    %1007 = vmatprep.subr.mxu0 0.0
    %1008 = vmatpush2.msra.mxu0 0.0
    %1009 = vmatprep.subr.mxu0 0.0
    %1010 = vmatpush2.msra.mxu0 0.0
    %1011 = vmatprep.subr.mxu0 0.0
    %1012 = vmatpush2.msra.mxu0 0.0
    %1013 = vmatprep.subr.mxu0 0.0
    %1014 = vmatpush2.msra.mxu0 0.0
    %1015 = vmatprep.subr.mxu0 0.0
    %1016 = vmatpush2.msra.mxu0 0.0
    %1017 = vmatprep.subr.mxu0 0.0
    %1018 = vmatpush2.msra.mxu0 0.0
    %1019 = vmatprep.subr.mxu0 0.0
    %1020 = vmatpush2.msra.mxu0 0.0
    %1021 = vmatprep.subr.mxu0 0.0
    %1022 = vmatpush2.msra.mxu0 0.0
    %1023 = vmatprep.subr.mxu0 0.0
    %1024 = vmatpush2.msra.mxu0 0.0
    %1025 = vmatprep.subr.mxu0 0.0
    %1026 = vmatpush2.msra.mxu0 0.0
    %1027 = vmatprep.subr.mxu0 0.0
    %1028 = vmatpush2.msra.mxu0 0.0
    %1029 = vmatprep.subr.mxu0 0.0
    %1030 = vmatpush2.msra.mxu0 0.0
    %1031 = vmatprep.subr.mxu0 0.0
    %1032 = vmatpush2.msra.mxu0 0.0
    %1033 = vmatprep.subr.mxu0 0.0
    %1034 = vmatpush2.msra.mxu0 0.0
    %1035 = vmatprep.subr.mxu0 0.0
    %1036 = vmatpush2.msra.mxu0 0.0
    %1037 = vmatprep.mubr.f32.mxu0 0.0
    %1038 = vmatmul.mubr.f32.gmra.mxu0 %v56
    %v1039 = vpop.f32.mrf.mxu0
    %v1040 = vadd.f32 0.0, %v1039
    %v1041 = vpop.f32.mrf.mxu0
    %1042 = vmatprep.mubr.f32.mxu0 0.0
    %1043 = vmatmul.mubr.f32.gmra.mxu0 %v59
    %v1044 = vpop.f32.mrf.mxu0
    %v1045 = vadd.f32 0.0, %v1044
    %v1046 = vpop.f32.mrf.mxu0
    %1047 = vmatprep.mubr.f32.mxu0 0.0
    %1048 = vmatmul.mubr.f32.gmra.mxu0 %v62
    %v1049 = vpop.f32.mrf.mxu0
    %v1050 = vadd.f32 0.0, %v1049
    %v1051 = vpop.f32.mrf.mxu0
    %1052 = vmatprep.mubr.f32.mxu0 0.0
    %1053 = vmatmul.mubr.f32.gmra.mxu0 %v65
    %v1054 = vpop.f32.mrf.mxu0
    %v1055 = vadd.f32 0.0, %v1054
    %v1056 = vpop.f32.mrf.mxu0
    %1057 = vmatprep.mubr.f32.mxu0 0.0
    %1058 = vmatmul.mubr.f32.gmra.mxu0 %v68
    %v1059 = vpop.f32.mrf.mxu0
    %v1060 = vadd.f32 0.0, %v1059
    %v1061 = vpop.f32.mrf.mxu0
    %1062 = vmatprep.mubr.f32.mxu0 0.0
    %1063 = vmatmul.mubr.f32.gmra.mxu0 %v71
    %v1064 = vpop.f32.mrf.mxu0
    %v1065 = vadd.f32 0.0, %v1064
    %v1066 = vpop.f32.mrf.mxu0
    %1067 = vmatprep.mubr.f32.mxu0 0.0
    %1068 = vmatmul.mubr.f32.gmra.mxu0 %v74
    %v1069 = vpop.f32.mrf.mxu0
    %v1070 = vadd.f32 0.0, %v1069
    %v1071 = vpop.f32.mrf.mxu0
    %1072 = vmatprep.mubr.f32.mxu0 0.0
    %1073 = vmatmul.mubr.f32.gmra.mxu0 %v77
    %v1074 = vpop.f32.mrf.mxu0
    %v1075 = vadd.f32 0.0, %v1074
    %v1076 = vpop.f32.mrf.mxu0
    %1077 = vmatprep.mubr.f32.mxu0 0.0
    %1078 = vmatmul.mubr.f32.gmra.mxu0 %v80
    %v1079 = vpop.f32.mrf.mxu0
    %v1080 = vadd.f32 0.0, %v1079
    %v1081 = vpop.f32.mrf.mxu0
    %1082 = vmatprep.mubr.f32.mxu0 0.0
    %1083 = vmatmul.mubr.f32.gmra.mxu0 %v83
    %v1084 = vpop.f32.mrf.mxu0
    %v1085 = vadd.f32 0.0, %v1084
    %v1086 = vpop.f32.mrf.mxu0
    %1087 = vmatprep.mubr.f32.mxu0 0.0
    %1088 = vmatmul.mubr.f32.gmra.mxu0 %v86
    %v1089 = vpop.f32.mrf.mxu0
    %v1090 = vadd.f32 0.0, %v1089
    %v1091 = vpop.f32.mrf.mxu0
    %1092 = vmatprep.mubr.f32.mxu0 0.0
    %1093 = vmatmul.mubr.f32.gmra.mxu0 %v89
    %v1094 = vpop.f32.mrf.mxu0
    %v1095 = vadd.f32 0.0, %v1094
    %v1096 = vpop.f32.mrf.mxu0
    %1097 = vmatprep.mubr.f32.mxu0 0.0
    %1098 = vmatmul.mubr.f32.gmra.mxu0 %v92
    %v1099 = vpop.f32.mrf.mxu0
    %v1100 = vadd.f32 0.0, %v1099
    %v1101 = vpop.f32.mrf.mxu0
    %1102 = vmatprep.mubr.f32.mxu0 0.0
    %1103 = vmatmul.mubr.f32.gmra.mxu0 %v95
    %v1104 = vpop.f32.mrf.mxu0
    %v1105 = vadd.f32 0.0, %v1104
    %v1106 = vpop.f32.mrf.mxu0
    %1107 = vmatprep.mubr.f32.mxu0 0.0
    %1108 = vmatmul.mubr.f32.gmra.mxu0 %v98
    %v1109 = vpop.f32.mrf.mxu0
    %v1110 = vadd.f32 0.0, %v1109
    %v1111 = vpop.f32.mrf.mxu0
    %1112 = vmatprep.mubr.f32.mxu0 0.0
    %1113 = vmatmul.mubr.f32.gmra.mxu0 %v101
    %v1114 = vpop.f32.mrf.mxu0
    %v1115 = vadd.f32 0.0, %v1114
    %v1116 = vpop.f32.mrf.mxu0
    %1117 = vdwg.mxu0
    %1118 = vmatprep.subr.mxu0 0.0
    %1119 = vmatpush1.msra.mxu0 0.0
    %1120 = vmatprep.subr.mxu0 0.0
    %1121 = vmatpush1.msra.mxu0 0.0
    %1122 = vmatprep.subr.mxu0 0.0
    %1123 = vmatpush1.msra.mxu0 0.0
    %1124 = vmatprep.subr.mxu0 0.0
    %1125 = vmatpush1.msra.mxu0 0.0
    %1126 = vmatprep.subr.mxu0 0.0
    %1127 = vmatpush1.msra.mxu0 0.0
    %1128 = vmatprep.subr.mxu0 0.0
    %1129 = vmatpush1.msra.mxu0 0.0
    %1130 = vmatprep.subr.mxu0 0.0
    %1131 = vmatpush1.msra.mxu0 0.0
    %1132 = vmatprep.subr.mxu0 0.0
    %1133 = vmatpush1.msra.mxu0 0.0
    %1134 = vmatprep.subr.mxu0 0.0
    %1135 = vmatpush1.msra.mxu0 0.0
    %1136 = vmatprep.subr.mxu0 0.0
    %1137 = vmatpush1.msra.mxu0 0.0
    %1138 = vmatprep.subr.mxu0 0.0
    %1139 = vmatpush1.msra.mxu0 0.0
    %1140 = vmatprep.subr.mxu0 0.0
    %1141 = vmatpush1.msra.mxu0 0.0
    %1142 = vmatprep.subr.mxu0 0.0
    %1143 = vmatpush1.msra.mxu0 0.0
    %1144 = vmatprep.subr.mxu0 0.0
    %1145 = vmatpush1.msra.mxu0 0.0
    %1146 = vmatprep.subr.mxu0 0.0
    %1147 = vmatpush1.msra.mxu0 0.0
    %1148 = vmatprep.subr.mxu0 0.0
    %1149 = vmatpush1.msra.mxu0 %v37
    %1150 = vmatprep.subr.mxu0 0.0
    %1151 = vmatpush2.msra.mxu0 0.0
    %1152 = vmatprep.subr.mxu0 0.0
    %1153 = vmatpush2.msra.mxu0 0.0
    %1154 = vmatprep.subr.mxu0 0.0
    %1155 = vmatpush2.msra.mxu0 0.0
    %1156 = vmatprep.subr.mxu0 0.0
    %1157 = vmatpush2.msra.mxu0 0.0
    %1158 = vmatprep.subr.mxu0 0.0
    %1159 = vmatpush2.msra.mxu0 0.0
    %1160 = vmatprep.subr.mxu0 0.0
    %1161 = vmatpush2.msra.mxu0 0.0
    %1162 = vmatprep.subr.mxu0 0.0
    %1163 = vmatpush2.msra.mxu0 0.0
    %1164 = vmatprep.subr.mxu0 0.0
    %1165 = vmatpush2.msra.mxu0 0.0
    %1166 = vmatprep.subr.mxu0 0.0
    %1167 = vmatpush2.msra.mxu0 0.0
    %1168 = vmatprep.subr.mxu0 0.0
    %1169 = vmatpush2.msra.mxu0 0.0
    %1170 = vmatprep.subr.mxu0 0.0
    %1171 = vmatpush2.msra.mxu0 0.0
    %1172 = vmatprep.subr.mxu0 0.0
    %1173 = vmatpush2.msra.mxu0 0.0
    %1174 = vmatprep.subr.mxu0 0.0
    %1175 = vmatpush2.msra.mxu0 0.0
    %1176 = vmatprep.subr.mxu0 0.0
    %1177 = vmatpush2.msra.mxu0 0.0
    %1178 = vmatprep.subr.mxu0 0.0
    %1179 = vmatpush2.msra.mxu0 0.0
    %1180 = vmatprep.subr.mxu0 0.0
    %1181 = vmatpush2.msra.mxu0 0.0
    %1182 = vmatprep.mubr.f32.mxu0 0.0
    %1183 = vmatmul.mubr.f32.gmra.mxu0 %v56
    %v1184 = vpop.f32.mrf.mxu0
    %v1185 = vadd.f32 0.0, %v1184
    %v1186 = vpop.f32.mrf.mxu0
    %1187 = vmatprep.mubr.f32.mxu0 0.0
    %1188 = vmatmul.mubr.f32.gmra.mxu0 %v59
    %v1189 = vpop.f32.mrf.mxu0
    %v1190 = vadd.f32 0.0, %v1189
    %v1191 = vpop.f32.mrf.mxu0
    %1192 = vmatprep.mubr.f32.mxu0 0.0
    %1193 = vmatmul.mubr.f32.gmra.mxu0 %v62
    %v1194 = vpop.f32.mrf.mxu0
    %v1195 = vadd.f32 0.0, %v1194
    %v1196 = vpop.f32.mrf.mxu0
    %1197 = vmatprep.mubr.f32.mxu0 0.0
    %1198 = vmatmul.mubr.f32.gmra.mxu0 %v65
    %v1199 = vpop.f32.mrf.mxu0
    %v1200 = vadd.f32 0.0, %v1199
    %v1201 = vpop.f32.mrf.mxu0
    %1202 = vmatprep.mubr.f32.mxu0 0.0
    %1203 = vmatmul.mubr.f32.gmra.mxu0 %v68
    %v1204 = vpop.f32.mrf.mxu0
    %v1205 = vadd.f32 0.0, %v1204
    %v1206 = vpop.f32.mrf.mxu0
    %1207 = vmatprep.mubr.f32.mxu0 0.0
    %1208 = vmatmul.mubr.f32.gmra.mxu0 %v71
    %v1209 = vpop.f32.mrf.mxu0
    %v1210 = vadd.f32 0.0, %v1209
    %v1211 = vpop.f32.mrf.mxu0
    %1212 = vmatprep.mubr.f32.mxu0 0.0
    %1213 = vmatmul.mubr.f32.gmra.mxu0 %v74
    %v1214 = vpop.f32.mrf.mxu0
    %v1215 = vadd.f32 0.0, %v1214
    %v1216 = vpop.f32.mrf.mxu0
    %1217 = vmatprep.mubr.f32.mxu0 0.0
    %1218 = vmatmul.mubr.f32.gmra.mxu0 %v77
    %v1219 = vpop.f32.mrf.mxu0
    %v1220 = vadd.f32 0.0, %v1219
    %v1221 = vpop.f32.mrf.mxu0
    %1222 = vmatprep.mubr.f32.mxu0 0.0
    %1223 = vmatmul.mubr.f32.gmra.mxu0 %v80
    %v1224 = vpop.f32.mrf.mxu0
    %v1225 = vadd.f32 0.0, %v1224
    %v1226 = vpop.f32.mrf.mxu0
    %1227 = vmatprep.mubr.f32.mxu0 0.0
    %1228 = vmatmul.mubr.f32.gmra.mxu0 %v83
    %v1229 = vpop.f32.mrf.mxu0
    %v1230 = vadd.f32 0.0, %v1229
    %v1231 = vpop.f32.mrf.mxu0
    %1232 = vmatprep.mubr.f32.mxu0 0.0
    %1233 = vmatmul.mubr.f32.gmra.mxu0 %v86
    %v1234 = vpop.f32.mrf.mxu0
    %v1235 = vadd.f32 0.0, %v1234
    %v1236 = vpop.f32.mrf.mxu0
    %1237 = vmatprep.mubr.f32.mxu0 0.0
    %1238 = vmatmul.mubr.f32.gmra.mxu0 %v89
    %v1239 = vpop.f32.mrf.mxu0
    %v1240 = vadd.f32 0.0, %v1239
    %v1241 = vpop.f32.mrf.mxu0
    %1242 = vmatprep.mubr.f32.mxu0 0.0
    %1243 = vmatmul.mubr.f32.gmra.mxu0 %v92
    %v1244 = vpop.f32.mrf.mxu0
    %v1245 = vadd.f32 0.0, %v1244
    %v1246 = vpop.f32.mrf.mxu0
    %1247 = vmatprep.mubr.f32.mxu0 0.0
    %1248 = vmatmul.mubr.f32.gmra.mxu0 %v95
    %v1249 = vpop.f32.mrf.mxu0
    %v1250 = vadd.f32 0.0, %v1249
    %v1251 = vpop.f32.mrf.mxu0
    %1252 = vmatprep.mubr.f32.mxu0 0.0
    %1253 = vmatmul.mubr.f32.gmra.mxu0 %v98
    %v1254 = vpop.f32.mrf.mxu0
    %v1255 = vadd.f32 0.0, %v1254
    %v1256 = vpop.f32.mrf.mxu0
    %1257 = vmatprep.mubr.f32.mxu0 0.0
    %1258 = vmatmul.mubr.f32.gmra.mxu0 %v101
    %v1259 = vpop.f32.mrf.mxu0
    %v1260 = vadd.f32 0.0, %v1259
    %v1261 = vpop.f32.mrf.mxu0
    %1262 = vdwg.mxu0
    %v1263 = vmul.f32 %v170, 4.0
    %v1264 = vmul.f32 %v175, 4.0
    %v1265 = vmul.f32 %v180, 4.0
    %v1266 = vmul.f32 %v185, 4.0
    %v1267 = vmul.f32 %v190, 4.0
    %v1268 = vmul.f32 %v195, 4.0
    %v1269 = vmul.f32 %v200, 4.0
    %v1270 = vmul.f32 %v205, 4.0
    %v1271 = vmul.f32 %v210, 4.0
    %v1272 = vmul.f32 %v215, 4.0
    %v1273 = vmul.f32 %v220, 4.0
    %v1274 = vmul.f32 %v225, 4.0
    %v1275 = vmul.f32 %v230, 4.0
    %v1276 = vmul.f32 %v235, 4.0
    %v1277 = vmul.f32 %v240, 4.0
    %v1278 = vmul.f32 %v245, 4.0
    %v1279 = vmul.f32 %v315, 4.0
    %v1280 = vmul.f32 %v320, 4.0
    %v1281 = vmul.f32 %v325, 4.0
    %v1282 = vmul.f32 %v330, 4.0
    %v1283 = vmul.f32 %v335, 4.0
    %v1284 = vmul.f32 %v340, 4.0
    %v1285 = vmul.f32 %v345, 4.0
    %v1286 = vmul.f32 %v350, 4.0
    %v1287 = vmul.f32 %v355, 4.0
    %v1288 = vmul.f32 %v360, 4.0
    %v1289 = vmul.f32 %v365, 4.0
    %v1290 = vmul.f32 %v370, 4.0
    %v1291 = vmul.f32 %v375, 4.0
    %v1292 = vmul.f32 %v380, 4.0
    %v1293 = vmul.f32 %v385, 4.0
    %v1294 = vmul.f32 %v390, 4.0
    %v1295 = vmul.f32 %v460, 4.0
    %v1296 = vmul.f32 %v465, 4.0
    %v1297 = vmul.f32 %v470, 4.0
    %v1298 = vmul.f32 %v475, 4.0
    %v1299 = vmul.f32 %v480, 4.0
    %v1300 = vmul.f32 %v485, 4.0
    %v1301 = vmul.f32 %v490, 4.0
    %v1302 = vmul.f32 %v495, 4.0
    %v1303 = vmul.f32 %v500, 4.0
    %v1304 = vmul.f32 %v505, 4.0
    %v1305 = vmul.f32 %v510, 4.0
    %v1306 = vmul.f32 %v515, 4.0
    %v1307 = vmul.f32 %v520, 4.0
    %v1308 = vmul.f32 %v525, 4.0
    %v1309 = vmul.f32 %v530, 4.0
    %v1310 = vmul.f32 %v535, 4.0
    %v1311 = vmul.f32 %v605, 4.0
    %v1312 = vmul.f32 %v610, 4.0
    %v1313 = vmul.f32 %v615, 4.0
    %v1314 = vmul.f32 %v620, 4.0
    %v1315 = vmul.f32 %v625, 4.0
    %v1316 = vmul.f32 %v630, 4.0
    %v1317 = vmul.f32 %v635, 4.0
    %v1318 = vmul.f32 %v640, 4.0
    %v1319 = vmul.f32 %v645, 4.0
    %v1320 = vmul.f32 %v650, 4.0
    %v1321 = vmul.f32 %v655, 4.0
    %v1322 = vmul.f32 %v660, 4.0
    %v1323 = vmul.f32 %v665, 4.0
    %v1324 = vmul.f32 %v670, 4.0
    %v1325 = vmul.f32 %v675, 4.0
    %v1326 = vmul.f32 %v680, 4.0
    %v1327 = vmul.f32 %v750, 4.0
    %v1328 = vmul.f32 %v755, 4.0
    %v1329 = vmul.f32 %v760, 4.0
    %v1330 = vmul.f32 %v765, 4.0
    %v1331 = vmul.f32 %v770, 4.0
    %v1332 = vmul.f32 %v775, 4.0
    %v1333 = vmul.f32 %v780, 4.0
    %v1334 = vmul.f32 %v785, 4.0
    %v1335 = vmul.f32 %v790, 4.0
    %v1336 = vmul.f32 %v795, 4.0
    %v1337 = vmul.f32 %v800, 4.0
    %v1338 = vmul.f32 %v805, 4.0
    %v1339 = vmul.f32 %v810, 4.0
    %v1340 = vmul.f32 %v815, 4.0
    %v1341 = vmul.f32 %v820, 4.0
    %v1342 = vmul.f32 %v825, 4.0
    %v1343 = vmul.f32 %v895, 4.0
    %v1344 = vmul.f32 %v900, 4.0
    %v1345 = vmul.f32 %v905, 4.0
    %v1346 = vmul.f32 %v910, 4.0
    %v1347 = vmul.f32 %v915, 4.0
    %v1348 = vmul.f32 %v920, 4.0
    %v1349 = vmul.f32 %v925, 4.0
    %v1350 = vmul.f32 %v930, 4.0
    %v1351 = vmul.f32 %v935, 4.0
    %v1352 = vmul.f32 %v940, 4.0
    %v1353 = vmul.f32 %v945, 4.0
    %v1354 = vmul.f32 %v950, 4.0
    %v1355 = vmul.f32 %v955, 4.0
    %v1356 = vmul.f32 %v960, 4.0
    %v1357 = vmul.f32 %v965, 4.0
    %v1358 = vmul.f32 %v970, 4.0
    %v1359 = vmul.f32 %v1040, 4.0
    %v1360 = vmul.f32 %v1045, 4.0
    %v1361 = vmul.f32 %v1050, 4.0
    %v1362 = vmul.f32 %v1055, 4.0
    %v1363 = vmul.f32 %v1060, 4.0
    %v1364 = vmul.f32 %v1065, 4.0
    %v1365 = vmul.f32 %v1070, 4.0
    %v1366 = vmul.f32 %v1075, 4.0
    %v1367 = vmul.f32 %v1080, 4.0
    %v1368 = vmul.f32 %v1085, 4.0
    %v1369 = vmul.f32 %v1090, 4.0
    %v1370 = vmul.f32 %v1095, 4.0
    %v1371 = vmul.f32 %v1100, 4.0
    %v1372 = vmul.f32 %v1105, 4.0
    %v1373 = vmul.f32 %v1110, 4.0
    %v1374 = vmul.f32 %v1115, 4.0
    %v1375 = vmul.f32 %v1185, 4.0
    %v1376 = vmul.f32 %v1190, 4.0
    %v1377 = vmul.f32 %v1195, 4.0
    %v1378 = vmul.f32 %v1200, 4.0
    %v1379 = vmul.f32 %v1205, 4.0
    %v1380 = vmul.f32 %v1210, 4.0
    %v1381 = vmul.f32 %v1215, 4.0
    %v1382 = vmul.f32 %v1220, 4.0
    %v1383 = vmul.f32 %v1225, 4.0
    %v1384 = vmul.f32 %v1230, 4.0
    %v1385 = vmul.f32 %v1235, 4.0
    %v1386 = vmul.f32 %v1240, 4.0
    %v1387 = vmul.f32 %v1245, 4.0
    %v1388 = vmul.f32 %v1250, 4.0
    %v1389 = vmul.f32 %v1255, 4.0
    %v1390 = vmul.f32 %v1260, 4.0
    %v1391 = vadd.f32 %v1263, 0.5
    %v1392 = vadd.f32 %v1264, 0.5
    %v1393 = vadd.f32 %v1265, 0.5
    %v1394 = vadd.f32 %v1266, 0.5
    %v1395 = vadd.f32 %v1267, 0.5
    %v1396 = vadd.f32 %v1268, 0.5
    %v1397 = vadd.f32 %v1269, 0.5
    %v1398 = vadd.f32 %v1270, 0.5
    %v1399 = vadd.f32 %v1271, 0.5
    %v1400 = vadd.f32 %v1272, 0.5
    %v1401 = vadd.f32 %v1273, 0.5
    %v1402 = vadd.f32 %v1274, 0.5
    %v1403 = vadd.f32 %v1275, 0.5
    %v1404 = vadd.f32 %v1276, 0.5
    %v1405 = vadd.f32 %v1277, 0.5
    %v1406 = vadd.f32 %v1278, 0.5
    %v1407 = vadd.f32 %v1279, 0.5
    %v1408 = vadd.f32 %v1280, 0.5
    %v1409 = vadd.f32 %v1281, 0.5
    %v1410 = vadd.f32 %v1282, 0.5
    %v1411 = vadd.f32 %v1283, 0.5
    %v1412 = vadd.f32 %v1284, 0.5
    %v1413 = vadd.f32 %v1285, 0.5
    %v1414 = vadd.f32 %v1286, 0.5
    %v1415 = vadd.f32 %v1287, 0.5
    %v1416 = vadd.f32 %v1288, 0.5
    %v1417 = vadd.f32 %v1289, 0.5
    %v1418 = vadd.f32 %v1290, 0.5
    %v1419 = vadd.f32 %v1291, 0.5
    %v1420 = vadd.f32 %v1292, 0.5
    %v1421 = vadd.f32 %v1293, 0.5
    %v1422 = vadd.f32 %v1294, 0.5
    %v1423 = vadd.f32 %v1295, 0.5
    %v1424 = vadd.f32 %v1296, 0.5
    %v1425 = vadd.f32 %v1297, 0.5
    %v1426 = vadd.f32 %v1298, 0.5
    %v1427 = vadd.f32 %v1299, 0.5
    %v1428 = vadd.f32 %v1300, 0.5
    %v1429 = vadd.f32 %v1301, 0.5
    %v1430 = vadd.f32 %v1302, 0.5
    %v1431 = vadd.f32 %v1303, 0.5
    %v1432 = vadd.f32 %v1304, 0.5
    %v1433 = vadd.f32 %v1305, 0.5
    %v1434 = vadd.f32 %v1306, 0.5
    %v1435 = vadd.f32 %v1307, 0.5
    %v1436 = vadd.f32 %v1308, 0.5
    %v1437 = vadd.f32 %v1309, 0.5
    %v1438 = vadd.f32 %v1310, 0.5
    %v1439 = vadd.f32 %v1311, 0.5
    %v1440 = vadd.f32 %v1312, 0.5
    %v1441 = vadd.f32 %v1313, 0.5
    %v1442 = vadd.f32 %v1314, 0.5
    %v1443 = vadd.f32 %v1315, 0.5
    %v1444 = vadd.f32 %v1316, 0.5
    %v1445 = vadd.f32 %v1317, 0.5
    %v1446 = vadd.f32 %v1318, 0.5
    %v1447 = vadd.f32 %v1319, 0.5
    %v1448 = vadd.f32 %v1320, 0.5
    %v1449 = vadd.f32 %v1321, 0.5
    %v1450 = vadd.f32 %v1322, 0.5
    %v1451 = vadd.f32 %v1323, 0.5
    %v1452 = vadd.f32 %v1324, 0.5
    %v1453 = vadd.f32 %v1325, 0.5
    %v1454 = vadd.f32 %v1326, 0.5
    %v1455 = vadd.f32 %v1327, 0.5
    %v1456 = vadd.f32 %v1328, 0.5
    %v1457 = vadd.f32 %v1329, 0.5
    %v1458 = vadd.f32 %v1330, 0.5
    %v1459 = vadd.f32 %v1331, 0.5
    %v1460 = vadd.f32 %v1332, 0.5
    %v1461 = vadd.f32 %v1333, 0.5
    %v1462 = vadd.f32 %v1334, 0.5
    %v1463 = vadd.f32 %v1335, 0.5
    %v1464 = vadd.f32 %v1336, 0.5
    %v1465 = vadd.f32 %v1337, 0.5
    %v1466 = vadd.f32 %v1338, 0.5
    %v1467 = vadd.f32 %v1339, 0.5
    %v1468 = vadd.f32 %v1340, 0.5
    %v1469 = vadd.f32 %v1341, 0.5
    %v1470 = vadd.f32 %v1342, 0.5
    %v1471 = vadd.f32 %v1343, 0.5
    %v1472 = vadd.f32 %v1344, 0.5
    %v1473 = vadd.f32 %v1345, 0.5
    %v1474 = vadd.f32 %v1346, 0.5
    %v1475 = vadd.f32 %v1347, 0.5
    %v1476 = vadd.f32 %v1348, 0.5
    %v1477 = vadd.f32 %v1349, 0.5
    %v1478 = vadd.f32 %v1350, 0.5
    %v1479 = vadd.f32 %v1351, 0.5
    %v1480 = vadd.f32 %v1352, 0.5
    %v1481 = vadd.f32 %v1353, 0.5
    %v1482 = vadd.f32 %v1354, 0.5
    %v1483 = vadd.f32 %v1355, 0.5
    %v1484 = vadd.f32 %v1356, 0.5
    %v1485 = vadd.f32 %v1357, 0.5
    %v1486 = vadd.f32 %v1358, 0.5
    %v1487 = vadd.f32 %v1359, 0.5
    %v1488 = vadd.f32 %v1360, 0.5
    %v1489 = vadd.f32 %v1361, 0.5
    %v1490 = vadd.f32 %v1362, 0.5
    %v1491 = vadd.f32 %v1363, 0.5
    %v1492 = vadd.f32 %v1364, 0.5
    %v1493 = vadd.f32 %v1365, 0.5
    %v1494 = vadd.f32 %v1366, 0.5
    %v1495 = vadd.f32 %v1367, 0.5
    %v1496 = vadd.f32 %v1368, 0.5
    %v1497 = vadd.f32 %v1369, 0.5
    %v1498 = vadd.f32 %v1370, 0.5
    %v1499 = vadd.f32 %v1371, 0.5
    %v1500 = vadd.f32 %v1372, 0.5
    %v1501 = vadd.f32 %v1373, 0.5
    %v1502 = vadd.f32 %v1374, 0.5
    %v1503 = vadd.f32 %v1375, 0.5
    %v1504 = vadd.f32 %v1376, 0.5
    %v1505 = vadd.f32 %v1377, 0.5
    %v1506 = vadd.f32 %v1378, 0.5
    %v1507 = vadd.f32 %v1379, 0.5
    %v1508 = vadd.f32 %v1380, 0.5
    %v1509 = vadd.f32 %v1381, 0.5
    %v1510 = vadd.f32 %v1382, 0.5
    %v1511 = vadd.f32 %v1383, 0.5
    %v1512 = vadd.f32 %v1384, 0.5
    %v1513 = vadd.f32 %v1385, 0.5
    %v1514 = vadd.f32 %v1386, 0.5
    %v1515 = vadd.f32 %v1387, 0.5
    %v1516 = vadd.f32 %v1388, 0.5
    %v1517 = vadd.f32 %v1389, 0.5
    %v1518 = vadd.f32 %v1390, 0.5
    %v1519 = vfloor.f32 %v1391
    %v1520 = vfloor.f32 %v1392
    %v1521 = vfloor.f32 %v1393
    %v1522 = vfloor.f32 %v1394
    %v1523 = vfloor.f32 %v1395
    %v1524 = vfloor.f32 %v1396
    %v1525 = vfloor.f32 %v1397
    %v1526 = vfloor.f32 %v1398
    %v1527 = vfloor.f32 %v1399
    %v1528 = vfloor.f32 %v1400
    %v1529 = vfloor.f32 %v1401
    %v1530 = vfloor.f32 %v1402
    %v1531 = vfloor.f32 %v1403
    %v1532 = vfloor.f32 %v1404
    %v1533 = vfloor.f32 %v1405
    %v1534 = vfloor.f32 %v1406
    %v1535 = vfloor.f32 %v1407
    %v1536 = vfloor.f32 %v1408
    %v1537 = vfloor.f32 %v1409
    %v1538 = vfloor.f32 %v1410
    %v1539 = vfloor.f32 %v1411
    %v1540 = vfloor.f32 %v1412
    %v1541 = vfloor.f32 %v1413
    %v1542 = vfloor.f32 %v1414
    %v1543 = vfloor.f32 %v1415
    %v1544 = vfloor.f32 %v1416
    %v1545 = vfloor.f32 %v1417
    %v1546 = vfloor.f32 %v1418
    %v1547 = vfloor.f32 %v1419
    %v1548 = vfloor.f32 %v1420
    %v1549 = vfloor.f32 %v1421
    %v1550 = vfloor.f32 %v1422
    %v1551 = vfloor.f32 %v1423
    %v1552 = vfloor.f32 %v1424
    %v1553 = vfloor.f32 %v1425
    %v1554 = vfloor.f32 %v1426
    %v1555 = vfloor.f32 %v1427
    %v1556 = vfloor.f32 %v1428
    %v1557 = vfloor.f32 %v1429
    %v1558 = vfloor.f32 %v1430
    %v1559 = vfloor.f32 %v1431
    %v1560 = vfloor.f32 %v1432
    %v1561 = vfloor.f32 %v1433
    %v1562 = vfloor.f32 %v1434
    %v1563 = vfloor.f32 %v1435
    %v1564 = vfloor.f32 %v1436
    %v1565 = vfloor.f32 %v1437
    %v1566 = vfloor.f32 %v1438
    %v1567 = vfloor.f32 %v1439
    %v1568 = vfloor.f32 %v1440
    %v1569 = vfloor.f32 %v1441
    %v1570 = vfloor.f32 %v1442
    %v1571 = vfloor.f32 %v1443
    %v1572 = vfloor.f32 %v1444
    %v1573 = vfloor.f32 %v1445
    %v1574 = vfloor.f32 %v1446
    %v1575 = vfloor.f32 %v1447
    %v1576 = vfloor.f32 %v1448
    %v1577 = vfloor.f32 %v1449
    %v1578 = vfloor.f32 %v1450
    %v1579 = vfloor.f32 %v1451
    %v1580 = vfloor.f32 %v1452
    %v1581 = vfloor.f32 %v1453
    %v1582 = vfloor.f32 %v1454
    %v1583 = vfloor.f32 %v1455
    %v1584 = vfloor.f32 %v1456
    %v1585 = vfloor.f32 %v1457
    %v1586 = vfloor.f32 %v1458
    %v1587 = vfloor.f32 %v1459
    %v1588 = vfloor.f32 %v1460
    %v1589 = vfloor.f32 %v1461
    %v1590 = vfloor.f32 %v1462
    %v1591 = vfloor.f32 %v1463
    %v1592 = vfloor.f32 %v1464
    %v1593 = vfloor.f32 %v1465
    %v1594 = vfloor.f32 %v1466
    %v1595 = vfloor.f32 %v1467
    %v1596 = vfloor.f32 %v1468
    %v1597 = vfloor.f32 %v1469
    %v1598 = vfloor.f32 %v1470
    %v1599 = vfloor.f32 %v1471
    %v1600 = vfloor.f32 %v1472
    %v1601 = vfloor.f32 %v1473
    %v1602 = vfloor.f32 %v1474
    %v1603 = vfloor.f32 %v1475
    %v1604 = vfloor.f32 %v1476
    %v1605 = vfloor.f32 %v1477
    %v1606 = vfloor.f32 %v1478
    %v1607 = vfloor.f32 %v1479
    %v1608 = vfloor.f32 %v1480
    %v1609 = vfloor.f32 %v1481
    %v1610 = vfloor.f32 %v1482
    %v1611 = vfloor.f32 %v1483
    %v1612 = vfloor.f32 %v1484
    %v1613 = vfloor.f32 %v1485
    %v1614 = vfloor.f32 %v1486
    %v1615 = vfloor.f32 %v1487
    %v1616 = vfloor.f32 %v1488
    %v1617 = vfloor.f32 %v1489
    %v1618 = vfloor.f32 %v1490
    %v1619 = vfloor.f32 %v1491
    %v1620 = vfloor.f32 %v1492
    %v1621 = vfloor.f32 %v1493
    %v1622 = vfloor.f32 %v1494
    %v1623 = vfloor.f32 %v1495
    %v1624 = vfloor.f32 %v1496
    %v1625 = vfloor.f32 %v1497
    %v1626 = vfloor.f32 %v1498
    %v1627 = vfloor.f32 %v1499
    %v1628 = vfloor.f32 %v1500
    %v1629 = vfloor.f32 %v1501
    %v1630 = vfloor.f32 %v1502
    %v1631 = vfloor.f32 %v1503
    %v1632 = vfloor.f32 %v1504
    %v1633 = vfloor.f32 %v1505
    %v1634 = vfloor.f32 %v1506
    %v1635 = vfloor.f32 %v1507
    %v1636 = vfloor.f32 %v1508
    %v1637 = vfloor.f32 %v1509
    %v1638 = vfloor.f32 %v1510
    %v1639 = vfloor.f32 %v1511
    %v1640 = vfloor.f32 %v1512
    %v1641 = vfloor.f32 %v1513
    %v1642 = vfloor.f32 %v1514
    %v1643 = vfloor.f32 %v1515
    %v1644 = vfloor.f32 %v1516
    %v1645 = vfloor.f32 %v1517
    %v1646 = vfloor.f32 %v1518
    %v1647 = vmul.f32 %v1519, 0.25
    %v1648 = vmul.f32 %v1520, 0.25
    %v1649 = vmul.f32 %v1521, 0.25
    %v1650 = vmul.f32 %v1522, 0.25
    %v1651 = vmul.f32 %v1523, 0.25
    %v1652 = vmul.f32 %v1524, 0.25
    %v1653 = vmul.f32 %v1525, 0.25
    %v1654 = vmul.f32 %v1526, 0.25
    %v1655 = vmul.f32 %v1527, 0.25
    %v1656 = vmul.f32 %v1528, 0.25
    %v1657 = vmul.f32 %v1529, 0.25
    %v1658 = vmul.f32 %v1530, 0.25
    %v1659 = vmul.f32 %v1531, 0.25
    %v1660 = vmul.f32 %v1532, 0.25
    %v1661 = vmul.f32 %v1533, 0.25
    %v1662 = vmul.f32 %v1534, 0.25
    %v1663 = vmul.f32 %v1535, 0.25
    %v1664 = vmul.f32 %v1536, 0.25
    %v1665 = vmul.f32 %v1537, 0.25
    %v1666 = vmul.f32 %v1538, 0.25
    %v1667 = vmul.f32 %v1539, 0.25
    %v1668 = vmul.f32 %v1540, 0.25
    %v1669 = vmul.f32 %v1541, 0.25
    %v1670 = vmul.f32 %v1542, 0.25
    %v1671 = vmul.f32 %v1543, 0.25
    %v1672 = vmul.f32 %v1544, 0.25
    %v1673 = vmul.f32 %v1545, 0.25
    %v1674 = vmul.f32 %v1546, 0.25
    %v1675 = vmul.f32 %v1547, 0.25
    %v1676 = vmul.f32 %v1548, 0.25
    %v1677 = vmul.f32 %v1549, 0.25
    %v1678 = vmul.f32 %v1550, 0.25
    %v1679 = vmul.f32 %v1551, 0.25
    %v1680 = vmul.f32 %v1552, 0.25
    %v1681 = vmul.f32 %v1553, 0.25
    %v1682 = vmul.f32 %v1554, 0.25
    %v1683 = vmul.f32 %v1555, 0.25
    %v1684 = vmul.f32 %v1556, 0.25
    %v1685 = vmul.f32 %v1557, 0.25
    %v1686 = vmul.f32 %v1558, 0.25
    %v1687 = vmul.f32 %v1559, 0.25
    %v1688 = vmul.f32 %v1560, 0.25
    %v1689 = vmul.f32 %v1561, 0.25
    %v1690 = vmul.f32 %v1562, 0.25
    %v1691 = vmul.f32 %v1563, 0.25
    %v1692 = vmul.f32 %v1564, 0.25
    %v1693 = vmul.f32 %v1565, 0.25
    %v1694 = vmul.f32 %v1566, 0.25
    %v1695 = vmul.f32 %v1567, 0.25
    %v1696 = vmul.f32 %v1568, 0.25
    %v1697 = vmul.f32 %v1569, 0.25
    %v1698 = vmul.f32 %v1570, 0.25
    %v1699 = vmul.f32 %v1571, 0.25
    %v1700 = vmul.f32 %v1572, 0.25
    %v1701 = vmul.f32 %v1573, 0.25
    %v1702 = vmul.f32 %v1574, 0.25
    %v1703 = vmul.f32 %v1575, 0.25
    %v1704 = vmul.f32 %v1576, 0.25
    %v1705 = vmul.f32 %v1577, 0.25
    %v1706 = vmul.f32 %v1578, 0.25
    %v1707 = vmul.f32 %v1579, 0.25
    %v1708 = vmul.f32 %v1580, 0.25
    %v1709 = vmul.f32 %v1581, 0.25
    %v1710 = vmul.f32 %v1582, 0.25
    %v1711 = vmul.f32 %v1583, 0.25
    %v1712 = vmul.f32 %v1584, 0.25
    %v1713 = vmul.f32 %v1585, 0.25
    %v1714 = vmul.f32 %v1586, 0.25
    %v1715 = vmul.f32 %v1587, 0.25
    %v1716 = vmul.f32 %v1588, 0.25
    %v1717 = vmul.f32 %v1589, 0.25
    %v1718 = vmul.f32 %v1590, 0.25
    %v1719 = vmul.f32 %v1591, 0.25
    %v1720 = vmul.f32 %v1592, 0.25
    %v1721 = vmul.f32 %v1593, 0.25
    %v1722 = vmul.f32 %v1594, 0.25
    %v1723 = vmul.f32 %v1595, 0.25
    %v1724 = vmul.f32 %v1596, 0.25
    %v1725 = vmul.f32 %v1597, 0.25
    %v1726 = vmul.f32 %v1598, 0.25
    %v1727 = vmul.f32 %v1599, 0.25
    %v1728 = vmul.f32 %v1600, 0.25
    %v1729 = vmul.f32 %v1601, 0.25
    %v1730 = vmul.f32 %v1602, 0.25
    %v1731 = vmul.f32 %v1603, 0.25
    %v1732 = vmul.f32 %v1604, 0.25
    %v1733 = vmul.f32 %v1605, 0.25
    %v1734 = vmul.f32 %v1606, 0.25
    %v1735 = vmul.f32 %v1607, 0.25
    %v1736 = vmul.f32 %v1608, 0.25
    %v1737 = vmul.f32 %v1609, 0.25
    %v1738 = vmul.f32 %v1610, 0.25
    %v1739 = vmul.f32 %v1611, 0.25
    %v1740 = vmul.f32 %v1612, 0.25
    %v1741 = vmul.f32 %v1613, 0.25
    %v1742 = vmul.f32 %v1614, 0.25
    %v1743 = vmul.f32 %v1615, 0.25
    %v1744 = vmul.f32 %v1616, 0.25
    %v1745 = vmul.f32 %v1617, 0.25
    %v1746 = vmul.f32 %v1618, 0.25
    %v1747 = vmul.f32 %v1619, 0.25
    %v1748 = vmul.f32 %v1620, 0.25
    %v1749 = vmul.f32 %v1621, 0.25
    %v1750 = vmul.f32 %v1622, 0.25
    %v1751 = vmul.f32 %v1623, 0.25
    %v1752 = vmul.f32 %v1624, 0.25
    %v1753 = vmul.f32 %v1625, 0.25
    %v1754 = vmul.f32 %v1626, 0.25
    %v1755 = vmul.f32 %v1627, 0.25
    %v1756 = vmul.f32 %v1628, 0.25
    %v1757 = vmul.f32 %v1629, 0.25
    %v1758 = vmul.f32 %v1630, 0.25
    %v1759 = vmul.f32 %v1631, 0.25
    %v1760 = vmul.f32 %v1632, 0.25
    %v1761 = vmul.f32 %v1633, 0.25
    %v1762 = vmul.f32 %v1634, 0.25
    %v1763 = vmul.f32 %v1635, 0.25
    %v1764 = vmul.f32 %v1636, 0.25
    %v1765 = vmul.f32 %v1637, 0.25
    %v1766 = vmul.f32 %v1638, 0.25
    %v1767 = vmul.f32 %v1639, 0.25
    %v1768 = vmul.f32 %v1640, 0.25
    %v1769 = vmul.f32 %v1641, 0.25
    %v1770 = vmul.f32 %v1642, 0.25
    %v1771 = vmul.f32 %v1643, 0.25
    %v1772 = vmul.f32 %v1644, 0.25
    %v1773 = vmul.f32 %v1645, 0.25
    %v1774 = vmul.f32 %v1646, 0.25
    %v1775 = vsub.f32 %v170, %v1647
    %v1776 = vsub.f32 %v175, %v1648
    %v1777 = vsub.f32 %v180, %v1649
    %v1778 = vsub.f32 %v185, %v1650
    %v1779 = vsub.f32 %v190, %v1651
    %v1780 = vsub.f32 %v195, %v1652
    %v1781 = vsub.f32 %v200, %v1653
    %v1782 = vsub.f32 %v205, %v1654
    %v1783 = vsub.f32 %v210, %v1655
    %v1784 = vsub.f32 %v215, %v1656
    %v1785 = vsub.f32 %v220, %v1657
    %v1786 = vsub.f32 %v225, %v1658
    %v1787 = vsub.f32 %v230, %v1659
    %v1788 = vsub.f32 %v235, %v1660
    %v1789 = vsub.f32 %v240, %v1661
    %v1790 = vsub.f32 %v245, %v1662
    %v1791 = vsub.f32 %v315, %v1663
    %v1792 = vsub.f32 %v320, %v1664
    %v1793 = vsub.f32 %v325, %v1665
    %v1794 = vsub.f32 %v330, %v1666
    %v1795 = vsub.f32 %v335, %v1667
    %v1796 = vsub.f32 %v340, %v1668
    %v1797 = vsub.f32 %v345, %v1669
    %v1798 = vsub.f32 %v350, %v1670
    %v1799 = vsub.f32 %v355, %v1671
    %v1800 = vsub.f32 %v360, %v1672
    %v1801 = vsub.f32 %v365, %v1673
    %v1802 = vsub.f32 %v370, %v1674
    %v1803 = vsub.f32 %v375, %v1675
    %v1804 = vsub.f32 %v380, %v1676
    %v1805 = vsub.f32 %v385, %v1677
    %v1806 = vsub.f32 %v390, %v1678
    %v1807 = vsub.f32 %v460, %v1679
    %v1808 = vsub.f32 %v465, %v1680
    %v1809 = vsub.f32 %v470, %v1681
    %v1810 = vsub.f32 %v475, %v1682
    %v1811 = vsub.f32 %v480, %v1683
    %v1812 = vsub.f32 %v485, %v1684
    %v1813 = vsub.f32 %v490, %v1685
    %v1814 = vsub.f32 %v495, %v1686
    %v1815 = vsub.f32 %v500, %v1687
    %v1816 = vsub.f32 %v505, %v1688
    %v1817 = vsub.f32 %v510, %v1689
    %v1818 = vsub.f32 %v515, %v1690
    %v1819 = vsub.f32 %v520, %v1691
    %v1820 = vsub.f32 %v525, %v1692
    %v1821 = vsub.f32 %v530, %v1693
    %v1822 = vsub.f32 %v535, %v1694
    %v1823 = vsub.f32 %v605, %v1695
    %v1824 = vsub.f32 %v610, %v1696
    %v1825 = vsub.f32 %v615, %v1697
    %v1826 = vsub.f32 %v620, %v1698
    %v1827 = vsub.f32 %v625, %v1699
    %v1828 = vsub.f32 %v630, %v1700
    %v1829 = vsub.f32 %v635, %v1701
    %v1830 = vsub.f32 %v640, %v1702
    %v1831 = vsub.f32 %v645, %v1703
    %v1832 = vsub.f32 %v650, %v1704
    %v1833 = vsub.f32 %v655, %v1705
    %v1834 = vsub.f32 %v660, %v1706
    %v1835 = vsub.f32 %v665, %v1707
    %v1836 = vsub.f32 %v670, %v1708
    %v1837 = vsub.f32 %v675, %v1709
    %v1838 = vsub.f32 %v680, %v1710
    %v1839 = vsub.f32 %v750, %v1711
    %v1840 = vsub.f32 %v755, %v1712
    %v1841 = vsub.f32 %v760, %v1713
    %v1842 = vsub.f32 %v765, %v1714
    %v1843 = vsub.f32 %v770, %v1715
    %v1844 = vsub.f32 %v775, %v1716
    %v1845 = vsub.f32 %v780, %v1717
    %v1846 = vsub.f32 %v785, %v1718
    %v1847 = vsub.f32 %v790, %v1719
    %v1848 = vsub.f32 %v795, %v1720
    %v1849 = vsub.f32 %v800, %v1721
    %v1850 = vsub.f32 %v805, %v1722
    %v1851 = vsub.f32 %v810, %v1723
    %v1852 = vsub.f32 %v815, %v1724
    %v1853 = vsub.f32 %v820, %v1725
    %v1854 = vsub.f32 %v825, %v1726
    %v1855 = vsub.f32 %v895, %v1727
    %v1856 = vsub.f32 %v900, %v1728
    %v1857 = vsub.f32 %v905, %v1729
    %v1858 = vsub.f32 %v910, %v1730
    %v1859 = vsub.f32 %v915, %v1731
    %v1860 = vsub.f32 %v920, %v1732
    %v1861 = vsub.f32 %v925, %v1733
    %v1862 = vsub.f32 %v930, %v1734
    %v1863 = vsub.f32 %v935, %v1735
    %v1864 = vsub.f32 %v940, %v1736
    %v1865 = vsub.f32 %v945, %v1737
    %v1866 = vsub.f32 %v950, %v1738
    %v1867 = vsub.f32 %v955, %v1739
    %v1868 = vsub.f32 %v960, %v1740
    %v1869 = vsub.f32 %v965, %v1741
    %v1870 = vsub.f32 %v970, %v1742
    %v1871 = vsub.f32 %v1040, %v1743
    %v1872 = vsub.f32 %v1045, %v1744
    %v1873 = vsub.f32 %v1050, %v1745
    %v1874 = vsub.f32 %v1055, %v1746
    %v1875 = vsub.f32 %v1060, %v1747
    %v1876 = vsub.f32 %v1065, %v1748
    %v1877 = vsub.f32 %v1070, %v1749
    %v1878 = vsub.f32 %v1075, %v1750
    %v1879 = vsub.f32 %v1080, %v1751
    %v1880 = vsub.f32 %v1085, %v1752
    %v1881 = vsub.f32 %v1090, %v1753
    %v1882 = vsub.f32 %v1095, %v1754
    %v1883 = vsub.f32 %v1100, %v1755
    %v1884 = vsub.f32 %v1105, %v1756
    %v1885 = vsub.f32 %v1110, %v1757
    %v1886 = vsub.f32 %v1115, %v1758
    %v1887 = vsub.f32 %v1185, %v1759
    %v1888 = vsub.f32 %v1190, %v1760
    %v1889 = vsub.f32 %v1195, %v1761
    %v1890 = vsub.f32 %v1200, %v1762
    %v1891 = vsub.f32 %v1205, %v1763
    %v1892 = vsub.f32 %v1210, %v1764
    %v1893 = vsub.f32 %v1215, %v1765
    %v1894 = vsub.f32 %v1220, %v1766
    %v1895 = vsub.f32 %v1225, %v1767
    %v1896 = vsub.f32 %v1230, %v1768
    %v1897 = vsub.f32 %v1235, %v1769
    %v1898 = vsub.f32 %v1240, %v1770
    %v1899 = vsub.f32 %v1245, %v1771
    %v1900 = vsub.f32 %v1250, %v1772
    %v1901 = vsub.f32 %v1255, %v1773
    %v1902 = vsub.f32 %v1260, %v1774
    %v1903 = vmul.f32 %v1775, 6.2831855
    %v1904 = vmul.f32 %v1776, 6.2831855
    %v1905 = vmul.f32 %v1777, 6.2831855
    %v1906 = vmul.f32 %v1778, 6.2831855
    %v1907 = vmul.f32 %v1779, 6.2831855
    %v1908 = vmul.f32 %v1780, 6.2831855
    %v1909 = vmul.f32 %v1781, 6.2831855
    %v1910 = vmul.f32 %v1782, 6.2831855
    %v1911 = vmul.f32 %v1783, 6.2831855
    %v1912 = vmul.f32 %v1784, 6.2831855
    %v1913 = vmul.f32 %v1785, 6.2831855
    %v1914 = vmul.f32 %v1786, 6.2831855
    %v1915 = vmul.f32 %v1787, 6.2831855
    %v1916 = vmul.f32 %v1788, 6.2831855
    %v1917 = vmul.f32 %v1789, 6.2831855
    %v1918 = vmul.f32 %v1790, 6.2831855
    %v1919 = vmul.f32 %v1791, 6.2831855
    %v1920 = vmul.f32 %v1792, 6.2831855
    %v1921 = vmul.f32 %v1793, 6.2831855
    %v1922 = vmul.f32 %v1794, 6.2831855
    %v1923 = vmul.f32 %v1795, 6.2831855
    %v1924 = vmul.f32 %v1796, 6.2831855
    %v1925 = vmul.f32 %v1797, 6.2831855
    %v1926 = vmul.f32 %v1798, 6.2831855
    %v1927 = vmul.f32 %v1799, 6.2831855
    %v1928 = vmul.f32 %v1800, 6.2831855
    %v1929 = vmul.f32 %v1801, 6.2831855
    %v1930 = vmul.f32 %v1802, 6.2831855
    %v1931 = vmul.f32 %v1803, 6.2831855
    %v1932 = vmul.f32 %v1804, 6.2831855
    %v1933 = vmul.f32 %v1805, 6.2831855
    %v1934 = vmul.f32 %v1806, 6.2831855
    %v1935 = vmul.f32 %v1807, 6.2831855
    %v1936 = vmul.f32 %v1808, 6.2831855
    %v1937 = vmul.f32 %v1809, 6.2831855
    %v1938 = vmul.f32 %v1810, 6.2831855
    %v1939 = vmul.f32 %v1811, 6.2831855
    %v1940 = vmul.f32 %v1812, 6.2831855
    %v1941 = vmul.f32 %v1813, 6.2831855
    %v1942 = vmul.f32 %v1814, 6.2831855
    %v1943 = vmul.f32 %v1815, 6.2831855
    %v1944 = vmul.f32 %v1816, 6.2831855
    %v1945 = vmul.f32 %v1817, 6.2831855
    %v1946 = vmul.f32 %v1818, 6.2831855
    %v1947 = vmul.f32 %v1819, 6.2831855
    %v1948 = vmul.f32 %v1820, 6.2831855
    %v1949 = vmul.f32 %v1821, 6.2831855
    %v1950 = vmul.f32 %v1822, 6.2831855
    %v1951 = vmul.f32 %v1823, 6.2831855
    %v1952 = vmul.f32 %v1824, 6.2831855
    %v1953 = vmul.f32 %v1825, 6.2831855
    %v1954 = vmul.f32 %v1826, 6.2831855
    %v1955 = vmul.f32 %v1827, 6.2831855
    %v1956 = vmul.f32 %v1828, 6.2831855
    %v1957 = vmul.f32 %v1829, 6.2831855
    %v1958 = vmul.f32 %v1830, 6.2831855
    %v1959 = vmul.f32 %v1831, 6.2831855
    %v1960 = vmul.f32 %v1832, 6.2831855
    %v1961 = vmul.f32 %v1833, 6.2831855
    %v1962 = vmul.f32 %v1834, 6.2831855
    %v1963 = vmul.f32 %v1835, 6.2831855
    %v1964 = vmul.f32 %v1836, 6.2831855
    %v1965 = vmul.f32 %v1837, 6.2831855
    %v1966 = vmul.f32 %v1838, 6.2831855
    %v1967 = vmul.f32 %v1839, 6.2831855
    %v1968 = vmul.f32 %v1840, 6.2831855
    %v1969 = vmul.f32 %v1841, 6.2831855
    %v1970 = vmul.f32 %v1842, 6.2831855
    %v1971 = vmul.f32 %v1843, 6.2831855
    %v1972 = vmul.f32 %v1844, 6.2831855
    %v1973 = vmul.f32 %v1845, 6.2831855
    %v1974 = vmul.f32 %v1846, 6.2831855
    %v1975 = vmul.f32 %v1847, 6.2831855
    %v1976 = vmul.f32 %v1848, 6.2831855
    %v1977 = vmul.f32 %v1849, 6.2831855
    %v1978 = vmul.f32 %v1850, 6.2831855
    %v1979 = vmul.f32 %v1851, 6.2831855
    %v1980 = vmul.f32 %v1852, 6.2831855
    %v1981 = vmul.f32 %v1853, 6.2831855
    %v1982 = vmul.f32 %v1854, 6.2831855
    %v1983 = vmul.f32 %v1855, 6.2831855
    %v1984 = vmul.f32 %v1856, 6.2831855
    %v1985 = vmul.f32 %v1857, 6.2831855
    %v1986 = vmul.f32 %v1858, 6.2831855
    %v1987 = vmul.f32 %v1859, 6.2831855
    %v1988 = vmul.f32 %v1860, 6.2831855
    %v1989 = vmul.f32 %v1861, 6.2831855
    %v1990 = vmul.f32 %v1862, 6.2831855
    %v1991 = vmul.f32 %v1863, 6.2831855
    %v1992 = vmul.f32 %v1864, 6.2831855
    %v1993 = vmul.f32 %v1865, 6.2831855
    %v1994 = vmul.f32 %v1866, 6.2831855
    %v1995 = vmul.f32 %v1867, 6.2831855
    %v1996 = vmul.f32 %v1868, 6.2831855
    %v1997 = vmul.f32 %v1869, 6.2831855
    %v1998 = vmul.f32 %v1870, 6.2831855
    %v1999 = vmul.f32 %v1871, 6.2831855
    %v2000 = vmul.f32 %v1872, 6.2831855
    %v2001 = vmul.f32 %v1873, 6.2831855
    %v2002 = vmul.f32 %v1874, 6.2831855
    %v2003 = vmul.f32 %v1875, 6.2831855
    %v2004 = vmul.f32 %v1876, 6.2831855
    %v2005 = vmul.f32 %v1877, 6.2831855
    %v2006 = vmul.f32 %v1878, 6.2831855
    %v2007 = vmul.f32 %v1879, 6.2831855
    %v2008 = vmul.f32 %v1880, 6.2831855
    %v2009 = vmul.f32 %v1881, 6.2831855
    %v2010 = vmul.f32 %v1882, 6.2831855
    %v2011 = vmul.f32 %v1883, 6.2831855
    %v2012 = vmul.f32 %v1884, 6.2831855
    %v2013 = vmul.f32 %v1885, 6.2831855
    %v2014 = vmul.f32 %v1886, 6.2831855
    %v2015 = vmul.f32 %v1887, 6.2831855
    %v2016 = vmul.f32 %v1888, 6.2831855
    %v2017 = vmul.f32 %v1889, 6.2831855
    %v2018 = vmul.f32 %v1890, 6.2831855
    %v2019 = vmul.f32 %v1891, 6.2831855
    %v2020 = vmul.f32 %v1892, 6.2831855
    %v2021 = vmul.f32 %v1893, 6.2831855
    %v2022 = vmul.f32 %v1894, 6.2831855
    %v2023 = vmul.f32 %v1895, 6.2831855
    %v2024 = vmul.f32 %v1896, 6.2831855
    %v2025 = vmul.f32 %v1897, 6.2831855
    %v2026 = vmul.f32 %v1898, 6.2831855
    %v2027 = vmul.f32 %v1899, 6.2831855
    %v2028 = vmul.f32 %v1900, 6.2831855
    %v2029 = vmul.f32 %v1901, 6.2831855
    %v2030 = vmul.f32 %v1902, 6.2831855
    %v2031 = vcvt.f32.s32.to.zero.pseudo %v1519
    %v2032 = vcvt.f32.s32.to.zero.pseudo %v1520
    %v2033 = vcvt.f32.s32.to.zero.pseudo %v1521
    %v2034 = vcvt.f32.s32.to.zero.pseudo %v1522
    %v2035 = vcvt.f32.s32.to.zero.pseudo %v1523
    %v2036 = vcvt.f32.s32.to.zero.pseudo %v1524
    %v2037 = vcvt.f32.s32.to.zero.pseudo %v1525
    %v2038 = vcvt.f32.s32.to.zero.pseudo %v1526
    %v2039 = vcvt.f32.s32.to.zero.pseudo %v1527
    %v2040 = vcvt.f32.s32.to.zero.pseudo %v1528
    %v2041 = vcvt.f32.s32.to.zero.pseudo %v1529
    %v2042 = vcvt.f32.s32.to.zero.pseudo %v1530
    %v2043 = vcvt.f32.s32.to.zero.pseudo %v1531
    %v2044 = vcvt.f32.s32.to.zero.pseudo %v1532
    %v2045 = vcvt.f32.s32.to.zero.pseudo %v1533
    %v2046 = vcvt.f32.s32.to.zero.pseudo %v1534
    %v2047 = vcvt.f32.s32.to.zero.pseudo %v1535
    %v2048 = vcvt.f32.s32.to.zero.pseudo %v1536
    %v2049 = vcvt.f32.s32.to.zero.pseudo %v1537
    %v2050 = vcvt.f32.s32.to.zero.pseudo %v1538
    %v2051 = vcvt.f32.s32.to.zero.pseudo %v1539
    %v2052 = vcvt.f32.s32.to.zero.pseudo %v1540
    %v2053 = vcvt.f32.s32.to.zero.pseudo %v1541
    %v2054 = vcvt.f32.s32.to.zero.pseudo %v1542
    %v2055 = vcvt.f32.s32.to.zero.pseudo %v1543
    %v2056 = vcvt.f32.s32.to.zero.pseudo %v1544
    %v2057 = vcvt.f32.s32.to.zero.pseudo %v1545
    %v2058 = vcvt.f32.s32.to.zero.pseudo %v1546
    %v2059 = vcvt.f32.s32.to.zero.pseudo %v1547
    %v2060 = vcvt.f32.s32.to.zero.pseudo %v1548
    %v2061 = vcvt.f32.s32.to.zero.pseudo %v1549
    %v2062 = vcvt.f32.s32.to.zero.pseudo %v1550
    %v2063 = vcvt.f32.s32.to.zero.pseudo %v1551
    %v2064 = vcvt.f32.s32.to.zero.pseudo %v1552
    %v2065 = vcvt.f32.s32.to.zero.pseudo %v1553
    %v2066 = vcvt.f32.s32.to.zero.pseudo %v1554
    %v2067 = vcvt.f32.s32.to.zero.pseudo %v1555
    %v2068 = vcvt.f32.s32.to.zero.pseudo %v1556
    %v2069 = vcvt.f32.s32.to.zero.pseudo %v1557
    %v2070 = vcvt.f32.s32.to.zero.pseudo %v1558
    %v2071 = vcvt.f32.s32.to.zero.pseudo %v1559
    %v2072 = vcvt.f32.s32.to.zero.pseudo %v1560
    %v2073 = vcvt.f32.s32.to.zero.pseudo %v1561
    %v2074 = vcvt.f32.s32.to.zero.pseudo %v1562
    %v2075 = vcvt.f32.s32.to.zero.pseudo %v1563
    %v2076 = vcvt.f32.s32.to.zero.pseudo %v1564
    %v2077 = vcvt.f32.s32.to.zero.pseudo %v1565
    %v2078 = vcvt.f32.s32.to.zero.pseudo %v1566
    %v2079 = vcvt.f32.s32.to.zero.pseudo %v1567
    %v2080 = vcvt.f32.s32.to.zero.pseudo %v1568
    %v2081 = vcvt.f32.s32.to.zero.pseudo %v1569
    %v2082 = vcvt.f32.s32.to.zero.pseudo %v1570
    %v2083 = vcvt.f32.s32.to.zero.pseudo %v1571
    %v2084 = vcvt.f32.s32.to.zero.pseudo %v1572
    %v2085 = vcvt.f32.s32.to.zero.pseudo %v1573
    %v2086 = vcvt.f32.s32.to.zero.pseudo %v1574
    %v2087 = vcvt.f32.s32.to.zero.pseudo %v1575
    %v2088 = vcvt.f32.s32.to.zero.pseudo %v1576
    %v2089 = vcvt.f32.s32.to.zero.pseudo %v1577
    %v2090 = vcvt.f32.s32.to.zero.pseudo %v1578
    %v2091 = vcvt.f32.s32.to.zero.pseudo %v1579
    %v2092 = vcvt.f32.s32.to.zero.pseudo %v1580
    %v2093 = vcvt.f32.s32.to.zero.pseudo %v1581
    %v2094 = vcvt.f32.s32.to.zero.pseudo %v1582
    %v2095 = vcvt.f32.s32.to.zero.pseudo %v1583
    %v2096 = vcvt.f32.s32.to.zero.pseudo %v1584
    %v2097 = vcvt.f32.s32.to.zero.pseudo %v1585
    %v2098 = vcvt.f32.s32.to.zero.pseudo %v1586
    %v2099 = vcvt.f32.s32.to.zero.pseudo %v1587
    %v2100 = vcvt.f32.s32.to.zero.pseudo %v1588
    %v2101 = vcvt.f32.s32.to.zero.pseudo %v1589
    %v2102 = vcvt.f32.s32.to.zero.pseudo %v1590
    %v2103 = vcvt.f32.s32.to.zero.pseudo %v1591
    %v2104 = vcvt.f32.s32.to.zero.pseudo %v1592
    %v2105 = vcvt.f32.s32.to.zero.pseudo %v1593
    %v2106 = vcvt.f32.s32.to.zero.pseudo %v1594
    %v2107 = vcvt.f32.s32.to.zero.pseudo %v1595
    %v2108 = vcvt.f32.s32.to.zero.pseudo %v1596
    %v2109 = vcvt.f32.s32.to.zero.pseudo %v1597
    %v2110 = vcvt.f32.s32.to.zero.pseudo %v1598
    %v2111 = vcvt.f32.s32.to.zero.pseudo %v1599
    %v2112 = vcvt.f32.s32.to.zero.pseudo %v1600
    %v2113 = vcvt.f32.s32.to.zero.pseudo %v1601
    %v2114 = vcvt.f32.s32.to.zero.pseudo %v1602
    %v2115 = vcvt.f32.s32.to.zero.pseudo %v1603
    %v2116 = vcvt.f32.s32.to.zero.pseudo %v1604
    %v2117 = vcvt.f32.s32.to.zero.pseudo %v1605
    %v2118 = vcvt.f32.s32.to.zero.pseudo %v1606
    %v2119 = vcvt.f32.s32.to.zero.pseudo %v1607
    %v2120 = vcvt.f32.s32.to.zero.pseudo %v1608
    %v2121 = vcvt.f32.s32.to.zero.pseudo %v1609
    %v2122 = vcvt.f32.s32.to.zero.pseudo %v1610
    %v2123 = vcvt.f32.s32.to.zero.pseudo %v1611
    %v2124 = vcvt.f32.s32.to.zero.pseudo %v1612
    %v2125 = vcvt.f32.s32.to.zero.pseudo %v1613
    %v2126 = vcvt.f32.s32.to.zero.pseudo %v1614
    %v2127 = vcvt.f32.s32.to.zero.pseudo %v1615
    %v2128 = vcvt.f32.s32.to.zero.pseudo %v1616
    %v2129 = vcvt.f32.s32.to.zero.pseudo %v1617
    %v2130 = vcvt.f32.s32.to.zero.pseudo %v1618
    %v2131 = vcvt.f32.s32.to.zero.pseudo %v1619
    %v2132 = vcvt.f32.s32.to.zero.pseudo %v1620
    %v2133 = vcvt.f32.s32.to.zero.pseudo %v1621
    %v2134 = vcvt.f32.s32.to.zero.pseudo %v1622
    %v2135 = vcvt.f32.s32.to.zero.pseudo %v1623
    %v2136 = vcvt.f32.s32.to.zero.pseudo %v1624
    %v2137 = vcvt.f32.s32.to.zero.pseudo %v1625
    %v2138 = vcvt.f32.s32.to.zero.pseudo %v1626
    %v2139 = vcvt.f32.s32.to.zero.pseudo %v1627
    %v2140 = vcvt.f32.s32.to.zero.pseudo %v1628
    %v2141 = vcvt.f32.s32.to.zero.pseudo %v1629
    %v2142 = vcvt.f32.s32.to.zero.pseudo %v1630
    %v2143 = vcvt.f32.s32.to.zero.pseudo %v1631
    %v2144 = vcvt.f32.s32.to.zero.pseudo %v1632
    %v2145 = vcvt.f32.s32.to.zero.pseudo %v1633
    %v2146 = vcvt.f32.s32.to.zero.pseudo %v1634
    %v2147 = vcvt.f32.s32.to.zero.pseudo %v1635
    %v2148 = vcvt.f32.s32.to.zero.pseudo %v1636
    %v2149 = vcvt.f32.s32.to.zero.pseudo %v1637
    %v2150 = vcvt.f32.s32.to.zero.pseudo %v1638
    %v2151 = vcvt.f32.s32.to.zero.pseudo %v1639
    %v2152 = vcvt.f32.s32.to.zero.pseudo %v1640
    %v2153 = vcvt.f32.s32.to.zero.pseudo %v1641
    %v2154 = vcvt.f32.s32.to.zero.pseudo %v1642
    %v2155 = vcvt.f32.s32.to.zero.pseudo %v1643
    %v2156 = vcvt.f32.s32.to.zero.pseudo %v1644
    %v2157 = vcvt.f32.s32.to.zero.pseudo %v1645
    %v2158 = vcvt.f32.s32.to.zero.pseudo %v1646
    %v2159 = vand.u32 %v2031, 3
    %v2160 = vand.u32 %v2032, 3
    %v2161 = vand.u32 %v2033, 3
    %v2162 = vand.u32 %v2034, 3
    %v2163 = vand.u32 %v2035, 3
    %v2164 = vand.u32 %v2036, 3
    %v2165 = vand.u32 %v2037, 3
    %v2166 = vand.u32 %v2038, 3
    %v2167 = vand.u32 %v2039, 3
    %v2168 = vand.u32 %v2040, 3
    %v2169 = vand.u32 %v2041, 3
    %v2170 = vand.u32 %v2042, 3
    %v2171 = vand.u32 %v2043, 3
    %v2172 = vand.u32 %v2044, 3
    %v2173 = vand.u32 %v2045, 3
    %v2174 = vand.u32 %v2046, 3
    %v2175 = vand.u32 %v2047, 3
    %v2176 = vand.u32 %v2048, 3
    %v2177 = vand.u32 %v2049, 3
    %v2178 = vand.u32 %v2050, 3
    %v2179 = vand.u32 %v2051, 3
    %v2180 = vand.u32 %v2052, 3
    %v2181 = vand.u32 %v2053, 3
    %v2182 = vand.u32 %v2054, 3
    %v2183 = vand.u32 %v2055, 3
    %v2184 = vand.u32 %v2056, 3
    %v2185 = vand.u32 %v2057, 3
    %v2186 = vand.u32 %v2058, 3
    %v2187 = vand.u32 %v2059, 3
    %v2188 = vand.u32 %v2060, 3
    %v2189 = vand.u32 %v2061, 3
    %v2190 = vand.u32 %v2062, 3
    %v2191 = vand.u32 %v2063, 3
    %v2192 = vand.u32 %v2064, 3
    %v2193 = vand.u32 %v2065, 3
    %v2194 = vand.u32 %v2066, 3
    %v2195 = vand.u32 %v2067, 3
    %v2196 = vand.u32 %v2068, 3
    %v2197 = vand.u32 %v2069, 3
    %v2198 = vand.u32 %v2070, 3
    %v2199 = vand.u32 %v2071, 3
    %v2200 = vand.u32 %v2072, 3
    %v2201 = vand.u32 %v2073, 3
    %v2202 = vand.u32 %v2074, 3
    %v2203 = vand.u32 %v2075, 3
    %v2204 = vand.u32 %v2076, 3
    %v2205 = vand.u32 %v2077, 3
    %v2206 = vand.u32 %v2078, 3
    %v2207 = vand.u32 %v2079, 3
    %v2208 = vand.u32 %v2080, 3
    %v2209 = vand.u32 %v2081, 3
    %v2210 = vand.u32 %v2082, 3
    %v2211 = vand.u32 %v2083, 3
    %v2212 = vand.u32 %v2084, 3
    %v2213 = vand.u32 %v2085, 3
    %v2214 = vand.u32 %v2086, 3
    %v2215 = vand.u32 %v2087, 3
    %v2216 = vand.u32 %v2088, 3
    %v2217 = vand.u32 %v2089, 3
    %v2218 = vand.u32 %v2090, 3
    %v2219 = vand.u32 %v2091, 3
    %v2220 = vand.u32 %v2092, 3
    %v2221 = vand.u32 %v2093, 3
    %v2222 = vand.u32 %v2094, 3
    %v2223 = vand.u32 %v2095, 3
    %v2224 = vand.u32 %v2096, 3
    %v2225 = vand.u32 %v2097, 3
    %v2226 = vand.u32 %v2098, 3
    %v2227 = vand.u32 %v2099, 3
    %v2228 = vand.u32 %v2100, 3
    %v2229 = vand.u32 %v2101, 3
    %v2230 = vand.u32 %v2102, 3
    %v2231 = vand.u32 %v2103, 3
    %v2232 = vand.u32 %v2104, 3
    %v2233 = vand.u32 %v2105, 3
    %v2234 = vand.u32 %v2106, 3
    %v2235 = vand.u32 %v2107, 3
    %v2236 = vand.u32 %v2108, 3
    %v2237 = vand.u32 %v2109, 3
    %v2238 = vand.u32 %v2110, 3
    %v2239 = vand.u32 %v2111, 3
    %v2240 = vand.u32 %v2112, 3
    %v2241 = vand.u32 %v2113, 3
    %v2242 = vand.u32 %v2114, 3
    %v2243 = vand.u32 %v2115, 3
    %v2244 = vand.u32 %v2116, 3
    %v2245 = vand.u32 %v2117, 3
    %v2246 = vand.u32 %v2118, 3
    %v2247 = vand.u32 %v2119, 3
    %v2248 = vand.u32 %v2120, 3
    %v2249 = vand.u32 %v2121, 3
    %v2250 = vand.u32 %v2122, 3
    %v2251 = vand.u32 %v2123, 3
    %v2252 = vand.u32 %v2124, 3
    %v2253 = vand.u32 %v2125, 3
    %v2254 = vand.u32 %v2126, 3
    %v2255 = vand.u32 %v2127, 3
    %v2256 = vand.u32 %v2128, 3
    %v2257 = vand.u32 %v2129, 3
    %v2258 = vand.u32 %v2130, 3
    %v2259 = vand.u32 %v2131, 3
    %v2260 = vand.u32 %v2132, 3
    %v2261 = vand.u32 %v2133, 3
    %v2262 = vand.u32 %v2134, 3
    %v2263 = vand.u32 %v2135, 3
    %v2264 = vand.u32 %v2136, 3
    %v2265 = vand.u32 %v2137, 3
    %v2266 = vand.u32 %v2138, 3
    %v2267 = vand.u32 %v2139, 3
    %v2268 = vand.u32 %v2140, 3
    %v2269 = vand.u32 %v2141, 3
    %v2270 = vand.u32 %v2142, 3
    %v2271 = vand.u32 %v2143, 3
    %v2272 = vand.u32 %v2144, 3
    %v2273 = vand.u32 %v2145, 3
    %v2274 = vand.u32 %v2146, 3
    %v2275 = vand.u32 %v2147, 3
    %v2276 = vand.u32 %v2148, 3
    %v2277 = vand.u32 %v2149, 3
    %v2278 = vand.u32 %v2150, 3
    %v2279 = vand.u32 %v2151, 3
    %v2280 = vand.u32 %v2152, 3
    %v2281 = vand.u32 %v2153, 3
    %v2282 = vand.u32 %v2154, 3
    %v2283 = vand.u32 %v2155, 3
    %v2284 = vand.u32 %v2156, 3
    %v2285 = vand.u32 %v2157, 3
    %v2286 = vand.u32 %v2158, 3
    %v2287 = vmul.f32 %v1903, %v1903
    %v2288 = vmul.f32 %v1904, %v1904
    %v2289 = vmul.f32 %v1905, %v1905
    %v2290 = vmul.f32 %v1906, %v1906
    %v2291 = vmul.f32 %v1907, %v1907
    %v2292 = vmul.f32 %v1908, %v1908
    %v2293 = vmul.f32 %v1909, %v1909
    %v2294 = vmul.f32 %v1910, %v1910
    %v2295 = vmul.f32 %v1911, %v1911
    %v2296 = vmul.f32 %v1912, %v1912
    %v2297 = vmul.f32 %v1913, %v1913
    %v2298 = vmul.f32 %v1914, %v1914
    %v2299 = vmul.f32 %v1915, %v1915
    %v2300 = vmul.f32 %v1916, %v1916
    %v2301 = vmul.f32 %v1917, %v1917
    %v2302 = vmul.f32 %v1918, %v1918
    %v2303 = vmul.f32 %v1919, %v1919
    %v2304 = vmul.f32 %v1920, %v1920
    %v2305 = vmul.f32 %v1921, %v1921
    %v2306 = vmul.f32 %v1922, %v1922
    %v2307 = vmul.f32 %v1923, %v1923
    %v2308 = vmul.f32 %v1924, %v1924
    %v2309 = vmul.f32 %v1925, %v1925
    %v2310 = vmul.f32 %v1926, %v1926
    %v2311 = vmul.f32 %v1927, %v1927
    %v2312 = vmul.f32 %v1928, %v1928
    %v2313 = vmul.f32 %v1929, %v1929
    %v2314 = vmul.f32 %v1930, %v1930
    %v2315 = vmul.f32 %v1931, %v1931
    %v2316 = vmul.f32 %v1932, %v1932
    %v2317 = vmul.f32 %v1933, %v1933
    %v2318 = vmul.f32 %v1934, %v1934
    %v2319 = vmul.f32 %v1935, %v1935
    %v2320 = vmul.f32 %v1936, %v1936
    %v2321 = vmul.f32 %v1937, %v1937
    %v2322 = vmul.f32 %v1938, %v1938
    %v2323 = vmul.f32 %v1939, %v1939
    %v2324 = vmul.f32 %v1940, %v1940
    %v2325 = vmul.f32 %v1941, %v1941
    %v2326 = vmul.f32 %v1942, %v1942
    %v2327 = vmul.f32 %v1943, %v1943
    %v2328 = vmul.f32 %v1944, %v1944
    %v2329 = vmul.f32 %v1945, %v1945
    %v2330 = vmul.f32 %v1946, %v1946
    %v2331 = vmul.f32 %v1947, %v1947
    %v2332 = vmul.f32 %v1948, %v1948
    %v2333 = vmul.f32 %v1949, %v1949
    %v2334 = vmul.f32 %v1950, %v1950
    %v2335 = vmul.f32 %v1951, %v1951
    %v2336 = vmul.f32 %v1952, %v1952
    %v2337 = vmul.f32 %v1953, %v1953
    %v2338 = vmul.f32 %v1954, %v1954
    %v2339 = vmul.f32 %v1955, %v1955
    %v2340 = vmul.f32 %v1956, %v1956
    %v2341 = vmul.f32 %v1957, %v1957
    %v2342 = vmul.f32 %v1958, %v1958
    %v2343 = vmul.f32 %v1959, %v1959
    %v2344 = vmul.f32 %v1960, %v1960
    %v2345 = vmul.f32 %v1961, %v1961
    %v2346 = vmul.f32 %v1962, %v1962
    %v2347 = vmul.f32 %v1963, %v1963
    %v2348 = vmul.f32 %v1964, %v1964
    %v2349 = vmul.f32 %v1965, %v1965
    %v2350 = vmul.f32 %v1966, %v1966
    %v2351 = vmul.f32 %v1967, %v1967
    %v2352 = vmul.f32 %v1968, %v1968
    %v2353 = vmul.f32 %v1969, %v1969
    %v2354 = vmul.f32 %v1970, %v1970
    %v2355 = vmul.f32 %v1971, %v1971
    %v2356 = vmul.f32 %v1972, %v1972
    %v2357 = vmul.f32 %v1973, %v1973
    %v2358 = vmul.f32 %v1974, %v1974
    %v2359 = vmul.f32 %v1975, %v1975
    %v2360 = vmul.f32 %v1976, %v1976
    %v2361 = vmul.f32 %v1977, %v1977
    %v2362 = vmul.f32 %v1978, %v1978
    %v2363 = vmul.f32 %v1979, %v1979
    %v2364 = vmul.f32 %v1980, %v1980
    %v2365 = vmul.f32 %v1981, %v1981
    %v2366 = vmul.f32 %v1982, %v1982
    %v2367 = vmul.f32 %v1983, %v1983
    %v2368 = vmul.f32 %v1984, %v1984
    %v2369 = vmul.f32 %v1985, %v1985
    %v2370 = vmul.f32 %v1986, %v1986
    %v2371 = vmul.f32 %v1987, %v1987
    %v2372 = vmul.f32 %v1988, %v1988
    %v2373 = vmul.f32 %v1989, %v1989
    %v2374 = vmul.f32 %v1990, %v1990
    %v2375 = vmul.f32 %v1991, %v1991
    %v2376 = vmul.f32 %v1992, %v1992
    %v2377 = vmul.f32 %v1993, %v1993
    %v2378 = vmul.f32 %v1994, %v1994
    %v2379 = vmul.f32 %v1995, %v1995
    %v2380 = vmul.f32 %v1996, %v1996
    %v2381 = vmul.f32 %v1997, %v1997
    %v2382 = vmul.f32 %v1998, %v1998
    %v2383 = vmul.f32 %v1999, %v1999
    %v2384 = vmul.f32 %v2000, %v2000
    %v2385 = vmul.f32 %v2001, %v2001
    %v2386 = vmul.f32 %v2002, %v2002
    %v2387 = vmul.f32 %v2003, %v2003
    %v2388 = vmul.f32 %v2004, %v2004
    %v2389 = vmul.f32 %v2005, %v2005
    %v2390 = vmul.f32 %v2006, %v2006
    %v2391 = vmul.f32 %v2007, %v2007
    %v2392 = vmul.f32 %v2008, %v2008
    %v2393 = vmul.f32 %v2009, %v2009
    %v2394 = vmul.f32 %v2010, %v2010
    %v2395 = vmul.f32 %v2011, %v2011
    %v2396 = vmul.f32 %v2012, %v2012
    %v2397 = vmul.f32 %v2013, %v2013
    %v2398 = vmul.f32 %v2014, %v2014
    %v2399 = vmul.f32 %v2015, %v2015
    %v2400 = vmul.f32 %v2016, %v2016
    %v2401 = vmul.f32 %v2017, %v2017
    %v2402 = vmul.f32 %v2018, %v2018
    %v2403 = vmul.f32 %v2019, %v2019
    %v2404 = vmul.f32 %v2020, %v2020
    %v2405 = vmul.f32 %v2021, %v2021
    %v2406 = vmul.f32 %v2022, %v2022
    %v2407 = vmul.f32 %v2023, %v2023
    %v2408 = vmul.f32 %v2024, %v2024
    %v2409 = vmul.f32 %v2025, %v2025
    %v2410 = vmul.f32 %v2026, %v2026
    %v2411 = vmul.f32 %v2027, %v2027
    %v2412 = vmul.f32 %v2028, %v2028
    %v2413 = vmul.f32 %v2029, %v2029
    %v2414 = vmul.f32 %v2030, %v2030
    %v2415 = vmul.f32 %v2287, -0.0001984127
    %v2416 = vmul.f32 %v2288, -0.0001984127
    %v2417 = vmul.f32 %v2289, -0.0001984127
    %v2418 = vmul.f32 %v2290, -0.0001984127
    %v2419 = vmul.f32 %v2291, -0.0001984127
    %v2420 = vmul.f32 %v2292, -0.0001984127
    %v2421 = vmul.f32 %v2293, -0.0001984127
    %v2422 = vmul.f32 %v2294, -0.0001984127
    %v2423 = vmul.f32 %v2295, -0.0001984127
    %v2424 = vmul.f32 %v2296, -0.0001984127
    %v2425 = vmul.f32 %v2297, -0.0001984127
    %v2426 = vmul.f32 %v2298, -0.0001984127
    %v2427 = vmul.f32 %v2299, -0.0001984127
    %v2428 = vmul.f32 %v2300, -0.0001984127
    %v2429 = vmul.f32 %v2301, -0.0001984127
    %v2430 = vmul.f32 %v2302, -0.0001984127
    %v2431 = vmul.f32 %v2303, -0.0001984127
    %v2432 = vmul.f32 %v2304, -0.0001984127
    %v2433 = vmul.f32 %v2305, -0.0001984127
    %v2434 = vmul.f32 %v2306, -0.0001984127
    %v2435 = vmul.f32 %v2307, -0.0001984127
    %v2436 = vmul.f32 %v2308, -0.0001984127
    %v2437 = vmul.f32 %v2309, -0.0001984127
    %v2438 = vmul.f32 %v2310, -0.0001984127
    %v2439 = vmul.f32 %v2311, -0.0001984127
    %v2440 = vmul.f32 %v2312, -0.0001984127
    %v2441 = vmul.f32 %v2313, -0.0001984127
    %v2442 = vmul.f32 %v2314, -0.0001984127
    %v2443 = vmul.f32 %v2315, -0.0001984127
    %v2444 = vmul.f32 %v2316, -0.0001984127
    %v2445 = vmul.f32 %v2317, -0.0001984127
    %v2446 = vmul.f32 %v2318, -0.0001984127
    %v2447 = vmul.f32 %v2319, -0.0001984127
    %v2448 = vmul.f32 %v2320, -0.0001984127
    %v2449 = vmul.f32 %v2321, -0.0001984127
    %v2450 = vmul.f32 %v2322, -0.0001984127
    %v2451 = vmul.f32 %v2323, -0.0001984127
    %v2452 = vmul.f32 %v2324, -0.0001984127
    %v2453 = vmul.f32 %v2325, -0.0001984127
    %v2454 = vmul.f32 %v2326, -0.0001984127
    %v2455 = vmul.f32 %v2327, -0.0001984127
    %v2456 = vmul.f32 %v2328, -0.0001984127
    %v2457 = vmul.f32 %v2329, -0.0001984127
    %v2458 = vmul.f32 %v2330, -0.0001984127
    %v2459 = vmul.f32 %v2331, -0.0001984127
    %v2460 = vmul.f32 %v2332, -0.0001984127
    %v2461 = vmul.f32 %v2333, -0.0001984127
    %v2462 = vmul.f32 %v2334, -0.0001984127
    %v2463 = vmul.f32 %v2335, -0.0001984127
    %v2464 = vmul.f32 %v2336, -0.0001984127
    %v2465 = vmul.f32 %v2337, -0.0001984127
    %v2466 = vmul.f32 %v2338, -0.0001984127
    %v2467 = vmul.f32 %v2339, -0.0001984127
    %v2468 = vmul.f32 %v2340, -0.0001984127
    %v2469 = vmul.f32 %v2341, -0.0001984127
    %v2470 = vmul.f32 %v2342, -0.0001984127
    %v2471 = vmul.f32 %v2343, -0.0001984127
    %v2472 = vmul.f32 %v2344, -0.0001984127
    %v2473 = vmul.f32 %v2345, -0.0001984127
    %v2474 = vmul.f32 %v2346, -0.0001984127
    %v2475 = vmul.f32 %v2347, -0.0001984127
    %v2476 = vmul.f32 %v2348, -0.0001984127
    %v2477 = vmul.f32 %v2349, -0.0001984127
    %v2478 = vmul.f32 %v2350, -0.0001984127
    %v2479 = vmul.f32 %v2351, -0.0001984127
    %v2480 = vmul.f32 %v2352, -0.0001984127
    %v2481 = vmul.f32 %v2353, -0.0001984127
    %v2482 = vmul.f32 %v2354, -0.0001984127
    %v2483 = vmul.f32 %v2355, -0.0001984127
    %v2484 = vmul.f32 %v2356, -0.0001984127
    %v2485 = vmul.f32 %v2357, -0.0001984127
    %v2486 = vmul.f32 %v2358, -0.0001984127
    %v2487 = vmul.f32 %v2359, -0.0001984127
    %v2488 = vmul.f32 %v2360, -0.0001984127
    %v2489 = vmul.f32 %v2361, -0.0001984127
    %v2490 = vmul.f32 %v2362, -0.0001984127
    %v2491 = vmul.f32 %v2363, -0.0001984127
    %v2492 = vmul.f32 %v2364, -0.0001984127
    %v2493 = vmul.f32 %v2365, -0.0001984127
    %v2494 = vmul.f32 %v2366, -0.0001984127
    %v2495 = vmul.f32 %v2367, -0.0001984127
    %v2496 = vmul.f32 %v2368, -0.0001984127
    %v2497 = vmul.f32 %v2369, -0.0001984127
    %v2498 = vmul.f32 %v2370, -0.0001984127
    %v2499 = vmul.f32 %v2371, -0.0001984127
    %v2500 = vmul.f32 %v2372, -0.0001984127
    %v2501 = vmul.f32 %v2373, -0.0001984127
    %v2502 = vmul.f32 %v2374, -0.0001984127
    %v2503 = vmul.f32 %v2375, -0.0001984127
    %v2504 = vmul.f32 %v2376, -0.0001984127
    %v2505 = vmul.f32 %v2377, -0.0001984127
    %v2506 = vmul.f32 %v2378, -0.0001984127
    %v2507 = vmul.f32 %v2379, -0.0001984127
    %v2508 = vmul.f32 %v2380, -0.0001984127
    %v2509 = vmul.f32 %v2381, -0.0001984127
    %v2510 = vmul.f32 %v2382, -0.0001984127
    %v2511 = vmul.f32 %v2383, -0.0001984127
    %v2512 = vmul.f32 %v2384, -0.0001984127
    %v2513 = vmul.f32 %v2385, -0.0001984127
    %v2514 = vmul.f32 %v2386, -0.0001984127
    %v2515 = vmul.f32 %v2387, -0.0001984127
    %v2516 = vmul.f32 %v2388, -0.0001984127
    %v2517 = vmul.f32 %v2389, -0.0001984127
    %v2518 = vmul.f32 %v2390, -0.0001984127
    %v2519 = vmul.f32 %v2391, -0.0001984127
    %v2520 = vmul.f32 %v2392, -0.0001984127
    %v2521 = vmul.f32 %v2393, -0.0001984127
    %v2522 = vmul.f32 %v2394, -0.0001984127
    %v2523 = vmul.f32 %v2395, -0.0001984127
    %v2524 = vmul.f32 %v2396, -0.0001984127
    %v2525 = vmul.f32 %v2397, -0.0001984127
    %v2526 = vmul.f32 %v2398, -0.0001984127
    %v2527 = vmul.f32 %v2399, -0.0001984127
    %v2528 = vmul.f32 %v2400, -0.0001984127
    %v2529 = vmul.f32 %v2401, -0.0001984127
    %v2530 = vmul.f32 %v2402, -0.0001984127
    %v2531 = vmul.f32 %v2403, -0.0001984127
    %v2532 = vmul.f32 %v2404, -0.0001984127
    %v2533 = vmul.f32 %v2405, -0.0001984127
    %v2534 = vmul.f32 %v2406, -0.0001984127
    %v2535 = vmul.f32 %v2407, -0.0001984127
    %v2536 = vmul.f32 %v2408, -0.0001984127
    %v2537 = vmul.f32 %v2409, -0.0001984127
    %v2538 = vmul.f32 %v2410, -0.0001984127
    %v2539 = vmul.f32 %v2411, -0.0001984127
    %v2540 = vmul.f32 %v2412, -0.0001984127
    %v2541 = vmul.f32 %v2413, -0.0001984127
    %v2542 = vmul.f32 %v2414, -0.0001984127
    %v2543 = vadd.f32 %v2415, 0.008333334
    %v2544 = vadd.f32 %v2416, 0.008333334
    %v2545 = vadd.f32 %v2417, 0.008333334
    %v2546 = vadd.f32 %v2418, 0.008333334
    %v2547 = vadd.f32 %v2419, 0.008333334
    %v2548 = vadd.f32 %v2420, 0.008333334
    %v2549 = vadd.f32 %v2421, 0.008333334
    %v2550 = vadd.f32 %v2422, 0.008333334
    %v2551 = vadd.f32 %v2423, 0.008333334
    %v2552 = vadd.f32 %v2424, 0.008333334
    %v2553 = vadd.f32 %v2425, 0.008333334
    %v2554 = vadd.f32 %v2426, 0.008333334
    %v2555 = vadd.f32 %v2427, 0.008333334
    %v2556 = vadd.f32 %v2428, 0.008333334
    %v2557 = vadd.f32 %v2429, 0.008333334
    %v2558 = vadd.f32 %v2430, 0.008333334
    %v2559 = vadd.f32 %v2431, 0.008333334
    %v2560 = vadd.f32 %v2432, 0.008333334
    %v2561 = vadd.f32 %v2433, 0.008333334
    %v2562 = vadd.f32 %v2434, 0.008333334
    %v2563 = vadd.f32 %v2435, 0.008333334
    %v2564 = vadd.f32 %v2436, 0.008333334
    %v2565 = vadd.f32 %v2437, 0.008333334
    %v2566 = vadd.f32 %v2438, 0.008333334
    %v2567 = vadd.f32 %v2439, 0.008333334
    %v2568 = vadd.f32 %v2440, 0.008333334
    %v2569 = vadd.f32 %v2441, 0.008333334
    %v2570 = vadd.f32 %v2442, 0.008333334
    %v2571 = vadd.f32 %v2443, 0.008333334
    %v2572 = vadd.f32 %v2444, 0.008333334
    %v2573 = vadd.f32 %v2445, 0.008333334
    %v2574 = vadd.f32 %v2446, 0.008333334
    %v2575 = vadd.f32 %v2447, 0.008333334
    %v2576 = vadd.f32 %v2448, 0.008333334
    %v2577 = vadd.f32 %v2449, 0.008333334
    %v2578 = vadd.f32 %v2450, 0.008333334
    %v2579 = vadd.f32 %v2451, 0.008333334
    %v2580 = vadd.f32 %v2452, 0.008333334
    %v2581 = vadd.f32 %v2453, 0.008333334
    %v2582 = vadd.f32 %v2454, 0.008333334
    %v2583 = vadd.f32 %v2455, 0.008333334
    %v2584 = vadd.f32 %v2456, 0.008333334
    %v2585 = vadd.f32 %v2457, 0.008333334
    %v2586 = vadd.f32 %v2458, 0.008333334
    %v2587 = vadd.f32 %v2459, 0.008333334
    %v2588 = vadd.f32 %v2460, 0.008333334
    %v2589 = vadd.f32 %v2461, 0.008333334
    %v2590 = vadd.f32 %v2462, 0.008333334
    %v2591 = vadd.f32 %v2463, 0.008333334
    %v2592 = vadd.f32 %v2464, 0.008333334
    %v2593 = vadd.f32 %v2465, 0.008333334
    %v2594 = vadd.f32 %v2466, 0.008333334
    %v2595 = vadd.f32 %v2467, 0.008333334
    %v2596 = vadd.f32 %v2468, 0.008333334
    %v2597 = vadd.f32 %v2469, 0.008333334
    %v2598 = vadd.f32 %v2470, 0.008333334
    %v2599 = vadd.f32 %v2471, 0.008333334
    %v2600 = vadd.f32 %v2472, 0.008333334
    %v2601 = vadd.f32 %v2473, 0.008333334
    %v2602 = vadd.f32 %v2474, 0.008333334
    %v2603 = vadd.f32 %v2475, 0.008333334
    %v2604 = vadd.f32 %v2476, 0.008333334
    %v2605 = vadd.f32 %v2477, 0.008333334
    %v2606 = vadd.f32 %v2478, 0.008333334
    %v2607 = vadd.f32 %v2479, 0.008333334
    %v2608 = vadd.f32 %v2480, 0.008333334
    %v2609 = vadd.f32 %v2481, 0.008333334
    %v2610 = vadd.f32 %v2482, 0.008333334
    %v2611 = vadd.f32 %v2483, 0.008333334
    %v2612 = vadd.f32 %v2484, 0.008333334
    %v2613 = vadd.f32 %v2485, 0.008333334
    %v2614 = vadd.f32 %v2486, 0.008333334
    %v2615 = vadd.f32 %v2487, 0.008333334
    %v2616 = vadd.f32 %v2488, 0.008333334
    %v2617 = vadd.f32 %v2489, 0.008333334
    %v2618 = vadd.f32 %v2490, 0.008333334
    %v2619 = vadd.f32 %v2491, 0.008333334
    %v2620 = vadd.f32 %v2492, 0.008333334
    %v2621 = vadd.f32 %v2493, 0.008333334
    %v2622 = vadd.f32 %v2494, 0.008333334
    %v2623 = vadd.f32 %v2495, 0.008333334
    %v2624 = vadd.f32 %v2496, 0.008333334
    %v2625 = vadd.f32 %v2497, 0.008333334
    %v2626 = vadd.f32 %v2498, 0.008333334
    %v2627 = vadd.f32 %v2499, 0.008333334
    %v2628 = vadd.f32 %v2500, 0.008333334
    %v2629 = vadd.f32 %v2501, 0.008333334
    %v2630 = vadd.f32 %v2502, 0.008333334
    %v2631 = vadd.f32 %v2503, 0.008333334
    %v2632 = vadd.f32 %v2504, 0.008333334
    %v2633 = vadd.f32 %v2505, 0.008333334
    %v2634 = vadd.f32 %v2506, 0.008333334
    %v2635 = vadd.f32 %v2507, 0.008333334
    %v2636 = vadd.f32 %v2508, 0.008333334
    %v2637 = vadd.f32 %v2509, 0.008333334
    %v2638 = vadd.f32 %v2510, 0.008333334
    %v2639 = vadd.f32 %v2511, 0.008333334
    %v2640 = vadd.f32 %v2512, 0.008333334
    %v2641 = vadd.f32 %v2513, 0.008333334
    %v2642 = vadd.f32 %v2514, 0.008333334
    %v2643 = vadd.f32 %v2515, 0.008333334
    %v2644 = vadd.f32 %v2516, 0.008333334
    %v2645 = vadd.f32 %v2517, 0.008333334
    %v2646 = vadd.f32 %v2518, 0.008333334
    %v2647 = vadd.f32 %v2519, 0.008333334
    %v2648 = vadd.f32 %v2520, 0.008333334
    %v2649 = vadd.f32 %v2521, 0.008333334
    %v2650 = vadd.f32 %v2522, 0.008333334
    %v2651 = vadd.f32 %v2523, 0.008333334
    %v2652 = vadd.f32 %v2524, 0.008333334
    %v2653 = vadd.f32 %v2525, 0.008333334
    %v2654 = vadd.f32 %v2526, 0.008333334
    %v2655 = vadd.f32 %v2527, 0.008333334
    %v2656 = vadd.f32 %v2528, 0.008333334
    %v2657 = vadd.f32 %v2529, 0.008333334
    %v2658 = vadd.f32 %v2530, 0.008333334
    %v2659 = vadd.f32 %v2531, 0.008333334
    %v2660 = vadd.f32 %v2532, 0.008333334
    %v2661 = vadd.f32 %v2533, 0.008333334
    %v2662 = vadd.f32 %v2534, 0.008333334
    %v2663 = vadd.f32 %v2535, 0.008333334
    %v2664 = vadd.f32 %v2536, 0.008333334
    %v2665 = vadd.f32 %v2537, 0.008333334
    %v2666 = vadd.f32 %v2538, 0.008333334
    %v2667 = vadd.f32 %v2539, 0.008333334
    %v2668 = vadd.f32 %v2540, 0.008333334
    %v2669 = vadd.f32 %v2541, 0.008333334
    %v2670 = vadd.f32 %v2542, 0.008333334
    %v2671 = vmul.f32 %v2287, %v2543
    %v2672 = vmul.f32 %v2288, %v2544
    %v2673 = vmul.f32 %v2289, %v2545
    %v2674 = vmul.f32 %v2290, %v2546
    %v2675 = vmul.f32 %v2291, %v2547
    %v2676 = vmul.f32 %v2292, %v2548
    %v2677 = vmul.f32 %v2293, %v2549
    %v2678 = vmul.f32 %v2294, %v2550
    %v2679 = vmul.f32 %v2295, %v2551
    %v2680 = vmul.f32 %v2296, %v2552
    %v2681 = vmul.f32 %v2297, %v2553
    %v2682 = vmul.f32 %v2298, %v2554
    %v2683 = vmul.f32 %v2299, %v2555
    %v2684 = vmul.f32 %v2300, %v2556
    %v2685 = vmul.f32 %v2301, %v2557
    %v2686 = vmul.f32 %v2302, %v2558
    %v2687 = vmul.f32 %v2303, %v2559
    %v2688 = vmul.f32 %v2304, %v2560
    %v2689 = vmul.f32 %v2305, %v2561
    %v2690 = vmul.f32 %v2306, %v2562
    %v2691 = vmul.f32 %v2307, %v2563
    %v2692 = vmul.f32 %v2308, %v2564
    %v2693 = vmul.f32 %v2309, %v2565
    %v2694 = vmul.f32 %v2310, %v2566
    %v2695 = vmul.f32 %v2311, %v2567
    %v2696 = vmul.f32 %v2312, %v2568
    %v2697 = vmul.f32 %v2313, %v2569
    %v2698 = vmul.f32 %v2314, %v2570
    %v2699 = vmul.f32 %v2315, %v2571
    %v2700 = vmul.f32 %v2316, %v2572
    %v2701 = vmul.f32 %v2317, %v2573
    %v2702 = vmul.f32 %v2318, %v2574
    %v2703 = vmul.f32 %v2319, %v2575
    %v2704 = vmul.f32 %v2320, %v2576
    %v2705 = vmul.f32 %v2321, %v2577
    %v2706 = vmul.f32 %v2322, %v2578
    %v2707 = vmul.f32 %v2323, %v2579
    %v2708 = vmul.f32 %v2324, %v2580
    %v2709 = vmul.f32 %v2325, %v2581
    %v2710 = vmul.f32 %v2326, %v2582
    %v2711 = vmul.f32 %v2327, %v2583
    %v2712 = vmul.f32 %v2328, %v2584
    %v2713 = vmul.f32 %v2329, %v2585
    %v2714 = vmul.f32 %v2330, %v2586
    %v2715 = vmul.f32 %v2331, %v2587
    %v2716 = vmul.f32 %v2332, %v2588
    %v2717 = vmul.f32 %v2333, %v2589
    %v2718 = vmul.f32 %v2334, %v2590
    %v2719 = vmul.f32 %v2335, %v2591
    %v2720 = vmul.f32 %v2336, %v2592
    %v2721 = vmul.f32 %v2337, %v2593
    %v2722 = vmul.f32 %v2338, %v2594
    %v2723 = vmul.f32 %v2339, %v2595
    %v2724 = vmul.f32 %v2340, %v2596
    %v2725 = vmul.f32 %v2341, %v2597
    %v2726 = vmul.f32 %v2342, %v2598
    %v2727 = vmul.f32 %v2343, %v2599
    %v2728 = vmul.f32 %v2344, %v2600
    %v2729 = vmul.f32 %v2345, %v2601
    %v2730 = vmul.f32 %v2346, %v2602
    %v2731 = vmul.f32 %v2347, %v2603
    %v2732 = vmul.f32 %v2348, %v2604
    %v2733 = vmul.f32 %v2349, %v2605
    %v2734 = vmul.f32 %v2350, %v2606
    %v2735 = vmul.f32 %v2351, %v2607
    %v2736 = vmul.f32 %v2352, %v2608
    %v2737 = vmul.f32 %v2353, %v2609
    %v2738 = vmul.f32 %v2354, %v2610
    %v2739 = vmul.f32 %v2355, %v2611
    %v2740 = vmul.f32 %v2356, %v2612
    %v2741 = vmul.f32 %v2357, %v2613
    %v2742 = vmul.f32 %v2358, %v2614
    %v2743 = vmul.f32 %v2359, %v2615
    %v2744 = vmul.f32 %v2360, %v2616
    %v2745 = vmul.f32 %v2361, %v2617
    %v2746 = vmul.f32 %v2362, %v2618
    %v2747 = vmul.f32 %v2363, %v2619
    %v2748 = vmul.f32 %v2364, %v2620
    %v2749 = vmul.f32 %v2365, %v2621
    %v2750 = vmul.f32 %v2366, %v2622
    %v2751 = vmul.f32 %v2367, %v2623
    %v2752 = vmul.f32 %v2368, %v2624
    %v2753 = vmul.f32 %v2369, %v2625
    %v2754 = vmul.f32 %v2370, %v2626
    %v2755 = vmul.f32 %v2371, %v2627
    %v2756 = vmul.f32 %v2372, %v2628
    %v2757 = vmul.f32 %v2373, %v2629
    %v2758 = vmul.f32 %v2374, %v2630
    %v2759 = vmul.f32 %v2375, %v2631
    %v2760 = vmul.f32 %v2376, %v2632
    %v2761 = vmul.f32 %v2377, %v2633
    %v2762 = vmul.f32 %v2378, %v2634
    %v2763 = vmul.f32 %v2379, %v2635
    %v2764 = vmul.f32 %v2380, %v2636
    %v2765 = vmul.f32 %v2381, %v2637
    %v2766 = vmul.f32 %v2382, %v2638
    %v2767 = vmul.f32 %v2383, %v2639
    %v2768 = vmul.f32 %v2384, %v2640
    %v2769 = vmul.f32 %v2385, %v2641
    %v2770 = vmul.f32 %v2386, %v2642
    %v2771 = vmul.f32 %v2387, %v2643
    %v2772 = vmul.f32 %v2388, %v2644
    %v2773 = vmul.f32 %v2389, %v2645
    %v2774 = vmul.f32 %v2390, %v2646
    %v2775 = vmul.f32 %v2391, %v2647
    %v2776 = vmul.f32 %v2392, %v2648
    %v2777 = vmul.f32 %v2393, %v2649
    %v2778 = vmul.f32 %v2394, %v2650
    %v2779 = vmul.f32 %v2395, %v2651
    %v2780 = vmul.f32 %v2396, %v2652
    %v2781 = vmul.f32 %v2397, %v2653
    %v2782 = vmul.f32 %v2398, %v2654
    %v2783 = vmul.f32 %v2399, %v2655
    %v2784 = vmul.f32 %v2400, %v2656
    %v2785 = vmul.f32 %v2401, %v2657
    %v2786 = vmul.f32 %v2402, %v2658
    %v2787 = vmul.f32 %v2403, %v2659
    %v2788 = vmul.f32 %v2404, %v2660
    %v2789 = vmul.f32 %v2405, %v2661
    %v2790 = vmul.f32 %v2406, %v2662
    %v2791 = vmul.f32 %v2407, %v2663
    %v2792 = vmul.f32 %v2408, %v2664
    %v2793 = vmul.f32 %v2409, %v2665
    %v2794 = vmul.f32 %v2410, %v2666
    %v2795 = vmul.f32 %v2411, %v2667
    %v2796 = vmul.f32 %v2412, %v2668
    %v2797 = vmul.f32 %v2413, %v2669
    %v2798 = vmul.f32 %v2414, %v2670
    %v2799 = vadd.f32 %v2671, -0.16666667
    %v2800 = vadd.f32 %v2672, -0.16666667
    %v2801 = vadd.f32 %v2673, -0.16666667
    %v2802 = vadd.f32 %v2674, -0.16666667
    %v2803 = vadd.f32 %v2675, -0.16666667
    %v2804 = vadd.f32 %v2676, -0.16666667
    %v2805 = vadd.f32 %v2677, -0.16666667
    %v2806 = vadd.f32 %v2678, -0.16666667
    %v2807 = vadd.f32 %v2679, -0.16666667
    %v2808 = vadd.f32 %v2680, -0.16666667
    %v2809 = vadd.f32 %v2681, -0.16666667
    %v2810 = vadd.f32 %v2682, -0.16666667
    %v2811 = vadd.f32 %v2683, -0.16666667
    %v2812 = vadd.f32 %v2684, -0.16666667
    %v2813 = vadd.f32 %v2685, -0.16666667
    %v2814 = vadd.f32 %v2686, -0.16666667
    %v2815 = vadd.f32 %v2687, -0.16666667
    %v2816 = vadd.f32 %v2688, -0.16666667
    %v2817 = vadd.f32 %v2689, -0.16666667
    %v2818 = vadd.f32 %v2690, -0.16666667
    %v2819 = vadd.f32 %v2691, -0.16666667
    %v2820 = vadd.f32 %v2692, -0.16666667
    %v2821 = vadd.f32 %v2693, -0.16666667
    %v2822 = vadd.f32 %v2694, -0.16666667
    %v2823 = vadd.f32 %v2695, -0.16666667
    %v2824 = vadd.f32 %v2696, -0.16666667
    %v2825 = vadd.f32 %v2697, -0.16666667
    %v2826 = vadd.f32 %v2698, -0.16666667
    %v2827 = vadd.f32 %v2699, -0.16666667
    %v2828 = vadd.f32 %v2700, -0.16666667
    %v2829 = vadd.f32 %v2701, -0.16666667
    %v2830 = vadd.f32 %v2702, -0.16666667
    %v2831 = vadd.f32 %v2703, -0.16666667
    %v2832 = vadd.f32 %v2704, -0.16666667
    %v2833 = vadd.f32 %v2705, -0.16666667
    %v2834 = vadd.f32 %v2706, -0.16666667
    %v2835 = vadd.f32 %v2707, -0.16666667
    %v2836 = vadd.f32 %v2708, -0.16666667
    %v2837 = vadd.f32 %v2709, -0.16666667
    %v2838 = vadd.f32 %v2710, -0.16666667
    %v2839 = vadd.f32 %v2711, -0.16666667
    %v2840 = vadd.f32 %v2712, -0.16666667
    %v2841 = vadd.f32 %v2713, -0.16666667
    %v2842 = vadd.f32 %v2714, -0.16666667
    %v2843 = vadd.f32 %v2715, -0.16666667
    %v2844 = vadd.f32 %v2716, -0.16666667
    %v2845 = vadd.f32 %v2717, -0.16666667
    %v2846 = vadd.f32 %v2718, -0.16666667
    %v2847 = vadd.f32 %v2719, -0.16666667
    %v2848 = vadd.f32 %v2720, -0.16666667
    %v2849 = vadd.f32 %v2721, -0.16666667
    %v2850 = vadd.f32 %v2722, -0.16666667
    %v2851 = vadd.f32 %v2723, -0.16666667
    %v2852 = vadd.f32 %v2724, -0.16666667
    %v2853 = vadd.f32 %v2725, -0.16666667
    %v2854 = vadd.f32 %v2726, -0.16666667
    %v2855 = vadd.f32 %v2727, -0.16666667
    %v2856 = vadd.f32 %v2728, -0.16666667
    %v2857 = vadd.f32 %v2729, -0.16666667
    %v2858 = vadd.f32 %v2730, -0.16666667
    %v2859 = vadd.f32 %v2731, -0.16666667
    %v2860 = vadd.f32 %v2732, -0.16666667
    %v2861 = vadd.f32 %v2733, -0.16666667
    %v2862 = vadd.f32 %v2734, -0.16666667
    %v2863 = vadd.f32 %v2735, -0.16666667
    %v2864 = vadd.f32 %v2736, -0.16666667
    %v2865 = vadd.f32 %v2737, -0.16666667
    %v2866 = vadd.f32 %v2738, -0.16666667
    %v2867 = vadd.f32 %v2739, -0.16666667
    %v2868 = vadd.f32 %v2740, -0.16666667
    %v2869 = vadd.f32 %v2741, -0.16666667
    %v2870 = vadd.f32 %v2742, -0.16666667
    %v2871 = vadd.f32 %v2743, -0.16666667
    %v2872 = vadd.f32 %v2744, -0.16666667
    %v2873 = vadd.f32 %v2745, -0.16666667
    %v2874 = vadd.f32 %v2746, -0.16666667
    %v2875 = vadd.f32 %v2747, -0.16666667
    %v2876 = vadd.f32 %v2748, -0.16666667
    %v2877 = vadd.f32 %v2749, -0.16666667
    %v2878 = vadd.f32 %v2750, -0.16666667
    %v2879 = vadd.f32 %v2751, -0.16666667
    %v2880 = vadd.f32 %v2752, -0.16666667
    %v2881 = vadd.f32 %v2753, -0.16666667
    %v2882 = vadd.f32 %v2754, -0.16666667
    %v2883 = vadd.f32 %v2755, -0.16666667
    %v2884 = vadd.f32 %v2756, -0.16666667
    %v2885 = vadd.f32 %v2757, -0.16666667
    %v2886 = vadd.f32 %v2758, -0.16666667
    %v2887 = vadd.f32 %v2759, -0.16666667
    %v2888 = vadd.f32 %v2760, -0.16666667
    %v2889 = vadd.f32 %v2761, -0.16666667
    %v2890 = vadd.f32 %v2762, -0.16666667
    %v2891 = vadd.f32 %v2763, -0.16666667
    %v2892 = vadd.f32 %v2764, -0.16666667
    %v2893 = vadd.f32 %v2765, -0.16666667
    %v2894 = vadd.f32 %v2766, -0.16666667
    %v2895 = vadd.f32 %v2767, -0.16666667
    %v2896 = vadd.f32 %v2768, -0.16666667
    %v2897 = vadd.f32 %v2769, -0.16666667
    %v2898 = vadd.f32 %v2770, -0.16666667
    %v2899 = vadd.f32 %v2771, -0.16666667
    %v2900 = vadd.f32 %v2772, -0.16666667
    %v2901 = vadd.f32 %v2773, -0.16666667
    %v2902 = vadd.f32 %v2774, -0.16666667
    %v2903 = vadd.f32 %v2775, -0.16666667
    %v2904 = vadd.f32 %v2776, -0.16666667
    %v2905 = vadd.f32 %v2777, -0.16666667
    %v2906 = vadd.f32 %v2778, -0.16666667
    %v2907 = vadd.f32 %v2779, -0.16666667
    %v2908 = vadd.f32 %v2780, -0.16666667
    %v2909 = vadd.f32 %v2781, -0.16666667
    %v2910 = vadd.f32 %v2782, -0.16666667
    %v2911 = vadd.f32 %v2783, -0.16666667
    %v2912 = vadd.f32 %v2784, -0.16666667
    %v2913 = vadd.f32 %v2785, -0.16666667
    %v2914 = vadd.f32 %v2786, -0.16666667
    %v2915 = vadd.f32 %v2787, -0.16666667
    %v2916 = vadd.f32 %v2788, -0.16666667
    %v2917 = vadd.f32 %v2789, -0.16666667
    %v2918 = vadd.f32 %v2790, -0.16666667
    %v2919 = vadd.f32 %v2791, -0.16666667
    %v2920 = vadd.f32 %v2792, -0.16666667
    %v2921 = vadd.f32 %v2793, -0.16666667
    %v2922 = vadd.f32 %v2794, -0.16666667
    %v2923 = vadd.f32 %v2795, -0.16666667
    %v2924 = vadd.f32 %v2796, -0.16666667
    %v2925 = vadd.f32 %v2797, -0.16666667
    %v2926 = vadd.f32 %v2798, -0.16666667
    %v2927 = vmul.f32 %v2287, %v2799
    %v2928 = vmul.f32 %v2288, %v2800
    %v2929 = vmul.f32 %v2289, %v2801
    %v2930 = vmul.f32 %v2290, %v2802
    %v2931 = vmul.f32 %v2291, %v2803
    %v2932 = vmul.f32 %v2292, %v2804
    %v2933 = vmul.f32 %v2293, %v2805
    %v2934 = vmul.f32 %v2294, %v2806
    %v2935 = vmul.f32 %v2295, %v2807
    %v2936 = vmul.f32 %v2296, %v2808
    %v2937 = vmul.f32 %v2297, %v2809
    %v2938 = vmul.f32 %v2298, %v2810
    %v2939 = vmul.f32 %v2299, %v2811
    %v2940 = vmul.f32 %v2300, %v2812
    %v2941 = vmul.f32 %v2301, %v2813
    %v2942 = vmul.f32 %v2302, %v2814
    %v2943 = vmul.f32 %v2303, %v2815
    %v2944 = vmul.f32 %v2304, %v2816
    %v2945 = vmul.f32 %v2305, %v2817
    %v2946 = vmul.f32 %v2306, %v2818
    %v2947 = vmul.f32 %v2307, %v2819
    %v2948 = vmul.f32 %v2308, %v2820
    %v2949 = vmul.f32 %v2309, %v2821
    %v2950 = vmul.f32 %v2310, %v2822
    %v2951 = vmul.f32 %v2311, %v2823
    %v2952 = vmul.f32 %v2312, %v2824
    %v2953 = vmul.f32 %v2313, %v2825
    %v2954 = vmul.f32 %v2314, %v2826
    %v2955 = vmul.f32 %v2315, %v2827
    %v2956 = vmul.f32 %v2316, %v2828
    %v2957 = vmul.f32 %v2317, %v2829
    %v2958 = vmul.f32 %v2318, %v2830
    %v2959 = vmul.f32 %v2319, %v2831
    %v2960 = vmul.f32 %v2320, %v2832
    %v2961 = vmul.f32 %v2321, %v2833
    %v2962 = vmul.f32 %v2322, %v2834
    %v2963 = vmul.f32 %v2323, %v2835
    %v2964 = vmul.f32 %v2324, %v2836
    %v2965 = vmul.f32 %v2325, %v2837
    %v2966 = vmul.f32 %v2326, %v2838
    %v2967 = vmul.f32 %v2327, %v2839
    %v2968 = vmul.f32 %v2328, %v2840
    %v2969 = vmul.f32 %v2329, %v2841
    %v2970 = vmul.f32 %v2330, %v2842
    %v2971 = vmul.f32 %v2331, %v2843
    %v2972 = vmul.f32 %v2332, %v2844
    %v2973 = vmul.f32 %v2333, %v2845
    %v2974 = vmul.f32 %v2334, %v2846
    %v2975 = vmul.f32 %v2335, %v2847
    %v2976 = vmul.f32 %v2336, %v2848
    %v2977 = vmul.f32 %v2337, %v2849
    %v2978 = vmul.f32 %v2338, %v2850
    %v2979 = vmul.f32 %v2339, %v2851
    %v2980 = vmul.f32 %v2340, %v2852
    %v2981 = vmul.f32 %v2341, %v2853
    %v2982 = vmul.f32 %v2342, %v2854
    %v2983 = vmul.f32 %v2343, %v2855
    %v2984 = vmul.f32 %v2344, %v2856
    %v2985 = vmul.f32 %v2345, %v2857
    %v2986 = vmul.f32 %v2346, %v2858
    %v2987 = vmul.f32 %v2347, %v2859
    %v2988 = vmul.f32 %v2348, %v2860
    %v2989 = vmul.f32 %v2349, %v2861
    %v2990 = vmul.f32 %v2350, %v2862
    %v2991 = vmul.f32 %v2351, %v2863
    %v2992 = vmul.f32 %v2352, %v2864
    %v2993 = vmul.f32 %v2353, %v2865
    %v2994 = vmul.f32 %v2354, %v2866
    %v2995 = vmul.f32 %v2355, %v2867
    %v2996 = vmul.f32 %v2356, %v2868
    %v2997 = vmul.f32 %v2357, %v2869
    %v2998 = vmul.f32 %v2358, %v2870
    %v2999 = vmul.f32 %v2359, %v2871
    %v3000 = vmul.f32 %v2360, %v2872
    %v3001 = vmul.f32 %v2361, %v2873
    %v3002 = vmul.f32 %v2362, %v2874
    %v3003 = vmul.f32 %v2363, %v2875
    %v3004 = vmul.f32 %v2364, %v2876
    %v3005 = vmul.f32 %v2365, %v2877
    %v3006 = vmul.f32 %v2366, %v2878
    %v3007 = vmul.f32 %v2367, %v2879
    %v3008 = vmul.f32 %v2368, %v2880
    %v3009 = vmul.f32 %v2369, %v2881
    %v3010 = vmul.f32 %v2370, %v2882
    %v3011 = vmul.f32 %v2371, %v2883
    %v3012 = vmul.f32 %v2372, %v2884
    %v3013 = vmul.f32 %v2373, %v2885
    %v3014 = vmul.f32 %v2374, %v2886
    %v3015 = vmul.f32 %v2375, %v2887
    %v3016 = vmul.f32 %v2376, %v2888
    %v3017 = vmul.f32 %v2377, %v2889
    %v3018 = vmul.f32 %v2378, %v2890
    %v3019 = vmul.f32 %v2379, %v2891
    %v3020 = vmul.f32 %v2380, %v2892
    %v3021 = vmul.f32 %v2381, %v2893
    %v3022 = vmul.f32 %v2382, %v2894
    %v3023 = vmul.f32 %v2383, %v2895
    %v3024 = vmul.f32 %v2384, %v2896
    %v3025 = vmul.f32 %v2385, %v2897
    %v3026 = vmul.f32 %v2386, %v2898
    %v3027 = vmul.f32 %v2387, %v2899
    %v3028 = vmul.f32 %v2388, %v2900
    %v3029 = vmul.f32 %v2389, %v2901
    %v3030 = vmul.f32 %v2390, %v2902
    %v3031 = vmul.f32 %v2391, %v2903
    %v3032 = vmul.f32 %v2392, %v2904
    %v3033 = vmul.f32 %v2393, %v2905
    %v3034 = vmul.f32 %v2394, %v2906
    %v3035 = vmul.f32 %v2395, %v2907
    %v3036 = vmul.f32 %v2396, %v2908
    %v3037 = vmul.f32 %v2397, %v2909
    %v3038 = vmul.f32 %v2398, %v2910
    %v3039 = vmul.f32 %v2399, %v2911
    %v3040 = vmul.f32 %v2400, %v2912
    %v3041 = vmul.f32 %v2401, %v2913
    %v3042 = vmul.f32 %v2402, %v2914
    %v3043 = vmul.f32 %v2403, %v2915
    %v3044 = vmul.f32 %v2404, %v2916
    %v3045 = vmul.f32 %v2405, %v2917
    %v3046 = vmul.f32 %v2406, %v2918
    %v3047 = vmul.f32 %v2407, %v2919
    %v3048 = vmul.f32 %v2408, %v2920
    %v3049 = vmul.f32 %v2409, %v2921
    %v3050 = vmul.f32 %v2410, %v2922
    %v3051 = vmul.f32 %v2411, %v2923
    %v3052 = vmul.f32 %v2412, %v2924
    %v3053 = vmul.f32 %v2413, %v2925
    %v3054 = vmul.f32 %v2414, %v2926
    %v3055 = vmul.f32 %v1903, %v2927
    %v3056 = vmul.f32 %v1904, %v2928
    %v3057 = vmul.f32 %v1905, %v2929
    %v3058 = vmul.f32 %v1906, %v2930
    %v3059 = vmul.f32 %v1907, %v2931
    %v3060 = vmul.f32 %v1908, %v2932
    %v3061 = vmul.f32 %v1909, %v2933
    %v3062 = vmul.f32 %v1910, %v2934
    %v3063 = vmul.f32 %v1911, %v2935
    %v3064 = vmul.f32 %v1912, %v2936
    %v3065 = vmul.f32 %v1913, %v2937
    %v3066 = vmul.f32 %v1914, %v2938
    %v3067 = vmul.f32 %v1915, %v2939
    %v3068 = vmul.f32 %v1916, %v2940
    %v3069 = vmul.f32 %v1917, %v2941
    %v3070 = vmul.f32 %v1918, %v2942
    %v3071 = vmul.f32 %v1919, %v2943
    %v3072 = vmul.f32 %v1920, %v2944
    %v3073 = vmul.f32 %v1921, %v2945
    %v3074 = vmul.f32 %v1922, %v2946
    %v3075 = vmul.f32 %v1923, %v2947
    %v3076 = vmul.f32 %v1924, %v2948
    %v3077 = vmul.f32 %v1925, %v2949
    %v3078 = vmul.f32 %v1926, %v2950
    %v3079 = vmul.f32 %v1927, %v2951
    %v3080 = vmul.f32 %v1928, %v2952
    %v3081 = vmul.f32 %v1929, %v2953
    %v3082 = vmul.f32 %v1930, %v2954
    %v3083 = vmul.f32 %v1931, %v2955
    %v3084 = vmul.f32 %v1932, %v2956
    %v3085 = vmul.f32 %v1933, %v2957
    %v3086 = vmul.f32 %v1934, %v2958
    %v3087 = vmul.f32 %v1935, %v2959
    %v3088 = vmul.f32 %v1936, %v2960
    %v3089 = vmul.f32 %v1937, %v2961
    %v3090 = vmul.f32 %v1938, %v2962
    %v3091 = vmul.f32 %v1939, %v2963
    %v3092 = vmul.f32 %v1940, %v2964
    %v3093 = vmul.f32 %v1941, %v2965
    %v3094 = vmul.f32 %v1942, %v2966
    %v3095 = vmul.f32 %v1943, %v2967
    %v3096 = vmul.f32 %v1944, %v2968
    %v3097 = vmul.f32 %v1945, %v2969
    %v3098 = vmul.f32 %v1946, %v2970
    %v3099 = vmul.f32 %v1947, %v2971
    %v3100 = vmul.f32 %v1948, %v2972
    %v3101 = vmul.f32 %v1949, %v2973
    %v3102 = vmul.f32 %v1950, %v2974
    %v3103 = vmul.f32 %v1951, %v2975
    %v3104 = vmul.f32 %v1952, %v2976
    %v3105 = vmul.f32 %v1953, %v2977
    %v3106 = vmul.f32 %v1954, %v2978
    %v3107 = vmul.f32 %v1955, %v2979
    %v3108 = vmul.f32 %v1956, %v2980
    %v3109 = vmul.f32 %v1957, %v2981
    %v3110 = vmul.f32 %v1958, %v2982
    %v3111 = vmul.f32 %v1959, %v2983
    %v3112 = vmul.f32 %v1960, %v2984
    %v3113 = vmul.f32 %v1961, %v2985
    %v3114 = vmul.f32 %v1962, %v2986
    %v3115 = vmul.f32 %v1963, %v2987
    %v3116 = vmul.f32 %v1964, %v2988
    %v3117 = vmul.f32 %v1965, %v2989
    %v3118 = vmul.f32 %v1966, %v2990
    %v3119 = vmul.f32 %v1967, %v2991
    %v3120 = vmul.f32 %v1968, %v2992
    %v3121 = vmul.f32 %v1969, %v2993
    %v3122 = vmul.f32 %v1970, %v2994
    %v3123 = vmul.f32 %v1971, %v2995
    %v3124 = vmul.f32 %v1972, %v2996
    %v3125 = vmul.f32 %v1973, %v2997
    %v3126 = vmul.f32 %v1974, %v2998
    %v3127 = vmul.f32 %v1975, %v2999
    %v3128 = vmul.f32 %v1976, %v3000
    %v3129 = vmul.f32 %v1977, %v3001
    %v3130 = vmul.f32 %v1978, %v3002
    %v3131 = vmul.f32 %v1979, %v3003
    %v3132 = vmul.f32 %v1980, %v3004
    %v3133 = vmul.f32 %v1981, %v3005
    %v3134 = vmul.f32 %v1982, %v3006
    %v3135 = vmul.f32 %v1983, %v3007
    %v3136 = vmul.f32 %v1984, %v3008
    %v3137 = vmul.f32 %v1985, %v3009
    %v3138 = vmul.f32 %v1986, %v3010
    %v3139 = vmul.f32 %v1987, %v3011
    %v3140 = vmul.f32 %v1988, %v3012
    %v3141 = vmul.f32 %v1989, %v3013
    %v3142 = vmul.f32 %v1990, %v3014
    %v3143 = vmul.f32 %v1991, %v3015
    %v3144 = vmul.f32 %v1992, %v3016
    %v3145 = vmul.f32 %v1993, %v3017
    %v3146 = vmul.f32 %v1994, %v3018
    %v3147 = vmul.f32 %v1995, %v3019
    %v3148 = vmul.f32 %v1996, %v3020
    %v3149 = vmul.f32 %v1997, %v3021
    %v3150 = vmul.f32 %v1998, %v3022
    %v3151 = vmul.f32 %v1999, %v3023
    %v3152 = vmul.f32 %v2000, %v3024
    %v3153 = vmul.f32 %v2001, %v3025
    %v3154 = vmul.f32 %v2002, %v3026
    %v3155 = vmul.f32 %v2003, %v3027
    %v3156 = vmul.f32 %v2004, %v3028
    %v3157 = vmul.f32 %v2005, %v3029
    %v3158 = vmul.f32 %v2006, %v3030
    %v3159 = vmul.f32 %v2007, %v3031
    %v3160 = vmul.f32 %v2008, %v3032
    %v3161 = vmul.f32 %v2009, %v3033
    %v3162 = vmul.f32 %v2010, %v3034
    %v3163 = vmul.f32 %v2011, %v3035
    %v3164 = vmul.f32 %v2012, %v3036
    %v3165 = vmul.f32 %v2013, %v3037
    %v3166 = vmul.f32 %v2014, %v3038
    %v3167 = vmul.f32 %v2015, %v3039
    %v3168 = vmul.f32 %v2016, %v3040
    %v3169 = vmul.f32 %v2017, %v3041
    %v3170 = vmul.f32 %v2018, %v3042
    %v3171 = vmul.f32 %v2019, %v3043
    %v3172 = vmul.f32 %v2020, %v3044
    %v3173 = vmul.f32 %v2021, %v3045
    %v3174 = vmul.f32 %v2022, %v3046
    %v3175 = vmul.f32 %v2023, %v3047
    %v3176 = vmul.f32 %v2024, %v3048
    %v3177 = vmul.f32 %v2025, %v3049
    %v3178 = vmul.f32 %v2026, %v3050
    %v3179 = vmul.f32 %v2027, %v3051
    %v3180 = vmul.f32 %v2028, %v3052
    %v3181 = vmul.f32 %v2029, %v3053
    %v3182 = vmul.f32 %v2030, %v3054
    %v3183 = vadd.f32 %v1903, %v3055
    %v3184 = vadd.f32 %v1904, %v3056
    %v3185 = vadd.f32 %v1905, %v3057
    %v3186 = vadd.f32 %v1906, %v3058
    %v3187 = vadd.f32 %v1907, %v3059
    %v3188 = vadd.f32 %v1908, %v3060
    %v3189 = vadd.f32 %v1909, %v3061
    %v3190 = vadd.f32 %v1910, %v3062
    %v3191 = vadd.f32 %v1911, %v3063
    %v3192 = vadd.f32 %v1912, %v3064
    %v3193 = vadd.f32 %v1913, %v3065
    %v3194 = vadd.f32 %v1914, %v3066
    %v3195 = vadd.f32 %v1915, %v3067
    %v3196 = vadd.f32 %v1916, %v3068
    %v3197 = vadd.f32 %v1917, %v3069
    %v3198 = vadd.f32 %v1918, %v3070
    %v3199 = vadd.f32 %v1919, %v3071
    %v3200 = vadd.f32 %v1920, %v3072
    %v3201 = vadd.f32 %v1921, %v3073
    %v3202 = vadd.f32 %v1922, %v3074
    %v3203 = vadd.f32 %v1923, %v3075
    %v3204 = vadd.f32 %v1924, %v3076
    %v3205 = vadd.f32 %v1925, %v3077
    %v3206 = vadd.f32 %v1926, %v3078
    %v3207 = vadd.f32 %v1927, %v3079
    %v3208 = vadd.f32 %v1928, %v3080
    %v3209 = vadd.f32 %v1929, %v3081
    %v3210 = vadd.f32 %v1930, %v3082
    %v3211 = vadd.f32 %v1931, %v3083
    %v3212 = vadd.f32 %v1932, %v3084
    %v3213 = vadd.f32 %v1933, %v3085
    %v3214 = vadd.f32 %v1934, %v3086
    %v3215 = vadd.f32 %v1935, %v3087
    %v3216 = vadd.f32 %v1936, %v3088
    %v3217 = vadd.f32 %v1937, %v3089
    %v3218 = vadd.f32 %v1938, %v3090
    %v3219 = vadd.f32 %v1939, %v3091
    %v3220 = vadd.f32 %v1940, %v3092
    %v3221 = vadd.f32 %v1941, %v3093
    %v3222 = vadd.f32 %v1942, %v3094
    %v3223 = vadd.f32 %v1943, %v3095
    %v3224 = vadd.f32 %v1944, %v3096
    %v3225 = vadd.f32 %v1945, %v3097
    %v3226 = vadd.f32 %v1946, %v3098
    %v3227 = vadd.f32 %v1947, %v3099
    %v3228 = vadd.f32 %v1948, %v3100
    %v3229 = vadd.f32 %v1949, %v3101
    %v3230 = vadd.f32 %v1950, %v3102
    %v3231 = vadd.f32 %v1951, %v3103
    %v3232 = vadd.f32 %v1952, %v3104
    %v3233 = vadd.f32 %v1953, %v3105
    %v3234 = vadd.f32 %v1954, %v3106
    %v3235 = vadd.f32 %v1955, %v3107
    %v3236 = vadd.f32 %v1956, %v3108
    %v3237 = vadd.f32 %v1957, %v3109
    %v3238 = vadd.f32 %v1958, %v3110
    %v3239 = vadd.f32 %v1959, %v3111
    %v3240 = vadd.f32 %v1960, %v3112
    %v3241 = vadd.f32 %v1961, %v3113
    %v3242 = vadd.f32 %v1962, %v3114
    %v3243 = vadd.f32 %v1963, %v3115
    %v3244 = vadd.f32 %v1964, %v3116
    %v3245 = vadd.f32 %v1965, %v3117
    %v3246 = vadd.f32 %v1966, %v3118
    %v3247 = vadd.f32 %v1967, %v3119
    %v3248 = vadd.f32 %v1968, %v3120
    %v3249 = vadd.f32 %v1969, %v3121
    %v3250 = vadd.f32 %v1970, %v3122
    %v3251 = vadd.f32 %v1971, %v3123
    %v3252 = vadd.f32 %v1972, %v3124
    %v3253 = vadd.f32 %v1973, %v3125
    %v3254 = vadd.f32 %v1974, %v3126
    %v3255 = vadd.f32 %v1975, %v3127
    %v3256 = vadd.f32 %v1976, %v3128
    %v3257 = vadd.f32 %v1977, %v3129
    %v3258 = vadd.f32 %v1978, %v3130
    %v3259 = vadd.f32 %v1979, %v3131
    %v3260 = vadd.f32 %v1980, %v3132
    %v3261 = vadd.f32 %v1981, %v3133
    %v3262 = vadd.f32 %v1982, %v3134
    %v3263 = vadd.f32 %v1983, %v3135
    %v3264 = vadd.f32 %v1984, %v3136
    %v3265 = vadd.f32 %v1985, %v3137
    %v3266 = vadd.f32 %v1986, %v3138
    %v3267 = vadd.f32 %v1987, %v3139
    %v3268 = vadd.f32 %v1988, %v3140
    %v3269 = vadd.f32 %v1989, %v3141
    %v3270 = vadd.f32 %v1990, %v3142
    %v3271 = vadd.f32 %v1991, %v3143
    %v3272 = vadd.f32 %v1992, %v3144
    %v3273 = vadd.f32 %v1993, %v3145
    %v3274 = vadd.f32 %v1994, %v3146
    %v3275 = vadd.f32 %v1995, %v3147
    %v3276 = vadd.f32 %v1996, %v3148
    %v3277 = vadd.f32 %v1997, %v3149
    %v3278 = vadd.f32 %v1998, %v3150
    %v3279 = vadd.f32 %v1999, %v3151
    %v3280 = vadd.f32 %v2000, %v3152
    %v3281 = vadd.f32 %v2001, %v3153
    %v3282 = vadd.f32 %v2002, %v3154
    %v3283 = vadd.f32 %v2003, %v3155
    %v3284 = vadd.f32 %v2004, %v3156
    %v3285 = vadd.f32 %v2005, %v3157
    %v3286 = vadd.f32 %v2006, %v3158
    %v3287 = vadd.f32 %v2007, %v3159
    %v3288 = vadd.f32 %v2008, %v3160
    %v3289 = vadd.f32 %v2009, %v3161
    %v3290 = vadd.f32 %v2010, %v3162
    %v3291 = vadd.f32 %v2011, %v3163
    %v3292 = vadd.f32 %v2012, %v3164
    %v3293 = vadd.f32 %v2013, %v3165
    %v3294 = vadd.f32 %v2014, %v3166
    %v3295 = vadd.f32 %v2015, %v3167
    %v3296 = vadd.f32 %v2016, %v3168
    %v3297 = vadd.f32 %v2017, %v3169
    %v3298 = vadd.f32 %v2018, %v3170
    %v3299 = vadd.f32 %v2019, %v3171
    %v3300 = vadd.f32 %v2020, %v3172
    %v3301 = vadd.f32 %v2021, %v3173
    %v3302 = vadd.f32 %v2022, %v3174
    %v3303 = vadd.f32 %v2023, %v3175
    %v3304 = vadd.f32 %v2024, %v3176
    %v3305 = vadd.f32 %v2025, %v3177
    %v3306 = vadd.f32 %v2026, %v3178
    %v3307 = vadd.f32 %v2027, %v3179
    %v3308 = vadd.f32 %v2028, %v3180
    %v3309 = vadd.f32 %v2029, %v3181
    %v3310 = vadd.f32 %v2030, %v3182
    %v3311 = vmul.f32 %v2287, -0.0013888889
    %v3312 = vmul.f32 %v2288, -0.0013888889
    %v3313 = vmul.f32 %v2289, -0.0013888889
    %v3314 = vmul.f32 %v2290, -0.0013888889
    %v3315 = vmul.f32 %v2291, -0.0013888889
    %v3316 = vmul.f32 %v2292, -0.0013888889
    %v3317 = vmul.f32 %v2293, -0.0013888889
    %v3318 = vmul.f32 %v2294, -0.0013888889
    %v3319 = vmul.f32 %v2295, -0.0013888889
    %v3320 = vmul.f32 %v2296, -0.0013888889
    %v3321 = vmul.f32 %v2297, -0.0013888889
    %v3322 = vmul.f32 %v2298, -0.0013888889
    %v3323 = vmul.f32 %v2299, -0.0013888889
    %v3324 = vmul.f32 %v2300, -0.0013888889
    %v3325 = vmul.f32 %v2301, -0.0013888889
    %v3326 = vmul.f32 %v2302, -0.0013888889
    %v3327 = vmul.f32 %v2303, -0.0013888889
    %v3328 = vmul.f32 %v2304, -0.0013888889
    %v3329 = vmul.f32 %v2305, -0.0013888889
    %v3330 = vmul.f32 %v2306, -0.0013888889
    %v3331 = vmul.f32 %v2307, -0.0013888889
    %v3332 = vmul.f32 %v2308, -0.0013888889
    %v3333 = vmul.f32 %v2309, -0.0013888889
    %v3334 = vmul.f32 %v2310, -0.0013888889
    %v3335 = vmul.f32 %v2311, -0.0013888889
    %v3336 = vmul.f32 %v2312, -0.0013888889
    %v3337 = vmul.f32 %v2313, -0.0013888889
    %v3338 = vmul.f32 %v2314, -0.0013888889
    %v3339 = vmul.f32 %v2315, -0.0013888889
    %v3340 = vmul.f32 %v2316, -0.0013888889
    %v3341 = vmul.f32 %v2317, -0.0013888889
    %v3342 = vmul.f32 %v2318, -0.0013888889
    %v3343 = vmul.f32 %v2319, -0.0013888889
    %v3344 = vmul.f32 %v2320, -0.0013888889
    %v3345 = vmul.f32 %v2321, -0.0013888889
    %v3346 = vmul.f32 %v2322, -0.0013888889
    %v3347 = vmul.f32 %v2323, -0.0013888889
    %v3348 = vmul.f32 %v2324, -0.0013888889
    %v3349 = vmul.f32 %v2325, -0.0013888889
    %v3350 = vmul.f32 %v2326, -0.0013888889
    %v3351 = vmul.f32 %v2327, -0.0013888889
    %v3352 = vmul.f32 %v2328, -0.0013888889
    %v3353 = vmul.f32 %v2329, -0.0013888889
    %v3354 = vmul.f32 %v2330, -0.0013888889
    %v3355 = vmul.f32 %v2331, -0.0013888889
    %v3356 = vmul.f32 %v2332, -0.0013888889
    %v3357 = vmul.f32 %v2333, -0.0013888889
    %v3358 = vmul.f32 %v2334, -0.0013888889
    %v3359 = vmul.f32 %v2335, -0.0013888889
    %v3360 = vmul.f32 %v2336, -0.0013888889
    %v3361 = vmul.f32 %v2337, -0.0013888889
    %v3362 = vmul.f32 %v2338, -0.0013888889
    %v3363 = vmul.f32 %v2339, -0.0013888889
    %v3364 = vmul.f32 %v2340, -0.0013888889
    %v3365 = vmul.f32 %v2341, -0.0013888889
    %v3366 = vmul.f32 %v2342, -0.0013888889
    %v3367 = vmul.f32 %v2343, -0.0013888889
    %v3368 = vmul.f32 %v2344, -0.0013888889
    %v3369 = vmul.f32 %v2345, -0.0013888889
    %v3370 = vmul.f32 %v2346, -0.0013888889
    %v3371 = vmul.f32 %v2347, -0.0013888889
    %v3372 = vmul.f32 %v2348, -0.0013888889
    %v3373 = vmul.f32 %v2349, -0.0013888889
    %v3374 = vmul.f32 %v2350, -0.0013888889
    %v3375 = vmul.f32 %v2351, -0.0013888889
    %v3376 = vmul.f32 %v2352, -0.0013888889
    %v3377 = vmul.f32 %v2353, -0.0013888889
    %v3378 = vmul.f32 %v2354, -0.0013888889
    %v3379 = vmul.f32 %v2355, -0.0013888889
    %v3380 = vmul.f32 %v2356, -0.0013888889
    %v3381 = vmul.f32 %v2357, -0.0013888889
    %v3382 = vmul.f32 %v2358, -0.0013888889
    %v3383 = vmul.f32 %v2359, -0.0013888889
    %v3384 = vmul.f32 %v2360, -0.0013888889
    %v3385 = vmul.f32 %v2361, -0.0013888889
    %v3386 = vmul.f32 %v2362, -0.0013888889
    %v3387 = vmul.f32 %v2363, -0.0013888889
    %v3388 = vmul.f32 %v2364, -0.0013888889
    %v3389 = vmul.f32 %v2365, -0.0013888889
    %v3390 = vmul.f32 %v2366, -0.0013888889
    %v3391 = vmul.f32 %v2367, -0.0013888889
    %v3392 = vmul.f32 %v2368, -0.0013888889
    %v3393 = vmul.f32 %v2369, -0.0013888889
    %v3394 = vmul.f32 %v2370, -0.0013888889
    %v3395 = vmul.f32 %v2371, -0.0013888889
    %v3396 = vmul.f32 %v2372, -0.0013888889
    %v3397 = vmul.f32 %v2373, -0.0013888889
    %v3398 = vmul.f32 %v2374, -0.0013888889
    %v3399 = vmul.f32 %v2375, -0.0013888889
    %v3400 = vmul.f32 %v2376, -0.0013888889
    %v3401 = vmul.f32 %v2377, -0.0013888889
    %v3402 = vmul.f32 %v2378, -0.0013888889
    %v3403 = vmul.f32 %v2379, -0.0013888889
    %v3404 = vmul.f32 %v2380, -0.0013888889
    %v3405 = vmul.f32 %v2381, -0.0013888889
    %v3406 = vmul.f32 %v2382, -0.0013888889
    %v3407 = vmul.f32 %v2383, -0.0013888889
    %v3408 = vmul.f32 %v2384, -0.0013888889
    %v3409 = vmul.f32 %v2385, -0.0013888889
    %v3410 = vmul.f32 %v2386, -0.0013888889
    %v3411 = vmul.f32 %v2387, -0.0013888889
    %v3412 = vmul.f32 %v2388, -0.0013888889
    %v3413 = vmul.f32 %v2389, -0.0013888889
    %v3414 = vmul.f32 %v2390, -0.0013888889
    %v3415 = vmul.f32 %v2391, -0.0013888889
    %v3416 = vmul.f32 %v2392, -0.0013888889
    %v3417 = vmul.f32 %v2393, -0.0013888889
    %v3418 = vmul.f32 %v2394, -0.0013888889
    %v3419 = vmul.f32 %v2395, -0.0013888889
    %v3420 = vmul.f32 %v2396, -0.0013888889
    %v3421 = vmul.f32 %v2397, -0.0013888889
    %v3422 = vmul.f32 %v2398, -0.0013888889
    %v3423 = vmul.f32 %v2399, -0.0013888889
    %v3424 = vmul.f32 %v2400, -0.0013888889
    %v3425 = vmul.f32 %v2401, -0.0013888889
    %v3426 = vmul.f32 %v2402, -0.0013888889
    %v3427 = vmul.f32 %v2403, -0.0013888889
    %v3428 = vmul.f32 %v2404, -0.0013888889
    %v3429 = vmul.f32 %v2405, -0.0013888889
    %v3430 = vmul.f32 %v2406, -0.0013888889
    %v3431 = vmul.f32 %v2407, -0.0013888889
    %v3432 = vmul.f32 %v2408, -0.0013888889
    %v3433 = vmul.f32 %v2409, -0.0013888889
    %v3434 = vmul.f32 %v2410, -0.0013888889
    %v3435 = vmul.f32 %v2411, -0.0013888889
    %v3436 = vmul.f32 %v2412, -0.0013888889
    %v3437 = vmul.f32 %v2413, -0.0013888889
    %v3438 = vmul.f32 %v2414, -0.0013888889
    %v3439 = vadd.f32 %v3311, 0.041666668
    %v3440 = vadd.f32 %v3312, 0.041666668
    %v3441 = vadd.f32 %v3313, 0.041666668
    %v3442 = vadd.f32 %v3314, 0.041666668
    %v3443 = vadd.f32 %v3315, 0.041666668
    %v3444 = vadd.f32 %v3316, 0.041666668
    %v3445 = vadd.f32 %v3317, 0.041666668
    %v3446 = vadd.f32 %v3318, 0.041666668
    %v3447 = vadd.f32 %v3319, 0.041666668
    %v3448 = vadd.f32 %v3320, 0.041666668
    %v3449 = vadd.f32 %v3321, 0.041666668
    %v3450 = vadd.f32 %v3322, 0.041666668
    %v3451 = vadd.f32 %v3323, 0.041666668
    %v3452 = vadd.f32 %v3324, 0.041666668
    %v3453 = vadd.f32 %v3325, 0.041666668
    %v3454 = vadd.f32 %v3326, 0.041666668
    %v3455 = vadd.f32 %v3327, 0.041666668
    %v3456 = vadd.f32 %v3328, 0.041666668
    %v3457 = vadd.f32 %v3329, 0.041666668
    %v3458 = vadd.f32 %v3330, 0.041666668
    %v3459 = vadd.f32 %v3331, 0.041666668
    %v3460 = vadd.f32 %v3332, 0.041666668
    %v3461 = vadd.f32 %v3333, 0.041666668
    %v3462 = vadd.f32 %v3334, 0.041666668
    %v3463 = vadd.f32 %v3335, 0.041666668
    %v3464 = vadd.f32 %v3336, 0.041666668
    %v3465 = vadd.f32 %v3337, 0.041666668
    %v3466 = vadd.f32 %v3338, 0.041666668
    %v3467 = vadd.f32 %v3339, 0.041666668
    %v3468 = vadd.f32 %v3340, 0.041666668
    %v3469 = vadd.f32 %v3341, 0.041666668
    %v3470 = vadd.f32 %v3342, 0.041666668
    %v3471 = vadd.f32 %v3343, 0.041666668
    %v3472 = vadd.f32 %v3344, 0.041666668
    %v3473 = vadd.f32 %v3345, 0.041666668
    %v3474 = vadd.f32 %v3346, 0.041666668
    %v3475 = vadd.f32 %v3347, 0.041666668
    %v3476 = vadd.f32 %v3348, 0.041666668
    %v3477 = vadd.f32 %v3349, 0.041666668
    %v3478 = vadd.f32 %v3350, 0.041666668
    %v3479 = vadd.f32 %v3351, 0.041666668
    %v3480 = vadd.f32 %v3352, 0.041666668
    %v3481 = vadd.f32 %v3353, 0.041666668
    %v3482 = vadd.f32 %v3354, 0.041666668
    %v3483 = vadd.f32 %v3355, 0.041666668
    %v3484 = vadd.f32 %v3356, 0.041666668
    %v3485 = vadd.f32 %v3357, 0.041666668
    %v3486 = vadd.f32 %v3358, 0.041666668
    %v3487 = vadd.f32 %v3359, 0.041666668
    %v3488 = vadd.f32 %v3360, 0.041666668
    %v3489 = vadd.f32 %v3361, 0.041666668
    %v3490 = vadd.f32 %v3362, 0.041666668
    %v3491 = vadd.f32 %v3363, 0.041666668
    %v3492 = vadd.f32 %v3364, 0.041666668
    %v3493 = vadd.f32 %v3365, 0.041666668
    %v3494 = vadd.f32 %v3366, 0.041666668
    %v3495 = vadd.f32 %v3367, 0.041666668
    %v3496 = vadd.f32 %v3368, 0.041666668
    %v3497 = vadd.f32 %v3369, 0.041666668
    %v3498 = vadd.f32 %v3370, 0.041666668
    %v3499 = vadd.f32 %v3371, 0.041666668
    %v3500 = vadd.f32 %v3372, 0.041666668
    %v3501 = vadd.f32 %v3373, 0.041666668
    %v3502 = vadd.f32 %v3374, 0.041666668
    %v3503 = vadd.f32 %v3375, 0.041666668
    %v3504 = vadd.f32 %v3376, 0.041666668
    %v3505 = vadd.f32 %v3377, 0.041666668
    %v3506 = vadd.f32 %v3378, 0.041666668
    %v3507 = vadd.f32 %v3379, 0.041666668
    %v3508 = vadd.f32 %v3380, 0.041666668
    %v3509 = vadd.f32 %v3381, 0.041666668
    %v3510 = vadd.f32 %v3382, 0.041666668
    %v3511 = vadd.f32 %v3383, 0.041666668
    %v3512 = vadd.f32 %v3384, 0.041666668
    %v3513 = vadd.f32 %v3385, 0.041666668
    %v3514 = vadd.f32 %v3386, 0.041666668
    %v3515 = vadd.f32 %v3387, 0.041666668
    %v3516 = vadd.f32 %v3388, 0.041666668
    %v3517 = vadd.f32 %v3389, 0.041666668
    %v3518 = vadd.f32 %v3390, 0.041666668
    %v3519 = vadd.f32 %v3391, 0.041666668
    %v3520 = vadd.f32 %v3392, 0.041666668
    %v3521 = vadd.f32 %v3393, 0.041666668
    %v3522 = vadd.f32 %v3394, 0.041666668
    %v3523 = vadd.f32 %v3395, 0.041666668
    %v3524 = vadd.f32 %v3396, 0.041666668
    %v3525 = vadd.f32 %v3397, 0.041666668
    %v3526 = vadd.f32 %v3398, 0.041666668
    %v3527 = vadd.f32 %v3399, 0.041666668
    %v3528 = vadd.f32 %v3400, 0.041666668
    %v3529 = vadd.f32 %v3401, 0.041666668
    %v3530 = vadd.f32 %v3402, 0.041666668
    %v3531 = vadd.f32 %v3403, 0.041666668
    %v3532 = vadd.f32 %v3404, 0.041666668
    %v3533 = vadd.f32 %v3405, 0.041666668
    %v3534 = vadd.f32 %v3406, 0.041666668
    %v3535 = vadd.f32 %v3407, 0.041666668
    %v3536 = vadd.f32 %v3408, 0.041666668
    %v3537 = vadd.f32 %v3409, 0.041666668
    %v3538 = vadd.f32 %v3410, 0.041666668
    %v3539 = vadd.f32 %v3411, 0.041666668
    %v3540 = vadd.f32 %v3412, 0.041666668
    %v3541 = vadd.f32 %v3413, 0.041666668
    %v3542 = vadd.f32 %v3414, 0.041666668
    %v3543 = vadd.f32 %v3415, 0.041666668
    %v3544 = vadd.f32 %v3416, 0.041666668
    %v3545 = vadd.f32 %v3417, 0.041666668
    %v3546 = vadd.f32 %v3418, 0.041666668
    %v3547 = vadd.f32 %v3419, 0.041666668
    %v3548 = vadd.f32 %v3420, 0.041666668
    %v3549 = vadd.f32 %v3421, 0.041666668
    %v3550 = vadd.f32 %v3422, 0.041666668
    %v3551 = vadd.f32 %v3423, 0.041666668
    %v3552 = vadd.f32 %v3424, 0.041666668
    %v3553 = vadd.f32 %v3425, 0.041666668
    %v3554 = vadd.f32 %v3426, 0.041666668
    %v3555 = vadd.f32 %v3427, 0.041666668
    %v3556 = vadd.f32 %v3428, 0.041666668
    %v3557 = vadd.f32 %v3429, 0.041666668
    %v3558 = vadd.f32 %v3430, 0.041666668
    %v3559 = vadd.f32 %v3431, 0.041666668
    %v3560 = vadd.f32 %v3432, 0.041666668
    %v3561 = vadd.f32 %v3433, 0.041666668
    %v3562 = vadd.f32 %v3434, 0.041666668
    %v3563 = vadd.f32 %v3435, 0.041666668
    %v3564 = vadd.f32 %v3436, 0.041666668
    %v3565 = vadd.f32 %v3437, 0.041666668
    %v3566 = vadd.f32 %v3438, 0.041666668
    %v3567 = vmul.f32 %v2287, %v3439
    %v3568 = vmul.f32 %v2288, %v3440
    %v3569 = vmul.f32 %v2289, %v3441
    %v3570 = vmul.f32 %v2290, %v3442
    %v3571 = vmul.f32 %v2291, %v3443
    %v3572 = vmul.f32 %v2292, %v3444
    %v3573 = vmul.f32 %v2293, %v3445
    %v3574 = vmul.f32 %v2294, %v3446
    %v3575 = vmul.f32 %v2295, %v3447
    %v3576 = vmul.f32 %v2296, %v3448
    %v3577 = vmul.f32 %v2297, %v3449
    %v3578 = vmul.f32 %v2298, %v3450
    %v3579 = vmul.f32 %v2299, %v3451
    %v3580 = vmul.f32 %v2300, %v3452
    %v3581 = vmul.f32 %v2301, %v3453
    %v3582 = vmul.f32 %v2302, %v3454
    %v3583 = vmul.f32 %v2303, %v3455
    %v3584 = vmul.f32 %v2304, %v3456
    %v3585 = vmul.f32 %v2305, %v3457
    %v3586 = vmul.f32 %v2306, %v3458
    %v3587 = vmul.f32 %v2307, %v3459
    %v3588 = vmul.f32 %v2308, %v3460
    %v3589 = vmul.f32 %v2309, %v3461
    %v3590 = vmul.f32 %v2310, %v3462
    %v3591 = vmul.f32 %v2311, %v3463
    %v3592 = vmul.f32 %v2312, %v3464
    %v3593 = vmul.f32 %v2313, %v3465
    %v3594 = vmul.f32 %v2314, %v3466
    %v3595 = vmul.f32 %v2315, %v3467
    %v3596 = vmul.f32 %v2316, %v3468
    %v3597 = vmul.f32 %v2317, %v3469
    %v3598 = vmul.f32 %v2318, %v3470
    %v3599 = vmul.f32 %v2319, %v3471
    %v3600 = vmul.f32 %v2320, %v3472
    %v3601 = vmul.f32 %v2321, %v3473
    %v3602 = vmul.f32 %v2322, %v3474
    %v3603 = vmul.f32 %v2323, %v3475
    %v3604 = vmul.f32 %v2324, %v3476
    %v3605 = vmul.f32 %v2325, %v3477
    %v3606 = vmul.f32 %v2326, %v3478
    %v3607 = vmul.f32 %v2327, %v3479
    %v3608 = vmul.f32 %v2328, %v3480
    %v3609 = vmul.f32 %v2329, %v3481
    %v3610 = vmul.f32 %v2330, %v3482
    %v3611 = vmul.f32 %v2331, %v3483
    %v3612 = vmul.f32 %v2332, %v3484
    %v3613 = vmul.f32 %v2333, %v3485
    %v3614 = vmul.f32 %v2334, %v3486
    %v3615 = vmul.f32 %v2335, %v3487
    %v3616 = vmul.f32 %v2336, %v3488
    %v3617 = vmul.f32 %v2337, %v3489
    %v3618 = vmul.f32 %v2338, %v3490
    %v3619 = vmul.f32 %v2339, %v3491
    %v3620 = vmul.f32 %v2340, %v3492
    %v3621 = vmul.f32 %v2341, %v3493
    %v3622 = vmul.f32 %v2342, %v3494
    %v3623 = vmul.f32 %v2343, %v3495
    %v3624 = vmul.f32 %v2344, %v3496
    %v3625 = vmul.f32 %v2345, %v3497
    %v3626 = vmul.f32 %v2346, %v3498
    %v3627 = vmul.f32 %v2347, %v3499
    %v3628 = vmul.f32 %v2348, %v3500
    %v3629 = vmul.f32 %v2349, %v3501
    %v3630 = vmul.f32 %v2350, %v3502
    %v3631 = vmul.f32 %v2351, %v3503
    %v3632 = vmul.f32 %v2352, %v3504
    %v3633 = vmul.f32 %v2353, %v3505
    %v3634 = vmul.f32 %v2354, %v3506
    %v3635 = vmul.f32 %v2355, %v3507
    %v3636 = vmul.f32 %v2356, %v3508
    %v3637 = vmul.f32 %v2357, %v3509
    %v3638 = vmul.f32 %v2358, %v3510
    %v3639 = vmul.f32 %v2359, %v3511
    %v3640 = vmul.f32 %v2360, %v3512
    %v3641 = vmul.f32 %v2361, %v3513
    %v3642 = vmul.f32 %v2362, %v3514
    %v3643 = vmul.f32 %v2363, %v3515
    %v3644 = vmul.f32 %v2364, %v3516
    %v3645 = vmul.f32 %v2365, %v3517
    %v3646 = vmul.f32 %v2366, %v3518
    %v3647 = vmul.f32 %v2367, %v3519
    %v3648 = vmul.f32 %v2368, %v3520
    %v3649 = vmul.f32 %v2369, %v3521
    %v3650 = vmul.f32 %v2370, %v3522
    %v3651 = vmul.f32 %v2371, %v3523
    %v3652 = vmul.f32 %v2372, %v3524
    %v3653 = vmul.f32 %v2373, %v3525
    %v3654 = vmul.f32 %v2374, %v3526
    %v3655 = vmul.f32 %v2375, %v3527
    %v3656 = vmul.f32 %v2376, %v3528
    %v3657 = vmul.f32 %v2377, %v3529
    %v3658 = vmul.f32 %v2378, %v3530
    %v3659 = vmul.f32 %v2379, %v3531
    %v3660 = vmul.f32 %v2380, %v3532
    %v3661 = vmul.f32 %v2381, %v3533
    %v3662 = vmul.f32 %v2382, %v3534
    %v3663 = vmul.f32 %v2383, %v3535
    %v3664 = vmul.f32 %v2384, %v3536
    %v3665 = vmul.f32 %v2385, %v3537
    %v3666 = vmul.f32 %v2386, %v3538
    %v3667 = vmul.f32 %v2387, %v3539
    %v3668 = vmul.f32 %v2388, %v3540
    %v3669 = vmul.f32 %v2389, %v3541
    %v3670 = vmul.f32 %v2390, %v3542
    %v3671 = vmul.f32 %v2391, %v3543
    %v3672 = vmul.f32 %v2392, %v3544
    %v3673 = vmul.f32 %v2393, %v3545
    %v3674 = vmul.f32 %v2394, %v3546
    %v3675 = vmul.f32 %v2395, %v3547
    %v3676 = vmul.f32 %v2396, %v3548
    %v3677 = vmul.f32 %v2397, %v3549
    %v3678 = vmul.f32 %v2398, %v3550
    %v3679 = vmul.f32 %v2399, %v3551
    %v3680 = vmul.f32 %v2400, %v3552
    %v3681 = vmul.f32 %v2401, %v3553
    %v3682 = vmul.f32 %v2402, %v3554
    %v3683 = vmul.f32 %v2403, %v3555
    %v3684 = vmul.f32 %v2404, %v3556
    %v3685 = vmul.f32 %v2405, %v3557
    %v3686 = vmul.f32 %v2406, %v3558
    %v3687 = vmul.f32 %v2407, %v3559
    %v3688 = vmul.f32 %v2408, %v3560
    %v3689 = vmul.f32 %v2409, %v3561
    %v3690 = vmul.f32 %v2410, %v3562
    %v3691 = vmul.f32 %v2411, %v3563
    %v3692 = vmul.f32 %v2412, %v3564
    %v3693 = vmul.f32 %v2413, %v3565
    %v3694 = vmul.f32 %v2414, %v3566
    %v3695 = vadd.f32 %v3567, -0.5
    %v3696 = vadd.f32 %v3568, -0.5
    %v3697 = vadd.f32 %v3569, -0.5
    %v3698 = vadd.f32 %v3570, -0.5
    %v3699 = vadd.f32 %v3571, -0.5
    %v3700 = vadd.f32 %v3572, -0.5
    %v3701 = vadd.f32 %v3573, -0.5
    %v3702 = vadd.f32 %v3574, -0.5
    %v3703 = vadd.f32 %v3575, -0.5
    %v3704 = vadd.f32 %v3576, -0.5
    %v3705 = vadd.f32 %v3577, -0.5
    %v3706 = vadd.f32 %v3578, -0.5
    %v3707 = vadd.f32 %v3579, -0.5
    %v3708 = vadd.f32 %v3580, -0.5
    %v3709 = vadd.f32 %v3581, -0.5
    %v3710 = vadd.f32 %v3582, -0.5
    %v3711 = vadd.f32 %v3583, -0.5
    %v3712 = vadd.f32 %v3584, -0.5
    %v3713 = vadd.f32 %v3585, -0.5
    %v3714 = vadd.f32 %v3586, -0.5
    %v3715 = vadd.f32 %v3587, -0.5
    %v3716 = vadd.f32 %v3588, -0.5
    %v3717 = vadd.f32 %v3589, -0.5
    %v3718 = vadd.f32 %v3590, -0.5
    %v3719 = vadd.f32 %v3591, -0.5
    %v3720 = vadd.f32 %v3592, -0.5
    %v3721 = vadd.f32 %v3593, -0.5
    %v3722 = vadd.f32 %v3594, -0.5
    %v3723 = vadd.f32 %v3595, -0.5
    %v3724 = vadd.f32 %v3596, -0.5
    %v3725 = vadd.f32 %v3597, -0.5
    %v3726 = vadd.f32 %v3598, -0.5
    %v3727 = vadd.f32 %v3599, -0.5
    %v3728 = vadd.f32 %v3600, -0.5
    %v3729 = vadd.f32 %v3601, -0.5
    %v3730 = vadd.f32 %v3602, -0.5
    %v3731 = vadd.f32 %v3603, -0.5
    %v3732 = vadd.f32 %v3604, -0.5
    %v3733 = vadd.f32 %v3605, -0.5
    %v3734 = vadd.f32 %v3606, -0.5
    %v3735 = vadd.f32 %v3607, -0.5
    %v3736 = vadd.f32 %v3608, -0.5
    %v3737 = vadd.f32 %v3609, -0.5
    %v3738 = vadd.f32 %v3610, -0.5
    %v3739 = vadd.f32 %v3611, -0.5
    %v3740 = vadd.f32 %v3612, -0.5
    %v3741 = vadd.f32 %v3613, -0.5
    %v3742 = vadd.f32 %v3614, -0.5
    %v3743 = vadd.f32 %v3615, -0.5
    %v3744 = vadd.f32 %v3616, -0.5
    %v3745 = vadd.f32 %v3617, -0.5
    %v3746 = vadd.f32 %v3618, -0.5
    %v3747 = vadd.f32 %v3619, -0.5
    %v3748 = vadd.f32 %v3620, -0.5
    %v3749 = vadd.f32 %v3621, -0.5
    %v3750 = vadd.f32 %v3622, -0.5
    %v3751 = vadd.f32 %v3623, -0.5
    %v3752 = vadd.f32 %v3624, -0.5
    %v3753 = vadd.f32 %v3625, -0.5
    %v3754 = vadd.f32 %v3626, -0.5
    %v3755 = vadd.f32 %v3627, -0.5
    %v3756 = vadd.f32 %v3628, -0.5
    %v3757 = vadd.f32 %v3629, -0.5
    %v3758 = vadd.f32 %v3630, -0.5
    %v3759 = vadd.f32 %v3631, -0.5
    %v3760 = vadd.f32 %v3632, -0.5
    %v3761 = vadd.f32 %v3633, -0.5
    %v3762 = vadd.f32 %v3634, -0.5
    %v3763 = vadd.f32 %v3635, -0.5
    %v3764 = vadd.f32 %v3636, -0.5
    %v3765 = vadd.f32 %v3637, -0.5
    %v3766 = vadd.f32 %v3638, -0.5
    %v3767 = vadd.f32 %v3639, -0.5
    %v3768 = vadd.f32 %v3640, -0.5
    %v3769 = vadd.f32 %v3641, -0.5
    %v3770 = vadd.f32 %v3642, -0.5
    %v3771 = vadd.f32 %v3643, -0.5
    %v3772 = vadd.f32 %v3644, -0.5
    %v3773 = vadd.f32 %v3645, -0.5
    %v3774 = vadd.f32 %v3646, -0.5
    %v3775 = vadd.f32 %v3647, -0.5
    %v3776 = vadd.f32 %v3648, -0.5
    %v3777 = vadd.f32 %v3649, -0.5
    %v3778 = vadd.f32 %v3650, -0.5
    %v3779 = vadd.f32 %v3651, -0.5
    %v3780 = vadd.f32 %v3652, -0.5
    %v3781 = vadd.f32 %v3653, -0.5
    %v3782 = vadd.f32 %v3654, -0.5
    %v3783 = vadd.f32 %v3655, -0.5
    %v3784 = vadd.f32 %v3656, -0.5
    %v3785 = vadd.f32 %v3657, -0.5
    %v3786 = vadd.f32 %v3658, -0.5
    %v3787 = vadd.f32 %v3659, -0.5
    %v3788 = vadd.f32 %v3660, -0.5
    %v3789 = vadd.f32 %v3661, -0.5
    %v3790 = vadd.f32 %v3662, -0.5
    %v3791 = vadd.f32 %v3663, -0.5
    %v3792 = vadd.f32 %v3664, -0.5
    %v3793 = vadd.f32 %v3665, -0.5
    %v3794 = vadd.f32 %v3666, -0.5
    %v3795 = vadd.f32 %v3667, -0.5
    %v3796 = vadd.f32 %v3668, -0.5
    %v3797 = vadd.f32 %v3669, -0.5
    %v3798 = vadd.f32 %v3670, -0.5
    %v3799 = vadd.f32 %v3671, -0.5
    %v3800 = vadd.f32 %v3672, -0.5
    %v3801 = vadd.f32 %v3673, -0.5
    %v3802 = vadd.f32 %v3674, -0.5
    %v3803 = vadd.f32 %v3675, -0.5
    %v3804 = vadd.f32 %v3676, -0.5
    %v3805 = vadd.f32 %v3677, -0.5
    %v3806 = vadd.f32 %v3678, -0.5
    %v3807 = vadd.f32 %v3679, -0.5
    %v3808 = vadd.f32 %v3680, -0.5
    %v3809 = vadd.f32 %v3681, -0.5
    %v3810 = vadd.f32 %v3682, -0.5
    %v3811 = vadd.f32 %v3683, -0.5
    %v3812 = vadd.f32 %v3684, -0.5
    %v3813 = vadd.f32 %v3685, -0.5
    %v3814 = vadd.f32 %v3686, -0.5
    %v3815 = vadd.f32 %v3687, -0.5
    %v3816 = vadd.f32 %v3688, -0.5
    %v3817 = vadd.f32 %v3689, -0.5
    %v3818 = vadd.f32 %v3690, -0.5
    %v3819 = vadd.f32 %v3691, -0.5
    %v3820 = vadd.f32 %v3692, -0.5
    %v3821 = vadd.f32 %v3693, -0.5
    %v3822 = vadd.f32 %v3694, -0.5
    %v3823 = vmul.f32 %v2287, %v3695
    %v3824 = vmul.f32 %v2288, %v3696
    %v3825 = vmul.f32 %v2289, %v3697
    %v3826 = vmul.f32 %v2290, %v3698
    %v3827 = vmul.f32 %v2291, %v3699
    %v3828 = vmul.f32 %v2292, %v3700
    %v3829 = vmul.f32 %v2293, %v3701
    %v3830 = vmul.f32 %v2294, %v3702
    %v3831 = vmul.f32 %v2295, %v3703
    %v3832 = vmul.f32 %v2296, %v3704
    %v3833 = vmul.f32 %v2297, %v3705
    %v3834 = vmul.f32 %v2298, %v3706
    %v3835 = vmul.f32 %v2299, %v3707
    %v3836 = vmul.f32 %v2300, %v3708
    %v3837 = vmul.f32 %v2301, %v3709
    %v3838 = vmul.f32 %v2302, %v3710
    %v3839 = vmul.f32 %v2303, %v3711
    %v3840 = vmul.f32 %v2304, %v3712
    %v3841 = vmul.f32 %v2305, %v3713
    %v3842 = vmul.f32 %v2306, %v3714
    %v3843 = vmul.f32 %v2307, %v3715
    %v3844 = vmul.f32 %v2308, %v3716
    %v3845 = vmul.f32 %v2309, %v3717
    %v3846 = vmul.f32 %v2310, %v3718
    %v3847 = vmul.f32 %v2311, %v3719
    %v3848 = vmul.f32 %v2312, %v3720
    %v3849 = vmul.f32 %v2313, %v3721
    %v3850 = vmul.f32 %v2314, %v3722
    %v3851 = vmul.f32 %v2315, %v3723
    %v3852 = vmul.f32 %v2316, %v3724
    %v3853 = vmul.f32 %v2317, %v3725
    %v3854 = vmul.f32 %v2318, %v3726
    %v3855 = vmul.f32 %v2319, %v3727
    %v3856 = vmul.f32 %v2320, %v3728
    %v3857 = vmul.f32 %v2321, %v3729
    %v3858 = vmul.f32 %v2322, %v3730
    %v3859 = vmul.f32 %v2323, %v3731
    %v3860 = vmul.f32 %v2324, %v3732
    %v3861 = vmul.f32 %v2325, %v3733
    %v3862 = vmul.f32 %v2326, %v3734
    %v3863 = vmul.f32 %v2327, %v3735
    %v3864 = vmul.f32 %v2328, %v3736
    %v3865 = vmul.f32 %v2329, %v3737
    %v3866 = vmul.f32 %v2330, %v3738
    %v3867 = vmul.f32 %v2331, %v3739
    %v3868 = vmul.f32 %v2332, %v3740
    %v3869 = vmul.f32 %v2333, %v3741
    %v3870 = vmul.f32 %v2334, %v3742
    %v3871 = vmul.f32 %v2335, %v3743
    %v3872 = vmul.f32 %v2336, %v3744
    %v3873 = vmul.f32 %v2337, %v3745
    %v3874 = vmul.f32 %v2338, %v3746
    %v3875 = vmul.f32 %v2339, %v3747
    %v3876 = vmul.f32 %v2340, %v3748
    %v3877 = vmul.f32 %v2341, %v3749
    %v3878 = vmul.f32 %v2342, %v3750
    %v3879 = vmul.f32 %v2343, %v3751
    %v3880 = vmul.f32 %v2344, %v3752
    %v3881 = vmul.f32 %v2345, %v3753
    %v3882 = vmul.f32 %v2346, %v3754
    %v3883 = vmul.f32 %v2347, %v3755
    %v3884 = vmul.f32 %v2348, %v3756
    %v3885 = vmul.f32 %v2349, %v3757
    %v3886 = vmul.f32 %v2350, %v3758
    %v3887 = vmul.f32 %v2351, %v3759
    %v3888 = vmul.f32 %v2352, %v3760
    %v3889 = vmul.f32 %v2353, %v3761
    %v3890 = vmul.f32 %v2354, %v3762
    %v3891 = vmul.f32 %v2355, %v3763
    %v3892 = vmul.f32 %v2356, %v3764
    %v3893 = vmul.f32 %v2357, %v3765
    %v3894 = vmul.f32 %v2358, %v3766
    %v3895 = vmul.f32 %v2359, %v3767
    %v3896 = vmul.f32 %v2360, %v3768
    %v3897 = vmul.f32 %v2361, %v3769
    %v3898 = vmul.f32 %v2362, %v3770
    %v3899 = vmul.f32 %v2363, %v3771
    %v3900 = vmul.f32 %v2364, %v3772
    %v3901 = vmul.f32 %v2365, %v3773
    %v3902 = vmul.f32 %v2366, %v3774
    %v3903 = vmul.f32 %v2367, %v3775
    %v3904 = vmul.f32 %v2368, %v3776
    %v3905 = vmul.f32 %v2369, %v3777
    %v3906 = vmul.f32 %v2370, %v3778
    %v3907 = vmul.f32 %v2371, %v3779
    %v3908 = vmul.f32 %v2372, %v3780
    %v3909 = vmul.f32 %v2373, %v3781
    %v3910 = vmul.f32 %v2374, %v3782
    %v3911 = vmul.f32 %v2375, %v3783
    %v3912 = vmul.f32 %v2376, %v3784
    %v3913 = vmul.f32 %v2377, %v3785
    %v3914 = vmul.f32 %v2378, %v3786
    %v3915 = vmul.f32 %v2379, %v3787
    %v3916 = vmul.f32 %v2380, %v3788
    %v3917 = vmul.f32 %v2381, %v3789
    %v3918 = vmul.f32 %v2382, %v3790
    %v3919 = vmul.f32 %v2383, %v3791
    %v3920 = vmul.f32 %v2384, %v3792
    %v3921 = vmul.f32 %v2385, %v3793
    %v3922 = vmul.f32 %v2386, %v3794
    %v3923 = vmul.f32 %v2387, %v3795
    %v3924 = vmul.f32 %v2388, %v3796
    %v3925 = vmul.f32 %v2389, %v3797
    %v3926 = vmul.f32 %v2390, %v3798
    %v3927 = vmul.f32 %v2391, %v3799
    %v3928 = vmul.f32 %v2392, %v3800
    %v3929 = vmul.f32 %v2393, %v3801
    %v3930 = vmul.f32 %v2394, %v3802
    %v3931 = vmul.f32 %v2395, %v3803
    %v3932 = vmul.f32 %v2396, %v3804
    %v3933 = vmul.f32 %v2397, %v3805
    %v3934 = vmul.f32 %v2398, %v3806
    %v3935 = vmul.f32 %v2399, %v3807
    %v3936 = vmul.f32 %v2400, %v3808
    %v3937 = vmul.f32 %v2401, %v3809
    %v3938 = vmul.f32 %v2402, %v3810
    %v3939 = vmul.f32 %v2403, %v3811
    %v3940 = vmul.f32 %v2404, %v3812
    %v3941 = vmul.f32 %v2405, %v3813
    %v3942 = vmul.f32 %v2406, %v3814
    %v3943 = vmul.f32 %v2407, %v3815
    %v3944 = vmul.f32 %v2408, %v3816
    %v3945 = vmul.f32 %v2409, %v3817
    %v3946 = vmul.f32 %v2410, %v3818
    %v3947 = vmul.f32 %v2411, %v3819
    %v3948 = vmul.f32 %v2412, %v3820
    %v3949 = vmul.f32 %v2413, %v3821
    %v3950 = vmul.f32 %v2414, %v3822
    %v3951 = vadd.f32 %v3823, 1.0
    %v3952 = vadd.f32 %v3824, 1.0
    %v3953 = vadd.f32 %v3825, 1.0
    %v3954 = vadd.f32 %v3826, 1.0
    %v3955 = vadd.f32 %v3827, 1.0
    %v3956 = vadd.f32 %v3828, 1.0
    %v3957 = vadd.f32 %v3829, 1.0
    %v3958 = vadd.f32 %v3830, 1.0
    %v3959 = vadd.f32 %v3831, 1.0
    %v3960 = vadd.f32 %v3832, 1.0
    %v3961 = vadd.f32 %v3833, 1.0
    %v3962 = vadd.f32 %v3834, 1.0
    %v3963 = vadd.f32 %v3835, 1.0
    %v3964 = vadd.f32 %v3836, 1.0
    %v3965 = vadd.f32 %v3837, 1.0
    %v3966 = vadd.f32 %v3838, 1.0
    %v3967 = vadd.f32 %v3839, 1.0
    %v3968 = vadd.f32 %v3840, 1.0
    %v3969 = vadd.f32 %v3841, 1.0
    %v3970 = vadd.f32 %v3842, 1.0
    %v3971 = vadd.f32 %v3843, 1.0
    %v3972 = vadd.f32 %v3844, 1.0
    %v3973 = vadd.f32 %v3845, 1.0
    %v3974 = vadd.f32 %v3846, 1.0
    %v3975 = vadd.f32 %v3847, 1.0
    %v3976 = vadd.f32 %v3848, 1.0
    %v3977 = vadd.f32 %v3849, 1.0
    %v3978 = vadd.f32 %v3850, 1.0
    %v3979 = vadd.f32 %v3851, 1.0
    %v3980 = vadd.f32 %v3852, 1.0
    %v3981 = vadd.f32 %v3853, 1.0
    %v3982 = vadd.f32 %v3854, 1.0
    %v3983 = vadd.f32 %v3855, 1.0
    %v3984 = vadd.f32 %v3856, 1.0
    %v3985 = vadd.f32 %v3857, 1.0
    %v3986 = vadd.f32 %v3858, 1.0
    %v3987 = vadd.f32 %v3859, 1.0
    %v3988 = vadd.f32 %v3860, 1.0
    %v3989 = vadd.f32 %v3861, 1.0
    %v3990 = vadd.f32 %v3862, 1.0
    %v3991 = vadd.f32 %v3863, 1.0
    %v3992 = vadd.f32 %v3864, 1.0
    %v3993 = vadd.f32 %v3865, 1.0
    %v3994 = vadd.f32 %v3866, 1.0
    %v3995 = vadd.f32 %v3867, 1.0
    %v3996 = vadd.f32 %v3868, 1.0
    %v3997 = vadd.f32 %v3869, 1.0
    %v3998 = vadd.f32 %v3870, 1.0
    %v3999 = vadd.f32 %v3871, 1.0
    %v4000 = vadd.f32 %v3872, 1.0
    %v4001 = vadd.f32 %v3873, 1.0
    %v4002 = vadd.f32 %v3874, 1.0
    %v4003 = vadd.f32 %v3875, 1.0
    %v4004 = vadd.f32 %v3876, 1.0
    %v4005 = vadd.f32 %v3877, 1.0
    %v4006 = vadd.f32 %v3878, 1.0
    %v4007 = vadd.f32 %v3879, 1.0
    %v4008 = vadd.f32 %v3880, 1.0
    %v4009 = vadd.f32 %v3881, 1.0
    %v4010 = vadd.f32 %v3882, 1.0
    %v4011 = vadd.f32 %v3883, 1.0
    %v4012 = vadd.f32 %v3884, 1.0
    %v4013 = vadd.f32 %v3885, 1.0
    %v4014 = vadd.f32 %v3886, 1.0
    %v4015 = vadd.f32 %v3887, 1.0
    %v4016 = vadd.f32 %v3888, 1.0
    %v4017 = vadd.f32 %v3889, 1.0
    %v4018 = vadd.f32 %v3890, 1.0
    %v4019 = vadd.f32 %v3891, 1.0
    %v4020 = vadd.f32 %v3892, 1.0
    %v4021 = vadd.f32 %v3893, 1.0
    %v4022 = vadd.f32 %v3894, 1.0
    %v4023 = vadd.f32 %v3895, 1.0
    %v4024 = vadd.f32 %v3896, 1.0
    %v4025 = vadd.f32 %v3897, 1.0
    %v4026 = vadd.f32 %v3898, 1.0
    %v4027 = vadd.f32 %v3899, 1.0
    %v4028 = vadd.f32 %v3900, 1.0
    %v4029 = vadd.f32 %v3901, 1.0
    %v4030 = vadd.f32 %v3902, 1.0
    %v4031 = vadd.f32 %v3903, 1.0
    %v4032 = vadd.f32 %v3904, 1.0
    %v4033 = vadd.f32 %v3905, 1.0
    %v4034 = vadd.f32 %v3906, 1.0
    %v4035 = vadd.f32 %v3907, 1.0
    %v4036 = vadd.f32 %v3908, 1.0
    %v4037 = vadd.f32 %v3909, 1.0
    %v4038 = vadd.f32 %v3910, 1.0
    %v4039 = vadd.f32 %v3911, 1.0
    %v4040 = vadd.f32 %v3912, 1.0
    %v4041 = vadd.f32 %v3913, 1.0
    %v4042 = vadd.f32 %v3914, 1.0
    %v4043 = vadd.f32 %v3915, 1.0
    %v4044 = vadd.f32 %v3916, 1.0
    %v4045 = vadd.f32 %v3917, 1.0
    %v4046 = vadd.f32 %v3918, 1.0
    %v4047 = vadd.f32 %v3919, 1.0
    %v4048 = vadd.f32 %v3920, 1.0
    %v4049 = vadd.f32 %v3921, 1.0
    %v4050 = vadd.f32 %v3922, 1.0
    %v4051 = vadd.f32 %v3923, 1.0
    %v4052 = vadd.f32 %v3924, 1.0
    %v4053 = vadd.f32 %v3925, 1.0
    %v4054 = vadd.f32 %v3926, 1.0
    %v4055 = vadd.f32 %v3927, 1.0
    %v4056 = vadd.f32 %v3928, 1.0
    %v4057 = vadd.f32 %v3929, 1.0
    %v4058 = vadd.f32 %v3930, 1.0
    %v4059 = vadd.f32 %v3931, 1.0
    %v4060 = vadd.f32 %v3932, 1.0
    %v4061 = vadd.f32 %v3933, 1.0
    %v4062 = vadd.f32 %v3934, 1.0
    %v4063 = vadd.f32 %v3935, 1.0
    %v4064 = vadd.f32 %v3936, 1.0
    %v4065 = vadd.f32 %v3937, 1.0
    %v4066 = vadd.f32 %v3938, 1.0
    %v4067 = vadd.f32 %v3939, 1.0
    %v4068 = vadd.f32 %v3940, 1.0
    %v4069 = vadd.f32 %v3941, 1.0
    %v4070 = vadd.f32 %v3942, 1.0
    %v4071 = vadd.f32 %v3943, 1.0
    %v4072 = vadd.f32 %v3944, 1.0
    %v4073 = vadd.f32 %v3945, 1.0
    %v4074 = vadd.f32 %v3946, 1.0
    %v4075 = vadd.f32 %v3947, 1.0
    %v4076 = vadd.f32 %v3948, 1.0
    %v4077 = vadd.f32 %v3949, 1.0
    %v4078 = vadd.f32 %v3950, 1.0
    %v4079 = vand.u32 %v2159, 1
    %v4080 = vand.u32 %v2160, 1
    %v4081 = vand.u32 %v2161, 1
    %v4082 = vand.u32 %v2162, 1
    %v4083 = vand.u32 %v2163, 1
    %v4084 = vand.u32 %v2164, 1
    %v4085 = vand.u32 %v2165, 1
    %v4086 = vand.u32 %v2166, 1
    %v4087 = vand.u32 %v2167, 1
    %v4088 = vand.u32 %v2168, 1
    %v4089 = vand.u32 %v2169, 1
    %v4090 = vand.u32 %v2170, 1
    %v4091 = vand.u32 %v2171, 1
    %v4092 = vand.u32 %v2172, 1
    %v4093 = vand.u32 %v2173, 1
    %v4094 = vand.u32 %v2174, 1
    %v4095 = vand.u32 %v2175, 1
    %v4096 = vand.u32 %v2176, 1
    %v4097 = vand.u32 %v2177, 1
    %v4098 = vand.u32 %v2178, 1
    %v4099 = vand.u32 %v2179, 1
    %v4100 = vand.u32 %v2180, 1
    %v4101 = vand.u32 %v2181, 1
    %v4102 = vand.u32 %v2182, 1
    %v4103 = vand.u32 %v2183, 1
    %v4104 = vand.u32 %v2184, 1
    %v4105 = vand.u32 %v2185, 1
    %v4106 = vand.u32 %v2186, 1
    %v4107 = vand.u32 %v2187, 1
    %v4108 = vand.u32 %v2188, 1
    %v4109 = vand.u32 %v2189, 1
    %v4110 = vand.u32 %v2190, 1
    %v4111 = vand.u32 %v2191, 1
    %v4112 = vand.u32 %v2192, 1
    %v4113 = vand.u32 %v2193, 1
    %v4114 = vand.u32 %v2194, 1
    %v4115 = vand.u32 %v2195, 1
    %v4116 = vand.u32 %v2196, 1
    %v4117 = vand.u32 %v2197, 1
    %v4118 = vand.u32 %v2198, 1
    %v4119 = vand.u32 %v2199, 1
    %v4120 = vand.u32 %v2200, 1
    %v4121 = vand.u32 %v2201, 1
    %v4122 = vand.u32 %v2202, 1
    %v4123 = vand.u32 %v2203, 1
    %v4124 = vand.u32 %v2204, 1
    %v4125 = vand.u32 %v2205, 1
    %v4126 = vand.u32 %v2206, 1
    %v4127 = vand.u32 %v2207, 1
    %v4128 = vand.u32 %v2208, 1
    %v4129 = vand.u32 %v2209, 1
    %v4130 = vand.u32 %v2210, 1
    %v4131 = vand.u32 %v2211, 1
    %v4132 = vand.u32 %v2212, 1
    %v4133 = vand.u32 %v2213, 1
    %v4134 = vand.u32 %v2214, 1
    %v4135 = vand.u32 %v2215, 1
    %v4136 = vand.u32 %v2216, 1
    %v4137 = vand.u32 %v2217, 1
    %v4138 = vand.u32 %v2218, 1
    %v4139 = vand.u32 %v2219, 1
    %v4140 = vand.u32 %v2220, 1
    %v4141 = vand.u32 %v2221, 1
    %v4142 = vand.u32 %v2222, 1
    %v4143 = vand.u32 %v2223, 1
    %v4144 = vand.u32 %v2224, 1
    %v4145 = vand.u32 %v2225, 1
    %v4146 = vand.u32 %v2226, 1
    %v4147 = vand.u32 %v2227, 1
    %v4148 = vand.u32 %v2228, 1
    %v4149 = vand.u32 %v2229, 1
    %v4150 = vand.u32 %v2230, 1
    %v4151 = vand.u32 %v2231, 1
    %v4152 = vand.u32 %v2232, 1
    %v4153 = vand.u32 %v2233, 1
    %v4154 = vand.u32 %v2234, 1
    %v4155 = vand.u32 %v2235, 1
    %v4156 = vand.u32 %v2236, 1
    %v4157 = vand.u32 %v2237, 1
    %v4158 = vand.u32 %v2238, 1
    %v4159 = vand.u32 %v2239, 1
    %v4160 = vand.u32 %v2240, 1
    %v4161 = vand.u32 %v2241, 1
    %v4162 = vand.u32 %v2242, 1
    %v4163 = vand.u32 %v2243, 1
    %v4164 = vand.u32 %v2244, 1
    %v4165 = vand.u32 %v2245, 1
    %v4166 = vand.u32 %v2246, 1
    %v4167 = vand.u32 %v2247, 1
    %v4168 = vand.u32 %v2248, 1
    %v4169 = vand.u32 %v2249, 1
    %v4170 = vand.u32 %v2250, 1
    %v4171 = vand.u32 %v2251, 1
    %v4172 = vand.u32 %v2252, 1
    %v4173 = vand.u32 %v2253, 1
    %v4174 = vand.u32 %v2254, 1
    %v4175 = vand.u32 %v2255, 1
    %v4176 = vand.u32 %v2256, 1
    %v4177 = vand.u32 %v2257, 1
    %v4178 = vand.u32 %v2258, 1
    %v4179 = vand.u32 %v2259, 1
    %v4180 = vand.u32 %v2260, 1
    %v4181 = vand.u32 %v2261, 1
    %v4182 = vand.u32 %v2262, 1
    %v4183 = vand.u32 %v2263, 1
    %v4184 = vand.u32 %v2264, 1
    %v4185 = vand.u32 %v2265, 1
    %v4186 = vand.u32 %v2266, 1
    %v4187 = vand.u32 %v2267, 1
    %v4188 = vand.u32 %v2268, 1
    %v4189 = vand.u32 %v2269, 1
    %v4190 = vand.u32 %v2270, 1
    %v4191 = vand.u32 %v2271, 1
    %v4192 = vand.u32 %v2272, 1
    %v4193 = vand.u32 %v2273, 1
    %v4194 = vand.u32 %v2274, 1
    %v4195 = vand.u32 %v2275, 1
    %v4196 = vand.u32 %v2276, 1
    %v4197 = vand.u32 %v2277, 1
    %v4198 = vand.u32 %v2278, 1
    %v4199 = vand.u32 %v2279, 1
    %v4200 = vand.u32 %v2280, 1
    %v4201 = vand.u32 %v2281, 1
    %v4202 = vand.u32 %v2282, 1
    %v4203 = vand.u32 %v2283, 1
    %v4204 = vand.u32 %v2284, 1
    %v4205 = vand.u32 %v2285, 1
    %v4206 = vand.u32 %v2286, 1
    %vm4207 = vcmp.eq.s32.totalorder %v4079, 1
    %vm4208 = vcmp.eq.s32.totalorder %v4080, 1
    %vm4209 = vcmp.eq.s32.totalorder %v4081, 1
    %vm4210 = vcmp.eq.s32.totalorder %v4082, 1
    %vm4211 = vcmp.eq.s32.totalorder %v4083, 1
    %vm4212 = vcmp.eq.s32.totalorder %v4084, 1
    %vm4213 = vcmp.eq.s32.totalorder %v4085, 1
    %vm4214 = vcmp.eq.s32.totalorder %v4086, 1
    %vm4215 = vcmp.eq.s32.totalorder %v4087, 1
    %vm4216 = vcmp.eq.s32.totalorder %v4088, 1
    %vm4217 = vcmp.eq.s32.totalorder %v4089, 1
    %vm4218 = vcmp.eq.s32.totalorder %v4090, 1
    %vm4219 = vcmp.eq.s32.totalorder %v4091, 1
    %vm4220 = vcmp.eq.s32.totalorder %v4092, 1
    %vm4221 = vcmp.eq.s32.totalorder %v4093, 1
    %vm4222 = vcmp.eq.s32.totalorder %v4094, 1
    %vm4223 = vcmp.eq.s32.totalorder %v4095, 1
    %vm4224 = vcmp.eq.s32.totalorder %v4096, 1
    %vm4225 = vcmp.eq.s32.totalorder %v4097, 1
    %vm4226 = vcmp.eq.s32.totalorder %v4098, 1
    %vm4227 = vcmp.eq.s32.totalorder %v4099, 1
    %vm4228 = vcmp.eq.s32.totalorder %v4100, 1
    %vm4229 = vcmp.eq.s32.totalorder %v4101, 1
    %vm4230 = vcmp.eq.s32.totalorder %v4102, 1
    %vm4231 = vcmp.eq.s32.totalorder %v4103, 1
    %vm4232 = vcmp.eq.s32.totalorder %v4104, 1
    %vm4233 = vcmp.eq.s32.totalorder %v4105, 1
    %vm4234 = vcmp.eq.s32.totalorder %v4106, 1
    %vm4235 = vcmp.eq.s32.totalorder %v4107, 1
    %vm4236 = vcmp.eq.s32.totalorder %v4108, 1
    %vm4237 = vcmp.eq.s32.totalorder %v4109, 1
    %vm4238 = vcmp.eq.s32.totalorder %v4110, 1
    %vm4239 = vcmp.eq.s32.totalorder %v4111, 1
    %vm4240 = vcmp.eq.s32.totalorder %v4112, 1
    %vm4241 = vcmp.eq.s32.totalorder %v4113, 1
    %vm4242 = vcmp.eq.s32.totalorder %v4114, 1
    %vm4243 = vcmp.eq.s32.totalorder %v4115, 1
    %vm4244 = vcmp.eq.s32.totalorder %v4116, 1
    %vm4245 = vcmp.eq.s32.totalorder %v4117, 1
    %vm4246 = vcmp.eq.s32.totalorder %v4118, 1
    %vm4247 = vcmp.eq.s32.totalorder %v4119, 1
    %vm4248 = vcmp.eq.s32.totalorder %v4120, 1
    %vm4249 = vcmp.eq.s32.totalorder %v4121, 1
    %vm4250 = vcmp.eq.s32.totalorder %v4122, 1
    %vm4251 = vcmp.eq.s32.totalorder %v4123, 1
    %vm4252 = vcmp.eq.s32.totalorder %v4124, 1
    %vm4253 = vcmp.eq.s32.totalorder %v4125, 1
    %vm4254 = vcmp.eq.s32.totalorder %v4126, 1
    %vm4255 = vcmp.eq.s32.totalorder %v4127, 1
    %vm4256 = vcmp.eq.s32.totalorder %v4128, 1
    %vm4257 = vcmp.eq.s32.totalorder %v4129, 1
    %vm4258 = vcmp.eq.s32.totalorder %v4130, 1
    %vm4259 = vcmp.eq.s32.totalorder %v4131, 1
    %vm4260 = vcmp.eq.s32.totalorder %v4132, 1
    %vm4261 = vcmp.eq.s32.totalorder %v4133, 1
    %vm4262 = vcmp.eq.s32.totalorder %v4134, 1
    %vm4263 = vcmp.eq.s32.totalorder %v4135, 1
    %vm4264 = vcmp.eq.s32.totalorder %v4136, 1
    %vm4265 = vcmp.eq.s32.totalorder %v4137, 1
    %vm4266 = vcmp.eq.s32.totalorder %v4138, 1
    %vm4267 = vcmp.eq.s32.totalorder %v4139, 1
    %vm4268 = vcmp.eq.s32.totalorder %v4140, 1
    %vm4269 = vcmp.eq.s32.totalorder %v4141, 1
    %vm4270 = vcmp.eq.s32.totalorder %v4142, 1
    %vm4271 = vcmp.eq.s32.totalorder %v4143, 1
    %vm4272 = vcmp.eq.s32.totalorder %v4144, 1
    %vm4273 = vcmp.eq.s32.totalorder %v4145, 1
    %vm4274 = vcmp.eq.s32.totalorder %v4146, 1
    %vm4275 = vcmp.eq.s32.totalorder %v4147, 1
    %vm4276 = vcmp.eq.s32.totalorder %v4148, 1
    %vm4277 = vcmp.eq.s32.totalorder %v4149, 1
    %vm4278 = vcmp.eq.s32.totalorder %v4150, 1
    %vm4279 = vcmp.eq.s32.totalorder %v4151, 1
    %vm4280 = vcmp.eq.s32.totalorder %v4152, 1
    %vm4281 = vcmp.eq.s32.totalorder %v4153, 1
    %vm4282 = vcmp.eq.s32.totalorder %v4154, 1
    %vm4283 = vcmp.eq.s32.totalorder %v4155, 1
    %vm4284 = vcmp.eq.s32.totalorder %v4156, 1
    %vm4285 = vcmp.eq.s32.totalorder %v4157, 1
    %vm4286 = vcmp.eq.s32.totalorder %v4158, 1
    %vm4287 = vcmp.eq.s32.totalorder %v4159, 1
    %vm4288 = vcmp.eq.s32.totalorder %v4160, 1
    %vm4289 = vcmp.eq.s32.totalorder %v4161, 1
    %vm4290 = vcmp.eq.s32.totalorder %v4162, 1
    %vm4291 = vcmp.eq.s32.totalorder %v4163, 1
    %vm4292 = vcmp.eq.s32.totalorder %v4164, 1
    %vm4293 = vcmp.eq.s32.totalorder %v4165, 1
    %vm4294 = vcmp.eq.s32.totalorder %v4166, 1
    %vm4295 = vcmp.eq.s32.totalorder %v4167, 1
    %vm4296 = vcmp.eq.s32.totalorder %v4168, 1
    %vm4297 = vcmp.eq.s32.totalorder %v4169, 1
    %vm4298 = vcmp.eq.s32.totalorder %v4170, 1
    %vm4299 = vcmp.eq.s32.totalorder %v4171, 1
    %vm4300 = vcmp.eq.s32.totalorder %v4172, 1
    %vm4301 = vcmp.eq.s32.totalorder %v4173, 1
    %vm4302 = vcmp.eq.s32.totalorder %v4174, 1
    %vm4303 = vcmp.eq.s32.totalorder %v4175, 1
    %vm4304 = vcmp.eq.s32.totalorder %v4176, 1
    %vm4305 = vcmp.eq.s32.totalorder %v4177, 1
    %vm4306 = vcmp.eq.s32.totalorder %v4178, 1
    %vm4307 = vcmp.eq.s32.totalorder %v4179, 1
    %vm4308 = vcmp.eq.s32.totalorder %v4180, 1
    %vm4309 = vcmp.eq.s32.totalorder %v4181, 1
    %vm4310 = vcmp.eq.s32.totalorder %v4182, 1
    %vm4311 = vcmp.eq.s32.totalorder %v4183, 1
    %vm4312 = vcmp.eq.s32.totalorder %v4184, 1
    %vm4313 = vcmp.eq.s32.totalorder %v4185, 1
    %vm4314 = vcmp.eq.s32.totalorder %v4186, 1
    %vm4315 = vcmp.eq.s32.totalorder %v4187, 1
    %vm4316 = vcmp.eq.s32.totalorder %v4188, 1
    %vm4317 = vcmp.eq.s32.totalorder %v4189, 1
    %vm4318 = vcmp.eq.s32.totalorder %v4190, 1
    %vm4319 = vcmp.eq.s32.totalorder %v4191, 1
    %vm4320 = vcmp.eq.s32.totalorder %v4192, 1
    %vm4321 = vcmp.eq.s32.totalorder %v4193, 1
    %vm4322 = vcmp.eq.s32.totalorder %v4194, 1
    %vm4323 = vcmp.eq.s32.totalorder %v4195, 1
    %vm4324 = vcmp.eq.s32.totalorder %v4196, 1
    %vm4325 = vcmp.eq.s32.totalorder %v4197, 1
    %vm4326 = vcmp.eq.s32.totalorder %v4198, 1
    %vm4327 = vcmp.eq.s32.totalorder %v4199, 1
    %vm4328 = vcmp.eq.s32.totalorder %v4200, 1
    %vm4329 = vcmp.eq.s32.totalorder %v4201, 1
    %vm4330 = vcmp.eq.s32.totalorder %v4202, 1
    %vm4331 = vcmp.eq.s32.totalorder %v4203, 1
    %vm4332 = vcmp.eq.s32.totalorder %v4204, 1
    %vm4333 = vcmp.eq.s32.totalorder %v4205, 1
    %vm4334 = vcmp.eq.s32.totalorder %v4206, 1
    %v4335 = vsel %vm4207, %v3951, %v3183
    %v4336 = vsel %vm4208, %v3952, %v3184
    %v4337 = vsel %vm4209, %v3953, %v3185
    %v4338 = vsel %vm4210, %v3954, %v3186
    %v4339 = vsel %vm4211, %v3955, %v3187
    %v4340 = vsel %vm4212, %v3956, %v3188
    %v4341 = vsel %vm4213, %v3957, %v3189
    %v4342 = vsel %vm4214, %v3958, %v3190
    %v4343 = vsel %vm4215, %v3959, %v3191
    %v4344 = vsel %vm4216, %v3960, %v3192
    %v4345 = vsel %vm4217, %v3961, %v3193
    %v4346 = vsel %vm4218, %v3962, %v3194
    %v4347 = vsel %vm4219, %v3963, %v3195
    %v4348 = vsel %vm4220, %v3964, %v3196
    %v4349 = vsel %vm4221, %v3965, %v3197
    %v4350 = vsel %vm4222, %v3966, %v3198
    %v4351 = vsel %vm4223, %v3967, %v3199
    %v4352 = vsel %vm4224, %v3968, %v3200
    %v4353 = vsel %vm4225, %v3969, %v3201
    %v4354 = vsel %vm4226, %v3970, %v3202
    %v4355 = vsel %vm4227, %v3971, %v3203
    %v4356 = vsel %vm4228, %v3972, %v3204
    %v4357 = vsel %vm4229, %v3973, %v3205
    %v4358 = vsel %vm4230, %v3974, %v3206
    %v4359 = vsel %vm4231, %v3975, %v3207
    %v4360 = vsel %vm4232, %v3976, %v3208
    %v4361 = vsel %vm4233, %v3977, %v3209
    %v4362 = vsel %vm4234, %v3978, %v3210
    %v4363 = vsel %vm4235, %v3979, %v3211
    %v4364 = vsel %vm4236, %v3980, %v3212
    %v4365 = vsel %vm4237, %v3981, %v3213
    %v4366 = vsel %vm4238, %v3982, %v3214
    %v4367 = vsel %vm4239, %v3983, %v3215
    %v4368 = vsel %vm4240, %v3984, %v3216
    %v4369 = vsel %vm4241, %v3985, %v3217
    %v4370 = vsel %vm4242, %v3986, %v3218
    %v4371 = vsel %vm4243, %v3987, %v3219
    %v4372 = vsel %vm4244, %v3988, %v3220
    %v4373 = vsel %vm4245, %v3989, %v3221
    %v4374 = vsel %vm4246, %v3990, %v3222
    %v4375 = vsel %vm4247, %v3991, %v3223
    %v4376 = vsel %vm4248, %v3992, %v3224
    %v4377 = vsel %vm4249, %v3993, %v3225
    %v4378 = vsel %vm4250, %v3994, %v3226
    %v4379 = vsel %vm4251, %v3995, %v3227
    %v4380 = vsel %vm4252, %v3996, %v3228
    %v4381 = vsel %vm4253, %v3997, %v3229
    %v4382 = vsel %vm4254, %v3998, %v3230
    %v4383 = vsel %vm4255, %v3999, %v3231
    %v4384 = vsel %vm4256, %v4000, %v3232
    %v4385 = vsel %vm4257, %v4001, %v3233
    %v4386 = vsel %vm4258, %v4002, %v3234
    %v4387 = vsel %vm4259, %v4003, %v3235
    %v4388 = vsel %vm4260, %v4004, %v3236
    %v4389 = vsel %vm4261, %v4005, %v3237
    %v4390 = vsel %vm4262, %v4006, %v3238
    %v4391 = vsel %vm4263, %v4007, %v3239
    %v4392 = vsel %vm4264, %v4008, %v3240
    %v4393 = vsel %vm4265, %v4009, %v3241
    %v4394 = vsel %vm4266, %v4010, %v3242
    %v4395 = vsel %vm4267, %v4011, %v3243
    %v4396 = vsel %vm4268, %v4012, %v3244
    %v4397 = vsel %vm4269, %v4013, %v3245
    %v4398 = vsel %vm4270, %v4014, %v3246
    %v4399 = vsel %vm4271, %v4015, %v3247
    %v4400 = vsel %vm4272, %v4016, %v3248
    %v4401 = vsel %vm4273, %v4017, %v3249
    %v4402 = vsel %vm4274, %v4018, %v3250
    %v4403 = vsel %vm4275, %v4019, %v3251
    %v4404 = vsel %vm4276, %v4020, %v3252
    %v4405 = vsel %vm4277, %v4021, %v3253
    %v4406 = vsel %vm4278, %v4022, %v3254
    %v4407 = vsel %vm4279, %v4023, %v3255
    %v4408 = vsel %vm4280, %v4024, %v3256
    %v4409 = vsel %vm4281, %v4025, %v3257
    %v4410 = vsel %vm4282, %v4026, %v3258
    %v4411 = vsel %vm4283, %v4027, %v3259
    %v4412 = vsel %vm4284, %v4028, %v3260
    %v4413 = vsel %vm4285, %v4029, %v3261
    %v4414 = vsel %vm4286, %v4030, %v3262
    %v4415 = vsel %vm4287, %v4031, %v3263
    %v4416 = vsel %vm4288, %v4032, %v3264
    %v4417 = vsel %vm4289, %v4033, %v3265
    %v4418 = vsel %vm4290, %v4034, %v3266
    %v4419 = vsel %vm4291, %v4035, %v3267
    %v4420 = vsel %vm4292, %v4036, %v3268
    %v4421 = vsel %vm4293, %v4037, %v3269
    %v4422 = vsel %vm4294, %v4038, %v3270
    %v4423 = vsel %vm4295, %v4039, %v3271
    %v4424 = vsel %vm4296, %v4040, %v3272
    %v4425 = vsel %vm4297, %v4041, %v3273
    %v4426 = vsel %vm4298, %v4042, %v3274
    %v4427 = vsel %vm4299, %v4043, %v3275
    %v4428 = vsel %vm4300, %v4044, %v3276
    %v4429 = vsel %vm4301, %v4045, %v3277
    %v4430 = vsel %vm4302, %v4046, %v3278
    %v4431 = vsel %vm4303, %v4047, %v3279
    %v4432 = vsel %vm4304, %v4048, %v3280
    %v4433 = vsel %vm4305, %v4049, %v3281
    %v4434 = vsel %vm4306, %v4050, %v3282
    %v4435 = vsel %vm4307, %v4051, %v3283
    %v4436 = vsel %vm4308, %v4052, %v3284
    %v4437 = vsel %vm4309, %v4053, %v3285
    %v4438 = vsel %vm4310, %v4054, %v3286
    %v4439 = vsel %vm4311, %v4055, %v3287
    %v4440 = vsel %vm4312, %v4056, %v3288
    %v4441 = vsel %vm4313, %v4057, %v3289
    %v4442 = vsel %vm4314, %v4058, %v3290
    %v4443 = vsel %vm4315, %v4059, %v3291
    %v4444 = vsel %vm4316, %v4060, %v3292
    %v4445 = vsel %vm4317, %v4061, %v3293
    %v4446 = vsel %vm4318, %v4062, %v3294
    %v4447 = vsel %vm4319, %v4063, %v3295
    %v4448 = vsel %vm4320, %v4064, %v3296
    %v4449 = vsel %vm4321, %v4065, %v3297
    %v4450 = vsel %vm4322, %v4066, %v3298
    %v4451 = vsel %vm4323, %v4067, %v3299
    %v4452 = vsel %vm4324, %v4068, %v3300
    %v4453 = vsel %vm4325, %v4069, %v3301
    %v4454 = vsel %vm4326, %v4070, %v3302
    %v4455 = vsel %vm4327, %v4071, %v3303
    %v4456 = vsel %vm4328, %v4072, %v3304
    %v4457 = vsel %vm4329, %v4073, %v3305
    %v4458 = vsel %vm4330, %v4074, %v3306
    %v4459 = vsel %vm4331, %v4075, %v3307
    %v4460 = vsel %vm4332, %v4076, %v3308
    %v4461 = vsel %vm4333, %v4077, %v3309
    %v4462 = vsel %vm4334, %v4078, %v3310
    %v4463 = vsel %vm4207, %v3183, %v3951
    %v4464 = vsel %vm4208, %v3184, %v3952
    %v4465 = vsel %vm4209, %v3185, %v3953
    %v4466 = vsel %vm4210, %v3186, %v3954
    %v4467 = vsel %vm4211, %v3187, %v3955
    %v4468 = vsel %vm4212, %v3188, %v3956
    %v4469 = vsel %vm4213, %v3189, %v3957
    %v4470 = vsel %vm4214, %v3190, %v3958
    %v4471 = vsel %vm4215, %v3191, %v3959
    %v4472 = vsel %vm4216, %v3192, %v3960
    %v4473 = vsel %vm4217, %v3193, %v3961
    %v4474 = vsel %vm4218, %v3194, %v3962
    %v4475 = vsel %vm4219, %v3195, %v3963
    %v4476 = vsel %vm4220, %v3196, %v3964
    %v4477 = vsel %vm4221, %v3197, %v3965
    %v4478 = vsel %vm4222, %v3198, %v3966
    %v4479 = vsel %vm4223, %v3199, %v3967
    %v4480 = vsel %vm4224, %v3200, %v3968
    %v4481 = vsel %vm4225, %v3201, %v3969
    %v4482 = vsel %vm4226, %v3202, %v3970
    %v4483 = vsel %vm4227, %v3203, %v3971
    %v4484 = vsel %vm4228, %v3204, %v3972
    %v4485 = vsel %vm4229, %v3205, %v3973
    %v4486 = vsel %vm4230, %v3206, %v3974
    %v4487 = vsel %vm4231, %v3207, %v3975
    %v4488 = vsel %vm4232, %v3208, %v3976
    %v4489 = vsel %vm4233, %v3209, %v3977
    %v4490 = vsel %vm4234, %v3210, %v3978
    %v4491 = vsel %vm4235, %v3211, %v3979
    %v4492 = vsel %vm4236, %v3212, %v3980
    %v4493 = vsel %vm4237, %v3213, %v3981
    %v4494 = vsel %vm4238, %v3214, %v3982
    %v4495 = vsel %vm4239, %v3215, %v3983
    %v4496 = vsel %vm4240, %v3216, %v3984
    %v4497 = vsel %vm4241, %v3217, %v3985
    %v4498 = vsel %vm4242, %v3218, %v3986
    %v4499 = vsel %vm4243, %v3219, %v3987
    %v4500 = vsel %vm4244, %v3220, %v3988
    %v4501 = vsel %vm4245, %v3221, %v3989
    %v4502 = vsel %vm4246, %v3222, %v3990
    %v4503 = vsel %vm4247, %v3223, %v3991
    %v4504 = vsel %vm4248, %v3224, %v3992
    %v4505 = vsel %vm4249, %v3225, %v3993
    %v4506 = vsel %vm4250, %v3226, %v3994
    %v4507 = vsel %vm4251, %v3227, %v3995
    %v4508 = vsel %vm4252, %v3228, %v3996
    %v4509 = vsel %vm4253, %v3229, %v3997
    %v4510 = vsel %vm4254, %v3230, %v3998
    %v4511 = vsel %vm4255, %v3231, %v3999
    %v4512 = vsel %vm4256, %v3232, %v4000
    %v4513 = vsel %vm4257, %v3233, %v4001
    %v4514 = vsel %vm4258, %v3234, %v4002
    %v4515 = vsel %vm4259, %v3235, %v4003
    %v4516 = vsel %vm4260, %v3236, %v4004
    %v4517 = vsel %vm4261, %v3237, %v4005
    %v4518 = vsel %vm4262, %v3238, %v4006
    %v4519 = vsel %vm4263, %v3239, %v4007
    %v4520 = vsel %vm4264, %v3240, %v4008
    %v4521 = vsel %vm4265, %v3241, %v4009
    %v4522 = vsel %vm4266, %v3242, %v4010
    %v4523 = vsel %vm4267, %v3243, %v4011
    %v4524 = vsel %vm4268, %v3244, %v4012
    %v4525 = vsel %vm4269, %v3245, %v4013
    %v4526 = vsel %vm4270, %v3246, %v4014
    %v4527 = vsel %vm4271, %v3247, %v4015
    %v4528 = vsel %vm4272, %v3248, %v4016
    %v4529 = vsel %vm4273, %v3249, %v4017
    %v4530 = vsel %vm4274, %v3250, %v4018
    %v4531 = vsel %vm4275, %v3251, %v4019
    %v4532 = vsel %vm4276, %v3252, %v4020
    %v4533 = vsel %vm4277, %v3253, %v4021
    %v4534 = vsel %vm4278, %v3254, %v4022
    %v4535 = vsel %vm4279, %v3255, %v4023
    %v4536 = vsel %vm4280, %v3256, %v4024
    %v4537 = vsel %vm4281, %v3257, %v4025
    %v4538 = vsel %vm4282, %v3258, %v4026
    %v4539 = vsel %vm4283, %v3259, %v4027
    %v4540 = vsel %vm4284, %v3260, %v4028
    %v4541 = vsel %vm4285, %v3261, %v4029
    %v4542 = vsel %vm4286, %v3262, %v4030
    %v4543 = vsel %vm4287, %v3263, %v4031
    %v4544 = vsel %vm4288, %v3264, %v4032
    %v4545 = vsel %vm4289, %v3265, %v4033
    %v4546 = vsel %vm4290, %v3266, %v4034
    %v4547 = vsel %vm4291, %v3267, %v4035
    %v4548 = vsel %vm4292, %v3268, %v4036
    %v4549 = vsel %vm4293, %v3269, %v4037
    %v4550 = vsel %vm4294, %v3270, %v4038
    %v4551 = vsel %vm4295, %v3271, %v4039
    %v4552 = vsel %vm4296, %v3272, %v4040
    %v4553 = vsel %vm4297, %v3273, %v4041
    %v4554 = vsel %vm4298, %v3274, %v4042
    %v4555 = vsel %vm4299, %v3275, %v4043
    %v4556 = vsel %vm4300, %v3276, %v4044
    %v4557 = vsel %vm4301, %v3277, %v4045
    %v4558 = vsel %vm4302, %v3278, %v4046
    %v4559 = vsel %vm4303, %v3279, %v4047
    %v4560 = vsel %vm4304, %v3280, %v4048
    %v4561 = vsel %vm4305, %v3281, %v4049
    %v4562 = vsel %vm4306, %v3282, %v4050
    %v4563 = vsel %vm4307, %v3283, %v4051
    %v4564 = vsel %vm4308, %v3284, %v4052
    %v4565 = vsel %vm4309, %v3285, %v4053
    %v4566 = vsel %vm4310, %v3286, %v4054
    %v4567 = vsel %vm4311, %v3287, %v4055
    %v4568 = vsel %vm4312, %v3288, %v4056
    %v4569 = vsel %vm4313, %v3289, %v4057
    %v4570 = vsel %vm4314, %v3290, %v4058
    %v4571 = vsel %vm4315, %v3291, %v4059
    %v4572 = vsel %vm4316, %v3292, %v4060
    %v4573 = vsel %vm4317, %v3293, %v4061
    %v4574 = vsel %vm4318, %v3294, %v4062
    %v4575 = vsel %vm4319, %v3295, %v4063
    %v4576 = vsel %vm4320, %v3296, %v4064
    %v4577 = vsel %vm4321, %v3297, %v4065
    %v4578 = vsel %vm4322, %v3298, %v4066
    %v4579 = vsel %vm4323, %v3299, %v4067
    %v4580 = vsel %vm4324, %v3300, %v4068
    %v4581 = vsel %vm4325, %v3301, %v4069
    %v4582 = vsel %vm4326, %v3302, %v4070
    %v4583 = vsel %vm4327, %v3303, %v4071
    %v4584 = vsel %vm4328, %v3304, %v4072
    %v4585 = vsel %vm4329, %v3305, %v4073
    %v4586 = vsel %vm4330, %v3306, %v4074
    %v4587 = vsel %vm4331, %v3307, %v4075
    %v4588 = vsel %vm4332, %v3308, %v4076
    %v4589 = vsel %vm4333, %v3309, %v4077
    %v4590 = vsel %vm4334, %v3310, %v4078
    %vm4591 = vcmp.ge.s32.totalorder %v2159, 2
    %vm4592 = vcmp.ge.s32.totalorder %v2160, 2
    %vm4593 = vcmp.ge.s32.totalorder %v2161, 2
    %vm4594 = vcmp.ge.s32.totalorder %v2162, 2
    %vm4595 = vcmp.ge.s32.totalorder %v2163, 2
    %vm4596 = vcmp.ge.s32.totalorder %v2164, 2
    %vm4597 = vcmp.ge.s32.totalorder %v2165, 2
    %vm4598 = vcmp.ge.s32.totalorder %v2166, 2
    %vm4599 = vcmp.ge.s32.totalorder %v2167, 2
    %vm4600 = vcmp.ge.s32.totalorder %v2168, 2
    %vm4601 = vcmp.ge.s32.totalorder %v2169, 2
    %vm4602 = vcmp.ge.s32.totalorder %v2170, 2
    %vm4603 = vcmp.ge.s32.totalorder %v2171, 2
    %vm4604 = vcmp.ge.s32.totalorder %v2172, 2
    %vm4605 = vcmp.ge.s32.totalorder %v2173, 2
    %vm4606 = vcmp.ge.s32.totalorder %v2174, 2
    %vm4607 = vcmp.ge.s32.totalorder %v2175, 2
    %vm4608 = vcmp.ge.s32.totalorder %v2176, 2
    %vm4609 = vcmp.ge.s32.totalorder %v2177, 2
    %vm4610 = vcmp.ge.s32.totalorder %v2178, 2
    %vm4611 = vcmp.ge.s32.totalorder %v2179, 2
    %vm4612 = vcmp.ge.s32.totalorder %v2180, 2
    %vm4613 = vcmp.ge.s32.totalorder %v2181, 2
    %vm4614 = vcmp.ge.s32.totalorder %v2182, 2
    %vm4615 = vcmp.ge.s32.totalorder %v2183, 2
    %vm4616 = vcmp.ge.s32.totalorder %v2184, 2
    %vm4617 = vcmp.ge.s32.totalorder %v2185, 2
    %vm4618 = vcmp.ge.s32.totalorder %v2186, 2
    %vm4619 = vcmp.ge.s32.totalorder %v2187, 2
    %vm4620 = vcmp.ge.s32.totalorder %v2188, 2
    %vm4621 = vcmp.ge.s32.totalorder %v2189, 2
    %vm4622 = vcmp.ge.s32.totalorder %v2190, 2
    %vm4623 = vcmp.ge.s32.totalorder %v2191, 2
    %vm4624 = vcmp.ge.s32.totalorder %v2192, 2
    %vm4625 = vcmp.ge.s32.totalorder %v2193, 2
    %vm4626 = vcmp.ge.s32.totalorder %v2194, 2
    %vm4627 = vcmp.ge.s32.totalorder %v2195, 2
    %vm4628 = vcmp.ge.s32.totalorder %v2196, 2
    %vm4629 = vcmp.ge.s32.totalorder %v2197, 2
    %vm4630 = vcmp.ge.s32.totalorder %v2198, 2
    %vm4631 = vcmp.ge.s32.totalorder %v2199, 2
    %vm4632 = vcmp.ge.s32.totalorder %v2200, 2
    %vm4633 = vcmp.ge.s32.totalorder %v2201, 2
    %vm4634 = vcmp.ge.s32.totalorder %v2202, 2
    %vm4635 = vcmp.ge.s32.totalorder %v2203, 2
    %vm4636 = vcmp.ge.s32.totalorder %v2204, 2
    %vm4637 = vcmp.ge.s32.totalorder %v2205, 2
    %vm4638 = vcmp.ge.s32.totalorder %v2206, 2
    %vm4639 = vcmp.ge.s32.totalorder %v2207, 2
    %vm4640 = vcmp.ge.s32.totalorder %v2208, 2
    %vm4641 = vcmp.ge.s32.totalorder %v2209, 2
    %vm4642 = vcmp.ge.s32.totalorder %v2210, 2
    %vm4643 = vcmp.ge.s32.totalorder %v2211, 2
    %vm4644 = vcmp.ge.s32.totalorder %v2212, 2
    %vm4645 = vcmp.ge.s32.totalorder %v2213, 2
    %vm4646 = vcmp.ge.s32.totalorder %v2214, 2
    %vm4647 = vcmp.ge.s32.totalorder %v2215, 2
    %vm4648 = vcmp.ge.s32.totalorder %v2216, 2
    %vm4649 = vcmp.ge.s32.totalorder %v2217, 2
    %vm4650 = vcmp.ge.s32.totalorder %v2218, 2
    %vm4651 = vcmp.ge.s32.totalorder %v2219, 2
    %vm4652 = vcmp.ge.s32.totalorder %v2220, 2
    %vm4653 = vcmp.ge.s32.totalorder %v2221, 2
    %vm4654 = vcmp.ge.s32.totalorder %v2222, 2
    %vm4655 = vcmp.ge.s32.totalorder %v2223, 2
    %vm4656 = vcmp.ge.s32.totalorder %v2224, 2
    %vm4657 = vcmp.ge.s32.totalorder %v2225, 2
    %vm4658 = vcmp.ge.s32.totalorder %v2226, 2
    %vm4659 = vcmp.ge.s32.totalorder %v2227, 2
    %vm4660 = vcmp.ge.s32.totalorder %v2228, 2
    %vm4661 = vcmp.ge.s32.totalorder %v2229, 2
    %vm4662 = vcmp.ge.s32.totalorder %v2230, 2
    %vm4663 = vcmp.ge.s32.totalorder %v2231, 2
    %vm4664 = vcmp.ge.s32.totalorder %v2232, 2
    %vm4665 = vcmp.ge.s32.totalorder %v2233, 2
    %vm4666 = vcmp.ge.s32.totalorder %v2234, 2
    %vm4667 = vcmp.ge.s32.totalorder %v2235, 2
    %vm4668 = vcmp.ge.s32.totalorder %v2236, 2
    %vm4669 = vcmp.ge.s32.totalorder %v2237, 2
    %vm4670 = vcmp.ge.s32.totalorder %v2238, 2
    %vm4671 = vcmp.ge.s32.totalorder %v2239, 2
    %vm4672 = vcmp.ge.s32.totalorder %v2240, 2
    %vm4673 = vcmp.ge.s32.totalorder %v2241, 2
    %vm4674 = vcmp.ge.s32.totalorder %v2242, 2
    %vm4675 = vcmp.ge.s32.totalorder %v2243, 2
    %vm4676 = vcmp.ge.s32.totalorder %v2244, 2
    %vm4677 = vcmp.ge.s32.totalorder %v2245, 2
    %vm4678 = vcmp.ge.s32.totalorder %v2246, 2
    %vm4679 = vcmp.ge.s32.totalorder %v2247, 2
    %vm4680 = vcmp.ge.s32.totalorder %v2248, 2
    %vm4681 = vcmp.ge.s32.totalorder %v2249, 2
    %vm4682 = vcmp.ge.s32.totalorder %v2250, 2
    %vm4683 = vcmp.ge.s32.totalorder %v2251, 2
    %vm4684 = vcmp.ge.s32.totalorder %v2252, 2
    %vm4685 = vcmp.ge.s32.totalorder %v2253, 2
    %vm4686 = vcmp.ge.s32.totalorder %v2254, 2
    %vm4687 = vcmp.ge.s32.totalorder %v2255, 2
    %vm4688 = vcmp.ge.s32.totalorder %v2256, 2
    %vm4689 = vcmp.ge.s32.totalorder %v2257, 2
    %vm4690 = vcmp.ge.s32.totalorder %v2258, 2
    %vm4691 = vcmp.ge.s32.totalorder %v2259, 2
    %vm4692 = vcmp.ge.s32.totalorder %v2260, 2
    %vm4693 = vcmp.ge.s32.totalorder %v2261, 2
    %vm4694 = vcmp.ge.s32.totalorder %v2262, 2
    %vm4695 = vcmp.ge.s32.totalorder %v2263, 2
    %vm4696 = vcmp.ge.s32.totalorder %v2264, 2
    %vm4697 = vcmp.ge.s32.totalorder %v2265, 2
    %vm4698 = vcmp.ge.s32.totalorder %v2266, 2
    %vm4699 = vcmp.ge.s32.totalorder %v2267, 2
    %vm4700 = vcmp.ge.s32.totalorder %v2268, 2
    %vm4701 = vcmp.ge.s32.totalorder %v2269, 2
    %vm4702 = vcmp.ge.s32.totalorder %v2270, 2
    %vm4703 = vcmp.ge.s32.totalorder %v2271, 2
    %vm4704 = vcmp.ge.s32.totalorder %v2272, 2
    %vm4705 = vcmp.ge.s32.totalorder %v2273, 2
    %vm4706 = vcmp.ge.s32.totalorder %v2274, 2
    %vm4707 = vcmp.ge.s32.totalorder %v2275, 2
    %vm4708 = vcmp.ge.s32.totalorder %v2276, 2
    %vm4709 = vcmp.ge.s32.totalorder %v2277, 2
    %vm4710 = vcmp.ge.s32.totalorder %v2278, 2
    %vm4711 = vcmp.ge.s32.totalorder %v2279, 2
    %vm4712 = vcmp.ge.s32.totalorder %v2280, 2
    %vm4713 = vcmp.ge.s32.totalorder %v2281, 2
    %vm4714 = vcmp.ge.s32.totalorder %v2282, 2
    %vm4715 = vcmp.ge.s32.totalorder %v2283, 2
    %vm4716 = vcmp.ge.s32.totalorder %v2284, 2
    %vm4717 = vcmp.ge.s32.totalorder %v2285, 2
    %vm4718 = vcmp.ge.s32.totalorder %v2286, 2
    %v4719 = vsub.f32 0.0, %v4335
    %v4720 = vsub.f32 0.0, %v4336
    %v4721 = vsub.f32 0.0, %v4337
    %v4722 = vsub.f32 0.0, %v4338
    %v4723 = vsub.f32 0.0, %v4339
    %v4724 = vsub.f32 0.0, %v4340
    %v4725 = vsub.f32 0.0, %v4341
    %v4726 = vsub.f32 0.0, %v4342
    %v4727 = vsub.f32 0.0, %v4343
    %v4728 = vsub.f32 0.0, %v4344
    %v4729 = vsub.f32 0.0, %v4345
    %v4730 = vsub.f32 0.0, %v4346
    %v4731 = vsub.f32 0.0, %v4347
    %v4732 = vsub.f32 0.0, %v4348
    %v4733 = vsub.f32 0.0, %v4349
    %v4734 = vsub.f32 0.0, %v4350
    %v4735 = vsub.f32 0.0, %v4351
    %v4736 = vsub.f32 0.0, %v4352
    %v4737 = vsub.f32 0.0, %v4353
    %v4738 = vsub.f32 0.0, %v4354
    %v4739 = vsub.f32 0.0, %v4355
    %v4740 = vsub.f32 0.0, %v4356
    %v4741 = vsub.f32 0.0, %v4357
    %v4742 = vsub.f32 0.0, %v4358
    %v4743 = vsub.f32 0.0, %v4359
    %v4744 = vsub.f32 0.0, %v4360
    %v4745 = vsub.f32 0.0, %v4361
    %v4746 = vsub.f32 0.0, %v4362
    %v4747 = vsub.f32 0.0, %v4363
    %v4748 = vsub.f32 0.0, %v4364
    %v4749 = vsub.f32 0.0, %v4365
    %v4750 = vsub.f32 0.0, %v4366
    %v4751 = vsub.f32 0.0, %v4367
    %v4752 = vsub.f32 0.0, %v4368
    %v4753 = vsub.f32 0.0, %v4369
    %v4754 = vsub.f32 0.0, %v4370
    %v4755 = vsub.f32 0.0, %v4371
    %v4756 = vsub.f32 0.0, %v4372
    %v4757 = vsub.f32 0.0, %v4373
    %v4758 = vsub.f32 0.0, %v4374
    %v4759 = vsub.f32 0.0, %v4375
    %v4760 = vsub.f32 0.0, %v4376
    %v4761 = vsub.f32 0.0, %v4377
    %v4762 = vsub.f32 0.0, %v4378
    %v4763 = vsub.f32 0.0, %v4379
    %v4764 = vsub.f32 0.0, %v4380
    %v4765 = vsub.f32 0.0, %v4381
    %v4766 = vsub.f32 0.0, %v4382
    %v4767 = vsub.f32 0.0, %v4383
    %v4768 = vsub.f32 0.0, %v4384
    %v4769 = vsub.f32 0.0, %v4385
    %v4770 = vsub.f32 0.0, %v4386
    %v4771 = vsub.f32 0.0, %v4387
    %v4772 = vsub.f32 0.0, %v4388
    %v4773 = vsub.f32 0.0, %v4389
    %v4774 = vsub.f32 0.0, %v4390
    %v4775 = vsub.f32 0.0, %v4391
    %v4776 = vsub.f32 0.0, %v4392
    %v4777 = vsub.f32 0.0, %v4393
    %v4778 = vsub.f32 0.0, %v4394
    %v4779 = vsub.f32 0.0, %v4395
    %v4780 = vsub.f32 0.0, %v4396
    %v4781 = vsub.f32 0.0, %v4397
    %v4782 = vsub.f32 0.0, %v4398
    %v4783 = vsub.f32 0.0, %v4399
    %v4784 = vsub.f32 0.0, %v4400
    %v4785 = vsub.f32 0.0, %v4401
    %v4786 = vsub.f32 0.0, %v4402
    %v4787 = vsub.f32 0.0, %v4403
    %v4788 = vsub.f32 0.0, %v4404
    %v4789 = vsub.f32 0.0, %v4405
    %v4790 = vsub.f32 0.0, %v4406
    %v4791 = vsub.f32 0.0, %v4407
    %v4792 = vsub.f32 0.0, %v4408
    %v4793 = vsub.f32 0.0, %v4409
    %v4794 = vsub.f32 0.0, %v4410
    %v4795 = vsub.f32 0.0, %v4411
    %v4796 = vsub.f32 0.0, %v4412
    %v4797 = vsub.f32 0.0, %v4413
    %v4798 = vsub.f32 0.0, %v4414
    %v4799 = vsub.f32 0.0, %v4415
    %v4800 = vsub.f32 0.0, %v4416
    %v4801 = vsub.f32 0.0, %v4417
    %v4802 = vsub.f32 0.0, %v4418
    %v4803 = vsub.f32 0.0, %v4419
    %v4804 = vsub.f32 0.0, %v4420
    %v4805 = vsub.f32 0.0, %v4421
    %v4806 = vsub.f32 0.0, %v4422
    %v4807 = vsub.f32 0.0, %v4423
    %v4808 = vsub.f32 0.0, %v4424
    %v4809 = vsub.f32 0.0, %v4425
    %v4810 = vsub.f32 0.0, %v4426
    %v4811 = vsub.f32 0.0, %v4427
    %v4812 = vsub.f32 0.0, %v4428
    %v4813 = vsub.f32 0.0, %v4429
    %v4814 = vsub.f32 0.0, %v4430
    %v4815 = vsub.f32 0.0, %v4431
    %v4816 = vsub.f32 0.0, %v4432
    %v4817 = vsub.f32 0.0, %v4433
    %v4818 = vsub.f32 0.0, %v4434
    %v4819 = vsub.f32 0.0, %v4435
    %v4820 = vsub.f32 0.0, %v4436
    %v4821 = vsub.f32 0.0, %v4437
    %v4822 = vsub.f32 0.0, %v4438
    %v4823 = vsub.f32 0.0, %v4439
    %v4824 = vsub.f32 0.0, %v4440
    %v4825 = vsub.f32 0.0, %v4441
    %v4826 = vsub.f32 0.0, %v4442
    %v4827 = vsub.f32 0.0, %v4443
    %v4828 = vsub.f32 0.0, %v4444
    %v4829 = vsub.f32 0.0, %v4445
    %v4830 = vsub.f32 0.0, %v4446
    %v4831 = vsub.f32 0.0, %v4447
    %v4832 = vsub.f32 0.0, %v4448
    %v4833 = vsub.f32 0.0, %v4449
    %v4834 = vsub.f32 0.0, %v4450
    %v4835 = vsub.f32 0.0, %v4451
    %v4836 = vsub.f32 0.0, %v4452
    %v4837 = vsub.f32 0.0, %v4453
    %v4838 = vsub.f32 0.0, %v4454
    %v4839 = vsub.f32 0.0, %v4455
    %v4840 = vsub.f32 0.0, %v4456
    %v4841 = vsub.f32 0.0, %v4457
    %v4842 = vsub.f32 0.0, %v4458
    %v4843 = vsub.f32 0.0, %v4459
    %v4844 = vsub.f32 0.0, %v4460
    %v4845 = vsub.f32 0.0, %v4461
    %v4846 = vsub.f32 0.0, %v4462
    %v4847 = vsel %vm4591, %v4719, %v4335
    %v4848 = vsel %vm4592, %v4720, %v4336
    %v4849 = vsel %vm4593, %v4721, %v4337
    %v4850 = vsel %vm4594, %v4722, %v4338
    %v4851 = vsel %vm4595, %v4723, %v4339
    %v4852 = vsel %vm4596, %v4724, %v4340
    %v4853 = vsel %vm4597, %v4725, %v4341
    %v4854 = vsel %vm4598, %v4726, %v4342
    %v4855 = vsel %vm4599, %v4727, %v4343
    %v4856 = vsel %vm4600, %v4728, %v4344
    %v4857 = vsel %vm4601, %v4729, %v4345
    %v4858 = vsel %vm4602, %v4730, %v4346
    %v4859 = vsel %vm4603, %v4731, %v4347
    %v4860 = vsel %vm4604, %v4732, %v4348
    %v4861 = vsel %vm4605, %v4733, %v4349
    %v4862 = vsel %vm4606, %v4734, %v4350
    %v4863 = vsel %vm4607, %v4735, %v4351
    %v4864 = vsel %vm4608, %v4736, %v4352
    %v4865 = vsel %vm4609, %v4737, %v4353
    %v4866 = vsel %vm4610, %v4738, %v4354
    %v4867 = vsel %vm4611, %v4739, %v4355
    %v4868 = vsel %vm4612, %v4740, %v4356
    %v4869 = vsel %vm4613, %v4741, %v4357
    %v4870 = vsel %vm4614, %v4742, %v4358
    %v4871 = vsel %vm4615, %v4743, %v4359
    %v4872 = vsel %vm4616, %v4744, %v4360
    %v4873 = vsel %vm4617, %v4745, %v4361
    %v4874 = vsel %vm4618, %v4746, %v4362
    %v4875 = vsel %vm4619, %v4747, %v4363
    %v4876 = vsel %vm4620, %v4748, %v4364
    %v4877 = vsel %vm4621, %v4749, %v4365
    %v4878 = vsel %vm4622, %v4750, %v4366
    %v4879 = vsel %vm4623, %v4751, %v4367
    %v4880 = vsel %vm4624, %v4752, %v4368
    %v4881 = vsel %vm4625, %v4753, %v4369
    %v4882 = vsel %vm4626, %v4754, %v4370
    %v4883 = vsel %vm4627, %v4755, %v4371
    %v4884 = vsel %vm4628, %v4756, %v4372
    %v4885 = vsel %vm4629, %v4757, %v4373
    %v4886 = vsel %vm4630, %v4758, %v4374
    %v4887 = vsel %vm4631, %v4759, %v4375
    %v4888 = vsel %vm4632, %v4760, %v4376
    %v4889 = vsel %vm4633, %v4761, %v4377
    %v4890 = vsel %vm4634, %v4762, %v4378
    %v4891 = vsel %vm4635, %v4763, %v4379
    %v4892 = vsel %vm4636, %v4764, %v4380
    %v4893 = vsel %vm4637, %v4765, %v4381
    %v4894 = vsel %vm4638, %v4766, %v4382
    %v4895 = vsel %vm4639, %v4767, %v4383
    %v4896 = vsel %vm4640, %v4768, %v4384
    %v4897 = vsel %vm4641, %v4769, %v4385
    %v4898 = vsel %vm4642, %v4770, %v4386
    %v4899 = vsel %vm4643, %v4771, %v4387
    %v4900 = vsel %vm4644, %v4772, %v4388
    %v4901 = vsel %vm4645, %v4773, %v4389
    %v4902 = vsel %vm4646, %v4774, %v4390
    %v4903 = vsel %vm4647, %v4775, %v4391
    %v4904 = vsel %vm4648, %v4776, %v4392
    %v4905 = vsel %vm4649, %v4777, %v4393
    %v4906 = vsel %vm4650, %v4778, %v4394
    %v4907 = vsel %vm4651, %v4779, %v4395
    %v4908 = vsel %vm4652, %v4780, %v4396
    %v4909 = vsel %vm4653, %v4781, %v4397
    %v4910 = vsel %vm4654, %v4782, %v4398
    %v4911 = vsel %vm4655, %v4783, %v4399
    %v4912 = vsel %vm4656, %v4784, %v4400
    %v4913 = vsel %vm4657, %v4785, %v4401
    %v4914 = vsel %vm4658, %v4786, %v4402
    %v4915 = vsel %vm4659, %v4787, %v4403
    %v4916 = vsel %vm4660, %v4788, %v4404
    %v4917 = vsel %vm4661, %v4789, %v4405
    %v4918 = vsel %vm4662, %v4790, %v4406
    %v4919 = vsel %vm4663, %v4791, %v4407
    %v4920 = vsel %vm4664, %v4792, %v4408
    %v4921 = vsel %vm4665, %v4793, %v4409
    %v4922 = vsel %vm4666, %v4794, %v4410
    %v4923 = vsel %vm4667, %v4795, %v4411
    %v4924 = vsel %vm4668, %v4796, %v4412
    %v4925 = vsel %vm4669, %v4797, %v4413
    %v4926 = vsel %vm4670, %v4798, %v4414
    %v4927 = vsel %vm4671, %v4799, %v4415
    %v4928 = vsel %vm4672, %v4800, %v4416
    %v4929 = vsel %vm4673, %v4801, %v4417
    %v4930 = vsel %vm4674, %v4802, %v4418
    %v4931 = vsel %vm4675, %v4803, %v4419
    %v4932 = vsel %vm4676, %v4804, %v4420
    %v4933 = vsel %vm4677, %v4805, %v4421
    %v4934 = vsel %vm4678, %v4806, %v4422
    %v4935 = vsel %vm4679, %v4807, %v4423
    %v4936 = vsel %vm4680, %v4808, %v4424
    %v4937 = vsel %vm4681, %v4809, %v4425
    %v4938 = vsel %vm4682, %v4810, %v4426
    %v4939 = vsel %vm4683, %v4811, %v4427
    %v4940 = vsel %vm4684, %v4812, %v4428
    %v4941 = vsel %vm4685, %v4813, %v4429
    %v4942 = vsel %vm4686, %v4814, %v4430
    %v4943 = vsel %vm4687, %v4815, %v4431
    %v4944 = vsel %vm4688, %v4816, %v4432
    %v4945 = vsel %vm4689, %v4817, %v4433
    %v4946 = vsel %vm4690, %v4818, %v4434
    %v4947 = vsel %vm4691, %v4819, %v4435
    %v4948 = vsel %vm4692, %v4820, %v4436
    %v4949 = vsel %vm4693, %v4821, %v4437
    %v4950 = vsel %vm4694, %v4822, %v4438
    %v4951 = vsel %vm4695, %v4823, %v4439
    %v4952 = vsel %vm4696, %v4824, %v4440
    %v4953 = vsel %vm4697, %v4825, %v4441
    %v4954 = vsel %vm4698, %v4826, %v4442
    %v4955 = vsel %vm4699, %v4827, %v4443
    %v4956 = vsel %vm4700, %v4828, %v4444
    %v4957 = vsel %vm4701, %v4829, %v4445
    %v4958 = vsel %vm4702, %v4830, %v4446
    %v4959 = vsel %vm4703, %v4831, %v4447
    %v4960 = vsel %vm4704, %v4832, %v4448
    %v4961 = vsel %vm4705, %v4833, %v4449
    %v4962 = vsel %vm4706, %v4834, %v4450
    %v4963 = vsel %vm4707, %v4835, %v4451
    %v4964 = vsel %vm4708, %v4836, %v4452
    %v4965 = vsel %vm4709, %v4837, %v4453
    %v4966 = vsel %vm4710, %v4838, %v4454
    %v4967 = vsel %vm4711, %v4839, %v4455
    %v4968 = vsel %vm4712, %v4840, %v4456
    %v4969 = vsel %vm4713, %v4841, %v4457
    %v4970 = vsel %vm4714, %v4842, %v4458
    %v4971 = vsel %vm4715, %v4843, %v4459
    %v4972 = vsel %vm4716, %v4844, %v4460
    %v4973 = vsel %vm4717, %v4845, %v4461
    %v4974 = vsel %vm4718, %v4846, %v4462
    %vm4975 = vcmp.eq.s32.totalorder %v2159, 1
    %vm4976 = vcmp.eq.s32.totalorder %v2160, 1
    %vm4977 = vcmp.eq.s32.totalorder %v2161, 1
    %vm4978 = vcmp.eq.s32.totalorder %v2162, 1
    %vm4979 = vcmp.eq.s32.totalorder %v2163, 1
    %vm4980 = vcmp.eq.s32.totalorder %v2164, 1
    %vm4981 = vcmp.eq.s32.totalorder %v2165, 1
    %vm4982 = vcmp.eq.s32.totalorder %v2166, 1
    %vm4983 = vcmp.eq.s32.totalorder %v2167, 1
    %vm4984 = vcmp.eq.s32.totalorder %v2168, 1
    %vm4985 = vcmp.eq.s32.totalorder %v2169, 1
    %vm4986 = vcmp.eq.s32.totalorder %v2170, 1
    %vm4987 = vcmp.eq.s32.totalorder %v2171, 1
    %vm4988 = vcmp.eq.s32.totalorder %v2172, 1
    %vm4989 = vcmp.eq.s32.totalorder %v2173, 1
    %vm4990 = vcmp.eq.s32.totalorder %v2174, 1
    %vm4991 = vcmp.eq.s32.totalorder %v2175, 1
    %vm4992 = vcmp.eq.s32.totalorder %v2176, 1
    %vm4993 = vcmp.eq.s32.totalorder %v2177, 1
    %vm4994 = vcmp.eq.s32.totalorder %v2178, 1
    %vm4995 = vcmp.eq.s32.totalorder %v2179, 1
    %vm4996 = vcmp.eq.s32.totalorder %v2180, 1
    %vm4997 = vcmp.eq.s32.totalorder %v2181, 1
    %vm4998 = vcmp.eq.s32.totalorder %v2182, 1
    %vm4999 = vcmp.eq.s32.totalorder %v2183, 1
    %vm5000 = vcmp.eq.s32.totalorder %v2184, 1
    %vm5001 = vcmp.eq.s32.totalorder %v2185, 1
    %vm5002 = vcmp.eq.s32.totalorder %v2186, 1
    %vm5003 = vcmp.eq.s32.totalorder %v2187, 1
    %vm5004 = vcmp.eq.s32.totalorder %v2188, 1
    %vm5005 = vcmp.eq.s32.totalorder %v2189, 1
    %vm5006 = vcmp.eq.s32.totalorder %v2190, 1
    %vm5007 = vcmp.eq.s32.totalorder %v2191, 1
    %vm5008 = vcmp.eq.s32.totalorder %v2192, 1
    %vm5009 = vcmp.eq.s32.totalorder %v2193, 1
    %vm5010 = vcmp.eq.s32.totalorder %v2194, 1
    %vm5011 = vcmp.eq.s32.totalorder %v2195, 1
    %vm5012 = vcmp.eq.s32.totalorder %v2196, 1
    %vm5013 = vcmp.eq.s32.totalorder %v2197, 1
    %vm5014 = vcmp.eq.s32.totalorder %v2198, 1
    %vm5015 = vcmp.eq.s32.totalorder %v2199, 1
    %vm5016 = vcmp.eq.s32.totalorder %v2200, 1
    %vm5017 = vcmp.eq.s32.totalorder %v2201, 1
    %vm5018 = vcmp.eq.s32.totalorder %v2202, 1
    %vm5019 = vcmp.eq.s32.totalorder %v2203, 1
    %vm5020 = vcmp.eq.s32.totalorder %v2204, 1
    %vm5021 = vcmp.eq.s32.totalorder %v2205, 1
    %vm5022 = vcmp.eq.s32.totalorder %v2206, 1
    %vm5023 = vcmp.eq.s32.totalorder %v2207, 1
    %vm5024 = vcmp.eq.s32.totalorder %v2208, 1
    %vm5025 = vcmp.eq.s32.totalorder %v2209, 1
    %vm5026 = vcmp.eq.s32.totalorder %v2210, 1
    %vm5027 = vcmp.eq.s32.totalorder %v2211, 1
    %vm5028 = vcmp.eq.s32.totalorder %v2212, 1
    %vm5029 = vcmp.eq.s32.totalorder %v2213, 1
    %vm5030 = vcmp.eq.s32.totalorder %v2214, 1
    %vm5031 = vcmp.eq.s32.totalorder %v2215, 1
    %vm5032 = vcmp.eq.s32.totalorder %v2216, 1
    %vm5033 = vcmp.eq.s32.totalorder %v2217, 1
    %vm5034 = vcmp.eq.s32.totalorder %v2218, 1
    %vm5035 = vcmp.eq.s32.totalorder %v2219, 1
    %vm5036 = vcmp.eq.s32.totalorder %v2220, 1
    %vm5037 = vcmp.eq.s32.totalorder %v2221, 1
    %vm5038 = vcmp.eq.s32.totalorder %v2222, 1
    %vm5039 = vcmp.eq.s32.totalorder %v2223, 1
    %vm5040 = vcmp.eq.s32.totalorder %v2224, 1
    %vm5041 = vcmp.eq.s32.totalorder %v2225, 1
    %vm5042 = vcmp.eq.s32.totalorder %v2226, 1
    %vm5043 = vcmp.eq.s32.totalorder %v2227, 1
    %vm5044 = vcmp.eq.s32.totalorder %v2228, 1
    %vm5045 = vcmp.eq.s32.totalorder %v2229, 1
    %vm5046 = vcmp.eq.s32.totalorder %v2230, 1
    %vm5047 = vcmp.eq.s32.totalorder %v2231, 1
    %vm5048 = vcmp.eq.s32.totalorder %v2232, 1
    %vm5049 = vcmp.eq.s32.totalorder %v2233, 1
    %vm5050 = vcmp.eq.s32.totalorder %v2234, 1
    %vm5051 = vcmp.eq.s32.totalorder %v2235, 1
    %vm5052 = vcmp.eq.s32.totalorder %v2236, 1
    %vm5053 = vcmp.eq.s32.totalorder %v2237, 1
    %vm5054 = vcmp.eq.s32.totalorder %v2238, 1
    %vm5055 = vcmp.eq.s32.totalorder %v2239, 1
    %vm5056 = vcmp.eq.s32.totalorder %v2240, 1
    %vm5057 = vcmp.eq.s32.totalorder %v2241, 1
    %vm5058 = vcmp.eq.s32.totalorder %v2242, 1
    %vm5059 = vcmp.eq.s32.totalorder %v2243, 1
    %vm5060 = vcmp.eq.s32.totalorder %v2244, 1
    %vm5061 = vcmp.eq.s32.totalorder %v2245, 1
    %vm5062 = vcmp.eq.s32.totalorder %v2246, 1
    %vm5063 = vcmp.eq.s32.totalorder %v2247, 1
    %vm5064 = vcmp.eq.s32.totalorder %v2248, 1
    %vm5065 = vcmp.eq.s32.totalorder %v2249, 1
    %vm5066 = vcmp.eq.s32.totalorder %v2250, 1
    %vm5067 = vcmp.eq.s32.totalorder %v2251, 1
    %vm5068 = vcmp.eq.s32.totalorder %v2252, 1
    %vm5069 = vcmp.eq.s32.totalorder %v2253, 1
    %vm5070 = vcmp.eq.s32.totalorder %v2254, 1
    %vm5071 = vcmp.eq.s32.totalorder %v2255, 1
    %vm5072 = vcmp.eq.s32.totalorder %v2256, 1
    %vm5073 = vcmp.eq.s32.totalorder %v2257, 1
    %vm5074 = vcmp.eq.s32.totalorder %v2258, 1
    %vm5075 = vcmp.eq.s32.totalorder %v2259, 1
    %vm5076 = vcmp.eq.s32.totalorder %v2260, 1
    %vm5077 = vcmp.eq.s32.totalorder %v2261, 1
    %vm5078 = vcmp.eq.s32.totalorder %v2262, 1
    %vm5079 = vcmp.eq.s32.totalorder %v2263, 1
    %vm5080 = vcmp.eq.s32.totalorder %v2264, 1
    %vm5081 = vcmp.eq.s32.totalorder %v2265, 1
    %vm5082 = vcmp.eq.s32.totalorder %v2266, 1
    %vm5083 = vcmp.eq.s32.totalorder %v2267, 1
    %vm5084 = vcmp.eq.s32.totalorder %v2268, 1
    %vm5085 = vcmp.eq.s32.totalorder %v2269, 1
    %vm5086 = vcmp.eq.s32.totalorder %v2270, 1
    %vm5087 = vcmp.eq.s32.totalorder %v2271, 1
    %vm5088 = vcmp.eq.s32.totalorder %v2272, 1
    %vm5089 = vcmp.eq.s32.totalorder %v2273, 1
    %vm5090 = vcmp.eq.s32.totalorder %v2274, 1
    %vm5091 = vcmp.eq.s32.totalorder %v2275, 1
    %vm5092 = vcmp.eq.s32.totalorder %v2276, 1
    %vm5093 = vcmp.eq.s32.totalorder %v2277, 1
    %vm5094 = vcmp.eq.s32.totalorder %v2278, 1
    %vm5095 = vcmp.eq.s32.totalorder %v2279, 1
    %vm5096 = vcmp.eq.s32.totalorder %v2280, 1
    %vm5097 = vcmp.eq.s32.totalorder %v2281, 1
    %vm5098 = vcmp.eq.s32.totalorder %v2282, 1
    %vm5099 = vcmp.eq.s32.totalorder %v2283, 1
    %vm5100 = vcmp.eq.s32.totalorder %v2284, 1
    %vm5101 = vcmp.eq.s32.totalorder %v2285, 1
    %vm5102 = vcmp.eq.s32.totalorder %v2286, 1
    %vm5103 = vcmp.eq.s32.totalorder %v2159, 2
    %vm5104 = vcmp.eq.s32.totalorder %v2160, 2
    %vm5105 = vcmp.eq.s32.totalorder %v2161, 2
    %vm5106 = vcmp.eq.s32.totalorder %v2162, 2
    %vm5107 = vcmp.eq.s32.totalorder %v2163, 2
    %vm5108 = vcmp.eq.s32.totalorder %v2164, 2
    %vm5109 = vcmp.eq.s32.totalorder %v2165, 2
    %vm5110 = vcmp.eq.s32.totalorder %v2166, 2
    %vm5111 = vcmp.eq.s32.totalorder %v2167, 2
    %vm5112 = vcmp.eq.s32.totalorder %v2168, 2
    %vm5113 = vcmp.eq.s32.totalorder %v2169, 2
    %vm5114 = vcmp.eq.s32.totalorder %v2170, 2
    %vm5115 = vcmp.eq.s32.totalorder %v2171, 2
    %vm5116 = vcmp.eq.s32.totalorder %v2172, 2
    %vm5117 = vcmp.eq.s32.totalorder %v2173, 2
    %vm5118 = vcmp.eq.s32.totalorder %v2174, 2
    %vm5119 = vcmp.eq.s32.totalorder %v2175, 2
    %vm5120 = vcmp.eq.s32.totalorder %v2176, 2
    %vm5121 = vcmp.eq.s32.totalorder %v2177, 2
    %vm5122 = vcmp.eq.s32.totalorder %v2178, 2
    %vm5123 = vcmp.eq.s32.totalorder %v2179, 2
    %vm5124 = vcmp.eq.s32.totalorder %v2180, 2
    %vm5125 = vcmp.eq.s32.totalorder %v2181, 2
    %vm5126 = vcmp.eq.s32.totalorder %v2182, 2
    %vm5127 = vcmp.eq.s32.totalorder %v2183, 2
    %vm5128 = vcmp.eq.s32.totalorder %v2184, 2
    %vm5129 = vcmp.eq.s32.totalorder %v2185, 2
    %vm5130 = vcmp.eq.s32.totalorder %v2186, 2
    %vm5131 = vcmp.eq.s32.totalorder %v2187, 2
    %vm5132 = vcmp.eq.s32.totalorder %v2188, 2
    %vm5133 = vcmp.eq.s32.totalorder %v2189, 2
    %vm5134 = vcmp.eq.s32.totalorder %v2190, 2
    %vm5135 = vcmp.eq.s32.totalorder %v2191, 2
    %vm5136 = vcmp.eq.s32.totalorder %v2192, 2
    %vm5137 = vcmp.eq.s32.totalorder %v2193, 2
    %vm5138 = vcmp.eq.s32.totalorder %v2194, 2
    %vm5139 = vcmp.eq.s32.totalorder %v2195, 2
    %vm5140 = vcmp.eq.s32.totalorder %v2196, 2
    %vm5141 = vcmp.eq.s32.totalorder %v2197, 2
    %vm5142 = vcmp.eq.s32.totalorder %v2198, 2
    %vm5143 = vcmp.eq.s32.totalorder %v2199, 2
    %vm5144 = vcmp.eq.s32.totalorder %v2200, 2
    %vm5145 = vcmp.eq.s32.totalorder %v2201, 2
    %vm5146 = vcmp.eq.s32.totalorder %v2202, 2
    %vm5147 = vcmp.eq.s32.totalorder %v2203, 2
    %vm5148 = vcmp.eq.s32.totalorder %v2204, 2
    %vm5149 = vcmp.eq.s32.totalorder %v2205, 2
    %vm5150 = vcmp.eq.s32.totalorder %v2206, 2
    %vm5151 = vcmp.eq.s32.totalorder %v2207, 2
    %vm5152 = vcmp.eq.s32.totalorder %v2208, 2
    %vm5153 = vcmp.eq.s32.totalorder %v2209, 2
    %vm5154 = vcmp.eq.s32.totalorder %v2210, 2
    %vm5155 = vcmp.eq.s32.totalorder %v2211, 2
    %vm5156 = vcmp.eq.s32.totalorder %v2212, 2
    %vm5157 = vcmp.eq.s32.totalorder %v2213, 2
    %vm5158 = vcmp.eq.s32.totalorder %v2214, 2
    %vm5159 = vcmp.eq.s32.totalorder %v2215, 2
    %vm5160 = vcmp.eq.s32.totalorder %v2216, 2
    %vm5161 = vcmp.eq.s32.totalorder %v2217, 2
    %vm5162 = vcmp.eq.s32.totalorder %v2218, 2
    %vm5163 = vcmp.eq.s32.totalorder %v2219, 2
    %vm5164 = vcmp.eq.s32.totalorder %v2220, 2
    %vm5165 = vcmp.eq.s32.totalorder %v2221, 2
    %vm5166 = vcmp.eq.s32.totalorder %v2222, 2
    %vm5167 = vcmp.eq.s32.totalorder %v2223, 2
    %vm5168 = vcmp.eq.s32.totalorder %v2224, 2
    %vm5169 = vcmp.eq.s32.totalorder %v2225, 2
    %vm5170 = vcmp.eq.s32.totalorder %v2226, 2
    %vm5171 = vcmp.eq.s32.totalorder %v2227, 2
    %vm5172 = vcmp.eq.s32.totalorder %v2228, 2
    %vm5173 = vcmp.eq.s32.totalorder %v2229, 2
    %vm5174 = vcmp.eq.s32.totalorder %v2230, 2
    %vm5175 = vcmp.eq.s32.totalorder %v2231, 2
    %vm5176 = vcmp.eq.s32.totalorder %v2232, 2
    %vm5177 = vcmp.eq.s32.totalorder %v2233, 2
    %vm5178 = vcmp.eq.s32.totalorder %v2234, 2
    %vm5179 = vcmp.eq.s32.totalorder %v2235, 2
    %vm5180 = vcmp.eq.s32.totalorder %v2236, 2
    %vm5181 = vcmp.eq.s32.totalorder %v2237, 2
    %vm5182 = vcmp.eq.s32.totalorder %v2238, 2
    %vm5183 = vcmp.eq.s32.totalorder %v2239, 2
    %vm5184 = vcmp.eq.s32.totalorder %v2240, 2
    %vm5185 = vcmp.eq.s32.totalorder %v2241, 2
    %vm5186 = vcmp.eq.s32.totalorder %v2242, 2
    %vm5187 = vcmp.eq.s32.totalorder %v2243, 2
    %vm5188 = vcmp.eq.s32.totalorder %v2244, 2
    %vm5189 = vcmp.eq.s32.totalorder %v2245, 2
    %vm5190 = vcmp.eq.s32.totalorder %v2246, 2
    %vm5191 = vcmp.eq.s32.totalorder %v2247, 2
    %vm5192 = vcmp.eq.s32.totalorder %v2248, 2
    %vm5193 = vcmp.eq.s32.totalorder %v2249, 2
    %vm5194 = vcmp.eq.s32.totalorder %v2250, 2
    %vm5195 = vcmp.eq.s32.totalorder %v2251, 2
    %vm5196 = vcmp.eq.s32.totalorder %v2252, 2
    %vm5197 = vcmp.eq.s32.totalorder %v2253, 2
    %vm5198 = vcmp.eq.s32.totalorder %v2254, 2
    %vm5199 = vcmp.eq.s32.totalorder %v2255, 2
    %vm5200 = vcmp.eq.s32.totalorder %v2256, 2
    %vm5201 = vcmp.eq.s32.totalorder %v2257, 2
    %vm5202 = vcmp.eq.s32.totalorder %v2258, 2
    %vm5203 = vcmp.eq.s32.totalorder %v2259, 2
    %vm5204 = vcmp.eq.s32.totalorder %v2260, 2
    %vm5205 = vcmp.eq.s32.totalorder %v2261, 2
    %vm5206 = vcmp.eq.s32.totalorder %v2262, 2
    %vm5207 = vcmp.eq.s32.totalorder %v2263, 2
    %vm5208 = vcmp.eq.s32.totalorder %v2264, 2
    %vm5209 = vcmp.eq.s32.totalorder %v2265, 2
    %vm5210 = vcmp.eq.s32.totalorder %v2266, 2
    %vm5211 = vcmp.eq.s32.totalorder %v2267, 2
    %vm5212 = vcmp.eq.s32.totalorder %v2268, 2
    %vm5213 = vcmp.eq.s32.totalorder %v2269, 2
    %vm5214 = vcmp.eq.s32.totalorder %v2270, 2
    %vm5215 = vcmp.eq.s32.totalorder %v2271, 2
    %vm5216 = vcmp.eq.s32.totalorder %v2272, 2
    %vm5217 = vcmp.eq.s32.totalorder %v2273, 2
    %vm5218 = vcmp.eq.s32.totalorder %v2274, 2
    %vm5219 = vcmp.eq.s32.totalorder %v2275, 2
    %vm5220 = vcmp.eq.s32.totalorder %v2276, 2
    %vm5221 = vcmp.eq.s32.totalorder %v2277, 2
    %vm5222 = vcmp.eq.s32.totalorder %v2278, 2
    %vm5223 = vcmp.eq.s32.totalorder %v2279, 2
    %vm5224 = vcmp.eq.s32.totalorder %v2280, 2
    %vm5225 = vcmp.eq.s32.totalorder %v2281, 2
    %vm5226 = vcmp.eq.s32.totalorder %v2282, 2
    %vm5227 = vcmp.eq.s32.totalorder %v2283, 2
    %vm5228 = vcmp.eq.s32.totalorder %v2284, 2
    %vm5229 = vcmp.eq.s32.totalorder %v2285, 2
    %vm5230 = vcmp.eq.s32.totalorder %v2286, 2
    %vm5231 = vmor %vm4975, %vm5103
    %vm5232 = vmor %vm4976, %vm5104
    %vm5233 = vmor %vm4977, %vm5105
    %vm5234 = vmor %vm4978, %vm5106
    %vm5235 = vmor %vm4979, %vm5107
    %vm5236 = vmor %vm4980, %vm5108
    %vm5237 = vmor %vm4981, %vm5109
    %vm5238 = vmor %vm4982, %vm5110
    %vm5239 = vmor %vm4983, %vm5111
    %vm5240 = vmor %vm4984, %vm5112
    %vm5241 = vmor %vm4985, %vm5113
    %vm5242 = vmor %vm4986, %vm5114
    %vm5243 = vmor %vm4987, %vm5115
    %vm5244 = vmor %vm4988, %vm5116
    %vm5245 = vmor %vm4989, %vm5117
    %vm5246 = vmor %vm4990, %vm5118
    %vm5247 = vmor %vm4991, %vm5119
    %vm5248 = vmor %vm4992, %vm5120
    %vm5249 = vmor %vm4993, %vm5121
    %vm5250 = vmor %vm4994, %vm5122
    %vm5251 = vmor %vm4995, %vm5123
    %vm5252 = vmor %vm4996, %vm5124
    %vm5253 = vmor %vm4997, %vm5125
    %vm5254 = vmor %vm4998, %vm5126
    %vm5255 = vmor %vm4999, %vm5127
    %vm5256 = vmor %vm5000, %vm5128
    %vm5257 = vmor %vm5001, %vm5129
    %vm5258 = vmor %vm5002, %vm5130
    %vm5259 = vmor %vm5003, %vm5131
    %vm5260 = vmor %vm5004, %vm5132
    %vm5261 = vmor %vm5005, %vm5133
    %vm5262 = vmor %vm5006, %vm5134
    %vm5263 = vmor %vm5007, %vm5135
    %vm5264 = vmor %vm5008, %vm5136
    %vm5265 = vmor %vm5009, %vm5137
    %vm5266 = vmor %vm5010, %vm5138
    %vm5267 = vmor %vm5011, %vm5139
    %vm5268 = vmor %vm5012, %vm5140
    %vm5269 = vmor %vm5013, %vm5141
    %vm5270 = vmor %vm5014, %vm5142
    %vm5271 = vmor %vm5015, %vm5143
    %vm5272 = vmor %vm5016, %vm5144
    %vm5273 = vmor %vm5017, %vm5145
    %vm5274 = vmor %vm5018, %vm5146
    %vm5275 = vmor %vm5019, %vm5147
    %vm5276 = vmor %vm5020, %vm5148
    %vm5277 = vmor %vm5021, %vm5149
    %vm5278 = vmor %vm5022, %vm5150
    %vm5279 = vmor %vm5023, %vm5151
    %vm5280 = vmor %vm5024, %vm5152
    %vm5281 = vmor %vm5025, %vm5153
    %vm5282 = vmor %vm5026, %vm5154
    %vm5283 = vmor %vm5027, %vm5155
    %vm5284 = vmor %vm5028, %vm5156
    %vm5285 = vmor %vm5029, %vm5157
    %vm5286 = vmor %vm5030, %vm5158
    %vm5287 = vmor %vm5031, %vm5159
    %vm5288 = vmor %vm5032, %vm5160
    %vm5289 = vmor %vm5033, %vm5161
    %vm5290 = vmor %vm5034, %vm5162
    %vm5291 = vmor %vm5035, %vm5163
    %vm5292 = vmor %vm5036, %vm5164
    %vm5293 = vmor %vm5037, %vm5165
    %vm5294 = vmor %vm5038, %vm5166
    %vm5295 = vmor %vm5039, %vm5167
    %vm5296 = vmor %vm5040, %vm5168
    %vm5297 = vmor %vm5041, %vm5169
    %vm5298 = vmor %vm5042, %vm5170
    %vm5299 = vmor %vm5043, %vm5171
    %vm5300 = vmor %vm5044, %vm5172
    %vm5301 = vmor %vm5045, %vm5173
    %vm5302 = vmor %vm5046, %vm5174
    %vm5303 = vmor %vm5047, %vm5175
    %vm5304 = vmor %vm5048, %vm5176
    %vm5305 = vmor %vm5049, %vm5177
    %vm5306 = vmor %vm5050, %vm5178
    %vm5307 = vmor %vm5051, %vm5179
    %vm5308 = vmor %vm5052, %vm5180
    %vm5309 = vmor %vm5053, %vm5181
    %vm5310 = vmor %vm5054, %vm5182
    %vm5311 = vmor %vm5055, %vm5183
    %vm5312 = vmor %vm5056, %vm5184
    %vm5313 = vmor %vm5057, %vm5185
    %vm5314 = vmor %vm5058, %vm5186
    %vm5315 = vmor %vm5059, %vm5187
    %vm5316 = vmor %vm5060, %vm5188
    %vm5317 = vmor %vm5061, %vm5189
    %vm5318 = vmor %vm5062, %vm5190
    %vm5319 = vmor %vm5063, %vm5191
    %vm5320 = vmor %vm5064, %vm5192
    %vm5321 = vmor %vm5065, %vm5193
    %vm5322 = vmor %vm5066, %vm5194
    %vm5323 = vmor %vm5067, %vm5195
    %vm5324 = vmor %vm5068, %vm5196
    %vm5325 = vmor %vm5069, %vm5197
    %vm5326 = vmor %vm5070, %vm5198
    %vm5327 = vmor %vm5071, %vm5199
    %vm5328 = vmor %vm5072, %vm5200
    %vm5329 = vmor %vm5073, %vm5201
    %vm5330 = vmor %vm5074, %vm5202
    %vm5331 = vmor %vm5075, %vm5203
    %vm5332 = vmor %vm5076, %vm5204
    %vm5333 = vmor %vm5077, %vm5205
    %vm5334 = vmor %vm5078, %vm5206
    %vm5335 = vmor %vm5079, %vm5207
    %vm5336 = vmor %vm5080, %vm5208
    %vm5337 = vmor %vm5081, %vm5209
    %vm5338 = vmor %vm5082, %vm5210
    %vm5339 = vmor %vm5083, %vm5211
    %vm5340 = vmor %vm5084, %vm5212
    %vm5341 = vmor %vm5085, %vm5213
    %vm5342 = vmor %vm5086, %vm5214
    %vm5343 = vmor %vm5087, %vm5215
    %vm5344 = vmor %vm5088, %vm5216
    %vm5345 = vmor %vm5089, %vm5217
    %vm5346 = vmor %vm5090, %vm5218
    %vm5347 = vmor %vm5091, %vm5219
    %vm5348 = vmor %vm5092, %vm5220
    %vm5349 = vmor %vm5093, %vm5221
    %vm5350 = vmor %vm5094, %vm5222
    %vm5351 = vmor %vm5095, %vm5223
    %vm5352 = vmor %vm5096, %vm5224
    %vm5353 = vmor %vm5097, %vm5225
    %vm5354 = vmor %vm5098, %vm5226
    %vm5355 = vmor %vm5099, %vm5227
    %vm5356 = vmor %vm5100, %vm5228
    %vm5357 = vmor %vm5101, %vm5229
    %vm5358 = vmor %vm5102, %vm5230
    %v5359 = vsub.f32 0.0, %v4463
    %v5360 = vsub.f32 0.0, %v4464
    %v5361 = vsub.f32 0.0, %v4465
    %v5362 = vsub.f32 0.0, %v4466
    %v5363 = vsub.f32 0.0, %v4467
    %v5364 = vsub.f32 0.0, %v4468
    %v5365 = vsub.f32 0.0, %v4469
    %v5366 = vsub.f32 0.0, %v4470
    %v5367 = vsub.f32 0.0, %v4471
    %v5368 = vsub.f32 0.0, %v4472
    %v5369 = vsub.f32 0.0, %v4473
    %v5370 = vsub.f32 0.0, %v4474
    %v5371 = vsub.f32 0.0, %v4475
    %v5372 = vsub.f32 0.0, %v4476
    %v5373 = vsub.f32 0.0, %v4477
    %v5374 = vsub.f32 0.0, %v4478
    %v5375 = vsub.f32 0.0, %v4479
    %v5376 = vsub.f32 0.0, %v4480
    %v5377 = vsub.f32 0.0, %v4481
    %v5378 = vsub.f32 0.0, %v4482
    %v5379 = vsub.f32 0.0, %v4483
    %v5380 = vsub.f32 0.0, %v4484
    %v5381 = vsub.f32 0.0, %v4485
    %v5382 = vsub.f32 0.0, %v4486
    %v5383 = vsub.f32 0.0, %v4487
    %v5384 = vsub.f32 0.0, %v4488
    %v5385 = vsub.f32 0.0, %v4489
    %v5386 = vsub.f32 0.0, %v4490
    %v5387 = vsub.f32 0.0, %v4491
    %v5388 = vsub.f32 0.0, %v4492
    %v5389 = vsub.f32 0.0, %v4493
    %v5390 = vsub.f32 0.0, %v4494
    %v5391 = vsub.f32 0.0, %v4495
    %v5392 = vsub.f32 0.0, %v4496
    %v5393 = vsub.f32 0.0, %v4497
    %v5394 = vsub.f32 0.0, %v4498
    %v5395 = vsub.f32 0.0, %v4499
    %v5396 = vsub.f32 0.0, %v4500
    %v5397 = vsub.f32 0.0, %v4501
    %v5398 = vsub.f32 0.0, %v4502
    %v5399 = vsub.f32 0.0, %v4503
    %v5400 = vsub.f32 0.0, %v4504
    %v5401 = vsub.f32 0.0, %v4505
    %v5402 = vsub.f32 0.0, %v4506
    %v5403 = vsub.f32 0.0, %v4507
    %v5404 = vsub.f32 0.0, %v4508
    %v5405 = vsub.f32 0.0, %v4509
    %v5406 = vsub.f32 0.0, %v4510
    %v5407 = vsub.f32 0.0, %v4511
    %v5408 = vsub.f32 0.0, %v4512
    %v5409 = vsub.f32 0.0, %v4513
    %v5410 = vsub.f32 0.0, %v4514
    %v5411 = vsub.f32 0.0, %v4515
    %v5412 = vsub.f32 0.0, %v4516
    %v5413 = vsub.f32 0.0, %v4517
    %v5414 = vsub.f32 0.0, %v4518
    %v5415 = vsub.f32 0.0, %v4519
    %v5416 = vsub.f32 0.0, %v4520
    %v5417 = vsub.f32 0.0, %v4521
    %v5418 = vsub.f32 0.0, %v4522
    %v5419 = vsub.f32 0.0, %v4523
    %v5420 = vsub.f32 0.0, %v4524
    %v5421 = vsub.f32 0.0, %v4525
    %v5422 = vsub.f32 0.0, %v4526
    %v5423 = vsub.f32 0.0, %v4527
    %v5424 = vsub.f32 0.0, %v4528
    %v5425 = vsub.f32 0.0, %v4529
    %v5426 = vsub.f32 0.0, %v4530
    %v5427 = vsub.f32 0.0, %v4531
    %v5428 = vsub.f32 0.0, %v4532
    %v5429 = vsub.f32 0.0, %v4533
    %v5430 = vsub.f32 0.0, %v4534
    %v5431 = vsub.f32 0.0, %v4535
    %v5432 = vsub.f32 0.0, %v4536
    %v5433 = vsub.f32 0.0, %v4537
    %v5434 = vsub.f32 0.0, %v4538
    %v5435 = vsub.f32 0.0, %v4539
    %v5436 = vsub.f32 0.0, %v4540
    %v5437 = vsub.f32 0.0, %v4541
    %v5438 = vsub.f32 0.0, %v4542
    %v5439 = vsub.f32 0.0, %v4543
    %v5440 = vsub.f32 0.0, %v4544
    %v5441 = vsub.f32 0.0, %v4545
    %v5442 = vsub.f32 0.0, %v4546
    %v5443 = vsub.f32 0.0, %v4547
    %v5444 = vsub.f32 0.0, %v4548
    %v5445 = vsub.f32 0.0, %v4549
    %v5446 = vsub.f32 0.0, %v4550
    %v5447 = vsub.f32 0.0, %v4551
    %v5448 = vsub.f32 0.0, %v4552
    %v5449 = vsub.f32 0.0, %v4553
    %v5450 = vsub.f32 0.0, %v4554
    %v5451 = vsub.f32 0.0, %v4555
    %v5452 = vsub.f32 0.0, %v4556
    %v5453 = vsub.f32 0.0, %v4557
    %v5454 = vsub.f32 0.0, %v4558
    %v5455 = vsub.f32 0.0, %v4559
    %v5456 = vsub.f32 0.0, %v4560
    %v5457 = vsub.f32 0.0, %v4561
    %v5458 = vsub.f32 0.0, %v4562
    %v5459 = vsub.f32 0.0, %v4563
    %v5460 = vsub.f32 0.0, %v4564
    %v5461 = vsub.f32 0.0, %v4565
    %v5462 = vsub.f32 0.0, %v4566
    %v5463 = vsub.f32 0.0, %v4567
    %v5464 = vsub.f32 0.0, %v4568
    %v5465 = vsub.f32 0.0, %v4569
    %v5466 = vsub.f32 0.0, %v4570
    %v5467 = vsub.f32 0.0, %v4571
    %v5468 = vsub.f32 0.0, %v4572
    %v5469 = vsub.f32 0.0, %v4573
    %v5470 = vsub.f32 0.0, %v4574
    %v5471 = vsub.f32 0.0, %v4575
    %v5472 = vsub.f32 0.0, %v4576
    %v5473 = vsub.f32 0.0, %v4577
    %v5474 = vsub.f32 0.0, %v4578
    %v5475 = vsub.f32 0.0, %v4579
    %v5476 = vsub.f32 0.0, %v4580
    %v5477 = vsub.f32 0.0, %v4581
    %v5478 = vsub.f32 0.0, %v4582
    %v5479 = vsub.f32 0.0, %v4583
    %v5480 = vsub.f32 0.0, %v4584
    %v5481 = vsub.f32 0.0, %v4585
    %v5482 = vsub.f32 0.0, %v4586
    %v5483 = vsub.f32 0.0, %v4587
    %v5484 = vsub.f32 0.0, %v4588
    %v5485 = vsub.f32 0.0, %v4589
    %v5486 = vsub.f32 0.0, %v4590
    %v5487 = vsel %vm5231, %v5359, %v4463
    %v5488 = vsel %vm5232, %v5360, %v4464
    %v5489 = vsel %vm5233, %v5361, %v4465
    %v5490 = vsel %vm5234, %v5362, %v4466
    %v5491 = vsel %vm5235, %v5363, %v4467
    %v5492 = vsel %vm5236, %v5364, %v4468
    %v5493 = vsel %vm5237, %v5365, %v4469
    %v5494 = vsel %vm5238, %v5366, %v4470
    %v5495 = vsel %vm5239, %v5367, %v4471
    %v5496 = vsel %vm5240, %v5368, %v4472
    %v5497 = vsel %vm5241, %v5369, %v4473
    %v5498 = vsel %vm5242, %v5370, %v4474
    %v5499 = vsel %vm5243, %v5371, %v4475
    %v5500 = vsel %vm5244, %v5372, %v4476
    %v5501 = vsel %vm5245, %v5373, %v4477
    %v5502 = vsel %vm5246, %v5374, %v4478
    %v5503 = vsel %vm5247, %v5375, %v4479
    %v5504 = vsel %vm5248, %v5376, %v4480
    %v5505 = vsel %vm5249, %v5377, %v4481
    %v5506 = vsel %vm5250, %v5378, %v4482
    %v5507 = vsel %vm5251, %v5379, %v4483
    %v5508 = vsel %vm5252, %v5380, %v4484
    %v5509 = vsel %vm5253, %v5381, %v4485
    %v5510 = vsel %vm5254, %v5382, %v4486
    %v5511 = vsel %vm5255, %v5383, %v4487
    %v5512 = vsel %vm5256, %v5384, %v4488
    %v5513 = vsel %vm5257, %v5385, %v4489
    %v5514 = vsel %vm5258, %v5386, %v4490
    %v5515 = vsel %vm5259, %v5387, %v4491
    %v5516 = vsel %vm5260, %v5388, %v4492
    %v5517 = vsel %vm5261, %v5389, %v4493
    %v5518 = vsel %vm5262, %v5390, %v4494
    %v5519 = vsel %vm5263, %v5391, %v4495
    %v5520 = vsel %vm5264, %v5392, %v4496
    %v5521 = vsel %vm5265, %v5393, %v4497
    %v5522 = vsel %vm5266, %v5394, %v4498
    %v5523 = vsel %vm5267, %v5395, %v4499
    %v5524 = vsel %vm5268, %v5396, %v4500
    %v5525 = vsel %vm5269, %v5397, %v4501
    %v5526 = vsel %vm5270, %v5398, %v4502
    %v5527 = vsel %vm5271, %v5399, %v4503
    %v5528 = vsel %vm5272, %v5400, %v4504
    %v5529 = vsel %vm5273, %v5401, %v4505
    %v5530 = vsel %vm5274, %v5402, %v4506
    %v5531 = vsel %vm5275, %v5403, %v4507
    %v5532 = vsel %vm5276, %v5404, %v4508
    %v5533 = vsel %vm5277, %v5405, %v4509
    %v5534 = vsel %vm5278, %v5406, %v4510
    %v5535 = vsel %vm5279, %v5407, %v4511
    %v5536 = vsel %vm5280, %v5408, %v4512
    %v5537 = vsel %vm5281, %v5409, %v4513
    %v5538 = vsel %vm5282, %v5410, %v4514
    %v5539 = vsel %vm5283, %v5411, %v4515
    %v5540 = vsel %vm5284, %v5412, %v4516
    %v5541 = vsel %vm5285, %v5413, %v4517
    %v5542 = vsel %vm5286, %v5414, %v4518
    %v5543 = vsel %vm5287, %v5415, %v4519
    %v5544 = vsel %vm5288, %v5416, %v4520
    %v5545 = vsel %vm5289, %v5417, %v4521
    %v5546 = vsel %vm5290, %v5418, %v4522
    %v5547 = vsel %vm5291, %v5419, %v4523
    %v5548 = vsel %vm5292, %v5420, %v4524
    %v5549 = vsel %vm5293, %v5421, %v4525
    %v5550 = vsel %vm5294, %v5422, %v4526
    %v5551 = vsel %vm5295, %v5423, %v4527
    %v5552 = vsel %vm5296, %v5424, %v4528
    %v5553 = vsel %vm5297, %v5425, %v4529
    %v5554 = vsel %vm5298, %v5426, %v4530
    %v5555 = vsel %vm5299, %v5427, %v4531
    %v5556 = vsel %vm5300, %v5428, %v4532
    %v5557 = vsel %vm5301, %v5429, %v4533
    %v5558 = vsel %vm5302, %v5430, %v4534
    %v5559 = vsel %vm5303, %v5431, %v4535
    %v5560 = vsel %vm5304, %v5432, %v4536
    %v5561 = vsel %vm5305, %v5433, %v4537
    %v5562 = vsel %vm5306, %v5434, %v4538
    %v5563 = vsel %vm5307, %v5435, %v4539
    %v5564 = vsel %vm5308, %v5436, %v4540
    %v5565 = vsel %vm5309, %v5437, %v4541
    %v5566 = vsel %vm5310, %v5438, %v4542
    %v5567 = vsel %vm5311, %v5439, %v4543
    %v5568 = vsel %vm5312, %v5440, %v4544
    %v5569 = vsel %vm5313, %v5441, %v4545
    %v5570 = vsel %vm5314, %v5442, %v4546
    %v5571 = vsel %vm5315, %v5443, %v4547
    %v5572 = vsel %vm5316, %v5444, %v4548
    %v5573 = vsel %vm5317, %v5445, %v4549
    %v5574 = vsel %vm5318, %v5446, %v4550
    %v5575 = vsel %vm5319, %v5447, %v4551
    %v5576 = vsel %vm5320, %v5448, %v4552
    %v5577 = vsel %vm5321, %v5449, %v4553
    %v5578 = vsel %vm5322, %v5450, %v4554
    %v5579 = vsel %vm5323, %v5451, %v4555
    %v5580 = vsel %vm5324, %v5452, %v4556
    %v5581 = vsel %vm5325, %v5453, %v4557
    %v5582 = vsel %vm5326, %v5454, %v4558
    %v5583 = vsel %vm5327, %v5455, %v4559
    %v5584 = vsel %vm5328, %v5456, %v4560
    %v5585 = vsel %vm5329, %v5457, %v4561
    %v5586 = vsel %vm5330, %v5458, %v4562
    %v5587 = vsel %vm5331, %v5459, %v4563
    %v5588 = vsel %vm5332, %v5460, %v4564
    %v5589 = vsel %vm5333, %v5461, %v4565
    %v5590 = vsel %vm5334, %v5462, %v4566
    %v5591 = vsel %vm5335, %v5463, %v4567
    %v5592 = vsel %vm5336, %v5464, %v4568
    %v5593 = vsel %vm5337, %v5465, %v4569
    %v5594 = vsel %vm5338, %v5466, %v4570
    %v5595 = vsel %vm5339, %v5467, %v4571
    %v5596 = vsel %vm5340, %v5468, %v4572
    %v5597 = vsel %vm5341, %v5469, %v4573
    %v5598 = vsel %vm5342, %v5470, %v4574
    %v5599 = vsel %vm5343, %v5471, %v4575
    %v5600 = vsel %vm5344, %v5472, %v4576
    %v5601 = vsel %vm5345, %v5473, %v4577
    %v5602 = vsel %vm5346, %v5474, %v4578
    %v5603 = vsel %vm5347, %v5475, %v4579
    %v5604 = vsel %vm5348, %v5476, %v4580
    %v5605 = vsel %vm5349, %v5477, %v4581
    %v5606 = vsel %vm5350, %v5478, %v4582
    %v5607 = vsel %vm5351, %v5479, %v4583
    %v5608 = vsel %vm5352, %v5480, %v4584
    %v5609 = vsel %vm5353, %v5481, %v4585
    %v5610 = vsel %vm5354, %v5482, %v4586
    %v5611 = vsel %vm5355, %v5483, %v4587
    %v5612 = vsel %vm5356, %v5484, %v4588
    %v5613 = vsel %vm5357, %v5485, %v4589
    %v5614 = vsel %vm5358, %v5486, %v4590
    %v5615 = vpack.c.bf16 %v4848, %v4847
    %v5616 = vpack.c.bf16 %v4850, %v4849
    %v5617 = vpack.c.bf16 %v4852, %v4851
    %v5618 = vpack.c.bf16 %v4854, %v4853
    %v5619 = vpack.c.bf16 %v4856, %v4855
    %v5620 = vpack.c.bf16 %v4858, %v4857
    %v5621 = vpack.c.bf16 %v4860, %v4859
    %v5622 = vpack.c.bf16 %v4862, %v4861
    %v5623 = vpack.c.bf16 %v4864, %v4863
    %v5624 = vpack.c.bf16 %v4866, %v4865
    %v5625 = vpack.c.bf16 %v4868, %v4867
    %v5626 = vpack.c.bf16 %v4870, %v4869
    %v5627 = vpack.c.bf16 %v4872, %v4871
    %v5628 = vpack.c.bf16 %v4874, %v4873
    %v5629 = vpack.c.bf16 %v4876, %v4875
    %v5630 = vpack.c.bf16 %v4878, %v4877
    %v5631 = vpack.c.bf16 %v4880, %v4879
    %v5632 = vpack.c.bf16 %v4882, %v4881
    %v5633 = vpack.c.bf16 %v4884, %v4883
    %v5634 = vpack.c.bf16 %v4886, %v4885
    %v5635 = vpack.c.bf16 %v4888, %v4887
    %v5636 = vpack.c.bf16 %v4890, %v4889
    %v5637 = vpack.c.bf16 %v4892, %v4891
    %v5638 = vpack.c.bf16 %v4894, %v4893
    %v5639 = vpack.c.bf16 %v4896, %v4895
    %v5640 = vpack.c.bf16 %v4898, %v4897
    %v5641 = vpack.c.bf16 %v4900, %v4899
    %v5642 = vpack.c.bf16 %v4902, %v4901
    %v5643 = vpack.c.bf16 %v4904, %v4903
    %v5644 = vpack.c.bf16 %v4906, %v4905
    %v5645 = vpack.c.bf16 %v4908, %v4907
    %v5646 = vpack.c.bf16 %v4910, %v4909
    %v5647 = vpack.c.bf16 %v4912, %v4911
    %v5648 = vpack.c.bf16 %v4914, %v4913
    %v5649 = vpack.c.bf16 %v4916, %v4915
    %v5650 = vpack.c.bf16 %v4918, %v4917
    %v5651 = vpack.c.bf16 %v4920, %v4919
    %v5652 = vpack.c.bf16 %v4922, %v4921
    %v5653 = vpack.c.bf16 %v4924, %v4923
    %v5654 = vpack.c.bf16 %v4926, %v4925
    %v5655 = vpack.c.bf16 %v4928, %v4927
    %v5656 = vpack.c.bf16 %v4930, %v4929
    %v5657 = vpack.c.bf16 %v4932, %v4931
    %v5658 = vpack.c.bf16 %v4934, %v4933
    %v5659 = vpack.c.bf16 %v4936, %v4935
    %v5660 = vpack.c.bf16 %v4938, %v4937
    %v5661 = vpack.c.bf16 %v4940, %v4939
    %v5662 = vpack.c.bf16 %v4942, %v4941
    %v5663 = vpack.c.bf16 %v4944, %v4943
    %v5664 = vpack.c.bf16 %v4946, %v4945
    %v5665 = vpack.c.bf16 %v4948, %v4947
    %v5666 = vpack.c.bf16 %v4950, %v4949
    %v5667 = vpack.c.bf16 %v4952, %v4951
    %v5668 = vpack.c.bf16 %v4954, %v4953
    %v5669 = vpack.c.bf16 %v4956, %v4955
    %v5670 = vpack.c.bf16 %v4958, %v4957
    %v5671 = vpack.c.bf16 %v4960, %v4959
    %v5672 = vpack.c.bf16 %v4962, %v4961
    %v5673 = vpack.c.bf16 %v4964, %v4963
    %v5674 = vpack.c.bf16 %v4966, %v4965
    %v5675 = vpack.c.bf16 %v4968, %v4967
    %v5676 = vpack.c.bf16 %v4970, %v4969
    %v5677 = vpack.c.bf16 %v4972, %v4971
    %v5678 = vpack.c.bf16 %v4974, %v4973
    %v5679 = vpack.c.bf16 %v5488, %v5487
    %v5680 = vpack.c.bf16 %v5490, %v5489
    %v5681 = vpack.c.bf16 %v5492, %v5491
    %v5682 = vpack.c.bf16 %v5494, %v5493
    %v5683 = vpack.c.bf16 %v5496, %v5495
    %v5684 = vpack.c.bf16 %v5498, %v5497
    %v5685 = vpack.c.bf16 %v5500, %v5499
    %v5686 = vpack.c.bf16 %v5502, %v5501
    %v5687 = vpack.c.bf16 %v5504, %v5503
    %v5688 = vpack.c.bf16 %v5506, %v5505
    %v5689 = vpack.c.bf16 %v5508, %v5507
    %v5690 = vpack.c.bf16 %v5510, %v5509
    %v5691 = vpack.c.bf16 %v5512, %v5511
    %v5692 = vpack.c.bf16 %v5514, %v5513
    %v5693 = vpack.c.bf16 %v5516, %v5515
    %v5694 = vpack.c.bf16 %v5518, %v5517
    %v5695 = vpack.c.bf16 %v5520, %v5519
    %v5696 = vpack.c.bf16 %v5522, %v5521
    %v5697 = vpack.c.bf16 %v5524, %v5523
    %v5698 = vpack.c.bf16 %v5526, %v5525
    %v5699 = vpack.c.bf16 %v5528, %v5527
    %v5700 = vpack.c.bf16 %v5530, %v5529
    %v5701 = vpack.c.bf16 %v5532, %v5531
    %v5702 = vpack.c.bf16 %v5534, %v5533
    %v5703 = vpack.c.bf16 %v5536, %v5535
    %v5704 = vpack.c.bf16 %v5538, %v5537
    %v5705 = vpack.c.bf16 %v5540, %v5539
    %v5706 = vpack.c.bf16 %v5542, %v5541
    %v5707 = vpack.c.bf16 %v5544, %v5543
    %v5708 = vpack.c.bf16 %v5546, %v5545
    %v5709 = vpack.c.bf16 %v5548, %v5547
    %v5710 = vpack.c.bf16 %v5550, %v5549
    %v5711 = vpack.c.bf16 %v5552, %v5551
    %v5712 = vpack.c.bf16 %v5554, %v5553
    %v5713 = vpack.c.bf16 %v5556, %v5555
    %v5714 = vpack.c.bf16 %v5558, %v5557
    %v5715 = vpack.c.bf16 %v5560, %v5559
    %v5716 = vpack.c.bf16 %v5562, %v5561
    %v5717 = vpack.c.bf16 %v5564, %v5563
    %v5718 = vpack.c.bf16 %v5566, %v5565
    %v5719 = vpack.c.bf16 %v5568, %v5567
    %v5720 = vpack.c.bf16 %v5570, %v5569
    %v5721 = vpack.c.bf16 %v5572, %v5571
    %v5722 = vpack.c.bf16 %v5574, %v5573
    %v5723 = vpack.c.bf16 %v5576, %v5575
    %v5724 = vpack.c.bf16 %v5578, %v5577
    %v5725 = vpack.c.bf16 %v5580, %v5579
    %v5726 = vpack.c.bf16 %v5582, %v5581
    %v5727 = vpack.c.bf16 %v5584, %v5583
    %v5728 = vpack.c.bf16 %v5586, %v5585
    %v5729 = vpack.c.bf16 %v5588, %v5587
    %v5730 = vpack.c.bf16 %v5590, %v5589
    %v5731 = vpack.c.bf16 %v5592, %v5591
    %v5732 = vpack.c.bf16 %v5594, %v5593
    %v5733 = vpack.c.bf16 %v5596, %v5595
    %v5734 = vpack.c.bf16 %v5598, %v5597
    %v5735 = vpack.c.bf16 %v5600, %v5599
    %v5736 = vpack.c.bf16 %v5602, %v5601
    %v5737 = vpack.c.bf16 %v5604, %v5603
    %v5738 = vpack.c.bf16 %v5606, %v5605
    %v5739 = vpack.c.bf16 %v5608, %v5607
    %v5740 = vpack.c.bf16 %v5610, %v5609
    %v5741 = vpack.c.bf16 %v5612, %v5611
    %v5742 = vpack.c.bf16 %v5614, %v5613
    %v5743 = vld [vmem:[#allocation2] sm:$0xf]
    %v5744 = vld [vmem:[#allocation2 + $0x4] sm:$0xf]
    %v5745 = vld [vmem:[#allocation2 + $0x8] sm:$0xf]
    %v5746 = vld [vmem:[#allocation2 + $0xc] sm:$0xf]
    %v5747 = vld [vmem:[#allocation2 + $0x34] sm:$0xf]
    %v5748 = vld [vmem:[#allocation2 + $0x38] sm:$0xf]
    %v5749 = vld [vmem:[#allocation2 + $0x3c] sm:$0xf]
    %v5750 = vld [vmem:[#allocation2 + $0x40] sm:$0xf]
    %v5751 = vld [vmem:[#allocation2 + $0x68] sm:$0xf]
    %v5752 = vld [vmem:[#allocation2 + $0x6c] sm:$0xf]
    %v5753 = vld [vmem:[#allocation2 + $0x70] sm:$0xf]
    %v5754 = vld [vmem:[#allocation2 + $0x74] sm:$0xf]
    %v5755 = vld [vmem:[#allocation2 + $0x9c] sm:$0xf]
    %v5756 = vld [vmem:[#allocation2 + $0xa0] sm:$0xf]
    %v5757 = vld [vmem:[#allocation2 + $0xa4] sm:$0xf]
    %v5758 = vld [vmem:[#allocation2 + $0xa8] sm:$0xf]
    %v5759 = vld [vmem:[#allocation2 + $0xd0] sm:$0xf]
    %v5760 = vld [vmem:[#allocation2 + $0xd4] sm:$0xf]
    %v5761 = vld [vmem:[#allocation2 + $0xd8] sm:$0xf]
    %v5762 = vld [vmem:[#allocation2 + $0xdc] sm:$0xf]
    %v5763 = vld [vmem:[#allocation2 + $0x104] sm:$0xf]
    %v5764 = vld [vmem:[#allocation2 + $0x108] sm:$0xf]
    %v5765 = vld [vmem:[#allocation2 + $0x10c] sm:$0xf]
    %v5766 = vld [vmem:[#allocation2 + $0x110] sm:$0xf]
    %v5767 = vld [vmem:[#allocation2 + $0x138] sm:$0xf]
    %v5768 = vld [vmem:[#allocation2 + $0x13c] sm:$0xf]
    %v5769 = vld [vmem:[#allocation2 + $0x140] sm:$0xf]
    %v5770 = vld [vmem:[#allocation2 + $0x144] sm:$0xf]
    %v5771 = vld [vmem:[#allocation2 + $0x16c] sm:$0xf]
    %v5772 = vld [vmem:[#allocation2 + $0x170] sm:$0xf]
    %v5773 = vld [vmem:[#allocation2 + $0x174] sm:$0xf]
    %v5774 = vld [vmem:[#allocation2 + $0x178] sm:$0xf]
    %v5775 = vld [vmem:[#allocation2 + $0x10] sm:$0xf]
    %v5776 = vld [vmem:[#allocation2 + $0x14] sm:$0xf]
    %v5777 = vld [vmem:[#allocation2 + $0x18] sm:$0xf]
    %v5778 = vld [vmem:[#allocation2 + $0x1c] sm:$0xf]
    %v5779 = vld [vmem:[#allocation2 + $0x44] sm:$0xf]
    %v5780 = vld [vmem:[#allocation2 + $0x48] sm:$0xf]
    %v5781 = vld [vmem:[#allocation2 + $0x4c] sm:$0xf]
    %v5782 = vld [vmem:[#allocation2 + $0x50] sm:$0xf]
    %v5783 = vld [vmem:[#allocation2 + $0x78] sm:$0xf]
    %v5784 = vld [vmem:[#allocation2 + $0x7c] sm:$0xf]
    %v5785 = vld [vmem:[#allocation2 + $0x80] sm:$0xf]
    %v5786 = vld [vmem:[#allocation2 + $0x84] sm:$0xf]
    %v5787 = vld [vmem:[#allocation2 + $0xac] sm:$0xf]
    %v5788 = vld [vmem:[#allocation2 + $0xb0] sm:$0xf]
    %v5789 = vld [vmem:[#allocation2 + $0xb4] sm:$0xf]
    %v5790 = vld [vmem:[#allocation2 + $0xb8] sm:$0xf]
    %v5791 = vld [vmem:[#allocation2 + $0xe0] sm:$0xf]
    %v5792 = vld [vmem:[#allocation2 + $0xe4] sm:$0xf]
    %v5793 = vld [vmem:[#allocation2 + $0xe8] sm:$0xf]
    %v5794 = vld [vmem:[#allocation2 + $0xec] sm:$0xf]
    %v5795 = vld [vmem:[#allocation2 + $0x114] sm:$0xf]
    %v5796 = vld [vmem:[#allocation2 + $0x118] sm:$0xf]
    %v5797 = vld [vmem:[#allocation2 + $0x11c] sm:$0xf]
    %v5798 = vld [vmem:[#allocation2 + $0x120] sm:$0xf]
    %v5799 = vld [vmem:[#allocation2 + $0x148] sm:$0xf]
    %v5800 = vld [vmem:[#allocation2 + $0x14c] sm:$0xf]
    %v5801 = vld [vmem:[#allocation2 + $0x150] sm:$0xf]
    %v5802 = vld [vmem:[#allocation2 + $0x154] sm:$0xf]
    %v5803 = vld [vmem:[#allocation2 + $0x17c] sm:$0xf]
    %v5804 = vld [vmem:[#allocation2 + $0x180] sm:$0xf]
    %v5805 = vld [vmem:[#allocation2 + $0x184] sm:$0xf]
    %v5806 = vld [vmem:[#allocation2 + $0x188] sm:$0xf]
    %v5807 = vld [vmem:[#allocation2 + $0x20] sm:$0xf]
    %v5808 = vld [vmem:[#allocation2 + $0x24] sm:$0xf]
    %v5809 = vld [vmem:[#allocation2 + $0x28] sm:$0xf]
    %v5810 = vld [vmem:[#allocation2 + $0x2c] sm:$0xf]
    %v5811 = vld [vmem:[#allocation2 + $0x54] sm:$0xf]
    %v5812 = vld [vmem:[#allocation2 + $0x58] sm:$0xf]
    %v5813 = vld [vmem:[#allocation2 + $0x5c] sm:$0xf]
    %v5814 = vld [vmem:[#allocation2 + $0x60] sm:$0xf]
    %v5815 = vld [vmem:[#allocation2 + $0x88] sm:$0xf]
    %v5816 = vld [vmem:[#allocation2 + $0x8c] sm:$0xf]
    %v5817 = vld [vmem:[#allocation2 + $0x90] sm:$0xf]
    %v5818 = vld [vmem:[#allocation2 + $0x94] sm:$0xf]
    %v5819 = vld [vmem:[#allocation2 + $0xbc] sm:$0xf]
    %v5820 = vld [vmem:[#allocation2 + $0xc0] sm:$0xf]
    %v5821 = vld [vmem:[#allocation2 + $0xc4] sm:$0xf]
    %v5822 = vld [vmem:[#allocation2 + $0xc8] sm:$0xf]
    %v5823 = vld [vmem:[#allocation2 + $0xf0] sm:$0xf]
    %v5824 = vld [vmem:[#allocation2 + $0xf4] sm:$0xf]
    %v5825 = vld [vmem:[#allocation2 + $0xf8] sm:$0xf]
    %v5826 = vld [vmem:[#allocation2 + $0xfc] sm:$0xf]
    %v5827 = vld [vmem:[#allocation2 + $0x124] sm:$0xf]
    %v5828 = vld [vmem:[#allocation2 + $0x128] sm:$0xf]
    %v5829 = vld [vmem:[#allocation2 + $0x12c] sm:$0xf]
    %v5830 = vld [vmem:[#allocation2 + $0x130] sm:$0xf]
    %v5831 = vld [vmem:[#allocation2 + $0x158] sm:$0xf]
    %v5832 = vld [vmem:[#allocation2 + $0x15c] sm:$0xf]
    %v5833 = vld [vmem:[#allocation2 + $0x160] sm:$0xf]
    %v5834 = vld [vmem:[#allocation2 + $0x164] sm:$0xf]
    %v5835 = vld [vmem:[#allocation2 + $0x18c] sm:$0xf]
    %v5836 = vld [vmem:[#allocation2 + $0x190] sm:$0xf]
    %v5837 = vld [vmem:[#allocation2 + $0x194] sm:$0xf]
    %v5838 = vld [vmem:[#allocation2 + $0x198] sm:$0xf]
    %v5839 = vunpack.c.l.bf16 %v5807
    %v5840 = vunpack.c.l.bf16 %v5808
    %v5841 = vunpack.c.l.bf16 %v5809
    %v5842 = vunpack.c.l.bf16 %v5810
    %v5843 = vunpack.c.l.bf16 %v5811
    %v5844 = vunpack.c.l.bf16 %v5812
    %v5845 = vunpack.c.l.bf16 %v5813
    %v5846 = vunpack.c.l.bf16 %v5814
    %v5847 = vunpack.c.l.bf16 %v5815
    %v5848 = vunpack.c.l.bf16 %v5816
    %v5849 = vunpack.c.l.bf16 %v5817
    %v5850 = vunpack.c.l.bf16 %v5818
    %v5851 = vunpack.c.l.bf16 %v5819
    %v5852 = vunpack.c.l.bf16 %v5820
    %v5853 = vunpack.c.l.bf16 %v5821
    %v5854 = vunpack.c.l.bf16 %v5822
    %v5855 = vunpack.c.l.bf16 %v5823
    %v5856 = vunpack.c.l.bf16 %v5824
    %v5857 = vunpack.c.l.bf16 %v5825
    %v5858 = vunpack.c.l.bf16 %v5826
    %v5859 = vunpack.c.l.bf16 %v5827
    %v5860 = vunpack.c.l.bf16 %v5828
    %v5861 = vunpack.c.l.bf16 %v5829
    %v5862 = vunpack.c.l.bf16 %v5830
    %v5863 = vunpack.c.l.bf16 %v5831
    %v5864 = vunpack.c.l.bf16 %v5832
    %v5865 = vunpack.c.l.bf16 %v5833
    %v5866 = vunpack.c.l.bf16 %v5834
    %v5867 = vunpack.c.l.bf16 %v5835
    %v5868 = vunpack.c.l.bf16 %v5836
    %v5869 = vunpack.c.l.bf16 %v5837
    %v5870 = vunpack.c.l.bf16 %v5838
    %v5871 = vld [vmem:[#allocation2 + $0x30] sm:$0x1]
    %v5872 = vld [vmem:[#allocation2 + $0x64] sm:$0x1]
    %v5873 = vld [vmem:[#allocation2 + $0x98] sm:$0x1]
    %v5874 = vld [vmem:[#allocation2 + $0xcc] sm:$0x1]
    %v5875 = vld [vmem:[#allocation2 + $0x100] sm:$0x1]
    %v5876 = vld [vmem:[#allocation2 + $0x134] sm:$0x1]
    %v5877 = vld [vmem:[#allocation2 + $0x168] sm:$0x1]
    %v5878 = vld [vmem:[#allocation2 + $0x19c] sm:$0x1]
    %v5879 = vunpack.c.l.bf16 %v5871
    %v5880 = vunpack.c.l.bf16 %v5872
    %v5881 = vunpack.c.l.bf16 %v5873
    %v5882 = vunpack.c.l.bf16 %v5874
    %v5883 = vunpack.c.l.bf16 %v5875
    %v5884 = vunpack.c.l.bf16 %v5876
    %v5885 = vunpack.c.l.bf16 %v5877
    %v5886 = vunpack.c.l.bf16 %v5878
    %v5891 = vunpack.c.l.b16 %v5775
    %v5892 = vunpack.c.l.b16 %v5776
    %v5893 = vunpack.c.l.b16 %v5777
    %v5894 = vunpack.c.l.b16 %v5778
    %v5895 = vpack.c.b16 %v5892, %v5891
    %v5896 = vpack.c.b16 %v5894, %v5893
    %5899 = vmatprep.subr.bf16.mxu0 0
    %5900 = vmatpush1.bf16.msra.mxu0 %v5686
    %5901 = vmatprep.subr.bf16.mxu0 0
    %5902 = vmatpush1.bf16.msra.mxu0 %v5685
    %5903 = vmatprep.subr.bf16.mxu0 0
    %5904 = vmatpush1.bf16.msra.mxu0 %v5684
    %5905 = vmatprep.subr.bf16.mxu0 0
    %5906 = vmatpush1.bf16.msra.mxu0 %v5683
    %5907 = vmatprep.subr.bf16.mxu0 0
    %5908 = vmatpush1.bf16.msra.mxu0 %v5682
    %5909 = vmatprep.subr.bf16.mxu0 0
    %5910 = vmatpush1.bf16.msra.mxu0 %v5681
    %5911 = vmatprep.subr.bf16.mxu0 0
    %5912 = vmatpush1.bf16.msra.mxu0 %v5680
    %5913 = vmatprep.subr.bf16.mxu0 0
    %5914 = vmatpush1.bf16.msra.mxu0 %v5679
    %5915 = vmatprep.subr.bf16.mxu0 0
    %5916 = vmatpush2.bf16.msra.mxu0 0
    %5917 = vmatprep.subr.bf16.mxu0 0
    %5918 = vmatpush2.bf16.msra.mxu0 0
    %5919 = vmatprep.subr.bf16.mxu0 0
    %5920 = vmatpush2.bf16.msra.mxu0 0
    %5921 = vmatprep.subr.bf16.mxu0 0
    %5922 = vmatpush2.bf16.msra.mxu0 0
    %5923 = vmatprep.subr.bf16.mxu0 0
    %5924 = vmatpush2.bf16.msra.mxu0 0
    %5925 = vmatprep.subr.bf16.mxu0 0
    %5926 = vmatpush2.bf16.msra.mxu0 0
    %5927 = vmatprep.subr.bf16.mxu0 0
    %5928 = vmatpush2.bf16.msra.mxu0 0
    %5929 = vmatprep.subr.bf16.mxu0 0
    %5930 = vmatpush2.bf16.msra.mxu0 0
    %5931 = vmatprep.mubr.bf16.mxu0 0
    %5932 = vmatmul.mubr.bf16.gmra.mxu0 %v5895
    %v5933 = vpop.f32.mrf.mxu0
    %v5934 = vadd.f32 0.0, %v5933
    %v5935 = vpop.f32.mrf.mxu0
    %v5936 = vpop.f32.mrf.mxu0
    %v5937 = vadd.f32 0.0, %v5936
    %v5938 = vpop.f32.mrf.mxu0
    %5939 = vmatprep.mubr.bf16.mxu0 0
    %5940 = vmatmul.mubr.bf16.gmra.mxu0 %v5896
    %v5941 = vpop.f32.mrf.mxu0
    %v5942 = vadd.f32 0.0, %v5941
    %v5943 = vpop.f32.mrf.mxu0
    %v5944 = vpop.f32.mrf.mxu0
    %v5945 = vadd.f32 0.0, %v5944
    %v5946 = vpop.f32.mrf.mxu0
    %5947 = vdwg.mxu0
    %v5952 = vunpack.c.l.b16 %v5779
    %v5953 = vunpack.c.l.b16 %v5780
    %v5954 = vunpack.c.l.b16 %v5781
    %v5955 = vunpack.c.l.b16 %v5782
    %v5956 = vpack.c.b16 %v5953, %v5952
    %v5957 = vpack.c.b16 %v5955, %v5954
    %5960 = vmatprep.subr.bf16.mxu0 0
    %5961 = vmatpush1.bf16.msra.mxu0 %v5694
    %5962 = vmatprep.subr.bf16.mxu0 0
    %5963 = vmatpush1.bf16.msra.mxu0 %v5693
    %5964 = vmatprep.subr.bf16.mxu0 0
    %5965 = vmatpush1.bf16.msra.mxu0 %v5692
    %5966 = vmatprep.subr.bf16.mxu0 0
    %5967 = vmatpush1.bf16.msra.mxu0 %v5691
    %5968 = vmatprep.subr.bf16.mxu0 0
    %5969 = vmatpush1.bf16.msra.mxu0 %v5690
    %5970 = vmatprep.subr.bf16.mxu0 0
    %5971 = vmatpush1.bf16.msra.mxu0 %v5689
    %5972 = vmatprep.subr.bf16.mxu0 0
    %5973 = vmatpush1.bf16.msra.mxu0 %v5688
    %5974 = vmatprep.subr.bf16.mxu0 0
    %5975 = vmatpush1.bf16.msra.mxu0 %v5687
    %5976 = vmatprep.subr.bf16.mxu0 0
    %5977 = vmatpush2.bf16.msra.mxu0 0
    %5978 = vmatprep.subr.bf16.mxu0 0
    %5979 = vmatpush2.bf16.msra.mxu0 0
    %5980 = vmatprep.subr.bf16.mxu0 0
    %5981 = vmatpush2.bf16.msra.mxu0 0
    %5982 = vmatprep.subr.bf16.mxu0 0
    %5983 = vmatpush2.bf16.msra.mxu0 0
    %5984 = vmatprep.subr.bf16.mxu0 0
    %5985 = vmatpush2.bf16.msra.mxu0 0
    %5986 = vmatprep.subr.bf16.mxu0 0
    %5987 = vmatpush2.bf16.msra.mxu0 0
    %5988 = vmatprep.subr.bf16.mxu0 0
    %5989 = vmatpush2.bf16.msra.mxu0 0
    %5990 = vmatprep.subr.bf16.mxu0 0
    %5991 = vmatpush2.bf16.msra.mxu0 0
    %5992 = vmatprep.mubr.bf16.mxu0 0
    %5993 = vmatmul.mubr.bf16.gmra.mxu0 %v5956
    %v5994 = vpop.f32.mrf.mxu0
    %v5995 = vadd.f32 0.0, %v5994
    %v5996 = vpop.f32.mrf.mxu0
    %v5997 = vpop.f32.mrf.mxu0
    %v5998 = vadd.f32 0.0, %v5997
    %v5999 = vpop.f32.mrf.mxu0
    %6000 = vmatprep.mubr.bf16.mxu0 0
    %6001 = vmatmul.mubr.bf16.gmra.mxu0 %v5957
    %v6002 = vpop.f32.mrf.mxu0
    %v6003 = vadd.f32 0.0, %v6002
    %v6004 = vpop.f32.mrf.mxu0
    %v6005 = vpop.f32.mrf.mxu0
    %v6006 = vadd.f32 0.0, %v6005
    %v6007 = vpop.f32.mrf.mxu0
    %6008 = vdwg.mxu0
    %v6013 = vunpack.c.l.b16 %v5783
    %v6014 = vunpack.c.l.b16 %v5784
    %v6015 = vunpack.c.l.b16 %v5785
    %v6016 = vunpack.c.l.b16 %v5786
    %v6017 = vpack.c.b16 %v6014, %v6013
    %v6018 = vpack.c.b16 %v6016, %v6015
    %6021 = vmatprep.subr.bf16.mxu0 0
    %6022 = vmatpush1.bf16.msra.mxu0 %v5702
    %6023 = vmatprep.subr.bf16.mxu0 0
    %6024 = vmatpush1.bf16.msra.mxu0 %v5701
    %6025 = vmatprep.subr.bf16.mxu0 0
    %6026 = vmatpush1.bf16.msra.mxu0 %v5700
    %6027 = vmatprep.subr.bf16.mxu0 0
    %6028 = vmatpush1.bf16.msra.mxu0 %v5699
    %6029 = vmatprep.subr.bf16.mxu0 0
    %6030 = vmatpush1.bf16.msra.mxu0 %v5698
    %6031 = vmatprep.subr.bf16.mxu0 0
    %6032 = vmatpush1.bf16.msra.mxu0 %v5697
    %6033 = vmatprep.subr.bf16.mxu0 0
    %6034 = vmatpush1.bf16.msra.mxu0 %v5696
    %6035 = vmatprep.subr.bf16.mxu0 0
    %6036 = vmatpush1.bf16.msra.mxu0 %v5695
    %6037 = vmatprep.subr.bf16.mxu0 0
    %6038 = vmatpush2.bf16.msra.mxu0 0
    %6039 = vmatprep.subr.bf16.mxu0 0
    %6040 = vmatpush2.bf16.msra.mxu0 0
    %6041 = vmatprep.subr.bf16.mxu0 0
    %6042 = vmatpush2.bf16.msra.mxu0 0
    %6043 = vmatprep.subr.bf16.mxu0 0
    %6044 = vmatpush2.bf16.msra.mxu0 0
    %6045 = vmatprep.subr.bf16.mxu0 0
    %6046 = vmatpush2.bf16.msra.mxu0 0
    %6047 = vmatprep.subr.bf16.mxu0 0
    %6048 = vmatpush2.bf16.msra.mxu0 0
    %6049 = vmatprep.subr.bf16.mxu0 0
    %6050 = vmatpush2.bf16.msra.mxu0 0
    %6051 = vmatprep.subr.bf16.mxu0 0
    %6052 = vmatpush2.bf16.msra.mxu0 0
    %6053 = vmatprep.mubr.bf16.mxu0 0
    %6054 = vmatmul.mubr.bf16.gmra.mxu0 %v6017
    %v6055 = vpop.f32.mrf.mxu0
    %v6056 = vadd.f32 0.0, %v6055
    %v6057 = vpop.f32.mrf.mxu0
    %v6058 = vpop.f32.mrf.mxu0
    %v6059 = vadd.f32 0.0, %v6058
    %v6060 = vpop.f32.mrf.mxu0
    %6061 = vmatprep.mubr.bf16.mxu0 0
    %6062 = vmatmul.mubr.bf16.gmra.mxu0 %v6018
    %v6063 = vpop.f32.mrf.mxu0
    %v6064 = vadd.f32 0.0, %v6063
    %v6065 = vpop.f32.mrf.mxu0
    %v6066 = vpop.f32.mrf.mxu0
    %v6067 = vadd.f32 0.0, %v6066
    %v6068 = vpop.f32.mrf.mxu0
    %6069 = vdwg.mxu0
    %v6074 = vunpack.c.l.b16 %v5787
    %v6075 = vunpack.c.l.b16 %v5788
    %v6076 = vunpack.c.l.b16 %v5789
    %v6077 = vunpack.c.l.b16 %v5790
    %v6078 = vpack.c.b16 %v6075, %v6074
    %v6079 = vpack.c.b16 %v6077, %v6076
    %6082 = vmatprep.subr.bf16.mxu0 0
    %6083 = vmatpush1.bf16.msra.mxu0 %v5710
    %6084 = vmatprep.subr.bf16.mxu0 0
    %6085 = vmatpush1.bf16.msra.mxu0 %v5709
    %6086 = vmatprep.subr.bf16.mxu0 0
    %6087 = vmatpush1.bf16.msra.mxu0 %v5708
    %6088 = vmatprep.subr.bf16.mxu0 0
    %6089 = vmatpush1.bf16.msra.mxu0 %v5707
    %6090 = vmatprep.subr.bf16.mxu0 0
    %6091 = vmatpush1.bf16.msra.mxu0 %v5706
    %6092 = vmatprep.subr.bf16.mxu0 0
    %6093 = vmatpush1.bf16.msra.mxu0 %v5705
    %6094 = vmatprep.subr.bf16.mxu0 0
    %6095 = vmatpush1.bf16.msra.mxu0 %v5704
    %6096 = vmatprep.subr.bf16.mxu0 0
    %6097 = vmatpush1.bf16.msra.mxu0 %v5703
    %6098 = vmatprep.subr.bf16.mxu0 0
    %6099 = vmatpush2.bf16.msra.mxu0 0
    %6100 = vmatprep.subr.bf16.mxu0 0
    %6101 = vmatpush2.bf16.msra.mxu0 0
    %6102 = vmatprep.subr.bf16.mxu0 0
    %6103 = vmatpush2.bf16.msra.mxu0 0
    %6104 = vmatprep.subr.bf16.mxu0 0
    %6105 = vmatpush2.bf16.msra.mxu0 0
    %6106 = vmatprep.subr.bf16.mxu0 0
    %6107 = vmatpush2.bf16.msra.mxu0 0
    %6108 = vmatprep.subr.bf16.mxu0 0
    %6109 = vmatpush2.bf16.msra.mxu0 0
    %6110 = vmatprep.subr.bf16.mxu0 0
    %6111 = vmatpush2.bf16.msra.mxu0 0
    %6112 = vmatprep.subr.bf16.mxu0 0
    %6113 = vmatpush2.bf16.msra.mxu0 0
    %6114 = vmatprep.mubr.bf16.mxu0 0
    %6115 = vmatmul.mubr.bf16.gmra.mxu0 %v6078
    %v6116 = vpop.f32.mrf.mxu0
    %v6117 = vadd.f32 0.0, %v6116
    %v6118 = vpop.f32.mrf.mxu0
    %v6119 = vpop.f32.mrf.mxu0
    %v6120 = vadd.f32 0.0, %v6119
    %v6121 = vpop.f32.mrf.mxu0
    %6122 = vmatprep.mubr.bf16.mxu0 0
    %6123 = vmatmul.mubr.bf16.gmra.mxu0 %v6079
    %v6124 = vpop.f32.mrf.mxu0
    %v6125 = vadd.f32 0.0, %v6124
    %v6126 = vpop.f32.mrf.mxu0
    %v6127 = vpop.f32.mrf.mxu0
    %v6128 = vadd.f32 0.0, %v6127
    %v6129 = vpop.f32.mrf.mxu0
    %6130 = vdwg.mxu0
    %v6135 = vunpack.c.l.b16 %v5791
    %v6136 = vunpack.c.l.b16 %v5792
    %v6137 = vunpack.c.l.b16 %v5793
    %v6138 = vunpack.c.l.b16 %v5794
    %v6139 = vpack.c.b16 %v6136, %v6135
    %v6140 = vpack.c.b16 %v6138, %v6137
    %6143 = vmatprep.subr.bf16.mxu0 0
    %6144 = vmatpush1.bf16.msra.mxu0 %v5718
    %6145 = vmatprep.subr.bf16.mxu0 0
    %6146 = vmatpush1.bf16.msra.mxu0 %v5717
    %6147 = vmatprep.subr.bf16.mxu0 0
    %6148 = vmatpush1.bf16.msra.mxu0 %v5716
    %6149 = vmatprep.subr.bf16.mxu0 0
    %6150 = vmatpush1.bf16.msra.mxu0 %v5715
    %6151 = vmatprep.subr.bf16.mxu0 0
    %6152 = vmatpush1.bf16.msra.mxu0 %v5714
    %6153 = vmatprep.subr.bf16.mxu0 0
    %6154 = vmatpush1.bf16.msra.mxu0 %v5713
    %6155 = vmatprep.subr.bf16.mxu0 0
    %6156 = vmatpush1.bf16.msra.mxu0 %v5712
    %6157 = vmatprep.subr.bf16.mxu0 0
    %6158 = vmatpush1.bf16.msra.mxu0 %v5711
    %6159 = vmatprep.subr.bf16.mxu0 0
    %6160 = vmatpush2.bf16.msra.mxu0 0
    %6161 = vmatprep.subr.bf16.mxu0 0
    %6162 = vmatpush2.bf16.msra.mxu0 0
    %6163 = vmatprep.subr.bf16.mxu0 0
    %6164 = vmatpush2.bf16.msra.mxu0 0
    %6165 = vmatprep.subr.bf16.mxu0 0
    %6166 = vmatpush2.bf16.msra.mxu0 0
    %6167 = vmatprep.subr.bf16.mxu0 0
    %6168 = vmatpush2.bf16.msra.mxu0 0
    %6169 = vmatprep.subr.bf16.mxu0 0
    %6170 = vmatpush2.bf16.msra.mxu0 0
    %6171 = vmatprep.subr.bf16.mxu0 0
    %6172 = vmatpush2.bf16.msra.mxu0 0
    %6173 = vmatprep.subr.bf16.mxu0 0
    %6174 = vmatpush2.bf16.msra.mxu0 0
    %6175 = vmatprep.mubr.bf16.mxu0 0
    %6176 = vmatmul.mubr.bf16.gmra.mxu0 %v6139
    %v6177 = vpop.f32.mrf.mxu0
    %v6178 = vadd.f32 0.0, %v6177
    %v6179 = vpop.f32.mrf.mxu0
    %v6180 = vpop.f32.mrf.mxu0
    %v6181 = vadd.f32 0.0, %v6180
    %v6182 = vpop.f32.mrf.mxu0
    %6183 = vmatprep.mubr.bf16.mxu0 0
    %6184 = vmatmul.mubr.bf16.gmra.mxu0 %v6140
    %v6185 = vpop.f32.mrf.mxu0
    %v6186 = vadd.f32 0.0, %v6185
    %v6187 = vpop.f32.mrf.mxu0
    %v6188 = vpop.f32.mrf.mxu0
    %v6189 = vadd.f32 0.0, %v6188
    %v6190 = vpop.f32.mrf.mxu0
    %6191 = vdwg.mxu0
    %v6196 = vunpack.c.l.b16 %v5795
    %v6197 = vunpack.c.l.b16 %v5796
    %v6198 = vunpack.c.l.b16 %v5797
    %v6199 = vunpack.c.l.b16 %v5798
    %v6200 = vpack.c.b16 %v6197, %v6196
    %v6201 = vpack.c.b16 %v6199, %v6198
    %6204 = vmatprep.subr.bf16.mxu0 0
    %6205 = vmatpush1.bf16.msra.mxu0 %v5726
    %6206 = vmatprep.subr.bf16.mxu0 0
    %6207 = vmatpush1.bf16.msra.mxu0 %v5725
    %6208 = vmatprep.subr.bf16.mxu0 0
    %6209 = vmatpush1.bf16.msra.mxu0 %v5724
    %6210 = vmatprep.subr.bf16.mxu0 0
    %6211 = vmatpush1.bf16.msra.mxu0 %v5723
    %6212 = vmatprep.subr.bf16.mxu0 0
    %6213 = vmatpush1.bf16.msra.mxu0 %v5722
    %6214 = vmatprep.subr.bf16.mxu0 0
    %6215 = vmatpush1.bf16.msra.mxu0 %v5721
    %6216 = vmatprep.subr.bf16.mxu0 0
    %6217 = vmatpush1.bf16.msra.mxu0 %v5720
    %6218 = vmatprep.subr.bf16.mxu0 0
    %6219 = vmatpush1.bf16.msra.mxu0 %v5719
    %6220 = vmatprep.subr.bf16.mxu0 0
    %6221 = vmatpush2.bf16.msra.mxu0 0
    %6222 = vmatprep.subr.bf16.mxu0 0
    %6223 = vmatpush2.bf16.msra.mxu0 0
    %6224 = vmatprep.subr.bf16.mxu0 0
    %6225 = vmatpush2.bf16.msra.mxu0 0
    %6226 = vmatprep.subr.bf16.mxu0 0
    %6227 = vmatpush2.bf16.msra.mxu0 0
    %6228 = vmatprep.subr.bf16.mxu0 0
    %6229 = vmatpush2.bf16.msra.mxu0 0
    %6230 = vmatprep.subr.bf16.mxu0 0
    %6231 = vmatpush2.bf16.msra.mxu0 0
    %6232 = vmatprep.subr.bf16.mxu0 0
    %6233 = vmatpush2.bf16.msra.mxu0 0
    %6234 = vmatprep.subr.bf16.mxu0 0
    %6235 = vmatpush2.bf16.msra.mxu0 0
    %6236 = vmatprep.mubr.bf16.mxu0 0
    %6237 = vmatmul.mubr.bf16.gmra.mxu0 %v6200
    %v6238 = vpop.f32.mrf.mxu0
    %v6239 = vadd.f32 0.0, %v6238
    %v6240 = vpop.f32.mrf.mxu0
    %v6241 = vpop.f32.mrf.mxu0
    %v6242 = vadd.f32 0.0, %v6241
    %v6243 = vpop.f32.mrf.mxu0
    %6244 = vmatprep.mubr.bf16.mxu0 0
    %6245 = vmatmul.mubr.bf16.gmra.mxu0 %v6201
    %v6246 = vpop.f32.mrf.mxu0
    %v6247 = vadd.f32 0.0, %v6246
    %v6248 = vpop.f32.mrf.mxu0
    %v6249 = vpop.f32.mrf.mxu0
    %v6250 = vadd.f32 0.0, %v6249
    %v6251 = vpop.f32.mrf.mxu0
    %6252 = vdwg.mxu0
    %v6257 = vunpack.c.l.b16 %v5799
    %v6258 = vunpack.c.l.b16 %v5800
    %v6259 = vunpack.c.l.b16 %v5801
    %v6260 = vunpack.c.l.b16 %v5802
    %v6261 = vpack.c.b16 %v6258, %v6257
    %v6262 = vpack.c.b16 %v6260, %v6259
    %6265 = vmatprep.subr.bf16.mxu0 0
    %6266 = vmatpush1.bf16.msra.mxu0 %v5734
    %6267 = vmatprep.subr.bf16.mxu0 0
    %6268 = vmatpush1.bf16.msra.mxu0 %v5733
    %6269 = vmatprep.subr.bf16.mxu0 0
    %6270 = vmatpush1.bf16.msra.mxu0 %v5732
    %6271 = vmatprep.subr.bf16.mxu0 0
    %6272 = vmatpush1.bf16.msra.mxu0 %v5731
    %6273 = vmatprep.subr.bf16.mxu0 0
    %6274 = vmatpush1.bf16.msra.mxu0 %v5730
    %6275 = vmatprep.subr.bf16.mxu0 0
    %6276 = vmatpush1.bf16.msra.mxu0 %v5729
    %6277 = vmatprep.subr.bf16.mxu0 0
    %6278 = vmatpush1.bf16.msra.mxu0 %v5728
    %6279 = vmatprep.subr.bf16.mxu0 0
    %6280 = vmatpush1.bf16.msra.mxu0 %v5727
    %6281 = vmatprep.subr.bf16.mxu0 0
    %6282 = vmatpush2.bf16.msra.mxu0 0
    %6283 = vmatprep.subr.bf16.mxu0 0
    %6284 = vmatpush2.bf16.msra.mxu0 0
    %6285 = vmatprep.subr.bf16.mxu0 0
    %6286 = vmatpush2.bf16.msra.mxu0 0
    %6287 = vmatprep.subr.bf16.mxu0 0
    %6288 = vmatpush2.bf16.msra.mxu0 0
    %6289 = vmatprep.subr.bf16.mxu0 0
    %6290 = vmatpush2.bf16.msra.mxu0 0
    %6291 = vmatprep.subr.bf16.mxu0 0
    %6292 = vmatpush2.bf16.msra.mxu0 0
    %6293 = vmatprep.subr.bf16.mxu0 0
    %6294 = vmatpush2.bf16.msra.mxu0 0
    %6295 = vmatprep.subr.bf16.mxu0 0
    %6296 = vmatpush2.bf16.msra.mxu0 0
    %6297 = vmatprep.mubr.bf16.mxu0 0
    %6298 = vmatmul.mubr.bf16.gmra.mxu0 %v6261
    %v6299 = vpop.f32.mrf.mxu0
    %v6300 = vadd.f32 0.0, %v6299
    %v6301 = vpop.f32.mrf.mxu0
    %v6302 = vpop.f32.mrf.mxu0
    %v6303 = vadd.f32 0.0, %v6302
    %v6304 = vpop.f32.mrf.mxu0
    %6305 = vmatprep.mubr.bf16.mxu0 0
    %6306 = vmatmul.mubr.bf16.gmra.mxu0 %v6262
    %v6307 = vpop.f32.mrf.mxu0
    %v6308 = vadd.f32 0.0, %v6307
    %v6309 = vpop.f32.mrf.mxu0
    %v6310 = vpop.f32.mrf.mxu0
    %v6311 = vadd.f32 0.0, %v6310
    %v6312 = vpop.f32.mrf.mxu0
    %6313 = vdwg.mxu0
    %v6318 = vunpack.c.l.b16 %v5803
    %v6319 = vunpack.c.l.b16 %v5804
    %v6320 = vunpack.c.l.b16 %v5805
    %v6321 = vunpack.c.l.b16 %v5806
    %v6322 = vpack.c.b16 %v6319, %v6318
    %v6323 = vpack.c.b16 %v6321, %v6320
    %6326 = vmatprep.subr.bf16.mxu0 0
    %6327 = vmatpush1.bf16.msra.mxu0 %v5742
    %6328 = vmatprep.subr.bf16.mxu0 0
    %6329 = vmatpush1.bf16.msra.mxu0 %v5741
    %6330 = vmatprep.subr.bf16.mxu0 0
    %6331 = vmatpush1.bf16.msra.mxu0 %v5740
    %6332 = vmatprep.subr.bf16.mxu0 0
    %6333 = vmatpush1.bf16.msra.mxu0 %v5739
    %6334 = vmatprep.subr.bf16.mxu0 0
    %6335 = vmatpush1.bf16.msra.mxu0 %v5738
    %6336 = vmatprep.subr.bf16.mxu0 0
    %6337 = vmatpush1.bf16.msra.mxu0 %v5737
    %6338 = vmatprep.subr.bf16.mxu0 0
    %6339 = vmatpush1.bf16.msra.mxu0 %v5736
    %6340 = vmatprep.subr.bf16.mxu0 0
    %6341 = vmatpush1.bf16.msra.mxu0 %v5735
    %6342 = vmatprep.subr.bf16.mxu0 0
    %6343 = vmatpush2.bf16.msra.mxu0 0
    %6344 = vmatprep.subr.bf16.mxu0 0
    %6345 = vmatpush2.bf16.msra.mxu0 0
    %6346 = vmatprep.subr.bf16.mxu0 0
    %6347 = vmatpush2.bf16.msra.mxu0 0
    %6348 = vmatprep.subr.bf16.mxu0 0
    %6349 = vmatpush2.bf16.msra.mxu0 0
    %6350 = vmatprep.subr.bf16.mxu0 0
    %6351 = vmatpush2.bf16.msra.mxu0 0
    %6352 = vmatprep.subr.bf16.mxu0 0
    %6353 = vmatpush2.bf16.msra.mxu0 0
    %6354 = vmatprep.subr.bf16.mxu0 0
    %6355 = vmatpush2.bf16.msra.mxu0 0
    %6356 = vmatprep.subr.bf16.mxu0 0
    %6357 = vmatpush2.bf16.msra.mxu0 0
    %6358 = vmatprep.mubr.bf16.mxu0 0
    %6359 = vmatmul.mubr.bf16.gmra.mxu0 %v6322
    %v6360 = vpop.f32.mrf.mxu0
    %v6361 = vadd.f32 0.0, %v6360
    %v6362 = vpop.f32.mrf.mxu0
    %v6363 = vpop.f32.mrf.mxu0
    %v6364 = vadd.f32 0.0, %v6363
    %v6365 = vpop.f32.mrf.mxu0
    %6366 = vmatprep.mubr.bf16.mxu0 0
    %6367 = vmatmul.mubr.bf16.gmra.mxu0 %v6323
    %v6368 = vpop.f32.mrf.mxu0
    %v6369 = vadd.f32 0.0, %v6368
    %v6370 = vpop.f32.mrf.mxu0
    %v6371 = vpop.f32.mrf.mxu0
    %v6372 = vadd.f32 0.0, %v6371
    %v6373 = vpop.f32.mrf.mxu0
    %6374 = vdwg.mxu0
    %v6379 = vunpack.c.l.b16 %v5743
    %v6380 = vunpack.c.l.b16 %v5744
    %v6381 = vunpack.c.l.b16 %v5745
    %v6382 = vunpack.c.l.b16 %v5746
    %v6383 = vpack.c.b16 %v6380, %v6379
    %v6384 = vpack.c.b16 %v6382, %v6381
    %6387 = vmatprep.subr.bf16.mxu0 0
    %6388 = vmatpush1.bf16.msra.mxu0 %v5622
    %6389 = vmatprep.subr.bf16.mxu0 0
    %6390 = vmatpush1.bf16.msra.mxu0 %v5621
    %6391 = vmatprep.subr.bf16.mxu0 0
    %6392 = vmatpush1.bf16.msra.mxu0 %v5620
    %6393 = vmatprep.subr.bf16.mxu0 0
    %6394 = vmatpush1.bf16.msra.mxu0 %v5619
    %6395 = vmatprep.subr.bf16.mxu0 0
    %6396 = vmatpush1.bf16.msra.mxu0 %v5618
    %6397 = vmatprep.subr.bf16.mxu0 0
    %6398 = vmatpush1.bf16.msra.mxu0 %v5617
    %6399 = vmatprep.subr.bf16.mxu0 0
    %6400 = vmatpush1.bf16.msra.mxu0 %v5616
    %6401 = vmatprep.subr.bf16.mxu0 0
    %6402 = vmatpush1.bf16.msra.mxu0 %v5615
    %6403 = vmatprep.subr.bf16.mxu0 0
    %6404 = vmatpush2.bf16.msra.mxu0 0
    %6405 = vmatprep.subr.bf16.mxu0 0
    %6406 = vmatpush2.bf16.msra.mxu0 0
    %6407 = vmatprep.subr.bf16.mxu0 0
    %6408 = vmatpush2.bf16.msra.mxu0 0
    %6409 = vmatprep.subr.bf16.mxu0 0
    %6410 = vmatpush2.bf16.msra.mxu0 0
    %6411 = vmatprep.subr.bf16.mxu0 0
    %6412 = vmatpush2.bf16.msra.mxu0 0
    %6413 = vmatprep.subr.bf16.mxu0 0
    %6414 = vmatpush2.bf16.msra.mxu0 0
    %6415 = vmatprep.subr.bf16.mxu0 0
    %6416 = vmatpush2.bf16.msra.mxu0 0
    %6417 = vmatprep.subr.bf16.mxu0 0
    %6418 = vmatpush2.bf16.msra.mxu0 0
    %6419 = vmatprep.mubr.bf16.mxu0 0
    %6420 = vmatmul.mubr.bf16.gmra.mxu0 %v6383
    %v6421 = vpop.f32.mrf.mxu0
    %v6422 = vadd.f32 %v5934, %v6421
    %v6423 = vpop.f32.mrf.mxu0
    %v6424 = vpop.f32.mrf.mxu0
    %v6425 = vadd.f32 %v5937, %v6424
    %v6426 = vpop.f32.mrf.mxu0
    %6427 = vmatprep.mubr.bf16.mxu0 0
    %6428 = vmatmul.mubr.bf16.gmra.mxu0 %v6384
    %v6429 = vpop.f32.mrf.mxu0
    %v6430 = vadd.f32 %v5942, %v6429
    %v6431 = vpop.f32.mrf.mxu0
    %v6432 = vpop.f32.mrf.mxu0
    %v6433 = vadd.f32 %v5945, %v6432
    %v6434 = vpop.f32.mrf.mxu0
    %6435 = vdwg.mxu0
    %v6440 = vunpack.c.l.b16 %v5747
    %v6441 = vunpack.c.l.b16 %v5748
    %v6442 = vunpack.c.l.b16 %v5749
    %v6443 = vunpack.c.l.b16 %v5750
    %v6444 = vpack.c.b16 %v6441, %v6440
    %v6445 = vpack.c.b16 %v6443, %v6442
    %6448 = vmatprep.subr.bf16.mxu0 0
    %6449 = vmatpush1.bf16.msra.mxu0 %v5630
    %6450 = vmatprep.subr.bf16.mxu0 0
    %6451 = vmatpush1.bf16.msra.mxu0 %v5629
    %6452 = vmatprep.subr.bf16.mxu0 0
    %6453 = vmatpush1.bf16.msra.mxu0 %v5628
    %6454 = vmatprep.subr.bf16.mxu0 0
    %6455 = vmatpush1.bf16.msra.mxu0 %v5627
    %6456 = vmatprep.subr.bf16.mxu0 0
    %6457 = vmatpush1.bf16.msra.mxu0 %v5626
    %6458 = vmatprep.subr.bf16.mxu0 0
    %6459 = vmatpush1.bf16.msra.mxu0 %v5625
    %6460 = vmatprep.subr.bf16.mxu0 0
    %6461 = vmatpush1.bf16.msra.mxu0 %v5624
    %6462 = vmatprep.subr.bf16.mxu0 0
    %6463 = vmatpush1.bf16.msra.mxu0 %v5623
    %6464 = vmatprep.subr.bf16.mxu0 0
    %6465 = vmatpush2.bf16.msra.mxu0 0
    %6466 = vmatprep.subr.bf16.mxu0 0
    %6467 = vmatpush2.bf16.msra.mxu0 0
    %6468 = vmatprep.subr.bf16.mxu0 0
    %6469 = vmatpush2.bf16.msra.mxu0 0
    %6470 = vmatprep.subr.bf16.mxu0 0
    %6471 = vmatpush2.bf16.msra.mxu0 0
    %6472 = vmatprep.subr.bf16.mxu0 0
    %6473 = vmatpush2.bf16.msra.mxu0 0
    %6474 = vmatprep.subr.bf16.mxu0 0
    %6475 = vmatpush2.bf16.msra.mxu0 0
    %6476 = vmatprep.subr.bf16.mxu0 0
    %6477 = vmatpush2.bf16.msra.mxu0 0
    %6478 = vmatprep.subr.bf16.mxu0 0
    %6479 = vmatpush2.bf16.msra.mxu0 0
    %6480 = vmatprep.mubr.bf16.mxu0 0
    %6481 = vmatmul.mubr.bf16.gmra.mxu0 %v6444
    %v6482 = vpop.f32.mrf.mxu0
    %v6483 = vadd.f32 %v5995, %v6482
    %v6484 = vpop.f32.mrf.mxu0
    %v6485 = vpop.f32.mrf.mxu0
    %v6486 = vadd.f32 %v5998, %v6485
    %v6487 = vpop.f32.mrf.mxu0
    %6488 = vmatprep.mubr.bf16.mxu0 0
    %6489 = vmatmul.mubr.bf16.gmra.mxu0 %v6445
    %v6490 = vpop.f32.mrf.mxu0
    %v6491 = vadd.f32 %v6003, %v6490
    %v6492 = vpop.f32.mrf.mxu0
    %v6493 = vpop.f32.mrf.mxu0
    %v6494 = vadd.f32 %v6006, %v6493
    %v6495 = vpop.f32.mrf.mxu0
    %6496 = vdwg.mxu0
    %v6501 = vunpack.c.l.b16 %v5751
    %v6502 = vunpack.c.l.b16 %v5752
    %v6503 = vunpack.c.l.b16 %v5753
    %v6504 = vunpack.c.l.b16 %v5754
    %v6505 = vpack.c.b16 %v6502, %v6501
    %v6506 = vpack.c.b16 %v6504, %v6503
    %6509 = vmatprep.subr.bf16.mxu0 0
    %6510 = vmatpush1.bf16.msra.mxu0 %v5638
    %6511 = vmatprep.subr.bf16.mxu0 0
    %6512 = vmatpush1.bf16.msra.mxu0 %v5637
    %6513 = vmatprep.subr.bf16.mxu0 0
    %6514 = vmatpush1.bf16.msra.mxu0 %v5636
    %6515 = vmatprep.subr.bf16.mxu0 0
    %6516 = vmatpush1.bf16.msra.mxu0 %v5635
    %6517 = vmatprep.subr.bf16.mxu0 0
    %6518 = vmatpush1.bf16.msra.mxu0 %v5634
    %6519 = vmatprep.subr.bf16.mxu0 0
    %6520 = vmatpush1.bf16.msra.mxu0 %v5633
    %6521 = vmatprep.subr.bf16.mxu0 0
    %6522 = vmatpush1.bf16.msra.mxu0 %v5632
    %6523 = vmatprep.subr.bf16.mxu0 0
    %6524 = vmatpush1.bf16.msra.mxu0 %v5631
    %6525 = vmatprep.subr.bf16.mxu0 0
    %6526 = vmatpush2.bf16.msra.mxu0 0
    %6527 = vmatprep.subr.bf16.mxu0 0
    %6528 = vmatpush2.bf16.msra.mxu0 0
    %6529 = vmatprep.subr.bf16.mxu0 0
    %6530 = vmatpush2.bf16.msra.mxu0 0
    %6531 = vmatprep.subr.bf16.mxu0 0
    %6532 = vmatpush2.bf16.msra.mxu0 0
    %6533 = vmatprep.subr.bf16.mxu0 0
    %6534 = vmatpush2.bf16.msra.mxu0 0
    %6535 = vmatprep.subr.bf16.mxu0 0
    %6536 = vmatpush2.bf16.msra.mxu0 0
    %6537 = vmatprep.subr.bf16.mxu0 0
    %6538 = vmatpush2.bf16.msra.mxu0 0
    %6539 = vmatprep.subr.bf16.mxu0 0
    %6540 = vmatpush2.bf16.msra.mxu0 0
    %6541 = vmatprep.mubr.bf16.mxu0 0
    %6542 = vmatmul.mubr.bf16.gmra.mxu0 %v6505
    %v6543 = vpop.f32.mrf.mxu0
    %v6544 = vadd.f32 %v6056, %v6543
    %v6545 = vpop.f32.mrf.mxu0
    %v6546 = vpop.f32.mrf.mxu0
    %v6547 = vadd.f32 %v6059, %v6546
    %v6548 = vpop.f32.mrf.mxu0
    %6549 = vmatprep.mubr.bf16.mxu0 0
    %6550 = vmatmul.mubr.bf16.gmra.mxu0 %v6506
    %v6551 = vpop.f32.mrf.mxu0
    %v6552 = vadd.f32 %v6064, %v6551
    %v6553 = vpop.f32.mrf.mxu0
    %v6554 = vpop.f32.mrf.mxu0
    %v6555 = vadd.f32 %v6067, %v6554
    %v6556 = vpop.f32.mrf.mxu0
    %6557 = vdwg.mxu0
    %v6562 = vunpack.c.l.b16 %v5755
    %v6563 = vunpack.c.l.b16 %v5756
    %v6564 = vunpack.c.l.b16 %v5757
    %v6565 = vunpack.c.l.b16 %v5758
    %v6566 = vpack.c.b16 %v6563, %v6562
    %v6567 = vpack.c.b16 %v6565, %v6564
    %6570 = vmatprep.subr.bf16.mxu0 0
    %6571 = vmatpush1.bf16.msra.mxu0 %v5646
    %6572 = vmatprep.subr.bf16.mxu0 0
    %6573 = vmatpush1.bf16.msra.mxu0 %v5645
    %6574 = vmatprep.subr.bf16.mxu0 0
    %6575 = vmatpush1.bf16.msra.mxu0 %v5644
    %6576 = vmatprep.subr.bf16.mxu0 0
    %6577 = vmatpush1.bf16.msra.mxu0 %v5643
    %6578 = vmatprep.subr.bf16.mxu0 0
    %6579 = vmatpush1.bf16.msra.mxu0 %v5642
    %6580 = vmatprep.subr.bf16.mxu0 0
    %6581 = vmatpush1.bf16.msra.mxu0 %v5641
    %6582 = vmatprep.subr.bf16.mxu0 0
    %6583 = vmatpush1.bf16.msra.mxu0 %v5640
    %6584 = vmatprep.subr.bf16.mxu0 0
    %6585 = vmatpush1.bf16.msra.mxu0 %v5639
    %6586 = vmatprep.subr.bf16.mxu0 0
    %6587 = vmatpush2.bf16.msra.mxu0 0
    %6588 = vmatprep.subr.bf16.mxu0 0
    %6589 = vmatpush2.bf16.msra.mxu0 0
    %6590 = vmatprep.subr.bf16.mxu0 0
    %6591 = vmatpush2.bf16.msra.mxu0 0
    %6592 = vmatprep.subr.bf16.mxu0 0
    %6593 = vmatpush2.bf16.msra.mxu0 0
    %6594 = vmatprep.subr.bf16.mxu0 0
    %6595 = vmatpush2.bf16.msra.mxu0 0
    %6596 = vmatprep.subr.bf16.mxu0 0
    %6597 = vmatpush2.bf16.msra.mxu0 0
    %6598 = vmatprep.subr.bf16.mxu0 0
    %6599 = vmatpush2.bf16.msra.mxu0 0
    %6600 = vmatprep.subr.bf16.mxu0 0
    %6601 = vmatpush2.bf16.msra.mxu0 0
    %6602 = vmatprep.mubr.bf16.mxu0 0
    %6603 = vmatmul.mubr.bf16.gmra.mxu0 %v6566
    %v6604 = vpop.f32.mrf.mxu0
    %v6605 = vadd.f32 %v6117, %v6604
    %v6606 = vpop.f32.mrf.mxu0
    %v6607 = vpop.f32.mrf.mxu0
    %v6608 = vadd.f32 %v6120, %v6607
    %v6609 = vpop.f32.mrf.mxu0
    %6610 = vmatprep.mubr.bf16.mxu0 0
    %6611 = vmatmul.mubr.bf16.gmra.mxu0 %v6567
    %v6612 = vpop.f32.mrf.mxu0
    %v6613 = vadd.f32 %v6125, %v6612
    %v6614 = vpop.f32.mrf.mxu0
    %v6615 = vpop.f32.mrf.mxu0
    %v6616 = vadd.f32 %v6128, %v6615
    %v6617 = vpop.f32.mrf.mxu0
    %6618 = vdwg.mxu0
    %v6623 = vunpack.c.l.b16 %v5759
    %v6624 = vunpack.c.l.b16 %v5760
    %v6625 = vunpack.c.l.b16 %v5761
    %v6626 = vunpack.c.l.b16 %v5762
    %v6627 = vpack.c.b16 %v6624, %v6623
    %v6628 = vpack.c.b16 %v6626, %v6625
    %6631 = vmatprep.subr.bf16.mxu0 0
    %6632 = vmatpush1.bf16.msra.mxu0 %v5654
    %6633 = vmatprep.subr.bf16.mxu0 0
    %6634 = vmatpush1.bf16.msra.mxu0 %v5653
    %6635 = vmatprep.subr.bf16.mxu0 0
    %6636 = vmatpush1.bf16.msra.mxu0 %v5652
    %6637 = vmatprep.subr.bf16.mxu0 0
    %6638 = vmatpush1.bf16.msra.mxu0 %v5651
    %6639 = vmatprep.subr.bf16.mxu0 0
    %6640 = vmatpush1.bf16.msra.mxu0 %v5650
    %6641 = vmatprep.subr.bf16.mxu0 0
    %6642 = vmatpush1.bf16.msra.mxu0 %v5649
    %6643 = vmatprep.subr.bf16.mxu0 0
    %6644 = vmatpush1.bf16.msra.mxu0 %v5648
    %6645 = vmatprep.subr.bf16.mxu0 0
    %6646 = vmatpush1.bf16.msra.mxu0 %v5647
    %6647 = vmatprep.subr.bf16.mxu0 0
    %6648 = vmatpush2.bf16.msra.mxu0 0
    %6649 = vmatprep.subr.bf16.mxu0 0
    %6650 = vmatpush2.bf16.msra.mxu0 0
    %6651 = vmatprep.subr.bf16.mxu0 0
    %6652 = vmatpush2.bf16.msra.mxu0 0
    %6653 = vmatprep.subr.bf16.mxu0 0
    %6654 = vmatpush2.bf16.msra.mxu0 0
    %6655 = vmatprep.subr.bf16.mxu0 0
    %6656 = vmatpush2.bf16.msra.mxu0 0
    %6657 = vmatprep.subr.bf16.mxu0 0
    %6658 = vmatpush2.bf16.msra.mxu0 0
    %6659 = vmatprep.subr.bf16.mxu0 0
    %6660 = vmatpush2.bf16.msra.mxu0 0
    %6661 = vmatprep.subr.bf16.mxu0 0
    %6662 = vmatpush2.bf16.msra.mxu0 0
    %6663 = vmatprep.mubr.bf16.mxu0 0
    %6664 = vmatmul.mubr.bf16.gmra.mxu0 %v6627
    %v6665 = vpop.f32.mrf.mxu0
    %v6666 = vadd.f32 %v6178, %v6665
    %v6667 = vpop.f32.mrf.mxu0
    %v6668 = vpop.f32.mrf.mxu0
    %v6669 = vadd.f32 %v6181, %v6668
    %v6670 = vpop.f32.mrf.mxu0
    %6671 = vmatprep.mubr.bf16.mxu0 0
    %6672 = vmatmul.mubr.bf16.gmra.mxu0 %v6628
    %v6673 = vpop.f32.mrf.mxu0
    %v6674 = vadd.f32 %v6186, %v6673
    %v6675 = vpop.f32.mrf.mxu0
    %v6676 = vpop.f32.mrf.mxu0
    %v6677 = vadd.f32 %v6189, %v6676
    %v6678 = vpop.f32.mrf.mxu0
    %6679 = vdwg.mxu0
    %v6684 = vunpack.c.l.b16 %v5763
    %v6685 = vunpack.c.l.b16 %v5764
    %v6686 = vunpack.c.l.b16 %v5765
    %v6687 = vunpack.c.l.b16 %v5766
    %v6688 = vpack.c.b16 %v6685, %v6684
    %v6689 = vpack.c.b16 %v6687, %v6686
    %6692 = vmatprep.subr.bf16.mxu0 0
    %6693 = vmatpush1.bf16.msra.mxu0 %v5662
    %6694 = vmatprep.subr.bf16.mxu0 0
    %6695 = vmatpush1.bf16.msra.mxu0 %v5661
    %6696 = vmatprep.subr.bf16.mxu0 0
    %6697 = vmatpush1.bf16.msra.mxu0 %v5660
    %6698 = vmatprep.subr.bf16.mxu0 0
    %6699 = vmatpush1.bf16.msra.mxu0 %v5659
    %6700 = vmatprep.subr.bf16.mxu0 0
    %6701 = vmatpush1.bf16.msra.mxu0 %v5658
    %6702 = vmatprep.subr.bf16.mxu0 0
    %6703 = vmatpush1.bf16.msra.mxu0 %v5657
    %6704 = vmatprep.subr.bf16.mxu0 0
    %6705 = vmatpush1.bf16.msra.mxu0 %v5656
    %6706 = vmatprep.subr.bf16.mxu0 0
    %6707 = vmatpush1.bf16.msra.mxu0 %v5655
    %6708 = vmatprep.subr.bf16.mxu0 0
    %6709 = vmatpush2.bf16.msra.mxu0 0
    %6710 = vmatprep.subr.bf16.mxu0 0
    %6711 = vmatpush2.bf16.msra.mxu0 0
    %6712 = vmatprep.subr.bf16.mxu0 0
    %6713 = vmatpush2.bf16.msra.mxu0 0
    %6714 = vmatprep.subr.bf16.mxu0 0
    %6715 = vmatpush2.bf16.msra.mxu0 0
    %6716 = vmatprep.subr.bf16.mxu0 0
    %6717 = vmatpush2.bf16.msra.mxu0 0
    %6718 = vmatprep.subr.bf16.mxu0 0
    %6719 = vmatpush2.bf16.msra.mxu0 0
    %6720 = vmatprep.subr.bf16.mxu0 0
    %6721 = vmatpush2.bf16.msra.mxu0 0
    %6722 = vmatprep.subr.bf16.mxu0 0
    %6723 = vmatpush2.bf16.msra.mxu0 0
    %6724 = vmatprep.mubr.bf16.mxu0 0
    %6725 = vmatmul.mubr.bf16.gmra.mxu0 %v6688
    %v6726 = vpop.f32.mrf.mxu0
    %v6727 = vadd.f32 %v6239, %v6726
    %v6728 = vpop.f32.mrf.mxu0
    %v6729 = vpop.f32.mrf.mxu0
    %v6730 = vadd.f32 %v6242, %v6729
    %v6731 = vpop.f32.mrf.mxu0
    %6732 = vmatprep.mubr.bf16.mxu0 0
    %6733 = vmatmul.mubr.bf16.gmra.mxu0 %v6689
    %v6734 = vpop.f32.mrf.mxu0
    %v6735 = vadd.f32 %v6247, %v6734
    %v6736 = vpop.f32.mrf.mxu0
    %v6737 = vpop.f32.mrf.mxu0
    %v6738 = vadd.f32 %v6250, %v6737
    %v6739 = vpop.f32.mrf.mxu0
    %6740 = vdwg.mxu0
    %v6745 = vunpack.c.l.b16 %v5767
    %v6746 = vunpack.c.l.b16 %v5768
    %v6747 = vunpack.c.l.b16 %v5769
    %v6748 = vunpack.c.l.b16 %v5770
    %v6749 = vpack.c.b16 %v6746, %v6745
    %v6750 = vpack.c.b16 %v6748, %v6747
    %6753 = vmatprep.subr.bf16.mxu0 0
    %6754 = vmatpush1.bf16.msra.mxu0 %v5670
    %6755 = vmatprep.subr.bf16.mxu0 0
    %6756 = vmatpush1.bf16.msra.mxu0 %v5669
    %6757 = vmatprep.subr.bf16.mxu0 0
    %6758 = vmatpush1.bf16.msra.mxu0 %v5668
    %6759 = vmatprep.subr.bf16.mxu0 0
    %6760 = vmatpush1.bf16.msra.mxu0 %v5667
    %6761 = vmatprep.subr.bf16.mxu0 0
    %6762 = vmatpush1.bf16.msra.mxu0 %v5666
    %6763 = vmatprep.subr.bf16.mxu0 0
    %6764 = vmatpush1.bf16.msra.mxu0 %v5665
    %6765 = vmatprep.subr.bf16.mxu0 0
    %6766 = vmatpush1.bf16.msra.mxu0 %v5664
    %6767 = vmatprep.subr.bf16.mxu0 0
    %6768 = vmatpush1.bf16.msra.mxu0 %v5663
    %6769 = vmatprep.subr.bf16.mxu0 0
    %6770 = vmatpush2.bf16.msra.mxu0 0
    %6771 = vmatprep.subr.bf16.mxu0 0
    %6772 = vmatpush2.bf16.msra.mxu0 0
    %6773 = vmatprep.subr.bf16.mxu0 0
    %6774 = vmatpush2.bf16.msra.mxu0 0
    %6775 = vmatprep.subr.bf16.mxu0 0
    %6776 = vmatpush2.bf16.msra.mxu0 0
    %6777 = vmatprep.subr.bf16.mxu0 0
    %6778 = vmatpush2.bf16.msra.mxu0 0
    %6779 = vmatprep.subr.bf16.mxu0 0
    %6780 = vmatpush2.bf16.msra.mxu0 0
    %6781 = vmatprep.subr.bf16.mxu0 0
    %6782 = vmatpush2.bf16.msra.mxu0 0
    %6783 = vmatprep.subr.bf16.mxu0 0
    %6784 = vmatpush2.bf16.msra.mxu0 0
    %6785 = vmatprep.mubr.bf16.mxu0 0
    %6786 = vmatmul.mubr.bf16.gmra.mxu0 %v6749
    %v6787 = vpop.f32.mrf.mxu0
    %v6788 = vadd.f32 %v6300, %v6787
    %v6789 = vpop.f32.mrf.mxu0
    %v6790 = vpop.f32.mrf.mxu0
    %v6791 = vadd.f32 %v6303, %v6790
    %v6792 = vpop.f32.mrf.mxu0
    %6793 = vmatprep.mubr.bf16.mxu0 0
    %6794 = vmatmul.mubr.bf16.gmra.mxu0 %v6750
    %v6795 = vpop.f32.mrf.mxu0
    %v6796 = vadd.f32 %v6308, %v6795
    %v6797 = vpop.f32.mrf.mxu0
    %v6798 = vpop.f32.mrf.mxu0
    %v6799 = vadd.f32 %v6311, %v6798
    %v6800 = vpop.f32.mrf.mxu0
    %6801 = vdwg.mxu0
    %v6806 = vunpack.c.l.b16 %v5771
    %v6807 = vunpack.c.l.b16 %v5772
    %v6808 = vunpack.c.l.b16 %v5773
    %v6809 = vunpack.c.l.b16 %v5774
    %v6810 = vpack.c.b16 %v6807, %v6806
    %v6811 = vpack.c.b16 %v6809, %v6808
    %6814 = vmatprep.subr.bf16.mxu0 0
    %6815 = vmatpush1.bf16.msra.mxu0 %v5678
    %6816 = vmatprep.subr.bf16.mxu0 0
    %6817 = vmatpush1.bf16.msra.mxu0 %v5677
    %6818 = vmatprep.subr.bf16.mxu0 0
    %6819 = vmatpush1.bf16.msra.mxu0 %v5676
    %6820 = vmatprep.subr.bf16.mxu0 0
    %6821 = vmatpush1.bf16.msra.mxu0 %v5675
    %6822 = vmatprep.subr.bf16.mxu0 0
    %6823 = vmatpush1.bf16.msra.mxu0 %v5674
    %6824 = vmatprep.subr.bf16.mxu0 0
    %6825 = vmatpush1.bf16.msra.mxu0 %v5673
    %6826 = vmatprep.subr.bf16.mxu0 0
    %6827 = vmatpush1.bf16.msra.mxu0 %v5672
    %6828 = vmatprep.subr.bf16.mxu0 0
    %6829 = vmatpush1.bf16.msra.mxu0 %v5671
    %6830 = vmatprep.subr.bf16.mxu0 0
    %6831 = vmatpush2.bf16.msra.mxu0 0
    %6832 = vmatprep.subr.bf16.mxu0 0
    %6833 = vmatpush2.bf16.msra.mxu0 0
    %6834 = vmatprep.subr.bf16.mxu0 0
    %6835 = vmatpush2.bf16.msra.mxu0 0
    %6836 = vmatprep.subr.bf16.mxu0 0
    %6837 = vmatpush2.bf16.msra.mxu0 0
    %6838 = vmatprep.subr.bf16.mxu0 0
    %6839 = vmatpush2.bf16.msra.mxu0 0
    %6840 = vmatprep.subr.bf16.mxu0 0
    %6841 = vmatpush2.bf16.msra.mxu0 0
    %6842 = vmatprep.subr.bf16.mxu0 0
    %6843 = vmatpush2.bf16.msra.mxu0 0
    %6844 = vmatprep.subr.bf16.mxu0 0
    %6845 = vmatpush2.bf16.msra.mxu0 0
    %6846 = vmatprep.mubr.bf16.mxu0 0
    %6847 = vmatmul.mubr.bf16.gmra.mxu0 %v6810
    %v6848 = vpop.f32.mrf.mxu0
    %v6849 = vadd.f32 %v6361, %v6848
    %v6850 = vpop.f32.mrf.mxu0
    %v6851 = vpop.f32.mrf.mxu0
    %v6852 = vadd.f32 %v6364, %v6851
    %v6853 = vpop.f32.mrf.mxu0
    %6854 = vmatprep.mubr.bf16.mxu0 0
    %6855 = vmatmul.mubr.bf16.gmra.mxu0 %v6811
    %v6856 = vpop.f32.mrf.mxu0
    %v6857 = vadd.f32 %v6369, %v6856
    %v6858 = vpop.f32.mrf.mxu0
    %v6859 = vpop.f32.mrf.mxu0
    %v6860 = vadd.f32 %v6372, %v6859
    %v6861 = vpop.f32.mrf.mxu0
    %6862 = vdwg.mxu0
    %v6863 = vpack.c.bf16 %v30, %v30
    %v6864 = vpack.c.bf16 %v31, %v31
    %v6865 = vpack.c.bf16 %v32, %v32
    %v6866 = vpack.c.bf16 %v33, %v33
    %v6867 = vpack.c.bf16 %v34, %v34
    %v6868 = vpack.c.bf16 %v35, %v35
    %v6869 = vpack.c.bf16 %v36, %v36
    %v6870 = vpack.c.bf16 %v37, %v37
    %v6875 = vunpack.c.l.b16 %v5807
    %v6876 = vunpack.c.l.b16 %v5808
    %v6877 = vunpack.c.l.b16 %v5809
    %v6878 = vunpack.c.l.b16 %v5810
    %v6879 = vpack.c.b16 %v6876, %v6875
    %v6880 = vpack.c.b16 %v6878, %v6877
    %6881 = vrot.lane.b32.xlu0 %v6879, 96
    %v6882 = vpop.permute.xlu0 %6881
    %6883 = vrot.lane.b32.xlu0 %v6880, 96
    %v6884 = vpop.permute.xlu0 %6883
    %v6886 = vrot.slane %v6863, 1
    %vm6887 = vcmask 39936
    %v6889 = vsel %vm6887, %v6882, 0
    %v6892 = vsel %vm6887, %v6884, 0
    %vm6894 = vcmask 1041408
    %vm6895 = vcmask 1042432
    %v6896 = vsel %vm6894, 4294967295, 65535
    %v6897 = vsel %vm6895, %v6896, 0
    %v6899 = vand.u32 %v6886, %v6897
    %6901 = vmatprep.subr.bf16.mxu0 0
    %6902 = vmatpush1.bf16.msra.mxu0 0
    %6903 = vmatprep.subr.bf16.mxu0 0
    %6904 = vmatpush1.bf16.msra.mxu0 0
    %6905 = vmatprep.subr.bf16.mxu0 0
    %6906 = vmatpush1.bf16.msra.mxu0 0
    %6907 = vmatprep.subr.bf16.mxu0 0
    %6908 = vmatpush1.bf16.msra.mxu0 0
    %6909 = vmatprep.subr.bf16.mxu0 0
    %6910 = vmatpush1.bf16.msra.mxu0 0
    %6911 = vmatprep.subr.bf16.mxu0 0
    %6912 = vmatpush1.bf16.msra.mxu0 0
    %6913 = vmatprep.subr.bf16.mxu0 0
    %6914 = vmatpush1.bf16.msra.mxu0 0
    %6915 = vmatprep.subr.bf16.mxu0 0
    %6916 = vmatpush1.bf16.msra.mxu0 %v6899
    %6917 = vmatprep.subr.bf16.mxu0 0
    %6918 = vmatpush2.bf16.msra.mxu0 0
    %6919 = vmatprep.subr.bf16.mxu0 0
    %6920 = vmatpush2.bf16.msra.mxu0 0
    %6921 = vmatprep.subr.bf16.mxu0 0
    %6922 = vmatpush2.bf16.msra.mxu0 0
    %6923 = vmatprep.subr.bf16.mxu0 0
    %6924 = vmatpush2.bf16.msra.mxu0 0
    %6925 = vmatprep.subr.bf16.mxu0 0
    %6926 = vmatpush2.bf16.msra.mxu0 0
    %6927 = vmatprep.subr.bf16.mxu0 0
    %6928 = vmatpush2.bf16.msra.mxu0 0
    %6929 = vmatprep.subr.bf16.mxu0 0
    %6930 = vmatpush2.bf16.msra.mxu0 0
    %6931 = vmatprep.subr.bf16.mxu0 0
    %6932 = vmatpush2.bf16.msra.mxu0 0
    %6933 = vmatprep.mubr.bf16.mxu0 0
    %6934 = vmatmul.mubr.bf16.gmra.mxu0 %v6889
    %v6935 = vpop.f32.mrf.mxu0
    %v6936 = vadd.f32 0.0, %v6935
    %v6937 = vpop.f32.mrf.mxu0
    %v6938 = vpop.f32.mrf.mxu0
    %v6939 = vadd.f32 0.0, %v6938
    %v6940 = vpop.f32.mrf.mxu0
    %6941 = vmatprep.mubr.bf16.mxu0 0
    %6942 = vmatmul.mubr.bf16.gmra.mxu0 %v6892
    %v6943 = vpop.f32.mrf.mxu0
    %v6944 = vadd.f32 0.0, %v6943
    %v6945 = vpop.f32.mrf.mxu0
    %v6946 = vpop.f32.mrf.mxu0
    %v6947 = vadd.f32 0.0, %v6946
    %v6948 = vpop.f32.mrf.mxu0
    %6949 = vdwg.mxu0
    %v6954 = vunpack.c.l.b16 %v5811
    %v6955 = vunpack.c.l.b16 %v5812
    %v6956 = vunpack.c.l.b16 %v5813
    %v6957 = vunpack.c.l.b16 %v5814
    %v6958 = vpack.c.b16 %v6955, %v6954
    %v6959 = vpack.c.b16 %v6957, %v6956
    %6960 = vrot.lane.b32.xlu0 %v6958, 96
    %v6961 = vpop.permute.xlu0 %6960
    %6962 = vrot.lane.b32.xlu0 %v6959, 96
    %v6963 = vpop.permute.xlu0 %6962
    %v6965 = vrot.slane %v6864, 1
    %v6967 = vsel %vm6887, %v6961, 0
    %v6970 = vsel %vm6887, %v6963, 0
    %v6973 = vand.u32 %v6965, %v6897
    %6975 = vmatprep.subr.bf16.mxu0 0
    %6976 = vmatpush1.bf16.msra.mxu0 0
    %6977 = vmatprep.subr.bf16.mxu0 0
    %6978 = vmatpush1.bf16.msra.mxu0 0
    %6979 = vmatprep.subr.bf16.mxu0 0
    %6980 = vmatpush1.bf16.msra.mxu0 0
    %6981 = vmatprep.subr.bf16.mxu0 0
    %6982 = vmatpush1.bf16.msra.mxu0 0
    %6983 = vmatprep.subr.bf16.mxu0 0
    %6984 = vmatpush1.bf16.msra.mxu0 0
    %6985 = vmatprep.subr.bf16.mxu0 0
    %6986 = vmatpush1.bf16.msra.mxu0 0
    %6987 = vmatprep.subr.bf16.mxu0 0
    %6988 = vmatpush1.bf16.msra.mxu0 0
    %6989 = vmatprep.subr.bf16.mxu0 0
    %6990 = vmatpush1.bf16.msra.mxu0 %v6973
    %6991 = vmatprep.subr.bf16.mxu0 0
    %6992 = vmatpush2.bf16.msra.mxu0 0
    %6993 = vmatprep.subr.bf16.mxu0 0
    %6994 = vmatpush2.bf16.msra.mxu0 0
    %6995 = vmatprep.subr.bf16.mxu0 0
    %6996 = vmatpush2.bf16.msra.mxu0 0
    %6997 = vmatprep.subr.bf16.mxu0 0
    %6998 = vmatpush2.bf16.msra.mxu0 0
    %6999 = vmatprep.subr.bf16.mxu0 0
    %7000 = vmatpush2.bf16.msra.mxu0 0
    %7001 = vmatprep.subr.bf16.mxu0 0
    %7002 = vmatpush2.bf16.msra.mxu0 0
    %7003 = vmatprep.subr.bf16.mxu0 0
    %7004 = vmatpush2.bf16.msra.mxu0 0
    %7005 = vmatprep.subr.bf16.mxu0 0
    %7006 = vmatpush2.bf16.msra.mxu0 0
    %7007 = vmatprep.mubr.bf16.mxu0 0
    %7008 = vmatmul.mubr.bf16.gmra.mxu0 %v6967
    %v7009 = vpop.f32.mrf.mxu0
    %v7010 = vadd.f32 0.0, %v7009
    %v7011 = vpop.f32.mrf.mxu0
    %v7012 = vpop.f32.mrf.mxu0
    %v7013 = vadd.f32 0.0, %v7012
    %v7014 = vpop.f32.mrf.mxu0
    %7015 = vmatprep.mubr.bf16.mxu0 0
    %7016 = vmatmul.mubr.bf16.gmra.mxu0 %v6970
    %v7017 = vpop.f32.mrf.mxu0
    %v7018 = vadd.f32 0.0, %v7017
    %v7019 = vpop.f32.mrf.mxu0
    %v7020 = vpop.f32.mrf.mxu0
    %v7021 = vadd.f32 0.0, %v7020
    %v7022 = vpop.f32.mrf.mxu0
    %7023 = vdwg.mxu0
    %v7028 = vunpack.c.l.b16 %v5815
    %v7029 = vunpack.c.l.b16 %v5816
    %v7030 = vunpack.c.l.b16 %v5817
    %v7031 = vunpack.c.l.b16 %v5818
    %v7032 = vpack.c.b16 %v7029, %v7028
    %v7033 = vpack.c.b16 %v7031, %v7030
    %7034 = vrot.lane.b32.xlu0 %v7032, 96
    %v7035 = vpop.permute.xlu0 %7034
    %7036 = vrot.lane.b32.xlu0 %v7033, 96
    %v7037 = vpop.permute.xlu0 %7036
    %v7039 = vrot.slane %v6865, 1
    %v7041 = vsel %vm6887, %v7035, 0
    %v7044 = vsel %vm6887, %v7037, 0
    %v7047 = vand.u32 %v7039, %v6897
    %7049 = vmatprep.subr.bf16.mxu0 0
    %7050 = vmatpush1.bf16.msra.mxu0 0
    %7051 = vmatprep.subr.bf16.mxu0 0
    %7052 = vmatpush1.bf16.msra.mxu0 0
    %7053 = vmatprep.subr.bf16.mxu0 0
    %7054 = vmatpush1.bf16.msra.mxu0 0
    %7055 = vmatprep.subr.bf16.mxu0 0
    %7056 = vmatpush1.bf16.msra.mxu0 0
    %7057 = vmatprep.subr.bf16.mxu0 0
    %7058 = vmatpush1.bf16.msra.mxu0 0
    %7059 = vmatprep.subr.bf16.mxu0 0
    %7060 = vmatpush1.bf16.msra.mxu0 0
    %7061 = vmatprep.subr.bf16.mxu0 0
    %7062 = vmatpush1.bf16.msra.mxu0 0
    %7063 = vmatprep.subr.bf16.mxu0 0
    %7064 = vmatpush1.bf16.msra.mxu0 %v7047
    %7065 = vmatprep.subr.bf16.mxu0 0
    %7066 = vmatpush2.bf16.msra.mxu0 0
    %7067 = vmatprep.subr.bf16.mxu0 0
    %7068 = vmatpush2.bf16.msra.mxu0 0
    %7069 = vmatprep.subr.bf16.mxu0 0
    %7070 = vmatpush2.bf16.msra.mxu0 0
    %7071 = vmatprep.subr.bf16.mxu0 0
    %7072 = vmatpush2.bf16.msra.mxu0 0
    %7073 = vmatprep.subr.bf16.mxu0 0
    %7074 = vmatpush2.bf16.msra.mxu0 0
    %7075 = vmatprep.subr.bf16.mxu0 0
    %7076 = vmatpush2.bf16.msra.mxu0 0
    %7077 = vmatprep.subr.bf16.mxu0 0
    %7078 = vmatpush2.bf16.msra.mxu0 0
    %7079 = vmatprep.subr.bf16.mxu0 0
    %7080 = vmatpush2.bf16.msra.mxu0 0
    %7081 = vmatprep.mubr.bf16.mxu0 0
    %7082 = vmatmul.mubr.bf16.gmra.mxu0 %v7041
    %v7083 = vpop.f32.mrf.mxu0
    %v7084 = vadd.f32 0.0, %v7083
    %v7085 = vpop.f32.mrf.mxu0
    %v7086 = vpop.f32.mrf.mxu0
    %v7087 = vadd.f32 0.0, %v7086
    %v7088 = vpop.f32.mrf.mxu0
    %7089 = vmatprep.mubr.bf16.mxu0 0
    %7090 = vmatmul.mubr.bf16.gmra.mxu0 %v7044
    %v7091 = vpop.f32.mrf.mxu0
    %v7092 = vadd.f32 0.0, %v7091
    %v7093 = vpop.f32.mrf.mxu0
    %v7094 = vpop.f32.mrf.mxu0
    %v7095 = vadd.f32 0.0, %v7094
    %v7096 = vpop.f32.mrf.mxu0
    %7097 = vdwg.mxu0
    %v7102 = vunpack.c.l.b16 %v5819
    %v7103 = vunpack.c.l.b16 %v5820
    %v7104 = vunpack.c.l.b16 %v5821
    %v7105 = vunpack.c.l.b16 %v5822
    %v7106 = vpack.c.b16 %v7103, %v7102
    %v7107 = vpack.c.b16 %v7105, %v7104
    %7108 = vrot.lane.b32.xlu0 %v7106, 96
    %v7109 = vpop.permute.xlu0 %7108
    %7110 = vrot.lane.b32.xlu0 %v7107, 96
    %v7111 = vpop.permute.xlu0 %7110
    %v7113 = vrot.slane %v6866, 1
    %v7115 = vsel %vm6887, %v7109, 0
    %v7118 = vsel %vm6887, %v7111, 0
    %v7121 = vand.u32 %v7113, %v6897
    %7123 = vmatprep.subr.bf16.mxu0 0
    %7124 = vmatpush1.bf16.msra.mxu0 0
    %7125 = vmatprep.subr.bf16.mxu0 0
    %7126 = vmatpush1.bf16.msra.mxu0 0
    %7127 = vmatprep.subr.bf16.mxu0 0
    %7128 = vmatpush1.bf16.msra.mxu0 0
    %7129 = vmatprep.subr.bf16.mxu0 0
    %7130 = vmatpush1.bf16.msra.mxu0 0
    %7131 = vmatprep.subr.bf16.mxu0 0
    %7132 = vmatpush1.bf16.msra.mxu0 0
    %7133 = vmatprep.subr.bf16.mxu0 0
    %7134 = vmatpush1.bf16.msra.mxu0 0
    %7135 = vmatprep.subr.bf16.mxu0 0
    %7136 = vmatpush1.bf16.msra.mxu0 0
    %7137 = vmatprep.subr.bf16.mxu0 0
    %7138 = vmatpush1.bf16.msra.mxu0 %v7121
    %7139 = vmatprep.subr.bf16.mxu0 0
    %7140 = vmatpush2.bf16.msra.mxu0 0
    %7141 = vmatprep.subr.bf16.mxu0 0
    %7142 = vmatpush2.bf16.msra.mxu0 0
    %7143 = vmatprep.subr.bf16.mxu0 0
    %7144 = vmatpush2.bf16.msra.mxu0 0
    %7145 = vmatprep.subr.bf16.mxu0 0
    %7146 = vmatpush2.bf16.msra.mxu0 0
    %7147 = vmatprep.subr.bf16.mxu0 0
    %7148 = vmatpush2.bf16.msra.mxu0 0
    %7149 = vmatprep.subr.bf16.mxu0 0
    %7150 = vmatpush2.bf16.msra.mxu0 0
    %7151 = vmatprep.subr.bf16.mxu0 0
    %7152 = vmatpush2.bf16.msra.mxu0 0
    %7153 = vmatprep.subr.bf16.mxu0 0
    %7154 = vmatpush2.bf16.msra.mxu0 0
    %7155 = vmatprep.mubr.bf16.mxu0 0
    %7156 = vmatmul.mubr.bf16.gmra.mxu0 %v7115
    %v7157 = vpop.f32.mrf.mxu0
    %v7158 = vadd.f32 0.0, %v7157
    %v7159 = vpop.f32.mrf.mxu0
    %v7160 = vpop.f32.mrf.mxu0
    %v7161 = vadd.f32 0.0, %v7160
    %v7162 = vpop.f32.mrf.mxu0
    %7163 = vmatprep.mubr.bf16.mxu0 0
    %7164 = vmatmul.mubr.bf16.gmra.mxu0 %v7118
    %v7165 = vpop.f32.mrf.mxu0
    %v7166 = vadd.f32 0.0, %v7165
    %v7167 = vpop.f32.mrf.mxu0
    %v7168 = vpop.f32.mrf.mxu0
    %v7169 = vadd.f32 0.0, %v7168
    %v7170 = vpop.f32.mrf.mxu0
    %7171 = vdwg.mxu0
    %v7176 = vunpack.c.l.b16 %v5823
    %v7177 = vunpack.c.l.b16 %v5824
    %v7178 = vunpack.c.l.b16 %v5825
    %v7179 = vunpack.c.l.b16 %v5826
    %v7180 = vpack.c.b16 %v7177, %v7176
    %v7181 = vpack.c.b16 %v7179, %v7178
    %7182 = vrot.lane.b32.xlu0 %v7180, 96
    %v7183 = vpop.permute.xlu0 %7182
    %7184 = vrot.lane.b32.xlu0 %v7181, 96
    %v7185 = vpop.permute.xlu0 %7184
    %v7187 = vrot.slane %v6867, 1
    %v7189 = vsel %vm6887, %v7183, 0
    %v7192 = vsel %vm6887, %v7185, 0
    %v7195 = vand.u32 %v7187, %v6897
    %7197 = vmatprep.subr.bf16.mxu0 0
    %7198 = vmatpush1.bf16.msra.mxu0 0
    %7199 = vmatprep.subr.bf16.mxu0 0
    %7200 = vmatpush1.bf16.msra.mxu0 0
    %7201 = vmatprep.subr.bf16.mxu0 0
    %7202 = vmatpush1.bf16.msra.mxu0 0
    %7203 = vmatprep.subr.bf16.mxu0 0
    %7204 = vmatpush1.bf16.msra.mxu0 0
    %7205 = vmatprep.subr.bf16.mxu0 0
    %7206 = vmatpush1.bf16.msra.mxu0 0
    %7207 = vmatprep.subr.bf16.mxu0 0
    %7208 = vmatpush1.bf16.msra.mxu0 0
    %7209 = vmatprep.subr.bf16.mxu0 0
    %7210 = vmatpush1.bf16.msra.mxu0 0
    %7211 = vmatprep.subr.bf16.mxu0 0
    %7212 = vmatpush1.bf16.msra.mxu0 %v7195
    %7213 = vmatprep.subr.bf16.mxu0 0
    %7214 = vmatpush2.bf16.msra.mxu0 0
    %7215 = vmatprep.subr.bf16.mxu0 0
    %7216 = vmatpush2.bf16.msra.mxu0 0
    %7217 = vmatprep.subr.bf16.mxu0 0
    %7218 = vmatpush2.bf16.msra.mxu0 0
    %7219 = vmatprep.subr.bf16.mxu0 0
    %7220 = vmatpush2.bf16.msra.mxu0 0
    %7221 = vmatprep.subr.bf16.mxu0 0
    %7222 = vmatpush2.bf16.msra.mxu0 0
    %7223 = vmatprep.subr.bf16.mxu0 0
    %7224 = vmatpush2.bf16.msra.mxu0 0
    %7225 = vmatprep.subr.bf16.mxu0 0
    %7226 = vmatpush2.bf16.msra.mxu0 0
    %7227 = vmatprep.subr.bf16.mxu0 0
    %7228 = vmatpush2.bf16.msra.mxu0 0
    %7229 = vmatprep.mubr.bf16.mxu0 0
    %7230 = vmatmul.mubr.bf16.gmra.mxu0 %v7189
    %v7231 = vpop.f32.mrf.mxu0
    %v7232 = vadd.f32 0.0, %v7231
    %v7233 = vpop.f32.mrf.mxu0
    %v7234 = vpop.f32.mrf.mxu0
    %v7235 = vadd.f32 0.0, %v7234
    %v7236 = vpop.f32.mrf.mxu0
    %7237 = vmatprep.mubr.bf16.mxu0 0
    %7238 = vmatmul.mubr.bf16.gmra.mxu0 %v7192
    %v7239 = vpop.f32.mrf.mxu0
    %v7240 = vadd.f32 0.0, %v7239
    %v7241 = vpop.f32.mrf.mxu0
    %v7242 = vpop.f32.mrf.mxu0
    %v7243 = vadd.f32 0.0, %v7242
    %v7244 = vpop.f32.mrf.mxu0
    %7245 = vdwg.mxu0
    %v7250 = vunpack.c.l.b16 %v5827
    %v7251 = vunpack.c.l.b16 %v5828
    %v7252 = vunpack.c.l.b16 %v5829
    %v7253 = vunpack.c.l.b16 %v5830
    %v7254 = vpack.c.b16 %v7251, %v7250
    %v7255 = vpack.c.b16 %v7253, %v7252
    %7256 = vrot.lane.b32.xlu0 %v7254, 96
    %v7257 = vpop.permute.xlu0 %7256
    %7258 = vrot.lane.b32.xlu0 %v7255, 96
    %v7259 = vpop.permute.xlu0 %7258
    %v7261 = vrot.slane %v6868, 1
    %v7263 = vsel %vm6887, %v7257, 0
    %v7266 = vsel %vm6887, %v7259, 0
    %v7269 = vand.u32 %v7261, %v6897
    %7271 = vmatprep.subr.bf16.mxu0 0
    %7272 = vmatpush1.bf16.msra.mxu0 0
    %7273 = vmatprep.subr.bf16.mxu0 0
    %7274 = vmatpush1.bf16.msra.mxu0 0
    %7275 = vmatprep.subr.bf16.mxu0 0
    %7276 = vmatpush1.bf16.msra.mxu0 0
    %7277 = vmatprep.subr.bf16.mxu0 0
    %7278 = vmatpush1.bf16.msra.mxu0 0
    %7279 = vmatprep.subr.bf16.mxu0 0
    %7280 = vmatpush1.bf16.msra.mxu0 0
    %7281 = vmatprep.subr.bf16.mxu0 0
    %7282 = vmatpush1.bf16.msra.mxu0 0
    %7283 = vmatprep.subr.bf16.mxu0 0
    %7284 = vmatpush1.bf16.msra.mxu0 0
    %7285 = vmatprep.subr.bf16.mxu0 0
    %7286 = vmatpush1.bf16.msra.mxu0 %v7269
    %7287 = vmatprep.subr.bf16.mxu0 0
    %7288 = vmatpush2.bf16.msra.mxu0 0
    %7289 = vmatprep.subr.bf16.mxu0 0
    %7290 = vmatpush2.bf16.msra.mxu0 0
    %7291 = vmatprep.subr.bf16.mxu0 0
    %7292 = vmatpush2.bf16.msra.mxu0 0
    %7293 = vmatprep.subr.bf16.mxu0 0
    %7294 = vmatpush2.bf16.msra.mxu0 0
    %7295 = vmatprep.subr.bf16.mxu0 0
    %7296 = vmatpush2.bf16.msra.mxu0 0
    %7297 = vmatprep.subr.bf16.mxu0 0
    %7298 = vmatpush2.bf16.msra.mxu0 0
    %7299 = vmatprep.subr.bf16.mxu0 0
    %7300 = vmatpush2.bf16.msra.mxu0 0
    %7301 = vmatprep.subr.bf16.mxu0 0
    %7302 = vmatpush2.bf16.msra.mxu0 0
    %7303 = vmatprep.mubr.bf16.mxu0 0
    %7304 = vmatmul.mubr.bf16.gmra.mxu0 %v7263
    %v7305 = vpop.f32.mrf.mxu0
    %v7306 = vadd.f32 0.0, %v7305
    %v7307 = vpop.f32.mrf.mxu0
    %v7308 = vpop.f32.mrf.mxu0
    %v7309 = vadd.f32 0.0, %v7308
    %v7310 = vpop.f32.mrf.mxu0
    %7311 = vmatprep.mubr.bf16.mxu0 0
    %7312 = vmatmul.mubr.bf16.gmra.mxu0 %v7266
    %v7313 = vpop.f32.mrf.mxu0
    %v7314 = vadd.f32 0.0, %v7313
    %v7315 = vpop.f32.mrf.mxu0
    %v7316 = vpop.f32.mrf.mxu0
    %v7317 = vadd.f32 0.0, %v7316
    %v7318 = vpop.f32.mrf.mxu0
    %7319 = vdwg.mxu0
    %v7324 = vunpack.c.l.b16 %v5831
    %v7325 = vunpack.c.l.b16 %v5832
    %v7326 = vunpack.c.l.b16 %v5833
    %v7327 = vunpack.c.l.b16 %v5834
    %v7328 = vpack.c.b16 %v7325, %v7324
    %v7329 = vpack.c.b16 %v7327, %v7326
    %7330 = vrot.lane.b32.xlu0 %v7328, 96
    %v7331 = vpop.permute.xlu0 %7330
    %7332 = vrot.lane.b32.xlu0 %v7329, 96
    %v7333 = vpop.permute.xlu0 %7332
    %v7335 = vrot.slane %v6869, 1
    %v7337 = vsel %vm6887, %v7331, 0
    %v7340 = vsel %vm6887, %v7333, 0
    %v7343 = vand.u32 %v7335, %v6897
    %7345 = vmatprep.subr.bf16.mxu0 0
    %7346 = vmatpush1.bf16.msra.mxu0 0
    %7347 = vmatprep.subr.bf16.mxu0 0
    %7348 = vmatpush1.bf16.msra.mxu0 0
    %7349 = vmatprep.subr.bf16.mxu0 0
    %7350 = vmatpush1.bf16.msra.mxu0 0
    %7351 = vmatprep.subr.bf16.mxu0 0
    %7352 = vmatpush1.bf16.msra.mxu0 0
    %7353 = vmatprep.subr.bf16.mxu0 0
    %7354 = vmatpush1.bf16.msra.mxu0 0
    %7355 = vmatprep.subr.bf16.mxu0 0
    %7356 = vmatpush1.bf16.msra.mxu0 0
    %7357 = vmatprep.subr.bf16.mxu0 0
    %7358 = vmatpush1.bf16.msra.mxu0 0
    %7359 = vmatprep.subr.bf16.mxu0 0
    %7360 = vmatpush1.bf16.msra.mxu0 %v7343
    %7361 = vmatprep.subr.bf16.mxu0 0
    %7362 = vmatpush2.bf16.msra.mxu0 0
    %7363 = vmatprep.subr.bf16.mxu0 0
    %7364 = vmatpush2.bf16.msra.mxu0 0
    %7365 = vmatprep.subr.bf16.mxu0 0
    %7366 = vmatpush2.bf16.msra.mxu0 0
    %7367 = vmatprep.subr.bf16.mxu0 0
    %7368 = vmatpush2.bf16.msra.mxu0 0
    %7369 = vmatprep.subr.bf16.mxu0 0
    %7370 = vmatpush2.bf16.msra.mxu0 0
    %7371 = vmatprep.subr.bf16.mxu0 0
    %7372 = vmatpush2.bf16.msra.mxu0 0
    %7373 = vmatprep.subr.bf16.mxu0 0
    %7374 = vmatpush2.bf16.msra.mxu0 0
    %7375 = vmatprep.subr.bf16.mxu0 0
    %7376 = vmatpush2.bf16.msra.mxu0 0
    %7377 = vmatprep.mubr.bf16.mxu0 0
    %7378 = vmatmul.mubr.bf16.gmra.mxu0 %v7337
    %v7379 = vpop.f32.mrf.mxu0
    %v7380 = vadd.f32 0.0, %v7379
    %v7381 = vpop.f32.mrf.mxu0
    %v7382 = vpop.f32.mrf.mxu0
    %v7383 = vadd.f32 0.0, %v7382
    %v7384 = vpop.f32.mrf.mxu0
    %7385 = vmatprep.mubr.bf16.mxu0 0
    %7386 = vmatmul.mubr.bf16.gmra.mxu0 %v7340
    %v7387 = vpop.f32.mrf.mxu0
    %v7388 = vadd.f32 0.0, %v7387
    %v7389 = vpop.f32.mrf.mxu0
    %v7390 = vpop.f32.mrf.mxu0
    %v7391 = vadd.f32 0.0, %v7390
    %v7392 = vpop.f32.mrf.mxu0
    %7393 = vdwg.mxu0
    %v7398 = vunpack.c.l.b16 %v5835
    %v7399 = vunpack.c.l.b16 %v5836
    %v7400 = vunpack.c.l.b16 %v5837
    %v7401 = vunpack.c.l.b16 %v5838
    %v7402 = vpack.c.b16 %v7399, %v7398
    %v7403 = vpack.c.b16 %v7401, %v7400
    %7404 = vrot.lane.b32.xlu0 %v7402, 96
    %v7405 = vpop.permute.xlu0 %7404
    %7406 = vrot.lane.b32.xlu0 %v7403, 96
    %v7407 = vpop.permute.xlu0 %7406
    %v7409 = vrot.slane %v6870, 1
    %v7411 = vsel %vm6887, %v7405, 0
    %v7414 = vsel %vm6887, %v7407, 0
    %v7417 = vand.u32 %v7409, %v6897
    %7419 = vmatprep.subr.bf16.mxu0 0
    %7420 = vmatpush1.bf16.msra.mxu0 0
    %7421 = vmatprep.subr.bf16.mxu0 0
    %7422 = vmatpush1.bf16.msra.mxu0 0
    %7423 = vmatprep.subr.bf16.mxu0 0
    %7424 = vmatpush1.bf16.msra.mxu0 0
    %7425 = vmatprep.subr.bf16.mxu0 0
    %7426 = vmatpush1.bf16.msra.mxu0 0
    %7427 = vmatprep.subr.bf16.mxu0 0
    %7428 = vmatpush1.bf16.msra.mxu0 0
    %7429 = vmatprep.subr.bf16.mxu0 0
    %7430 = vmatpush1.bf16.msra.mxu0 0
    %7431 = vmatprep.subr.bf16.mxu0 0
    %7432 = vmatpush1.bf16.msra.mxu0 0
    %7433 = vmatprep.subr.bf16.mxu0 0
    %7434 = vmatpush1.bf16.msra.mxu0 %v7417
    %7435 = vmatprep.subr.bf16.mxu0 0
    %7436 = vmatpush2.bf16.msra.mxu0 0
    %7437 = vmatprep.subr.bf16.mxu0 0
    %7438 = vmatpush2.bf16.msra.mxu0 0
    %7439 = vmatprep.subr.bf16.mxu0 0
    %7440 = vmatpush2.bf16.msra.mxu0 0
    %7441 = vmatprep.subr.bf16.mxu0 0
    %7442 = vmatpush2.bf16.msra.mxu0 0
    %7443 = vmatprep.subr.bf16.mxu0 0
    %7444 = vmatpush2.bf16.msra.mxu0 0
    %7445 = vmatprep.subr.bf16.mxu0 0
    %7446 = vmatpush2.bf16.msra.mxu0 0
    %7447 = vmatprep.subr.bf16.mxu0 0
    %7448 = vmatpush2.bf16.msra.mxu0 0
    %7449 = vmatprep.subr.bf16.mxu0 0
    %7450 = vmatpush2.bf16.msra.mxu0 0
    %7451 = vmatprep.mubr.bf16.mxu0 0
    %7452 = vmatmul.mubr.bf16.gmra.mxu0 %v7411
    %v7453 = vpop.f32.mrf.mxu0
    %v7454 = vadd.f32 0.0, %v7453
    %v7455 = vpop.f32.mrf.mxu0
    %v7456 = vpop.f32.mrf.mxu0
    %v7457 = vadd.f32 0.0, %v7456
    %v7458 = vpop.f32.mrf.mxu0
    %7459 = vmatprep.mubr.bf16.mxu0 0
    %7460 = vmatmul.mubr.bf16.gmra.mxu0 %v7414
    %v7461 = vpop.f32.mrf.mxu0
    %v7462 = vadd.f32 0.0, %v7461
    %v7463 = vpop.f32.mrf.mxu0
    %v7464 = vpop.f32.mrf.mxu0
    %v7465 = vadd.f32 0.0, %v7464
    %v7466 = vpop.f32.mrf.mxu0
    %7467 = vdwg.mxu0
    %v7468 = vadd.f32 %v6422, %v6936
    %v7469 = vadd.f32 %v6425, %v6939
    %v7470 = vadd.f32 %v6430, %v6944
    %v7471 = vadd.f32 %v6433, %v6947
    %v7472 = vadd.f32 %v6483, %v7010
    %v7473 = vadd.f32 %v6486, %v7013
    %v7474 = vadd.f32 %v6491, %v7018
    %v7475 = vadd.f32 %v6494, %v7021
    %v7476 = vadd.f32 %v6544, %v7084
    %v7477 = vadd.f32 %v6547, %v7087
    %v7478 = vadd.f32 %v6552, %v7092
    %v7479 = vadd.f32 %v6555, %v7095
    %v7480 = vadd.f32 %v6605, %v7158
    %v7481 = vadd.f32 %v6608, %v7161
    %v7482 = vadd.f32 %v6613, %v7166
    %v7483 = vadd.f32 %v6616, %v7169
    %v7484 = vadd.f32 %v6666, %v7232
    %v7485 = vadd.f32 %v6669, %v7235
    %v7486 = vadd.f32 %v6674, %v7240
    %v7487 = vadd.f32 %v6677, %v7243
    %v7488 = vadd.f32 %v6727, %v7306
    %v7489 = vadd.f32 %v6730, %v7309
    %v7490 = vadd.f32 %v6735, %v7314
    %v7491 = vadd.f32 %v6738, %v7317
    %v7492 = vadd.f32 %v6788, %v7380
    %v7493 = vadd.f32 %v6791, %v7383
    %v7494 = vadd.f32 %v6796, %v7388
    %v7495 = vadd.f32 %v6799, %v7391
    %v7496 = vadd.f32 %v6849, %v7454
    %v7497 = vadd.f32 %v6852, %v7457
    %v7498 = vadd.f32 %v6857, %v7462
    %v7499 = vadd.f32 %v6860, %v7465
    %v7500 = vmax.f32 %v7468, 0.0
    %v7501 = vmax.f32 %v7469, 0.0
    %v7502 = vmax.f32 %v7470, 0.0
    %v7503 = vmax.f32 %v7471, 0.0
    %v7504 = vmax.f32 %v7472, 0.0
    %v7505 = vmax.f32 %v7473, 0.0
    %v7506 = vmax.f32 %v7474, 0.0
    %v7507 = vmax.f32 %v7475, 0.0
    %v7508 = vmax.f32 %v7476, 0.0
    %v7509 = vmax.f32 %v7477, 0.0
    %v7510 = vmax.f32 %v7478, 0.0
    %v7511 = vmax.f32 %v7479, 0.0
    %v7512 = vmax.f32 %v7480, 0.0
    %v7513 = vmax.f32 %v7481, 0.0
    %v7514 = vmax.f32 %v7482, 0.0
    %v7515 = vmax.f32 %v7483, 0.0
    %v7516 = vmax.f32 %v7484, 0.0
    %v7517 = vmax.f32 %v7485, 0.0
    %v7518 = vmax.f32 %v7486, 0.0
    %v7519 = vmax.f32 %v7487, 0.0
    %v7520 = vmax.f32 %v7488, 0.0
    %v7521 = vmax.f32 %v7489, 0.0
    %v7522 = vmax.f32 %v7490, 0.0
    %v7523 = vmax.f32 %v7491, 0.0
    %v7524 = vmax.f32 %v7492, 0.0
    %v7525 = vmax.f32 %v7493, 0.0
    %v7526 = vmax.f32 %v7494, 0.0
    %v7527 = vmax.f32 %v7495, 0.0
    %v7528 = vmax.f32 %v7496, 0.0
    %v7529 = vmax.f32 %v7497, 0.0
    %v7530 = vmax.f32 %v7498, 0.0
    %v7531 = vmax.f32 %v7499, 0.0
    %v7532 = vpack.c.bf16 %v7501, %v7500
    %v7533 = vpack.c.bf16 %v7503, %v7502
    %v7534 = vpack.c.bf16 %v7505, %v7504
    %v7535 = vpack.c.bf16 %v7507, %v7506
    %v7536 = vpack.c.bf16 %v7509, %v7508
    %v7537 = vpack.c.bf16 %v7511, %v7510
    %v7538 = vpack.c.bf16 %v7513, %v7512
    %v7539 = vpack.c.bf16 %v7515, %v7514
    %v7540 = vpack.c.bf16 %v7517, %v7516
    %v7541 = vpack.c.bf16 %v7519, %v7518
    %v7542 = vpack.c.bf16 %v7521, %v7520
    %v7543 = vpack.c.bf16 %v7523, %v7522
    %v7544 = vpack.c.bf16 %v7525, %v7524
    %v7545 = vpack.c.bf16 %v7527, %v7526
    %v7546 = vpack.c.bf16 %v7529, %v7528
    %v7547 = vpack.c.bf16 %v7531, %v7530
    %7549 = vset.pattern.permute.xlu0 40
    %7550 = vperm.xlu0 %7549, %v5839
    %v7551 = vpop.permute.xlu0 %7550
    %7554 = vset.pattern.permute.xlu0 40
    %7555 = vperm.xlu0 %7554, %v5840
    %v7556 = vpop.permute.xlu0 %7555
    %7559 = vset.pattern.permute.xlu0 40
    %7560 = vperm.xlu0 %7559, %v5841
    %v7561 = vpop.permute.xlu0 %7560
    %7564 = vset.pattern.permute.xlu0 40
    %7565 = vperm.xlu0 %7564, %v5842
    %v7566 = vpop.permute.xlu0 %7565
    %7569 = vset.pattern.permute.xlu0 40
    %7570 = vperm.xlu0 %7569, %v5843
    %v7571 = vpop.permute.xlu0 %7570
    %7574 = vset.pattern.permute.xlu0 40
    %7575 = vperm.xlu0 %7574, %v5844
    %v7576 = vpop.permute.xlu0 %7575
    %7579 = vset.pattern.permute.xlu0 40
    %7580 = vperm.xlu0 %7579, %v5845
    %v7581 = vpop.permute.xlu0 %7580
    %7584 = vset.pattern.permute.xlu0 40
    %7585 = vperm.xlu0 %7584, %v5846
    %v7586 = vpop.permute.xlu0 %7585
    %7589 = vset.pattern.permute.xlu0 40
    %7590 = vperm.xlu0 %7589, %v5847
    %v7591 = vpop.permute.xlu0 %7590
    %7594 = vset.pattern.permute.xlu0 40
    %7595 = vperm.xlu0 %7594, %v5848
    %v7596 = vpop.permute.xlu0 %7595
    %7599 = vset.pattern.permute.xlu0 40
    %7600 = vperm.xlu0 %7599, %v5849
    %v7601 = vpop.permute.xlu0 %7600
    %7604 = vset.pattern.permute.xlu0 40
    %7605 = vperm.xlu0 %7604, %v5850
    %v7606 = vpop.permute.xlu0 %7605
    %7609 = vset.pattern.permute.xlu0 40
    %7610 = vperm.xlu0 %7609, %v5851
    %v7611 = vpop.permute.xlu0 %7610
    %7614 = vset.pattern.permute.xlu0 40
    %7615 = vperm.xlu0 %7614, %v5852
    %v7616 = vpop.permute.xlu0 %7615
    %7619 = vset.pattern.permute.xlu0 40
    %7620 = vperm.xlu0 %7619, %v5853
    %v7621 = vpop.permute.xlu0 %7620
    %7624 = vset.pattern.permute.xlu0 40
    %7625 = vperm.xlu0 %7624, %v5854
    %v7626 = vpop.permute.xlu0 %7625
    %7629 = vset.pattern.permute.xlu0 40
    %7630 = vperm.xlu0 %7629, %v5855
    %v7631 = vpop.permute.xlu0 %7630
    %7634 = vset.pattern.permute.xlu0 40
    %7635 = vperm.xlu0 %7634, %v5856
    %v7636 = vpop.permute.xlu0 %7635
    %7639 = vset.pattern.permute.xlu0 40
    %7640 = vperm.xlu0 %7639, %v5857
    %v7641 = vpop.permute.xlu0 %7640
    %7644 = vset.pattern.permute.xlu0 40
    %7645 = vperm.xlu0 %7644, %v5858
    %v7646 = vpop.permute.xlu0 %7645
    %7649 = vset.pattern.permute.xlu0 40
    %7650 = vperm.xlu0 %7649, %v5859
    %v7651 = vpop.permute.xlu0 %7650
    %7654 = vset.pattern.permute.xlu0 40
    %7655 = vperm.xlu0 %7654, %v5860
    %v7656 = vpop.permute.xlu0 %7655
    %7659 = vset.pattern.permute.xlu0 40
    %7660 = vperm.xlu0 %7659, %v5861
    %v7661 = vpop.permute.xlu0 %7660
    %7664 = vset.pattern.permute.xlu0 40
    %7665 = vperm.xlu0 %7664, %v5862
    %v7666 = vpop.permute.xlu0 %7665
    %7669 = vset.pattern.permute.xlu0 40
    %7670 = vperm.xlu0 %7669, %v5863
    %v7671 = vpop.permute.xlu0 %7670
    %7674 = vset.pattern.permute.xlu0 40
    %7675 = vperm.xlu0 %7674, %v5864
    %v7676 = vpop.permute.xlu0 %7675
    %7679 = vset.pattern.permute.xlu0 40
    %7680 = vperm.xlu0 %7679, %v5865
    %v7681 = vpop.permute.xlu0 %7680
    %7684 = vset.pattern.permute.xlu0 40
    %7685 = vperm.xlu0 %7684, %v5866
    %v7686 = vpop.permute.xlu0 %7685
    %7689 = vset.pattern.permute.xlu0 40
    %7690 = vperm.xlu0 %7689, %v5867
    %v7691 = vpop.permute.xlu0 %7690
    %7694 = vset.pattern.permute.xlu0 40
    %7695 = vperm.xlu0 %7694, %v5868
    %v7696 = vpop.permute.xlu0 %7695
    %7699 = vset.pattern.permute.xlu0 40
    %7700 = vperm.xlu0 %7699, %v5869
    %v7701 = vpop.permute.xlu0 %7700
    %7704 = vset.pattern.permute.xlu0 40
    %7705 = vperm.xlu0 %7704, %v5870
    %v7706 = vpop.permute.xlu0 %7705
    %vm7708 = vcmask 261120
    %v7710 = vsel %vm7708, %v6879, 0
    %v7713 = vsel %vm7708, %v6880, 0
    %7715 = vmatprep.subr.bf16.mxu0 0
    %7716 = vmatpush1.bf16.msra.mxu0 0
    %7717 = vmatprep.subr.bf16.mxu0 0
    %7718 = vmatpush1.bf16.msra.mxu0 0
    %7719 = vmatprep.subr.bf16.mxu0 0
    %7720 = vmatpush1.bf16.msra.mxu0 0
    %7721 = vmatprep.subr.bf16.mxu0 0
    %7722 = vmatpush1.bf16.msra.mxu0 0
    %7723 = vmatprep.subr.bf16.mxu0 0
    %7724 = vmatpush1.bf16.msra.mxu0 0
    %7725 = vmatprep.subr.bf16.mxu0 0
    %7726 = vmatpush1.bf16.msra.mxu0 0
    %7727 = vmatprep.subr.bf16.mxu0 0
    %7728 = vmatpush1.bf16.msra.mxu0 %v7533
    %7729 = vmatprep.subr.bf16.mxu0 0
    %7730 = vmatpush1.bf16.msra.mxu0 %v7532
    %7731 = vmatprep.subr.bf16.mxu0 0
    %7732 = vmatpush2.bf16.msra.mxu0 0
    %7733 = vmatprep.subr.bf16.mxu0 0
    %7734 = vmatpush2.bf16.msra.mxu0 0
    %7735 = vmatprep.subr.bf16.mxu0 0
    %7736 = vmatpush2.bf16.msra.mxu0 0
    %7737 = vmatprep.subr.bf16.mxu0 0
    %7738 = vmatpush2.bf16.msra.mxu0 0
    %7739 = vmatprep.subr.bf16.mxu0 0
    %7740 = vmatpush2.bf16.msra.mxu0 0
    %7741 = vmatprep.subr.bf16.mxu0 0
    %7742 = vmatpush2.bf16.msra.mxu0 0
    %7743 = vmatprep.subr.bf16.mxu0 0
    %7744 = vmatpush2.bf16.msra.mxu0 0
    %7745 = vmatprep.subr.bf16.mxu0 0
    %7746 = vmatpush2.bf16.msra.mxu0 0
    %7747 = vmatprep.mubr.bf16.mxu0 0
    %7748 = vmatmul.mubr.bf16.gmra.mxu0 %v7710
    %v7749 = vpop.f32.mrf.mxu0
    %v7750 = vadd.f32 %v7551, %v7749
    %v7751 = vpop.f32.mrf.mxu0
    %v7752 = vpop.f32.mrf.mxu0
    %v7753 = vadd.f32 %v7556, %v7752
    %v7754 = vpop.f32.mrf.mxu0
    %7755 = vmatprep.mubr.bf16.mxu0 0
    %7756 = vmatmul.mubr.bf16.gmra.mxu0 %v7713
    %v7757 = vpop.f32.mrf.mxu0
    %v7758 = vadd.f32 %v7561, %v7757
    %v7759 = vpop.f32.mrf.mxu0
    %v7760 = vpop.f32.mrf.mxu0
    %v7761 = vadd.f32 %v7566, %v7760
    %v7762 = vpop.f32.mrf.mxu0
    %7763 = vdwg.mxu0
    %v7765 = vsel %vm7708, %v6958, 0
    %v7768 = vsel %vm7708, %v6959, 0
    %7770 = vmatprep.subr.bf16.mxu0 0
    %7771 = vmatpush1.bf16.msra.mxu0 0
    %7772 = vmatprep.subr.bf16.mxu0 0
    %7773 = vmatpush1.bf16.msra.mxu0 0
    %7774 = vmatprep.subr.bf16.mxu0 0
    %7775 = vmatpush1.bf16.msra.mxu0 0
    %7776 = vmatprep.subr.bf16.mxu0 0
    %7777 = vmatpush1.bf16.msra.mxu0 0
    %7778 = vmatprep.subr.bf16.mxu0 0
    %7779 = vmatpush1.bf16.msra.mxu0 0
    %7780 = vmatprep.subr.bf16.mxu0 0
    %7781 = vmatpush1.bf16.msra.mxu0 0
    %7782 = vmatprep.subr.bf16.mxu0 0
    %7783 = vmatpush1.bf16.msra.mxu0 %v7535
    %7784 = vmatprep.subr.bf16.mxu0 0
    %7785 = vmatpush1.bf16.msra.mxu0 %v7534
    %7786 = vmatprep.subr.bf16.mxu0 0
    %7787 = vmatpush2.bf16.msra.mxu0 0
    %7788 = vmatprep.subr.bf16.mxu0 0
    %7789 = vmatpush2.bf16.msra.mxu0 0
    %7790 = vmatprep.subr.bf16.mxu0 0
    %7791 = vmatpush2.bf16.msra.mxu0 0
    %7792 = vmatprep.subr.bf16.mxu0 0
    %7793 = vmatpush2.bf16.msra.mxu0 0
    %7794 = vmatprep.subr.bf16.mxu0 0
    %7795 = vmatpush2.bf16.msra.mxu0 0
    %7796 = vmatprep.subr.bf16.mxu0 0
    %7797 = vmatpush2.bf16.msra.mxu0 0
    %7798 = vmatprep.subr.bf16.mxu0 0
    %7799 = vmatpush2.bf16.msra.mxu0 0
    %7800 = vmatprep.subr.bf16.mxu0 0
    %7801 = vmatpush2.bf16.msra.mxu0 0
    %7802 = vmatprep.mubr.bf16.mxu0 0
    %7803 = vmatmul.mubr.bf16.gmra.mxu0 %v7765
    %v7804 = vpop.f32.mrf.mxu0
    %v7805 = vadd.f32 %v7571, %v7804
    %v7806 = vpop.f32.mrf.mxu0
    %v7807 = vpop.f32.mrf.mxu0
    %v7808 = vadd.f32 %v7576, %v7807
    %v7809 = vpop.f32.mrf.mxu0
    %7810 = vmatprep.mubr.bf16.mxu0 0
    %7811 = vmatmul.mubr.bf16.gmra.mxu0 %v7768
    %v7812 = vpop.f32.mrf.mxu0
    %v7813 = vadd.f32 %v7581, %v7812
    %v7814 = vpop.f32.mrf.mxu0
    %v7815 = vpop.f32.mrf.mxu0
    %v7816 = vadd.f32 %v7586, %v7815
    %v7817 = vpop.f32.mrf.mxu0
    %7818 = vdwg.mxu0
    %v7820 = vsel %vm7708, %v7032, 0
    %v7823 = vsel %vm7708, %v7033, 0
    %7825 = vmatprep.subr.bf16.mxu0 0
    %7826 = vmatpush1.bf16.msra.mxu0 0
    %7827 = vmatprep.subr.bf16.mxu0 0
    %7828 = vmatpush1.bf16.msra.mxu0 0
    %7829 = vmatprep.subr.bf16.mxu0 0
    %7830 = vmatpush1.bf16.msra.mxu0 0
    %7831 = vmatprep.subr.bf16.mxu0 0
    %7832 = vmatpush1.bf16.msra.mxu0 0
    %7833 = vmatprep.subr.bf16.mxu0 0
    %7834 = vmatpush1.bf16.msra.mxu0 0
    %7835 = vmatprep.subr.bf16.mxu0 0
    %7836 = vmatpush1.bf16.msra.mxu0 0
    %7837 = vmatprep.subr.bf16.mxu0 0
    %7838 = vmatpush1.bf16.msra.mxu0 %v7537
    %7839 = vmatprep.subr.bf16.mxu0 0
    %7840 = vmatpush1.bf16.msra.mxu0 %v7536
    %7841 = vmatprep.subr.bf16.mxu0 0
    %7842 = vmatpush2.bf16.msra.mxu0 0
    %7843 = vmatprep.subr.bf16.mxu0 0
    %7844 = vmatpush2.bf16.msra.mxu0 0
    %7845 = vmatprep.subr.bf16.mxu0 0
    %7846 = vmatpush2.bf16.msra.mxu0 0
    %7847 = vmatprep.subr.bf16.mxu0 0
    %7848 = vmatpush2.bf16.msra.mxu0 0
    %7849 = vmatprep.subr.bf16.mxu0 0
    %7850 = vmatpush2.bf16.msra.mxu0 0
    %7851 = vmatprep.subr.bf16.mxu0 0
    %7852 = vmatpush2.bf16.msra.mxu0 0
    %7853 = vmatprep.subr.bf16.mxu0 0
    %7854 = vmatpush2.bf16.msra.mxu0 0
    %7855 = vmatprep.subr.bf16.mxu0 0
    %7856 = vmatpush2.bf16.msra.mxu0 0
    %7857 = vmatprep.mubr.bf16.mxu0 0
    %7858 = vmatmul.mubr.bf16.gmra.mxu0 %v7820
    %v7859 = vpop.f32.mrf.mxu0
    %v7860 = vadd.f32 %v7591, %v7859
    %v7861 = vpop.f32.mrf.mxu0
    %v7862 = vpop.f32.mrf.mxu0
    %v7863 = vadd.f32 %v7596, %v7862
    %v7864 = vpop.f32.mrf.mxu0
    %7865 = vmatprep.mubr.bf16.mxu0 0
    %7866 = vmatmul.mubr.bf16.gmra.mxu0 %v7823
    %v7867 = vpop.f32.mrf.mxu0
    %v7868 = vadd.f32 %v7601, %v7867
    %v7869 = vpop.f32.mrf.mxu0
    %v7870 = vpop.f32.mrf.mxu0
    %v7871 = vadd.f32 %v7606, %v7870
    %v7872 = vpop.f32.mrf.mxu0
    %7873 = vdwg.mxu0
    %v7875 = vsel %vm7708, %v7106, 0
    %v7878 = vsel %vm7708, %v7107, 0
    %7880 = vmatprep.subr.bf16.mxu0 0
    %7881 = vmatpush1.bf16.msra.mxu0 0
    %7882 = vmatprep.subr.bf16.mxu0 0
    %7883 = vmatpush1.bf16.msra.mxu0 0
    %7884 = vmatprep.subr.bf16.mxu0 0
    %7885 = vmatpush1.bf16.msra.mxu0 0
    %7886 = vmatprep.subr.bf16.mxu0 0
    %7887 = vmatpush1.bf16.msra.mxu0 0
    %7888 = vmatprep.subr.bf16.mxu0 0
    %7889 = vmatpush1.bf16.msra.mxu0 0
    %7890 = vmatprep.subr.bf16.mxu0 0
    %7891 = vmatpush1.bf16.msra.mxu0 0
    %7892 = vmatprep.subr.bf16.mxu0 0
    %7893 = vmatpush1.bf16.msra.mxu0 %v7539
    %7894 = vmatprep.subr.bf16.mxu0 0
    %7895 = vmatpush1.bf16.msra.mxu0 %v7538
    %7896 = vmatprep.subr.bf16.mxu0 0
    %7897 = vmatpush2.bf16.msra.mxu0 0
    %7898 = vmatprep.subr.bf16.mxu0 0
    %7899 = vmatpush2.bf16.msra.mxu0 0
    %7900 = vmatprep.subr.bf16.mxu0 0
    %7901 = vmatpush2.bf16.msra.mxu0 0
    %7902 = vmatprep.subr.bf16.mxu0 0
    %7903 = vmatpush2.bf16.msra.mxu0 0
    %7904 = vmatprep.subr.bf16.mxu0 0
    %7905 = vmatpush2.bf16.msra.mxu0 0
    %7906 = vmatprep.subr.bf16.mxu0 0
    %7907 = vmatpush2.bf16.msra.mxu0 0
    %7908 = vmatprep.subr.bf16.mxu0 0
    %7909 = vmatpush2.bf16.msra.mxu0 0
    %7910 = vmatprep.subr.bf16.mxu0 0
    %7911 = vmatpush2.bf16.msra.mxu0 0
    %7912 = vmatprep.mubr.bf16.mxu0 0
    %7913 = vmatmul.mubr.bf16.gmra.mxu0 %v7875
    %v7914 = vpop.f32.mrf.mxu0
    %v7915 = vadd.f32 %v7611, %v7914
    %v7916 = vpop.f32.mrf.mxu0
    %v7917 = vpop.f32.mrf.mxu0
    %v7918 = vadd.f32 %v7616, %v7917
    %v7919 = vpop.f32.mrf.mxu0
    %7920 = vmatprep.mubr.bf16.mxu0 0
    %7921 = vmatmul.mubr.bf16.gmra.mxu0 %v7878
    %v7922 = vpop.f32.mrf.mxu0
    %v7923 = vadd.f32 %v7621, %v7922
    %v7924 = vpop.f32.mrf.mxu0
    %v7925 = vpop.f32.mrf.mxu0
    %v7926 = vadd.f32 %v7626, %v7925
    %v7927 = vpop.f32.mrf.mxu0
    %7928 = vdwg.mxu0
    %v7930 = vsel %vm7708, %v7180, 0
    %v7933 = vsel %vm7708, %v7181, 0
    %7935 = vmatprep.subr.bf16.mxu0 0
    %7936 = vmatpush1.bf16.msra.mxu0 0
    %7937 = vmatprep.subr.bf16.mxu0 0
    %7938 = vmatpush1.bf16.msra.mxu0 0
    %7939 = vmatprep.subr.bf16.mxu0 0
    %7940 = vmatpush1.bf16.msra.mxu0 0
    %7941 = vmatprep.subr.bf16.mxu0 0
    %7942 = vmatpush1.bf16.msra.mxu0 0
    %7943 = vmatprep.subr.bf16.mxu0 0
    %7944 = vmatpush1.bf16.msra.mxu0 0
    %7945 = vmatprep.subr.bf16.mxu0 0
    %7946 = vmatpush1.bf16.msra.mxu0 0
    %7947 = vmatprep.subr.bf16.mxu0 0
    %7948 = vmatpush1.bf16.msra.mxu0 %v7541
    %7949 = vmatprep.subr.bf16.mxu0 0
    %7950 = vmatpush1.bf16.msra.mxu0 %v7540
    %7951 = vmatprep.subr.bf16.mxu0 0
    %7952 = vmatpush2.bf16.msra.mxu0 0
    %7953 = vmatprep.subr.bf16.mxu0 0
    %7954 = vmatpush2.bf16.msra.mxu0 0
    %7955 = vmatprep.subr.bf16.mxu0 0
    %7956 = vmatpush2.bf16.msra.mxu0 0
    %7957 = vmatprep.subr.bf16.mxu0 0
    %7958 = vmatpush2.bf16.msra.mxu0 0
    %7959 = vmatprep.subr.bf16.mxu0 0
    %7960 = vmatpush2.bf16.msra.mxu0 0
    %7961 = vmatprep.subr.bf16.mxu0 0
    %7962 = vmatpush2.bf16.msra.mxu0 0
    %7963 = vmatprep.subr.bf16.mxu0 0
    %7964 = vmatpush2.bf16.msra.mxu0 0
    %7965 = vmatprep.subr.bf16.mxu0 0
    %7966 = vmatpush2.bf16.msra.mxu0 0
    %7967 = vmatprep.mubr.bf16.mxu0 0
    %7968 = vmatmul.mubr.bf16.gmra.mxu0 %v7930
    %v7969 = vpop.f32.mrf.mxu0
    %v7970 = vadd.f32 %v7631, %v7969
    %v7971 = vpop.f32.mrf.mxu0
    %v7972 = vpop.f32.mrf.mxu0
    %v7973 = vadd.f32 %v7636, %v7972
    %v7974 = vpop.f32.mrf.mxu0
    %7975 = vmatprep.mubr.bf16.mxu0 0
    %7976 = vmatmul.mubr.bf16.gmra.mxu0 %v7933
    %v7977 = vpop.f32.mrf.mxu0
    %v7978 = vadd.f32 %v7641, %v7977
    %v7979 = vpop.f32.mrf.mxu0
    %v7980 = vpop.f32.mrf.mxu0
    %v7981 = vadd.f32 %v7646, %v7980
    %v7982 = vpop.f32.mrf.mxu0
    %7983 = vdwg.mxu0
    %v7985 = vsel %vm7708, %v7254, 0
    %v7988 = vsel %vm7708, %v7255, 0
    %7990 = vmatprep.subr.bf16.mxu0 0
    %7991 = vmatpush1.bf16.msra.mxu0 0
    %7992 = vmatprep.subr.bf16.mxu0 0
    %7993 = vmatpush1.bf16.msra.mxu0 0
    %7994 = vmatprep.subr.bf16.mxu0 0
    %7995 = vmatpush1.bf16.msra.mxu0 0
    %7996 = vmatprep.subr.bf16.mxu0 0
    %7997 = vmatpush1.bf16.msra.mxu0 0
    %7998 = vmatprep.subr.bf16.mxu0 0
    %7999 = vmatpush1.bf16.msra.mxu0 0
    %8000 = vmatprep.subr.bf16.mxu0 0
    %8001 = vmatpush1.bf16.msra.mxu0 0
    %8002 = vmatprep.subr.bf16.mxu0 0
    %8003 = vmatpush1.bf16.msra.mxu0 %v7543
    %8004 = vmatprep.subr.bf16.mxu0 0
    %8005 = vmatpush1.bf16.msra.mxu0 %v7542
    %8006 = vmatprep.subr.bf16.mxu0 0
    %8007 = vmatpush2.bf16.msra.mxu0 0
    %8008 = vmatprep.subr.bf16.mxu0 0
    %8009 = vmatpush2.bf16.msra.mxu0 0
    %8010 = vmatprep.subr.bf16.mxu0 0
    %8011 = vmatpush2.bf16.msra.mxu0 0
    %8012 = vmatprep.subr.bf16.mxu0 0
    %8013 = vmatpush2.bf16.msra.mxu0 0
    %8014 = vmatprep.subr.bf16.mxu0 0
    %8015 = vmatpush2.bf16.msra.mxu0 0
    %8016 = vmatprep.subr.bf16.mxu0 0
    %8017 = vmatpush2.bf16.msra.mxu0 0
    %8018 = vmatprep.subr.bf16.mxu0 0
    %8019 = vmatpush2.bf16.msra.mxu0 0
    %8020 = vmatprep.subr.bf16.mxu0 0
    %8021 = vmatpush2.bf16.msra.mxu0 0
    %8022 = vmatprep.mubr.bf16.mxu0 0
    %8023 = vmatmul.mubr.bf16.gmra.mxu0 %v7985
    %v8024 = vpop.f32.mrf.mxu0
    %v8025 = vadd.f32 %v7651, %v8024
    %v8026 = vpop.f32.mrf.mxu0
    %v8027 = vpop.f32.mrf.mxu0
    %v8028 = vadd.f32 %v7656, %v8027
    %v8029 = vpop.f32.mrf.mxu0
    %8030 = vmatprep.mubr.bf16.mxu0 0
    %8031 = vmatmul.mubr.bf16.gmra.mxu0 %v7988
    %v8032 = vpop.f32.mrf.mxu0
    %v8033 = vadd.f32 %v7661, %v8032
    %v8034 = vpop.f32.mrf.mxu0
    %v8035 = vpop.f32.mrf.mxu0
    %v8036 = vadd.f32 %v7666, %v8035
    %v8037 = vpop.f32.mrf.mxu0
    %8038 = vdwg.mxu0
    %v8040 = vsel %vm7708, %v7328, 0
    %v8043 = vsel %vm7708, %v7329, 0
    %8045 = vmatprep.subr.bf16.mxu0 0
    %8046 = vmatpush1.bf16.msra.mxu0 0
    %8047 = vmatprep.subr.bf16.mxu0 0
    %8048 = vmatpush1.bf16.msra.mxu0 0
    %8049 = vmatprep.subr.bf16.mxu0 0
    %8050 = vmatpush1.bf16.msra.mxu0 0
    %8051 = vmatprep.subr.bf16.mxu0 0
    %8052 = vmatpush1.bf16.msra.mxu0 0
    %8053 = vmatprep.subr.bf16.mxu0 0
    %8054 = vmatpush1.bf16.msra.mxu0 0
    %8055 = vmatprep.subr.bf16.mxu0 0
    %8056 = vmatpush1.bf16.msra.mxu0 0
    %8057 = vmatprep.subr.bf16.mxu0 0
    %8058 = vmatpush1.bf16.msra.mxu0 %v7545
    %8059 = vmatprep.subr.bf16.mxu0 0
    %8060 = vmatpush1.bf16.msra.mxu0 %v7544
    %8061 = vmatprep.subr.bf16.mxu0 0
    %8062 = vmatpush2.bf16.msra.mxu0 0
    %8063 = vmatprep.subr.bf16.mxu0 0
    %8064 = vmatpush2.bf16.msra.mxu0 0
    %8065 = vmatprep.subr.bf16.mxu0 0
    %8066 = vmatpush2.bf16.msra.mxu0 0
    %8067 = vmatprep.subr.bf16.mxu0 0
    %8068 = vmatpush2.bf16.msra.mxu0 0
    %8069 = vmatprep.subr.bf16.mxu0 0
    %8070 = vmatpush2.bf16.msra.mxu0 0
    %8071 = vmatprep.subr.bf16.mxu0 0
    %8072 = vmatpush2.bf16.msra.mxu0 0
    %8073 = vmatprep.subr.bf16.mxu0 0
    %8074 = vmatpush2.bf16.msra.mxu0 0
    %8075 = vmatprep.subr.bf16.mxu0 0
    %8076 = vmatpush2.bf16.msra.mxu0 0
    %8077 = vmatprep.mubr.bf16.mxu0 0
    %8078 = vmatmul.mubr.bf16.gmra.mxu0 %v8040
    %v8079 = vpop.f32.mrf.mxu0
    %v8080 = vadd.f32 %v7671, %v8079
    %v8081 = vpop.f32.mrf.mxu0
    %v8082 = vpop.f32.mrf.mxu0
    %v8083 = vadd.f32 %v7676, %v8082
    %v8084 = vpop.f32.mrf.mxu0
    %8085 = vmatprep.mubr.bf16.mxu0 0
    %8086 = vmatmul.mubr.bf16.gmra.mxu0 %v8043
    %v8087 = vpop.f32.mrf.mxu0
    %v8088 = vadd.f32 %v7681, %v8087
    %v8089 = vpop.f32.mrf.mxu0
    %v8090 = vpop.f32.mrf.mxu0
    %v8091 = vadd.f32 %v7686, %v8090
    %v8092 = vpop.f32.mrf.mxu0
    %8093 = vdwg.mxu0
    %v8095 = vsel %vm7708, %v7402, 0
    %v8098 = vsel %vm7708, %v7403, 0
    %8100 = vmatprep.subr.bf16.mxu0 0
    %8101 = vmatpush1.bf16.msra.mxu0 0
    %8102 = vmatprep.subr.bf16.mxu0 0
    %8103 = vmatpush1.bf16.msra.mxu0 0
    %8104 = vmatprep.subr.bf16.mxu0 0
    %8105 = vmatpush1.bf16.msra.mxu0 0
    %8106 = vmatprep.subr.bf16.mxu0 0
    %8107 = vmatpush1.bf16.msra.mxu0 0
    %8108 = vmatprep.subr.bf16.mxu0 0
    %8109 = vmatpush1.bf16.msra.mxu0 0
    %8110 = vmatprep.subr.bf16.mxu0 0
    %8111 = vmatpush1.bf16.msra.mxu0 0
    %8112 = vmatprep.subr.bf16.mxu0 0
    %8113 = vmatpush1.bf16.msra.mxu0 %v7547
    %8114 = vmatprep.subr.bf16.mxu0 0
    %8115 = vmatpush1.bf16.msra.mxu0 %v7546
    %8116 = vmatprep.subr.bf16.mxu0 0
    %8117 = vmatpush2.bf16.msra.mxu0 0
    %8118 = vmatprep.subr.bf16.mxu0 0
    %8119 = vmatpush2.bf16.msra.mxu0 0
    %8120 = vmatprep.subr.bf16.mxu0 0
    %8121 = vmatpush2.bf16.msra.mxu0 0
    %8122 = vmatprep.subr.bf16.mxu0 0
    %8123 = vmatpush2.bf16.msra.mxu0 0
    %8124 = vmatprep.subr.bf16.mxu0 0
    %8125 = vmatpush2.bf16.msra.mxu0 0
    %8126 = vmatprep.subr.bf16.mxu0 0
    %8127 = vmatpush2.bf16.msra.mxu0 0
    %8128 = vmatprep.subr.bf16.mxu0 0
    %8129 = vmatpush2.bf16.msra.mxu0 0
    %8130 = vmatprep.subr.bf16.mxu0 0
    %8131 = vmatpush2.bf16.msra.mxu0 0
    %8132 = vmatprep.mubr.bf16.mxu0 0
    %8133 = vmatmul.mubr.bf16.gmra.mxu0 %v8095
    %v8134 = vpop.f32.mrf.mxu0
    %v8135 = vadd.f32 %v7691, %v8134
    %v8136 = vpop.f32.mrf.mxu0
    %v8137 = vpop.f32.mrf.mxu0
    %v8138 = vadd.f32 %v7696, %v8137
    %v8139 = vpop.f32.mrf.mxu0
    %8140 = vmatprep.mubr.bf16.mxu0 0
    %8141 = vmatmul.mubr.bf16.gmra.mxu0 %v8098
    %v8142 = vpop.f32.mrf.mxu0
    %v8143 = vadd.f32 %v7701, %v8142
    %v8144 = vpop.f32.mrf.mxu0
    %v8145 = vpop.f32.mrf.mxu0
    %v8146 = vadd.f32 %v7706, %v8145
    %v8147 = vpop.f32.mrf.mxu0
    %8148 = vdwg.mxu0
    %v8149 = vmax.f32 %v7750, 0.0
    %v8150 = vmax.f32 %v7753, 0.0
    %v8151 = vmax.f32 %v7758, 0.0
    %v8152 = vmax.f32 %v7761, 0.0
    %v8153 = vmax.f32 %v7805, 0.0
    %v8154 = vmax.f32 %v7808, 0.0
    %v8155 = vmax.f32 %v7813, 0.0
    %v8156 = vmax.f32 %v7816, 0.0
    %v8157 = vmax.f32 %v7860, 0.0
    %v8158 = vmax.f32 %v7863, 0.0
    %v8159 = vmax.f32 %v7868, 0.0
    %v8160 = vmax.f32 %v7871, 0.0
    %v8161 = vmax.f32 %v7915, 0.0
    %v8162 = vmax.f32 %v7918, 0.0
    %v8163 = vmax.f32 %v7923, 0.0
    %v8164 = vmax.f32 %v7926, 0.0
    %v8165 = vmax.f32 %v7970, 0.0
    %v8166 = vmax.f32 %v7973, 0.0
    %v8167 = vmax.f32 %v7978, 0.0
    %v8168 = vmax.f32 %v7981, 0.0
    %v8169 = vmax.f32 %v8025, 0.0
    %v8170 = vmax.f32 %v8028, 0.0
    %v8171 = vmax.f32 %v8033, 0.0
    %v8172 = vmax.f32 %v8036, 0.0
    %v8173 = vmax.f32 %v8080, 0.0
    %v8174 = vmax.f32 %v8083, 0.0
    %v8175 = vmax.f32 %v8088, 0.0
    %v8176 = vmax.f32 %v8091, 0.0
    %v8177 = vmax.f32 %v8135, 0.0
    %v8178 = vmax.f32 %v8138, 0.0
    %v8179 = vmax.f32 %v8143, 0.0
    %v8180 = vmax.f32 %v8146, 0.0
    %v8181 = vpack.c.bf16 %v8150, %v8149
    %v8182 = vpack.c.bf16 %v8152, %v8151
    %v8183 = vpack.c.bf16 %v8154, %v8153
    %v8184 = vpack.c.bf16 %v8156, %v8155
    %v8185 = vpack.c.bf16 %v8158, %v8157
    %v8186 = vpack.c.bf16 %v8160, %v8159
    %v8187 = vpack.c.bf16 %v8162, %v8161
    %v8188 = vpack.c.bf16 %v8164, %v8163
    %v8189 = vpack.c.bf16 %v8166, %v8165
    %v8190 = vpack.c.bf16 %v8168, %v8167
    %v8191 = vpack.c.bf16 %v8170, %v8169
    %v8192 = vpack.c.bf16 %v8172, %v8171
    %v8193 = vpack.c.bf16 %v8174, %v8173
    %v8194 = vpack.c.bf16 %v8176, %v8175
    %v8195 = vpack.c.bf16 %v8178, %v8177
    %v8196 = vpack.c.bf16 %v8180, %v8179
    %8198 = vset.pattern.permute.xlu0 40
    %8199 = vperm.xlu0 %8198, %v5879
    %v8200 = vpop.permute.xlu0 %8199
    %8203 = vset.pattern.permute.xlu0 40
    %8204 = vperm.xlu0 %8203, %v5880
    %v8205 = vpop.permute.xlu0 %8204
    %8208 = vset.pattern.permute.xlu0 40
    %8209 = vperm.xlu0 %8208, %v5881
    %v8210 = vpop.permute.xlu0 %8209
    %8213 = vset.pattern.permute.xlu0 40
    %8214 = vperm.xlu0 %8213, %v5882
    %v8215 = vpop.permute.xlu0 %8214
    %8218 = vset.pattern.permute.xlu0 40
    %8219 = vperm.xlu0 %8218, %v5883
    %v8220 = vpop.permute.xlu0 %8219
    %8223 = vset.pattern.permute.xlu0 40
    %8224 = vperm.xlu0 %8223, %v5884
    %v8225 = vpop.permute.xlu0 %8224
    %8228 = vset.pattern.permute.xlu0 40
    %8229 = vperm.xlu0 %8228, %v5885
    %v8230 = vpop.permute.xlu0 %8229
    %8233 = vset.pattern.permute.xlu0 40
    %8234 = vperm.xlu0 %8233, %v5886
    %v8235 = vpop.permute.xlu0 %8234
    %v8238 = vsel %vm7708, %v5871, 0
    %8240 = vmatprep.subr.bf16.mxu0 0
    %8241 = vmatpush1.bf16.msra.mxu0 0
    %8242 = vmatprep.subr.bf16.mxu0 0
    %8243 = vmatpush1.bf16.msra.mxu0 0
    %8244 = vmatprep.subr.bf16.mxu0 0
    %8245 = vmatpush1.bf16.msra.mxu0 0
    %8246 = vmatprep.subr.bf16.mxu0 0
    %8247 = vmatpush1.bf16.msra.mxu0 0
    %8248 = vmatprep.subr.bf16.mxu0 0
    %8249 = vmatpush1.bf16.msra.mxu0 0
    %8250 = vmatprep.subr.bf16.mxu0 0
    %8251 = vmatpush1.bf16.msra.mxu0 0
    %8252 = vmatprep.subr.bf16.mxu0 0
    %8253 = vmatpush1.bf16.msra.mxu0 %v8182
    %8254 = vmatprep.subr.bf16.mxu0 0
    %8255 = vmatpush1.bf16.msra.mxu0 %v8181
    %8256 = vmatprep.subr.bf16.mxu0 0
    %8257 = vmatpush2.bf16.msra.mxu0 0
    %8258 = vmatprep.subr.bf16.mxu0 0
    %8259 = vmatpush2.bf16.msra.mxu0 0
    %8260 = vmatprep.subr.bf16.mxu0 0
    %8261 = vmatpush2.bf16.msra.mxu0 0
    %8262 = vmatprep.subr.bf16.mxu0 0
    %8263 = vmatpush2.bf16.msra.mxu0 0
    %8264 = vmatprep.subr.bf16.mxu0 0
    %8265 = vmatpush2.bf16.msra.mxu0 0
    %8266 = vmatprep.subr.bf16.mxu0 0
    %8267 = vmatpush2.bf16.msra.mxu0 0
    %8268 = vmatprep.subr.bf16.mxu0 0
    %8269 = vmatpush2.bf16.msra.mxu0 0
    %8270 = vmatprep.subr.bf16.mxu0 0
    %8271 = vmatpush2.bf16.msra.mxu0 0
    %8272 = vmatprep.mubr.bf16.mxu0 0
    %8273 = vmatmul.mubr.bf16.gmra.mxu0 %v8238
    %v8274 = vpop.f32.mrf.mxu0
    %v8275 = vadd.f32 %v8200, %v8274
    %v8276 = vpop.f32.mrf.mxu0
    %v8277 = vpop.f32.mrf.mxu0
    %v8278 = vpop.f32.mrf.mxu0
    %8279 = vdwg.mxu0
    %v8281 = vsel %vm7708, %v5872, 0
    %8283 = vmatprep.subr.bf16.mxu0 0
    %8284 = vmatpush1.bf16.msra.mxu0 0
    %8285 = vmatprep.subr.bf16.mxu0 0
    %8286 = vmatpush1.bf16.msra.mxu0 0
    %8287 = vmatprep.subr.bf16.mxu0 0
    %8288 = vmatpush1.bf16.msra.mxu0 0
    %8289 = vmatprep.subr.bf16.mxu0 0
    %8290 = vmatpush1.bf16.msra.mxu0 0
    %8291 = vmatprep.subr.bf16.mxu0 0
    %8292 = vmatpush1.bf16.msra.mxu0 0
    %8293 = vmatprep.subr.bf16.mxu0 0
    %8294 = vmatpush1.bf16.msra.mxu0 0
    %8295 = vmatprep.subr.bf16.mxu0 0
    %8296 = vmatpush1.bf16.msra.mxu0 %v8184
    %8297 = vmatprep.subr.bf16.mxu0 0
    %8298 = vmatpush1.bf16.msra.mxu0 %v8183
    %8299 = vmatprep.subr.bf16.mxu0 0
    %8300 = vmatpush2.bf16.msra.mxu0 0
    %8301 = vmatprep.subr.bf16.mxu0 0
    %8302 = vmatpush2.bf16.msra.mxu0 0
    %8303 = vmatprep.subr.bf16.mxu0 0
    %8304 = vmatpush2.bf16.msra.mxu0 0
    %8305 = vmatprep.subr.bf16.mxu0 0
    %8306 = vmatpush2.bf16.msra.mxu0 0
    %8307 = vmatprep.subr.bf16.mxu0 0
    %8308 = vmatpush2.bf16.msra.mxu0 0
    %8309 = vmatprep.subr.bf16.mxu0 0
    %8310 = vmatpush2.bf16.msra.mxu0 0
    %8311 = vmatprep.subr.bf16.mxu0 0
    %8312 = vmatpush2.bf16.msra.mxu0 0
    %8313 = vmatprep.subr.bf16.mxu0 0
    %8314 = vmatpush2.bf16.msra.mxu0 0
    %8315 = vmatprep.mubr.bf16.mxu0 0
    %8316 = vmatmul.mubr.bf16.gmra.mxu0 %v8281
    %v8317 = vpop.f32.mrf.mxu0
    %v8318 = vadd.f32 %v8205, %v8317
    %v8319 = vpop.f32.mrf.mxu0
    %v8320 = vpop.f32.mrf.mxu0
    %v8321 = vpop.f32.mrf.mxu0
    %8322 = vdwg.mxu0
    %v8324 = vsel %vm7708, %v5873, 0
    %8326 = vmatprep.subr.bf16.mxu0 0
    %8327 = vmatpush1.bf16.msra.mxu0 0
    %8328 = vmatprep.subr.bf16.mxu0 0
    %8329 = vmatpush1.bf16.msra.mxu0 0
    %8330 = vmatprep.subr.bf16.mxu0 0
    %8331 = vmatpush1.bf16.msra.mxu0 0
    %8332 = vmatprep.subr.bf16.mxu0 0
    %8333 = vmatpush1.bf16.msra.mxu0 0
    %8334 = vmatprep.subr.bf16.mxu0 0
    %8335 = vmatpush1.bf16.msra.mxu0 0
    %8336 = vmatprep.subr.bf16.mxu0 0
    %8337 = vmatpush1.bf16.msra.mxu0 0
    %8338 = vmatprep.subr.bf16.mxu0 0
    %8339 = vmatpush1.bf16.msra.mxu0 %v8186
    %8340 = vmatprep.subr.bf16.mxu0 0
    %8341 = vmatpush1.bf16.msra.mxu0 %v8185
    %8342 = vmatprep.subr.bf16.mxu0 0
    %8343 = vmatpush2.bf16.msra.mxu0 0
    %8344 = vmatprep.subr.bf16.mxu0 0
    %8345 = vmatpush2.bf16.msra.mxu0 0
    %8346 = vmatprep.subr.bf16.mxu0 0
    %8347 = vmatpush2.bf16.msra.mxu0 0
    %8348 = vmatprep.subr.bf16.mxu0 0
    %8349 = vmatpush2.bf16.msra.mxu0 0
    %8350 = vmatprep.subr.bf16.mxu0 0
    %8351 = vmatpush2.bf16.msra.mxu0 0
    %8352 = vmatprep.subr.bf16.mxu0 0
    %8353 = vmatpush2.bf16.msra.mxu0 0
    %8354 = vmatprep.subr.bf16.mxu0 0
    %8355 = vmatpush2.bf16.msra.mxu0 0
    %8356 = vmatprep.subr.bf16.mxu0 0
    %8357 = vmatpush2.bf16.msra.mxu0 0
    %8358 = vmatprep.mubr.bf16.mxu0 0
    %8359 = vmatmul.mubr.bf16.gmra.mxu0 %v8324
    %v8360 = vpop.f32.mrf.mxu0
    %v8361 = vadd.f32 %v8210, %v8360
    %v8362 = vpop.f32.mrf.mxu0
    %v8363 = vpop.f32.mrf.mxu0
    %v8364 = vpop.f32.mrf.mxu0
    %8365 = vdwg.mxu0
    %v8367 = vsel %vm7708, %v5874, 0
    %8369 = vmatprep.subr.bf16.mxu0 0
    %8370 = vmatpush1.bf16.msra.mxu0 0
    %8371 = vmatprep.subr.bf16.mxu0 0
    %8372 = vmatpush1.bf16.msra.mxu0 0
    %8373 = vmatprep.subr.bf16.mxu0 0
    %8374 = vmatpush1.bf16.msra.mxu0 0
    %8375 = vmatprep.subr.bf16.mxu0 0
    %8376 = vmatpush1.bf16.msra.mxu0 0
    %8377 = vmatprep.subr.bf16.mxu0 0
    %8378 = vmatpush1.bf16.msra.mxu0 0
    %8379 = vmatprep.subr.bf16.mxu0 0
    %8380 = vmatpush1.bf16.msra.mxu0 0
    %8381 = vmatprep.subr.bf16.mxu0 0
    %8382 = vmatpush1.bf16.msra.mxu0 %v8188
    %8383 = vmatprep.subr.bf16.mxu0 0
    %8384 = vmatpush1.bf16.msra.mxu0 %v8187
    %8385 = vmatprep.subr.bf16.mxu0 0
    %8386 = vmatpush2.bf16.msra.mxu0 0
    %8387 = vmatprep.subr.bf16.mxu0 0
    %8388 = vmatpush2.bf16.msra.mxu0 0
    %8389 = vmatprep.subr.bf16.mxu0 0
    %8390 = vmatpush2.bf16.msra.mxu0 0
    %8391 = vmatprep.subr.bf16.mxu0 0
    %8392 = vmatpush2.bf16.msra.mxu0 0
    %8393 = vmatprep.subr.bf16.mxu0 0
    %8394 = vmatpush2.bf16.msra.mxu0 0
    %8395 = vmatprep.subr.bf16.mxu0 0
    %8396 = vmatpush2.bf16.msra.mxu0 0
    %8397 = vmatprep.subr.bf16.mxu0 0
    %8398 = vmatpush2.bf16.msra.mxu0 0
    %8399 = vmatprep.subr.bf16.mxu0 0
    %8400 = vmatpush2.bf16.msra.mxu0 0
    %8401 = vmatprep.mubr.bf16.mxu0 0
    %8402 = vmatmul.mubr.bf16.gmra.mxu0 %v8367
    %v8403 = vpop.f32.mrf.mxu0
    %v8404 = vadd.f32 %v8215, %v8403
    %v8405 = vpop.f32.mrf.mxu0
    %v8406 = vpop.f32.mrf.mxu0
    %v8407 = vpop.f32.mrf.mxu0
    %8408 = vdwg.mxu0
    %v8410 = vsel %vm7708, %v5875, 0
    %8412 = vmatprep.subr.bf16.mxu0 0
    %8413 = vmatpush1.bf16.msra.mxu0 0
    %8414 = vmatprep.subr.bf16.mxu0 0
    %8415 = vmatpush1.bf16.msra.mxu0 0
    %8416 = vmatprep.subr.bf16.mxu0 0
    %8417 = vmatpush1.bf16.msra.mxu0 0
    %8418 = vmatprep.subr.bf16.mxu0 0
    %8419 = vmatpush1.bf16.msra.mxu0 0
    %8420 = vmatprep.subr.bf16.mxu0 0
    %8421 = vmatpush1.bf16.msra.mxu0 0
    %8422 = vmatprep.subr.bf16.mxu0 0
    %8423 = vmatpush1.bf16.msra.mxu0 0
    %8424 = vmatprep.subr.bf16.mxu0 0
    %8425 = vmatpush1.bf16.msra.mxu0 %v8190
    %8426 = vmatprep.subr.bf16.mxu0 0
    %8427 = vmatpush1.bf16.msra.mxu0 %v8189
    %8428 = vmatprep.subr.bf16.mxu0 0
    %8429 = vmatpush2.bf16.msra.mxu0 0
    %8430 = vmatprep.subr.bf16.mxu0 0
    %8431 = vmatpush2.bf16.msra.mxu0 0
    %8432 = vmatprep.subr.bf16.mxu0 0
    %8433 = vmatpush2.bf16.msra.mxu0 0
    %8434 = vmatprep.subr.bf16.mxu0 0
    %8435 = vmatpush2.bf16.msra.mxu0 0
    %8436 = vmatprep.subr.bf16.mxu0 0
    %8437 = vmatpush2.bf16.msra.mxu0 0
    %8438 = vmatprep.subr.bf16.mxu0 0
    %8439 = vmatpush2.bf16.msra.mxu0 0
    %8440 = vmatprep.subr.bf16.mxu0 0
    %8441 = vmatpush2.bf16.msra.mxu0 0
    %8442 = vmatprep.subr.bf16.mxu0 0
    %8443 = vmatpush2.bf16.msra.mxu0 0
    %8444 = vmatprep.mubr.bf16.mxu0 0
    %8445 = vmatmul.mubr.bf16.gmra.mxu0 %v8410
    %v8446 = vpop.f32.mrf.mxu0
    %v8447 = vadd.f32 %v8220, %v8446
    %v8448 = vpop.f32.mrf.mxu0
    %v8449 = vpop.f32.mrf.mxu0
    %v8450 = vpop.f32.mrf.mxu0
    %8451 = vdwg.mxu0
    %v8453 = vsel %vm7708, %v5876, 0
    %8455 = vmatprep.subr.bf16.mxu0 0
    %8456 = vmatpush1.bf16.msra.mxu0 0
    %8457 = vmatprep.subr.bf16.mxu0 0
    %8458 = vmatpush1.bf16.msra.mxu0 0
    %8459 = vmatprep.subr.bf16.mxu0 0
    %8460 = vmatpush1.bf16.msra.mxu0 0
    %8461 = vmatprep.subr.bf16.mxu0 0
    %8462 = vmatpush1.bf16.msra.mxu0 0
    %8463 = vmatprep.subr.bf16.mxu0 0
    %8464 = vmatpush1.bf16.msra.mxu0 0
    %8465 = vmatprep.subr.bf16.mxu0 0
    %8466 = vmatpush1.bf16.msra.mxu0 0
    %8467 = vmatprep.subr.bf16.mxu0 0
    %8468 = vmatpush1.bf16.msra.mxu0 %v8192
    %8469 = vmatprep.subr.bf16.mxu0 0
    %8470 = vmatpush1.bf16.msra.mxu0 %v8191
    %8471 = vmatprep.subr.bf16.mxu0 0
    %8472 = vmatpush2.bf16.msra.mxu0 0
    %8473 = vmatprep.subr.bf16.mxu0 0
    %8474 = vmatpush2.bf16.msra.mxu0 0
    %8475 = vmatprep.subr.bf16.mxu0 0
    %8476 = vmatpush2.bf16.msra.mxu0 0
    %8477 = vmatprep.subr.bf16.mxu0 0
    %8478 = vmatpush2.bf16.msra.mxu0 0
    %8479 = vmatprep.subr.bf16.mxu0 0
    %8480 = vmatpush2.bf16.msra.mxu0 0
    %8481 = vmatprep.subr.bf16.mxu0 0
    %8482 = vmatpush2.bf16.msra.mxu0 0
    %8483 = vmatprep.subr.bf16.mxu0 0
    %8484 = vmatpush2.bf16.msra.mxu0 0
    %8485 = vmatprep.subr.bf16.mxu0 0
    %8486 = vmatpush2.bf16.msra.mxu0 0
    %8487 = vmatprep.mubr.bf16.mxu0 0
    %8488 = vmatmul.mubr.bf16.gmra.mxu0 %v8453
    %v8489 = vpop.f32.mrf.mxu0
    %v8490 = vadd.f32 %v8225, %v8489
    %v8491 = vpop.f32.mrf.mxu0
    %v8492 = vpop.f32.mrf.mxu0
    %v8493 = vpop.f32.mrf.mxu0
    %8494 = vdwg.mxu0
    %v8496 = vsel %vm7708, %v5877, 0
    %8498 = vmatprep.subr.bf16.mxu0 0
    %8499 = vmatpush1.bf16.msra.mxu0 0
    %8500 = vmatprep.subr.bf16.mxu0 0
    %8501 = vmatpush1.bf16.msra.mxu0 0
    %8502 = vmatprep.subr.bf16.mxu0 0
    %8503 = vmatpush1.bf16.msra.mxu0 0
    %8504 = vmatprep.subr.bf16.mxu0 0
    %8505 = vmatpush1.bf16.msra.mxu0 0
    %8506 = vmatprep.subr.bf16.mxu0 0
    %8507 = vmatpush1.bf16.msra.mxu0 0
    %8508 = vmatprep.subr.bf16.mxu0 0
    %8509 = vmatpush1.bf16.msra.mxu0 0
    %8510 = vmatprep.subr.bf16.mxu0 0
    %8511 = vmatpush1.bf16.msra.mxu0 %v8194
    %8512 = vmatprep.subr.bf16.mxu0 0
    %8513 = vmatpush1.bf16.msra.mxu0 %v8193
    %8514 = vmatprep.subr.bf16.mxu0 0
    %8515 = vmatpush2.bf16.msra.mxu0 0
    %8516 = vmatprep.subr.bf16.mxu0 0
    %8517 = vmatpush2.bf16.msra.mxu0 0
    %8518 = vmatprep.subr.bf16.mxu0 0
    %8519 = vmatpush2.bf16.msra.mxu0 0
    %8520 = vmatprep.subr.bf16.mxu0 0
    %8521 = vmatpush2.bf16.msra.mxu0 0
    %8522 = vmatprep.subr.bf16.mxu0 0
    %8523 = vmatpush2.bf16.msra.mxu0 0
    %8524 = vmatprep.subr.bf16.mxu0 0
    %8525 = vmatpush2.bf16.msra.mxu0 0
    %8526 = vmatprep.subr.bf16.mxu0 0
    %8527 = vmatpush2.bf16.msra.mxu0 0
    %8528 = vmatprep.subr.bf16.mxu0 0
    %8529 = vmatpush2.bf16.msra.mxu0 0
    %8530 = vmatprep.mubr.bf16.mxu0 0
    %8531 = vmatmul.mubr.bf16.gmra.mxu0 %v8496
    %v8532 = vpop.f32.mrf.mxu0
    %v8533 = vadd.f32 %v8230, %v8532
    %v8534 = vpop.f32.mrf.mxu0
    %v8535 = vpop.f32.mrf.mxu0
    %v8536 = vpop.f32.mrf.mxu0
    %8537 = vdwg.mxu0
    %v8539 = vsel %vm7708, %v5878, 0
    %8541 = vmatprep.subr.bf16.mxu0 0
    %8542 = vmatpush1.bf16.msra.mxu0 0
    %8543 = vmatprep.subr.bf16.mxu0 0
    %8544 = vmatpush1.bf16.msra.mxu0 0
    %8545 = vmatprep.subr.bf16.mxu0 0
    %8546 = vmatpush1.bf16.msra.mxu0 0
    %8547 = vmatprep.subr.bf16.mxu0 0
    %8548 = vmatpush1.bf16.msra.mxu0 0
    %8549 = vmatprep.subr.bf16.mxu0 0
    %8550 = vmatpush1.bf16.msra.mxu0 0
    %8551 = vmatprep.subr.bf16.mxu0 0
    %8552 = vmatpush1.bf16.msra.mxu0 0
    %8553 = vmatprep.subr.bf16.mxu0 0
    %8554 = vmatpush1.bf16.msra.mxu0 %v8196
    %8555 = vmatprep.subr.bf16.mxu0 0
    %8556 = vmatpush1.bf16.msra.mxu0 %v8195
    %8557 = vmatprep.subr.bf16.mxu0 0
    %8558 = vmatpush2.bf16.msra.mxu0 0
    %8559 = vmatprep.subr.bf16.mxu0 0
    %8560 = vmatpush2.bf16.msra.mxu0 0
    %8561 = vmatprep.subr.bf16.mxu0 0
    %8562 = vmatpush2.bf16.msra.mxu0 0
    %8563 = vmatprep.subr.bf16.mxu0 0
    %8564 = vmatpush2.bf16.msra.mxu0 0
    %8565 = vmatprep.subr.bf16.mxu0 0
    %8566 = vmatpush2.bf16.msra.mxu0 0
    %8567 = vmatprep.subr.bf16.mxu0 0
    %8568 = vmatpush2.bf16.msra.mxu0 0
    %8569 = vmatprep.subr.bf16.mxu0 0
    %8570 = vmatpush2.bf16.msra.mxu0 0
    %8571 = vmatprep.subr.bf16.mxu0 0
    %8572 = vmatpush2.bf16.msra.mxu0 0
    %8573 = vmatprep.mubr.bf16.mxu0 0
    %8574 = vmatmul.mubr.bf16.gmra.mxu0 %v8539
    %v8575 = vpop.f32.mrf.mxu0
    %v8576 = vadd.f32 %v8235, %v8575
    %v8577 = vpop.f32.mrf.mxu0
    %v8578 = vpop.f32.mrf.mxu0
    %v8579 = vpop.f32.mrf.mxu0
    %8580 = vdwg.mxu0
    %v8589 = vrot.slane %v8318, 7
    %vm8590 = vcmask 1041409
    %v8591 = vsel %vm8590, %v8589, %v8275
    %v8592 = vrot.slane %v8361, 6
    %vm8593 = vcmask 1042434
    %v8594 = vsel %vm8593, %v8592, %v8591
    %v8595 = vrot.slane %v8404, 5
    %vm8596 = vcmask 1043459
    %v8597 = vsel %vm8596, %v8595, %v8594
    %v8598 = vrot.slane %v8447, 4
    %vm8599 = vcmask 1044484
    %v8600 = vsel %vm8599, %v8598, %v8597
    %v8601 = vrot.slane %v8490, 3
    %vm8602 = vcmask 1045509
    %v8603 = vsel %vm8602, %v8601, %v8600
    %v8604 = vrot.slane %v8533, 2
    %vm8605 = vcmask 1046534
    %v8606 = vsel %vm8605, %v8604, %v8603
    %v8607 = vrot.slane %v8576, 1
    %vm8608 = vcmask 1047559
    %v8609 = vsel %vm8608, %v8607, %v8606
    %8611 = vst [vmem:[#allocation5] sm:$0xff] %v8609
    // Predicated region
    $region18: #{tpu_custom_call.1} parent=1 // pred_check
      _
    $region19: #{tpu_custom_call.1} parent=1 // pred_check_branch
      %8613 = sbr.rel (0) target = $region21
    $region20: #{tpu_custom_call.1} parent=1 // pred_region
      %s8615 = ssub.s32 128, 128
      %8616 = vsyncadd [#allocation4], %s8615
      %s8618 = sshll.u32 [#allocation5], 4
      %s8619 = int_to_ptr.vmem [resolvable:$true] %s8618
      %8621 = dma.vmem_to_hbm [thread:$0]  %s8619, 128, %s3, [#allocation4]
    $region21: #{tpu_custom_call.1} parent=1 // pred_fallthru
      _
    // Predicated region
    $region22: #{tpu_custom_call.1} parent=1 // pred_check
      _
    $region23: #{tpu_custom_call.1} parent=1 // pred_check_branch
      %8623 = sbr.rel (0) target = $region25
    $region24: #{tpu_custom_call.1} parent=1 // pred_region
      %8624 = dma.done [#allocation4], 128
    $region25: #{tpu_custom_call.1} parent=1 // pred_fallthru
      _
    %8625 = vsyncpa [#allocation3], 1
    %8626 = vsyncpa [#allocation4], 1

</llo_original>
